<compile_context>
chip_gen: v5e
topology: v5e:2x2
jax: 0.10.0
libtpu: 0.0.40
codegen_flags: <defaults>
</compile_context>

<pallas_src>
import jax
import jax.numpy as jnp
from jax import lax
from jax.experimental import pallas as pl
from jax.experimental.pallas import tpu as pltpu


# ---------------------------------------------------------------------------
# In-kernel helpers (traced inside the Pallas kernel; static shapes only).
# ---------------------------------------------------------------------------
def _pad_hw(a, p):
    """Zero-pad the two leading spatial dims of an (h, w, c) value by p."""
    h, w, c = a.shape
    zr = jnp.zeros((p, w, c), a.dtype)
    a = jnp.concatenate([zr, a, zr], axis=0)
    zc = jnp.zeros((h + 2 * p, p, c), a.dtype)
    return jnp.concatenate([zc, a, zc], axis=1)


def _im2col(apad, kh, kw, oh, ow):
    """Build the (oh*ow, kh*kw*c) patch matrix (taps concatenated on lanes)."""
    taps = [apad[dh:dh + oh, dw:dw + ow, :]
            for dh in range(kh) for dw in range(kw)]
    cat = jnp.concatenate(taps, axis=-1)                  # (oh, ow, kh*kw*c)
    return cat.reshape(oh * ow, kh * kw * apad.shape[-1])


def _interleave(a, b, axis):
    """Element-interleave a and b along `axis`: result[2k] = a[k], [2k+1] = b[k]."""
    sh = a.shape
    exp = sh[:axis + 1] + (2,) + sh[axis + 1:]
    new = sh[:axis] + (sh[axis] * 2,) + sh[axis + 1:]
    aa = jnp.broadcast_to(jnp.expand_dims(a, axis + 1), exp).reshape(new)
    bb = jnp.broadcast_to(jnp.expand_dims(b, axis + 1), exp).reshape(new)
    idx = lax.broadcasted_iota(jnp.int32, new, axis)
    return jnp.where(idx % 2 == 0, aa, bb)


# ---------------------------------------------------------------------------
# Fused decoder kernel: one program per batch element, everything in VMEM.
# ---------------------------------------------------------------------------
def _decoder_kernel(x_ref, w_in_ref, b_in_ref, wt_ref, bt_ref,
                    rw3_ref, rb3_ref, rw1_ref, rb1_ref,
                    w_out_ref, b_out_ref, o_ref):
    f32 = jnp.float32
    x = x_ref[0].astype(f32)                    # (H, W, Cin)
    H, W, _ = x.shape
    C1 = w_in_ref.shape[1]                      # 4 * ch_hidden
    C2 = wt_ref.shape[3]                        # 2 * ch_hidden
    L = rw3_ref.shape[0]
    Cout = w_out_ref.shape[1]
    H2, W2 = 2 * H, 2 * W

    # ---- conv_in: 3x3 / pad 1, one (H*W, 9*Cin) @ (9*Cin, C1) matmul ----
    p_in = _im2col(_pad_hw(x, 1), 3, 3, H, W)
    a1 = jnp.dot(p_in, w_in_ref[...], preferred_element_type=f32) + b_in_ref[...]
    a1 = a1.reshape(H, W, C1)

    # ---- tconv1 (ConvTranspose2d k=4, s=2, p=1): stride-phase decomposition --
    # The zero side-info concat was dropped in weight packing (weights for the
    # zero channels are never loaded).  Each output parity (po, pw) is a dense
    # 2x2 stride-1 conv with contraction 4*C1 (= 128 at these sizes).
    a1p = _pad_hw(a1, 1)                        # (H+2, W+2, C1)
    wt = wt_ref[...]                            # (2, 2, 4*C1, C2)
    bt = bt_ref[...]                            # (1, C2)
    ph = [[None, None], [None, None]]
    for po in range(2):
        for pw in range(2):
            crop = a1p[po:po + H + 1, pw:pw + W + 1, :]
            pm = _im2col(crop, 2, 2, H, W)      # (H*W, 4*C1)
            y = jnp.dot(pm, wt[po, pw], preferred_element_type=f32) + bt
            ph[po][pw] = y.reshape(H, W, C2)
    r0 = _interleave(ph[0][0], ph[0][1], axis=1)   # (H, 2W, C2)
    r1 = _interleave(ph[1][0], ph[1][1], axis=1)
    t = _interleave(r0, r1, axis=0)                # (2H, 2W, C2)

    # ---- residual stack ----
    # TODO(synk): vqvae.ResidualBlock source not provided; assumed the standard
    # VQ-VAE form  x += conv1x1(relu(conv3x3(relu(x))))  per layer, with the
    # final stack ReLU fused as cond_out's pre-activation below.
    rw3 = rw3_ref[...]; rb3 = rb3_ref[...]
    rw1 = rw1_ref[...]; rb1 = rb1_ref[...]
    for l in range(L):
        h = jnp.maximum(t, 0.0)
        pm = _im2col(_pad_hw(h, 1), 3, 3, H2, W2)          # (H2*W2, 9*C2)
        y = jnp.dot(pm, rw3[l], preferred_element_type=f32) + rb3[l]
        y = jnp.maximum(y, 0.0)
        y = jnp.dot(y, rw1[l], preferred_element_type=f32) + rb1[l]
        t = t + y.reshape(H2, W2, C2)

    # ---- cond_out (3x3 / pad 1) + sigmoid(x) - 0.5 epilogue ----
    pm = _im2col(_pad_hw(jnp.maximum(t, 0.0), 1), 3, 3, H2, W2)
    o = jnp.dot(pm, w_out_ref[...], preferred_element_type=f32) + b_out_ref[...]
    o = jax.nn.sigmoid(o) - 0.5
    o_ref[...] = o.reshape(1, H2, W2, Cout).astype(o_ref.dtype)


# ---------------------------------------------------------------------------
# Wrapper: NCHW in/out (PyTorch convention), single fused pallas_call.
# ---------------------------------------------------------------------------
def decoder_forward(packed, x_nchw):
    x = jnp.transpose(x_nchw, (0, 2, 3, 1))     # boundary-only NCHW -> NHWC (~4 KB)
    N, H, W, Cin = x.shape
    Cout = packed["w_out"].shape[1]
    H2, W2 = 2 * H, 2 * W

    def full(a):
        return pl.BlockSpec(a.shape, lambda n, _nd=a.ndim: (0,) * _nd)

    weights = (packed["w_in"], packed["b_in"], packed["wt"], packed["bt"],
               packed["rw3"], packed["rb3"], packed["rw1"], packed["rb1"],
               packed["w_out"], packed["b_out"])

    out_nhwc = pl.pallas_call(
        _decoder_kernel,
        out_shape=jax.ShapeDtypeStruct((N, H2, W2, Cout), x.dtype),
        grid=(N,),
        in_specs=[pl.BlockSpec((1, H, W, Cin), lambda n: (n, 0, 0, 0))]
                 + [full(w) for w in weights],
        out_specs=pl.BlockSpec((1, H2, W2, Cout), lambda n: (n, 0, 0, 0)),
        compiler_params=pltpu.CompilerParams(
            dimension_semantics=("parallel",)),
    )(x, *weights)
    return jnp.transpose(out_nhwc, (0, 3, 1, 2))  # boundary-only NHWC -> NCHW (~6 KB)


# ---------------------------------------------------------------------------
# Parameter construction (deterministic, torch-like layouts) and packing.
# ---------------------------------------------------------------------------
def _winit(key, shape, fan_in):
    return jax.random.normal(key, shape, jnp.float32) / jnp.sqrt(fan_in)


def init_decoder_params(key, ch_in, ch_hidden, ch_out, ch_residual,
                        num_residual_layers):
    # TODO(synk): vqvae.Conv2d / vqvae.ConvTranspose2d assumed to be plain
    # nn.Conv2d / nn.ConvTranspose2d; init is deterministic (not kaiming).
    ks = jax.random.split(key, 8 + 4 * num_residual_layers)
    c1, c2 = 4 * ch_hidden, 2 * ch_hidden
    p = {}
    p["conv_in_w"] = _winit(ks[0], (3, 3, ch_in, c1), 9 * ch_in)            # HWIO
    p["conv_in_b"] = _winit(ks[1], (c1,), 9 * ch_in)
    p["tconv1_w"] = _winit(ks[2], (8 * ch_hidden, c2, 4, 4), 16 * 8 * ch_hidden)  # (Cin,Cout,KH,KW)
    p["tconv1_b"] = _winit(ks[3], (c2,), 16 * 8 * ch_hidden)
    res = []
    for i in range(num_residual_layers):
        k0, k1, k2, k3 = ks[4 + 4 * i: 8 + 4 * i]
        res.append((
            _winit(k0, (3, 3, c2, ch_residual), 9 * c2),        # 3x3 HWIO
            _winit(k1, (ch_residual,), 9 * c2),
            _winit(k2, (1, 1, ch_residual, c2), ch_residual),   # 1x1 HWIO
            _winit(k3, (c2,), ch_residual),
        ))
    p["res1"] = res
    p["cond_out_w"] = _winit(ks[-2], (3, 3, c2, ch_out), 9 * c2)
    p["cond_out_b"] = _winit(ks[-1], (ch_out,), 9 * c2)
    return p


_TAP = ((3, 1), (2, 0))  # output parity -> transpose-conv kernel tap for dh/dw in {0,1}


def pack_decoder_params(p):
    """Convert raw (torch-layout) params into the fused kernel's matmul operands."""
    c1 = p["conv_in_w"].shape[-1]          # 4 * ch_hidden
    c2 = p["tconv1_w"].shape[1]            # 2 * ch_hidden
    packed = {
        "w_in": p["conv_in_w"].reshape(-1, c1),
        "b_in": p["conv_in_b"].reshape(1, c1),
        "bt": p["tconv1_b"].reshape(1, c2),
        "w_out": p["cond_out_w"].reshape(-1, p["cond_out_w"].shape[-1]),
        "b_out": p["cond_out_b"].reshape(1, -1),
    }
    # tconv1: keep only the first c1 input channels (the rest multiply the zero
    # side-info branch) and build one (4*c1, c2) matrix per output parity.
    wt_eff = p["tconv1_w"][:c1]            # (C1, C2, 4, 4)
    phase_rows = []
    for po in range(2):
        row = []
        for pw in range(2):
            blocks = [wt_eff[:, :, _TAP[po][dh], _TAP[pw][dw]]
                      for dh in range(2) for dw in range(2)]
            row.append(jnp.concatenate(blocks, axis=0))          # (4*C1, C2)
        phase_rows.append(jnp.stack(row, axis=0))
    packed["wt"] = jnp.stack(phase_rows, axis=0)                 # (2, 2, 4*C1, C2)
    packed["rw3"] = jnp.stack([w3.reshape(-1, w3.shape[-1]) for w3, _, _, _ in p["res1"]])
    packed["rb3"] = jnp.stack([b3.reshape(1, -1) for _, b3, _, _ in p["res1"]])
    packed["rw1"] = jnp.stack([w1.reshape(w1.shape[2], w1.shape[3]) for _, _, w1, _ in p["res1"]])
    packed["rb1"] = jnp.stack([b1.reshape(1, -1) for _, _, _, b1 in p["res1"]])
    return packed


# ---------------------------------------------------------------------------
# Pure-JAX reference (same assumed ResidualBlock structure), NCHW.
# ---------------------------------------------------------------------------
def decoder_reference(p, x_nchw):
    hi = lax.Precision.HIGHEST

    def conv(x, w_hwio, b, pad):
        y = lax.conv_general_dilated(
            x, w_hwio, window_strides=(1, 1), padding=((pad, pad), (pad, pad)),
            dimension_numbers=("NCHW", "HWIO", "NCHW"), precision=hi)
        return y + b.reshape(1, -1, 1, 1)

    def tconv(x, w_iohw, b):  # nn.ConvTranspose2d(k=4, s=2, p=1)
        w_hwio = jnp.transpose(w_iohw[:, :, ::-1, ::-1], (2, 3, 0, 1))
        y = lax.conv_general_dilated(
            x, w_hwio, window_strides=(1, 1), padding=((2, 2), (2, 2)),
            lhs_dilation=(2, 2),
            dimension_numbers=("NCHW", "HWIO", "NCHW"), precision=hi)
        return y + b.reshape(1, -1, 1, 1)

    x1 = conv(x_nchw, p["conv_in_w"], p["conv_in_b"], 1)
    xc = jnp.concatenate([x1, jnp.zeros_like(x1)], axis=1)   # cond_ch_in=None path
    t = tconv(xc, p["tconv1_w"], p["tconv1_b"])
    for w3, b3, w1, b1 in p["res1"]:
        h = conv(jax.nn.relu(t), w3, b3, 1)
        t = t + conv(jax.nn.relu(h), w1, b1, 0)
    o = conv(jax.nn.relu(t), p["cond_out_w"], p["cond_out_b"], 1)
    return jax.nn.sigmoid(o) - 0.5


if __name__ == "__main__":
    # Small shapes consistent with the module:
    #   ch_in=8, ch_hidden=8, ch_out=3, ch_residual=8, num_residual_layers=2,
    #   activation='relu', input x: (N=2, C=8, H=8, W=8) -> output (2, 3, 16, 16)
    ch_in, ch_hidden, ch_out = 8, 8, 3
    ch_residual, num_residual_layers = 8, 2

    key = jax.random.PRNGKey(0)
    kp, kx = jax.random.split(key)
    raw = init_decoder_params(kp, ch_in, ch_hidden, ch_out, ch_residual,
                              num_residual_layers)
    packed = pack_decoder_params(raw)
    x = jax.random.normal(kx, (2, ch_in, 8, 8), jnp.float32)

    fwd = jax.jit(decoder_forward)
    out = fwd(packed, x)
    jax.block_until_ready(out)

    assert out.shape == (2, ch_out, 16, 16), out.shape
    assert out.dtype == jnp.float32
    # sigmoid(x) - 0.5 lies strictly in (-0.5, 0.5)
    assert float(jnp.max(jnp.abs(out))) < 0.5

    ref = decoder_reference(raw, x)
    err = float(jnp.max(jnp.abs(out - ref)))
    assert err < 5e-3, f"mismatch vs pure-JAX reference: {err}"

    print("KERNEL_OK")
</pallas_src>

<mosaic_0001>
module attributes {stable_mosaic.version = 11 : i64} {
  func.func @_decoder_kernel(%arg0: i32, %arg1: memref<1x8x8x8xf32, #tpu.memory_space<vmem>>, %arg2: memref<72x32xf32, #tpu.memory_space<vmem>>, %arg3: memref<1x32xf32, #tpu.memory_space<vmem>>, %arg4: memref<2x2x128x16xf32, #tpu.memory_space<vmem>>, %arg5: memref<1x16xf32, #tpu.memory_space<vmem>>, %arg6: memref<2x144x8xf32, #tpu.memory_space<vmem>>, %arg7: memref<2x1x8xf32, #tpu.memory_space<vmem>>, %arg8: memref<2x8x16xf32, #tpu.memory_space<vmem>>, %arg9: memref<2x1x16xf32, #tpu.memory_space<vmem>>, %arg10: memref<144x3xf32, #tpu.memory_space<vmem>>, %arg11: memref<1x3xf32, #tpu.memory_space<vmem>>, %arg12: memref<1x16x16x3xf32, #tpu.memory_space<vmem>>) attributes {dimension_semantics = [#tpu.dimension_semantics<parallel>], iteration_bounds = array<i64: 2>, scalar_prefetch = 0 : i64, scratch_operands = 0 : i64, tpu.core_type = #tpu.core_type<tc>, window_params = [{transform_indices = @transform_0, window_bounds = array<i64: 1, 8, 8, 8>}, {pipeline_mode = #tpu.pipeline_mode<synchronous>, transform_indices = @transform_1, window_bounds = array<i64: 72, 32>}, {pipeline_mode = #tpu.pipeline_mode<synchronous>, transform_indices = @transform_2, window_bounds = array<i64: 1, 32>}, {pipeline_mode = #tpu.pipeline_mode<synchronous>, transform_indices = @transform_3, window_bounds = array<i64: 2, 2, 128, 16>}, {pipeline_mode = #tpu.pipeline_mode<synchronous>, transform_indices = @transform_4, window_bounds = array<i64: 1, 16>}, {pipeline_mode = #tpu.pipeline_mode<synchronous>, transform_indices = @transform_5, window_bounds = array<i64: 2, 144, 8>}, {pipeline_mode = #tpu.pipeline_mode<synchronous>, transform_indices = @transform_6, window_bounds = array<i64: 2, 1, 8>}, {pipeline_mode = #tpu.pipeline_mode<synchronous>, transform_indices = @transform_7, window_bounds = array<i64: 2, 8, 16>}, {pipeline_mode = #tpu.pipeline_mode<synchronous>, transform_indices = @transform_8, window_bounds = array<i64: 2, 1, 16>}, {pipeline_mode = #tpu.pipeline_mode<synchronous>, transform_indices = @transform_9, window_bounds = array<i64: 144, 3>}, {pipeline_mode = #tpu.pipeline_mode<synchronous>, transform_indices = @transform_10, window_bounds = array<i64: 1, 3>}, {transform_indices = @transform_11, window_bounds = array<i64: 1, 16, 16, 3>}]} {
    %c0 = arith.constant 0 : index
    %c0_0 = arith.constant 0 : index
    %c0_1 = arith.constant 0 : index
    %c0_2 = arith.constant 0 : index
    %0 = vector.load %arg1[%c0, %c0_0, %c0_1, %c0_2] : memref<1x8x8x8xf32, #tpu.memory_space<vmem>>, vector<1x8x8x8xf32>
    %1 = vector.shape_cast %0 : vector<1x8x8x8xf32> to vector<8x8x8xf32>
    %cst = arith.constant 0.000000e+00 : f32
    %2 = vector.broadcast %cst : f32 to vector<1x8x8xf32>
    %3 = tpu.concatenate %2, %1, %2 in 0 : vector<1x8x8xf32>, vector<8x8x8xf32>, vector<1x8x8xf32> -> vector<10x8x8xf32>
    %cst_3 = arith.constant 0.000000e+00 : f32
    %4 = vector.broadcast %cst_3 : f32 to vector<10x1x8xf32>
    %5 = tpu.concatenate %4, %3, %4 in 1 : vector<10x1x8xf32>, vector<10x8x8xf32>, vector<10x1x8xf32> -> vector<10x10x8xf32>
    %6 = vector.extract_strided_slice %5 {offsets = [0, 0, 0], sizes = [8, 8, 8], strides = [1, 1, 1]} : vector<10x10x8xf32> to vector<8x8x8xf32>
    %7 = vector.extract_strided_slice %5 {offsets = [0, 1, 0], sizes = [8, 8, 8], strides = [1, 1, 1]} : vector<10x10x8xf32> to vector<8x8x8xf32>
    %8 = vector.extract_strided_slice %5 {offsets = [0, 2, 0], sizes = [8, 8, 8], strides = [1, 1, 1]} : vector<10x10x8xf32> to vector<8x8x8xf32>
    %9 = vector.extract_strided_slice %5 {offsets = [1, 0, 0], sizes = [8, 8, 8], strides = [1, 1, 1]} : vector<10x10x8xf32> to vector<8x8x8xf32>
    %10 = vector.extract_strided_slice %5 {offsets = [1, 1, 0], sizes = [8, 8, 8], strides = [1, 1, 1]} : vector<10x10x8xf32> to vector<8x8x8xf32>
    %11 = vector.extract_strided_slice %5 {offsets = [1, 2, 0], sizes = [8, 8, 8], strides = [1, 1, 1]} : vector<10x10x8xf32> to vector<8x8x8xf32>
    %12 = vector.extract_strided_slice %5 {offsets = [2, 0, 0], sizes = [8, 8, 8], strides = [1, 1, 1]} : vector<10x10x8xf32> to vector<8x8x8xf32>
    %13 = vector.extract_strided_slice %5 {offsets = [2, 1, 0], sizes = [8, 8, 8], strides = [1, 1, 1]} : vector<10x10x8xf32> to vector<8x8x8xf32>
    %14 = vector.extract_strided_slice %5 {offsets = [2, 2, 0], sizes = [8, 8, 8], strides = [1, 1, 1]} : vector<10x10x8xf32> to vector<8x8x8xf32>
    %15 = tpu.concatenate %6, %7, %8, %9, %10, %11, %12, %13, %14 in 2 : vector<8x8x8xf32>, vector<8x8x8xf32>, vector<8x8x8xf32>, vector<8x8x8xf32>, vector<8x8x8xf32>, vector<8x8x8xf32>, vector<8x8x8xf32>, vector<8x8x8xf32>, vector<8x8x8xf32> -> vector<8x8x72xf32>
    %16 = vector.shape_cast %15 : vector<8x8x72xf32> to vector<64x72xf32>
    %c0_4 = arith.constant 0 : index
    %c0_5 = arith.constant 0 : index
    %17 = vector.load %arg2[%c0_4, %c0_5] : memref<72x32xf32, #tpu.memory_space<vmem>>, vector<72x32xf32>
    %cst_6 = arith.constant dense<0.000000e+00> : vector<64x32xf32>
    %18 = tpu.matmul %16, %17, %cst_6 {dimension_numbers = #tpu.dot_dimension_numbers<[1], [0], [0], [1], [0, 0, 1, 1], [], []>} : vector<64x72xf32>, vector<72x32xf32>, vector<64x32xf32> -> vector<64x32xf32>
    %c0_7 = arith.constant 0 : index
    %c0_8 = arith.constant 0 : index
    %19 = vector.load %arg3[%c0_7, %c0_8] : memref<1x32xf32, #tpu.memory_space<vmem>>, vector<1x32xf32>
    %20 = vector.broadcast %19 : vector<1x32xf32> to vector<64x32xf32>
    %21 = arith.addf %18, %20 : vector<64x32xf32>
    %22 = vector.shape_cast %21 : vector<64x32xf32> to vector<8x8x32xf32>
    %cst_9 = arith.constant 0.000000e+00 : f32
    %23 = vector.broadcast %cst_9 : f32 to vector<1x8x32xf32>
    %24 = tpu.concatenate %23, %22, %23 in 0 : vector<1x8x32xf32>, vector<8x8x32xf32>, vector<1x8x32xf32> -> vector<10x8x32xf32>
    %cst_10 = arith.constant 0.000000e+00 : f32
    %25 = vector.broadcast %cst_10 : f32 to vector<10x1x32xf32>
    %26 = tpu.concatenate %25, %24, %25 in 1 : vector<10x1x32xf32>, vector<10x8x32xf32>, vector<10x1x32xf32> -> vector<10x10x32xf32>
    %c0_11 = arith.constant 0 : index
    %c0_12 = arith.constant 0 : index
    %c0_13 = arith.constant 0 : index
    %c0_14 = arith.constant 0 : index
    %27 = vector.load %arg4[%c0_11, %c0_12, %c0_13, %c0_14] : memref<2x2x128x16xf32, #tpu.memory_space<vmem>>, vector<2x2x128x16xf32>
    %c0_15 = arith.constant 0 : index
    %c0_16 = arith.constant 0 : index
    %28 = vector.load %arg5[%c0_15, %c0_16] : memref<1x16xf32, #tpu.memory_space<vmem>>, vector<1x16xf32>
    %29 = vector.extract_strided_slice %26 {offsets = [0, 0, 0], sizes = [9, 9, 32], strides = [1, 1, 1]} : vector<10x10x32xf32> to vector<9x9x32xf32>
    %30 = vector.extract_strided_slice %29 {offsets = [0, 0, 0], sizes = [8, 8, 32], strides = [1, 1, 1]} : vector<9x9x32xf32> to vector<8x8x32xf32>
    %31 = vector.extract_strided_slice %29 {offsets = [0, 1, 0], sizes = [8, 8, 32], strides = [1, 1, 1]} : vector<9x9x32xf32> to vector<8x8x32xf32>
    %32 = vector.extract_strided_slice %29 {offsets = [1, 0, 0], sizes = [8, 8, 32], strides = [1, 1, 1]} : vector<9x9x32xf32> to vector<8x8x32xf32>
    %33 = vector.extract_strided_slice %29 {offsets = [1, 1, 0], sizes = [8, 8, 32], strides = [1, 1, 1]} : vector<9x9x32xf32> to vector<8x8x32xf32>
    %34 = tpu.concatenate %30, %31, %32, %33 in 2 : vector<8x8x32xf32>, vector<8x8x32xf32>, vector<8x8x32xf32>, vector<8x8x32xf32> -> vector<8x8x128xf32>
    %35 = vector.shape_cast %34 : vector<8x8x128xf32> to vector<64x128xf32>
    %36 = vector.extract_strided_slice %27 {offsets = [0, 0, 0, 0], sizes = [1, 1, 128, 16], strides = [1, 1, 1, 1]} : vector<2x2x128x16xf32> to vector<1x1x128x16xf32>
    %37 = vector.shape_cast %36 : vector<1x1x128x16xf32> to vector<128x16xf32>
    %cst_17 = arith.constant dense<0.000000e+00> : vector<64x16xf32>
    %38 = tpu.matmul %35, %37, %cst_17 {dimension_numbers = #tpu.dot_dimension_numbers<[1], [0], [0], [1], [0, 0, 1, 1], [], []>} : vector<64x128xf32>, vector<128x16xf32>, vector<64x16xf32> -> vector<64x16xf32>
    %39 = vector.broadcast %28 : vector<1x16xf32> to vector<64x16xf32>
    %40 = arith.addf %38, %39 : vector<64x16xf32>
    %41 = vector.shape_cast %40 : vector<64x16xf32> to vector<8x8x16xf32>
    %42 = vector.extract_strided_slice %26 {offsets = [0, 1, 0], sizes = [9, 9, 32], strides = [1, 1, 1]} : vector<10x10x32xf32> to vector<9x9x32xf32>
    %43 = vector.extract_strided_slice %42 {offsets = [0, 0, 0], sizes = [8, 8, 32], strides = [1, 1, 1]} : vector<9x9x32xf32> to vector<8x8x32xf32>
    %44 = vector.extract_strided_slice %42 {offsets = [0, 1, 0], sizes = [8, 8, 32], strides = [1, 1, 1]} : vector<9x9x32xf32> to vector<8x8x32xf32>
    %45 = vector.extract_strided_slice %42 {offsets = [1, 0, 0], sizes = [8, 8, 32], strides = [1, 1, 1]} : vector<9x9x32xf32> to vector<8x8x32xf32>
    %46 = vector.extract_strided_slice %42 {offsets = [1, 1, 0], sizes = [8, 8, 32], strides = [1, 1, 1]} : vector<9x9x32xf32> to vector<8x8x32xf32>
    %47 = tpu.concatenate %43, %44, %45, %46 in 2 : vector<8x8x32xf32>, vector<8x8x32xf32>, vector<8x8x32xf32>, vector<8x8x32xf32> -> vector<8x8x128xf32>
    %48 = vector.shape_cast %47 : vector<8x8x128xf32> to vector<64x128xf32>
    %49 = vector.extract_strided_slice %27 {offsets = [0, 1, 0, 0], sizes = [1, 1, 128, 16], strides = [1, 1, 1, 1]} : vector<2x2x128x16xf32> to vector<1x1x128x16xf32>
    %50 = vector.shape_cast %49 : vector<1x1x128x16xf32> to vector<128x16xf32>
    %cst_18 = arith.constant dense<0.000000e+00> : vector<64x16xf32>
    %51 = tpu.matmul %48, %50, %cst_18 {dimension_numbers = #tpu.dot_dimension_numbers<[1], [0], [0], [1], [0, 0, 1, 1], [], []>} : vector<64x128xf32>, vector<128x16xf32>, vector<64x16xf32> -> vector<64x16xf32>
    %52 = vector.broadcast %28 : vector<1x16xf32> to vector<64x16xf32>
    %53 = arith.addf %51, %52 : vector<64x16xf32>
    %54 = vector.shape_cast %53 : vector<64x16xf32> to vector<8x8x16xf32>
    %55 = vector.extract_strided_slice %26 {offsets = [1, 0, 0], sizes = [9, 9, 32], strides = [1, 1, 1]} : vector<10x10x32xf32> to vector<9x9x32xf32>
    %56 = vector.extract_strided_slice %55 {offsets = [0, 0, 0], sizes = [8, 8, 32], strides = [1, 1, 1]} : vector<9x9x32xf32> to vector<8x8x32xf32>
    %57 = vector.extract_strided_slice %55 {offsets = [0, 1, 0], sizes = [8, 8, 32], strides = [1, 1, 1]} : vector<9x9x32xf32> to vector<8x8x32xf32>
    %58 = vector.extract_strided_slice %55 {offsets = [1, 0, 0], sizes = [8, 8, 32], strides = [1, 1, 1]} : vector<9x9x32xf32> to vector<8x8x32xf32>
    %59 = vector.extract_strided_slice %55 {offsets = [1, 1, 0], sizes = [8, 8, 32], strides = [1, 1, 1]} : vector<9x9x32xf32> to vector<8x8x32xf32>
    %60 = tpu.concatenate %56, %57, %58, %59 in 2 : vector<8x8x32xf32>, vector<8x8x32xf32>, vector<8x8x32xf32>, vector<8x8x32xf32> -> vector<8x8x128xf32>
    %61 = vector.shape_cast %60 : vector<8x8x128xf32> to vector<64x128xf32>
    %62 = vector.extract_strided_slice %27 {offsets = [1, 0, 0, 0], sizes = [1, 1, 128, 16], strides = [1, 1, 1, 1]} : vector<2x2x128x16xf32> to vector<1x1x128x16xf32>
    %63 = vector.shape_cast %62 : vector<1x1x128x16xf32> to vector<128x16xf32>
    %cst_19 = arith.constant dense<0.000000e+00> : vector<64x16xf32>
    %64 = tpu.matmul %61, %63, %cst_19 {dimension_numbers = #tpu.dot_dimension_numbers<[1], [0], [0], [1], [0, 0, 1, 1], [], []>} : vector<64x128xf32>, vector<128x16xf32>, vector<64x16xf32> -> vector<64x16xf32>
    %65 = vector.broadcast %28 : vector<1x16xf32> to vector<64x16xf32>
    %66 = arith.addf %64, %65 : vector<64x16xf32>
    %67 = vector.shape_cast %66 : vector<64x16xf32> to vector<8x8x16xf32>
    %68 = vector.extract_strided_slice %26 {offsets = [1, 1, 0], sizes = [9, 9, 32], strides = [1, 1, 1]} : vector<10x10x32xf32> to vector<9x9x32xf32>
    %69 = vector.extract_strided_slice %68 {offsets = [0, 0, 0], sizes = [8, 8, 32], strides = [1, 1, 1]} : vector<9x9x32xf32> to vector<8x8x32xf32>
    %70 = vector.extract_strided_slice %68 {offsets = [0, 1, 0], sizes = [8, 8, 32], strides = [1, 1, 1]} : vector<9x9x32xf32> to vector<8x8x32xf32>
    %71 = vector.extract_strided_slice %68 {offsets = [1, 0, 0], sizes = [8, 8, 32], strides = [1, 1, 1]} : vector<9x9x32xf32> to vector<8x8x32xf32>
    %72 = vector.extract_strided_slice %68 {offsets = [1, 1, 0], sizes = [8, 8, 32], strides = [1, 1, 1]} : vector<9x9x32xf32> to vector<8x8x32xf32>
    %73 = tpu.concatenate %69, %70, %71, %72 in 2 : vector<8x8x32xf32>, vector<8x8x32xf32>, vector<8x8x32xf32>, vector<8x8x32xf32> -> vector<8x8x128xf32>
    %74 = vector.shape_cast %73 : vector<8x8x128xf32> to vector<64x128xf32>
    %75 = vector.extract_strided_slice %27 {offsets = [1, 1, 0, 0], sizes = [1, 1, 128, 16], strides = [1, 1, 1, 1]} : vector<2x2x128x16xf32> to vector<1x1x128x16xf32>
    %76 = vector.shape_cast %75 : vector<1x1x128x16xf32> to vector<128x16xf32>
    %cst_20 = arith.constant dense<0.000000e+00> : vector<64x16xf32>
    %77 = tpu.matmul %74, %76, %cst_20 {dimension_numbers = #tpu.dot_dimension_numbers<[1], [0], [0], [1], [0, 0, 1, 1], [], []>} : vector<64x128xf32>, vector<128x16xf32>, vector<64x16xf32> -> vector<64x16xf32>
    %78 = vector.broadcast %28 : vector<1x16xf32> to vector<64x16xf32>
    %79 = arith.addf %77, %78 : vector<64x16xf32>
    %80 = vector.shape_cast %79 : vector<64x16xf32> to vector<8x8x16xf32>
    %81 = vector.shape_cast %41 : vector<8x8x16xf32> to vector<8x8x1x16xf32>
    %82 = vector.shape_cast %81 : vector<8x8x1x16xf32> to vector<8x8x1x16xf32>
    %83 = vector.broadcast %82 : vector<8x8x1x16xf32> to vector<8x8x2x16xf32>
    %84 = vector.shape_cast %83 : vector<8x8x2x16xf32> to vector<8x16x16xf32>
    %85 = vector.shape_cast %54 : vector<8x8x16xf32> to vector<8x8x1x16xf32>
    %86 = vector.shape_cast %85 : vector<8x8x1x16xf32> to vector<8x8x1x16xf32>
    %87 = vector.broadcast %86 : vector<8x8x1x16xf32> to vector<8x8x2x16xf32>
    %88 = vector.shape_cast %87 : vector<8x8x2x16xf32> to vector<8x16x16xf32>
    %89 = tpu.iota {dimensions = array<i32: 1>} : vector<8x16x16xi32>
    %c2_i32 = arith.constant 2 : i32
    %c0_i32 = arith.constant 0 : i32
    %90 = arith.cmpi eq, %c2_i32, %c0_i32 : i32
    %c1_i32 = arith.constant 1 : i32
    %91 = arith.select %90, %c1_i32, %c2_i32 : i32
    %92 = vector.broadcast %91 : i32 to vector<8x16x16xi32>
    %93 = arith.remsi %89, %92 : vector<8x16x16xi32>
    %c0_i32_21 = arith.constant 0 : i32
    %94 = vector.broadcast %c0_i32_21 : i32 to vector<8x16x16xi32>
    %95 = arith.cmpi ne, %93, %94 : vector<8x16x16xi32>
    %c0_i32_22 = arith.constant 0 : i32
    %96 = vector.broadcast %c0_i32_22 : i32 to vector<8x16x16xi32>
    %97 = arith.cmpi slt, %93, %96 : vector<8x16x16xi32>
    %c0_i32_23 = arith.constant 0 : i32
    %98 = arith.cmpi slt, %91, %c0_i32_23 : i32
    %99 = vector.broadcast %98 : i1 to vector<8x16x16xi1>
    %100 = vector.broadcast %99 : vector<8x16x16xi1> to vector<8x16x16xi1>
    %101 = arith.xori %97, %100 : vector<8x16x16xi1>
    %102 = arith.andi %101, %95 : vector<8x16x16xi1>
    %103 = vector.broadcast %91 : i32 to vector<8x16x16xi32>
    %104 = arith.addi %93, %103 : vector<8x16x16xi32>
    %105 = arith.select %102, %104, %93 : vector<8x16x16xi1>, vector<8x16x16xi32>
    %c0_i32_24 = arith.constant 0 : i32
    %106 = vector.broadcast %c0_i32_24 : i32 to vector<8x16x16xi32>
    %107 = arith.cmpi eq, %105, %106 : vector<8x16x16xi32>
    %108 = arith.select %107, %84, %88 : vector<8x16x16xi1>, vector<8x16x16xf32>
    %109 = vector.shape_cast %67 : vector<8x8x16xf32> to vector<8x8x1x16xf32>
    %110 = vector.shape_cast %109 : vector<8x8x1x16xf32> to vector<8x8x1x16xf32>
    %111 = vector.broadcast %110 : vector<8x8x1x16xf32> to vector<8x8x2x16xf32>
    %112 = vector.shape_cast %111 : vector<8x8x2x16xf32> to vector<8x16x16xf32>
    %113 = vector.shape_cast %80 : vector<8x8x16xf32> to vector<8x8x1x16xf32>
    %114 = vector.shape_cast %113 : vector<8x8x1x16xf32> to vector<8x8x1x16xf32>
    %115 = vector.broadcast %114 : vector<8x8x1x16xf32> to vector<8x8x2x16xf32>
    %116 = vector.shape_cast %115 : vector<8x8x2x16xf32> to vector<8x16x16xf32>
    %117 = tpu.iota {dimensions = array<i32: 1>} : vector<8x16x16xi32>
    %c2_i32_25 = arith.constant 2 : i32
    %c0_i32_26 = arith.constant 0 : i32
    %118 = arith.cmpi eq, %c2_i32_25, %c0_i32_26 : i32
    %c1_i32_27 = arith.constant 1 : i32
    %119 = arith.select %118, %c1_i32_27, %c2_i32_25 : i32
    %120 = vector.broadcast %119 : i32 to vector<8x16x16xi32>
    %121 = arith.remsi %117, %120 : vector<8x16x16xi32>
    %c0_i32_28 = arith.constant 0 : i32
    %122 = vector.broadcast %c0_i32_28 : i32 to vector<8x16x16xi32>
    %123 = arith.cmpi ne, %121, %122 : vector<8x16x16xi32>
    %c0_i32_29 = arith.constant 0 : i32
    %124 = vector.broadcast %c0_i32_29 : i32 to vector<8x16x16xi32>
    %125 = arith.cmpi slt, %121, %124 : vector<8x16x16xi32>
    %c0_i32_30 = arith.constant 0 : i32
    %126 = arith.cmpi slt, %119, %c0_i32_30 : i32
    %127 = vector.broadcast %126 : i1 to vector<8x16x16xi1>
    %128 = vector.broadcast %127 : vector<8x16x16xi1> to vector<8x16x16xi1>
    %129 = arith.xori %125, %128 : vector<8x16x16xi1>
    %130 = arith.andi %129, %123 : vector<8x16x16xi1>
    %131 = vector.broadcast %119 : i32 to vector<8x16x16xi32>
    %132 = arith.addi %121, %131 : vector<8x16x16xi32>
    %133 = arith.select %130, %132, %121 : vector<8x16x16xi1>, vector<8x16x16xi32>
    %c0_i32_31 = arith.constant 0 : i32
    %134 = vector.broadcast %c0_i32_31 : i32 to vector<8x16x16xi32>
    %135 = arith.cmpi eq, %133, %134 : vector<8x16x16xi32>
    %136 = arith.select %135, %112, %116 : vector<8x16x16xi1>, vector<8x16x16xf32>
    %137 = vector.shape_cast %108 : vector<8x16x16xf32> to vector<8x1x16x16xf32>
    %138 = vector.shape_cast %137 : vector<8x1x16x16xf32> to vector<8x1x16x16xf32>
    %139 = vector.broadcast %138 : vector<8x1x16x16xf32> to vector<8x2x16x16xf32>
    %140 = vector.shape_cast %139 : vector<8x2x16x16xf32> to vector<16x16x16xf32>
    %141 = vector.shape_cast %136 : vector<8x16x16xf32> to vector<8x1x16x16xf32>
    %142 = vector.shape_cast %141 : vector<8x1x16x16xf32> to vector<8x1x16x16xf32>
    %143 = vector.broadcast %142 : vector<8x1x16x16xf32> to vector<8x2x16x16xf32>
    %144 = vector.shape_cast %143 : vector<8x2x16x16xf32> to vector<16x16x16xf32>
    %145 = tpu.iota {dimensions = array<i32: 0>} : vector<16x16x16xi32>
    %c2_i32_32 = arith.constant 2 : i32
    %c0_i32_33 = arith.constant 0 : i32
    %146 = arith.cmpi eq, %c2_i32_32, %c0_i32_33 : i32
    %c1_i32_34 = arith.constant 1 : i32
    %147 = arith.select %146, %c1_i32_34, %c2_i32_32 : i32
    %148 = vector.broadcast %147 : i32 to vector<16x16x16xi32>
    %149 = arith.remsi %145, %148 : vector<16x16x16xi32>
    %c0_i32_35 = arith.constant 0 : i32
    %150 = vector.broadcast %c0_i32_35 : i32 to vector<16x16x16xi32>
    %151 = arith.cmpi ne, %149, %150 : vector<16x16x16xi32>
    %c0_i32_36 = arith.constant 0 : i32
    %152 = vector.broadcast %c0_i32_36 : i32 to vector<16x16x16xi32>
    %153 = arith.cmpi slt, %149, %152 : vector<16x16x16xi32>
    %c0_i32_37 = arith.constant 0 : i32
    %154 = arith.cmpi slt, %147, %c0_i32_37 : i32
    %155 = vector.broadcast %154 : i1 to vector<16x16x16xi1>
    %156 = vector.broadcast %155 : vector<16x16x16xi1> to vector<16x16x16xi1>
    %157 = arith.xori %153, %156 : vector<16x16x16xi1>
    %158 = arith.andi %157, %151 : vector<16x16x16xi1>
    %159 = vector.broadcast %147 : i32 to vector<16x16x16xi32>
    %160 = arith.addi %149, %159 : vector<16x16x16xi32>
    %161 = arith.select %158, %160, %149 : vector<16x16x16xi1>, vector<16x16x16xi32>
    %c0_i32_38 = arith.constant 0 : i32
    %162 = vector.broadcast %c0_i32_38 : i32 to vector<16x16x16xi32>
    %163 = arith.cmpi eq, %161, %162 : vector<16x16x16xi32>
    %164 = arith.select %163, %140, %144 : vector<16x16x16xi1>, vector<16x16x16xf32>
    %c0_39 = arith.constant 0 : index
    %c0_40 = arith.constant 0 : index
    %c0_41 = arith.constant 0 : index
    %165 = vector.load %arg6[%c0_39, %c0_40, %c0_41] : memref<2x144x8xf32, #tpu.memory_space<vmem>>, vector<2x144x8xf32>
    %c0_42 = arith.constant 0 : index
    %c0_43 = arith.constant 0 : index
    %c0_44 = arith.constant 0 : index
    %166 = vector.load %arg7[%c0_42, %c0_43, %c0_44] : memref<2x1x8xf32, #tpu.memory_space<vmem>>, vector<2x1x8xf32>
    %c0_45 = arith.constant 0 : index
    %c0_46 = arith.constant 0 : index
    %c0_47 = arith.constant 0 : index
    %167 = vector.load %arg8[%c0_45, %c0_46, %c0_47] : memref<2x8x16xf32, #tpu.memory_space<vmem>>, vector<2x8x16xf32>
    %c0_48 = arith.constant 0 : index
    %c0_49 = arith.constant 0 : index
    %c0_50 = arith.constant 0 : index
    %168 = vector.load %arg9[%c0_48, %c0_49, %c0_50] : memref<2x1x16xf32, #tpu.memory_space<vmem>>, vector<2x1x16xf32>
    %cst_51 = arith.constant 0.000000e+00 : f32
    %169 = vector.broadcast %cst_51 : f32 to vector<16x16x16xf32>
    %170 = arith.maximumf %164, %169 : vector<16x16x16xf32>
    %cst_52 = arith.constant 0.000000e+00 : f32
    %171 = vector.broadcast %cst_52 : f32 to vector<1x16x16xf32>
    %172 = tpu.concatenate %171, %170, %171 in 0 : vector<1x16x16xf32>, vector<16x16x16xf32>, vector<1x16x16xf32> -> vector<18x16x16xf32>
    %cst_53 = arith.constant 0.000000e+00 : f32
    %173 = vector.broadcast %cst_53 : f32 to vector<18x1x16xf32>
    %174 = tpu.concatenate %173, %172, %173 in 1 : vector<18x1x16xf32>, vector<18x16x16xf32>, vector<18x1x16xf32> -> vector<18x18x16xf32>
    %175 = vector.extract_strided_slice %174 {offsets = [0, 0, 0], sizes = [16, 16, 16], strides = [1, 1, 1]} : vector<18x18x16xf32> to vector<16x16x16xf32>
    %176 = vector.extract_strided_slice %174 {offsets = [0, 1, 0], sizes = [16, 16, 16], strides = [1, 1, 1]} : vector<18x18x16xf32> to vector<16x16x16xf32>
    %177 = vector.extract_strided_slice %174 {offsets = [0, 2, 0], sizes = [16, 16, 16], strides = [1, 1, 1]} : vector<18x18x16xf32> to vector<16x16x16xf32>
    %178 = vector.extract_strided_slice %174 {offsets = [1, 0, 0], sizes = [16, 16, 16], strides = [1, 1, 1]} : vector<18x18x16xf32> to vector<16x16x16xf32>
    %179 = vector.extract_strided_slice %174 {offsets = [1, 1, 0], sizes = [16, 16, 16], strides = [1, 1, 1]} : vector<18x18x16xf32> to vector<16x16x16xf32>
    %180 = vector.extract_strided_slice %174 {offsets = [1, 2, 0], sizes = [16, 16, 16], strides = [1, 1, 1]} : vector<18x18x16xf32> to vector<16x16x16xf32>
    %181 = vector.extract_strided_slice %174 {offsets = [2, 0, 0], sizes = [16, 16, 16], strides = [1, 1, 1]} : vector<18x18x16xf32> to vector<16x16x16xf32>
    %182 = vector.extract_strided_slice %174 {offsets = [2, 1, 0], sizes = [16, 16, 16], strides = [1, 1, 1]} : vector<18x18x16xf32> to vector<16x16x16xf32>
    %183 = vector.extract_strided_slice %174 {offsets = [2, 2, 0], sizes = [16, 16, 16], strides = [1, 1, 1]} : vector<18x18x16xf32> to vector<16x16x16xf32>
    %184 = tpu.concatenate %175, %176, %177, %178, %179, %180, %181, %182, %183 in 2 : vector<16x16x16xf32>, vector<16x16x16xf32>, vector<16x16x16xf32>, vector<16x16x16xf32>, vector<16x16x16xf32>, vector<16x16x16xf32>, vector<16x16x16xf32>, vector<16x16x16xf32>, vector<16x16x16xf32> -> vector<16x16x144xf32>
    %185 = vector.shape_cast %184 : vector<16x16x144xf32> to vector<256x144xf32>
    %186 = vector.extract_strided_slice %165 {offsets = [0, 0, 0], sizes = [1, 144, 8], strides = [1, 1, 1]} : vector<2x144x8xf32> to vector<1x144x8xf32>
    %187 = vector.shape_cast %186 : vector<1x144x8xf32> to vector<144x8xf32>
    %cst_54 = arith.constant dense<0.000000e+00> : vector<256x8xf32>
    %188 = tpu.matmul %185, %187, %cst_54 {dimension_numbers = #tpu.dot_dimension_numbers<[1], [0], [0], [1], [0, 0, 1, 1], [], []>} : vector<256x144xf32>, vector<144x8xf32>, vector<256x8xf32> -> vector<256x8xf32>
    %189 = vector.extract_strided_slice %166 {offsets = [0, 0, 0], sizes = [1, 1, 8], strides = [1, 1, 1]} : vector<2x1x8xf32> to vector<1x1x8xf32>
    %190 = vector.shape_cast %189 : vector<1x1x8xf32> to vector<1x8xf32>
    %191 = vector.broadcast %190 : vector<1x8xf32> to vector<256x8xf32>
    %192 = arith.addf %188, %191 : vector<256x8xf32>
    %cst_55 = arith.constant 0.000000e+00 : f32
    %193 = vector.broadcast %cst_55 : f32 to vector<256x8xf32>
    %194 = arith.maximumf %192, %193 : vector<256x8xf32>
    %195 = vector.extract_strided_slice %167 {offsets = [0, 0, 0], sizes = [1, 8, 16], strides = [1, 1, 1]} : vector<2x8x16xf32> to vector<1x8x16xf32>
    %196 = vector.shape_cast %195 : vector<1x8x16xf32> to vector<8x16xf32>
    %cst_56 = arith.constant dense<0.000000e+00> : vector<256x16xf32>
    %197 = tpu.matmul %194, %196, %cst_56 {dimension_numbers = #tpu.dot_dimension_numbers<[1], [0], [0], [1], [0, 0, 1, 1], [], []>} : vector<256x8xf32>, vector<8x16xf32>, vector<256x16xf32> -> vector<256x16xf32>
    %198 = vector.extract_strided_slice %168 {offsets = [0, 0, 0], sizes = [1, 1, 16], strides = [1, 1, 1]} : vector<2x1x16xf32> to vector<1x1x16xf32>
    %199 = vector.shape_cast %198 : vector<1x1x16xf32> to vector<1x16xf32>
    %200 = vector.broadcast %199 : vector<1x16xf32> to vector<256x16xf32>
    %201 = arith.addf %197, %200 : vector<256x16xf32>
    %202 = vector.shape_cast %201 : vector<256x16xf32> to vector<16x16x16xf32>
    %203 = arith.addf %164, %202 : vector<16x16x16xf32>
    %cst_57 = arith.constant 0.000000e+00 : f32
    %204 = vector.broadcast %cst_57 : f32 to vector<16x16x16xf32>
    %205 = arith.maximumf %203, %204 : vector<16x16x16xf32>
    %cst_58 = arith.constant 0.000000e+00 : f32
    %206 = vector.broadcast %cst_58 : f32 to vector<1x16x16xf32>
    %207 = tpu.concatenate %206, %205, %206 in 0 : vector<1x16x16xf32>, vector<16x16x16xf32>, vector<1x16x16xf32> -> vector<18x16x16xf32>
    %cst_59 = arith.constant 0.000000e+00 : f32
    %208 = vector.broadcast %cst_59 : f32 to vector<18x1x16xf32>
    %209 = tpu.concatenate %208, %207, %208 in 1 : vector<18x1x16xf32>, vector<18x16x16xf32>, vector<18x1x16xf32> -> vector<18x18x16xf32>
    %210 = vector.extract_strided_slice %209 {offsets = [0, 0, 0], sizes = [16, 16, 16], strides = [1, 1, 1]} : vector<18x18x16xf32> to vector<16x16x16xf32>
    %211 = vector.extract_strided_slice %209 {offsets = [0, 1, 0], sizes = [16, 16, 16], strides = [1, 1, 1]} : vector<18x18x16xf32> to vector<16x16x16xf32>
    %212 = vector.extract_strided_slice %209 {offsets = [0, 2, 0], sizes = [16, 16, 16], strides = [1, 1, 1]} : vector<18x18x16xf32> to vector<16x16x16xf32>
    %213 = vector.extract_strided_slice %209 {offsets = [1, 0, 0], sizes = [16, 16, 16], strides = [1, 1, 1]} : vector<18x18x16xf32> to vector<16x16x16xf32>
    %214 = vector.extract_strided_slice %209 {offsets = [1, 1, 0], sizes = [16, 16, 16], strides = [1, 1, 1]} : vector<18x18x16xf32> to vector<16x16x16xf32>
    %215 = vector.extract_strided_slice %209 {offsets = [1, 2, 0], sizes = [16, 16, 16], strides = [1, 1, 1]} : vector<18x18x16xf32> to vector<16x16x16xf32>
    %216 = vector.extract_strided_slice %209 {offsets = [2, 0, 0], sizes = [16, 16, 16], strides = [1, 1, 1]} : vector<18x18x16xf32> to vector<16x16x16xf32>
    %217 = vector.extract_strided_slice %209 {offsets = [2, 1, 0], sizes = [16, 16, 16], strides = [1, 1, 1]} : vector<18x18x16xf32> to vector<16x16x16xf32>
    %218 = vector.extract_strided_slice %209 {offsets = [2, 2, 0], sizes = [16, 16, 16], strides = [1, 1, 1]} : vector<18x18x16xf32> to vector<16x16x16xf32>
    %219 = tpu.concatenate %210, %211, %212, %213, %214, %215, %216, %217, %218 in 2 : vector<16x16x16xf32>, vector<16x16x16xf32>, vector<16x16x16xf32>, vector<16x16x16xf32>, vector<16x16x16xf32>, vector<16x16x16xf32>, vector<16x16x16xf32>, vector<16x16x16xf32>, vector<16x16x16xf32> -> vector<16x16x144xf32>
    %220 = vector.shape_cast %219 : vector<16x16x144xf32> to vector<256x144xf32>
    %221 = vector.extract_strided_slice %165 {offsets = [1, 0, 0], sizes = [1, 144, 8], strides = [1, 1, 1]} : vector<2x144x8xf32> to vector<1x144x8xf32>
    %222 = vector.shape_cast %221 : vector<1x144x8xf32> to vector<144x8xf32>
    %cst_60 = arith.constant dense<0.000000e+00> : vector<256x8xf32>
    %223 = tpu.matmul %220, %222, %cst_60 {dimension_numbers = #tpu.dot_dimension_numbers<[1], [0], [0], [1], [0, 0, 1, 1], [], []>} : vector<256x144xf32>, vector<144x8xf32>, vector<256x8xf32> -> vector<256x8xf32>
    %224 = vector.extract_strided_slice %166 {offsets = [1, 0, 0], sizes = [1, 1, 8], strides = [1, 1, 1]} : vector<2x1x8xf32> to vector<1x1x8xf32>
    %225 = vector.shape_cast %224 : vector<1x1x8xf32> to vector<1x8xf32>
    %226 = vector.broadcast %225 : vector<1x8xf32> to vector<256x8xf32>
    %227 = arith.addf %223, %226 : vector<256x8xf32>
    %cst_61 = arith.constant 0.000000e+00 : f32
    %228 = vector.broadcast %cst_61 : f32 to vector<256x8xf32>
    %229 = arith.maximumf %227, %228 : vector<256x8xf32>
    %230 = vector.extract_strided_slice %167 {offsets = [1, 0, 0], sizes = [1, 8, 16], strides = [1, 1, 1]} : vector<2x8x16xf32> to vector<1x8x16xf32>
    %231 = vector.shape_cast %230 : vector<1x8x16xf32> to vector<8x16xf32>
    %cst_62 = arith.constant dense<0.000000e+00> : vector<256x16xf32>
    %232 = tpu.matmul %229, %231, %cst_62 {dimension_numbers = #tpu.dot_dimension_numbers<[1], [0], [0], [1], [0, 0, 1, 1], [], []>} : vector<256x8xf32>, vector<8x16xf32>, vector<256x16xf32> -> vector<256x16xf32>
    %233 = vector.extract_strided_slice %168 {offsets = [1, 0, 0], sizes = [1, 1, 16], strides = [1, 1, 1]} : vector<2x1x16xf32> to vector<1x1x16xf32>
    %234 = vector.shape_cast %233 : vector<1x1x16xf32> to vector<1x16xf32>
    %235 = vector.broadcast %234 : vector<1x16xf32> to vector<256x16xf32>
    %236 = arith.addf %232, %235 : vector<256x16xf32>
    %237 = vector.shape_cast %236 : vector<256x16xf32> to vector<16x16x16xf32>
    %238 = arith.addf %203, %237 : vector<16x16x16xf32>
    %cst_63 = arith.constant 0.000000e+00 : f32
    %239 = vector.broadcast %cst_63 : f32 to vector<16x16x16xf32>
    %240 = arith.maximumf %238, %239 : vector<16x16x16xf32>
    %cst_64 = arith.constant 0.000000e+00 : f32
    %241 = vector.broadcast %cst_64 : f32 to vector<1x16x16xf32>
    %242 = tpu.concatenate %241, %240, %241 in 0 : vector<1x16x16xf32>, vector<16x16x16xf32>, vector<1x16x16xf32> -> vector<18x16x16xf32>
    %cst_65 = arith.constant 0.000000e+00 : f32
    %243 = vector.broadcast %cst_65 : f32 to vector<18x1x16xf32>
    %244 = tpu.concatenate %243, %242, %243 in 1 : vector<18x1x16xf32>, vector<18x16x16xf32>, vector<18x1x16xf32> -> vector<18x18x16xf32>
    %245 = vector.extract_strided_slice %244 {offsets = [0, 0, 0], sizes = [16, 16, 16], strides = [1, 1, 1]} : vector<18x18x16xf32> to vector<16x16x16xf32>
    %246 = vector.extract_strided_slice %244 {offsets = [0, 1, 0], sizes = [16, 16, 16], strides = [1, 1, 1]} : vector<18x18x16xf32> to vector<16x16x16xf32>
    %247 = vector.extract_strided_slice %244 {offsets = [0, 2, 0], sizes = [16, 16, 16], strides = [1, 1, 1]} : vector<18x18x16xf32> to vector<16x16x16xf32>
    %248 = vector.extract_strided_slice %244 {offsets = [1, 0, 0], sizes = [16, 16, 16], strides = [1, 1, 1]} : vector<18x18x16xf32> to vector<16x16x16xf32>
    %249 = vector.extract_strided_slice %244 {offsets = [1, 1, 0], sizes = [16, 16, 16], strides = [1, 1, 1]} : vector<18x18x16xf32> to vector<16x16x16xf32>
    %250 = vector.extract_strided_slice %244 {offsets = [1, 2, 0], sizes = [16, 16, 16], strides = [1, 1, 1]} : vector<18x18x16xf32> to vector<16x16x16xf32>
    %251 = vector.extract_strided_slice %244 {offsets = [2, 0, 0], sizes = [16, 16, 16], strides = [1, 1, 1]} : vector<18x18x16xf32> to vector<16x16x16xf32>
    %252 = vector.extract_strided_slice %244 {offsets = [2, 1, 0], sizes = [16, 16, 16], strides = [1, 1, 1]} : vector<18x18x16xf32> to vector<16x16x16xf32>
    %253 = vector.extract_strided_slice %244 {offsets = [2, 2, 0], sizes = [16, 16, 16], strides = [1, 1, 1]} : vector<18x18x16xf32> to vector<16x16x16xf32>
    %254 = tpu.concatenate %245, %246, %247, %248, %249, %250, %251, %252, %253 in 2 : vector<16x16x16xf32>, vector<16x16x16xf32>, vector<16x16x16xf32>, vector<16x16x16xf32>, vector<16x16x16xf32>, vector<16x16x16xf32>, vector<16x16x16xf32>, vector<16x16x16xf32>, vector<16x16x16xf32> -> vector<16x16x144xf32>
    %255 = vector.shape_cast %254 : vector<16x16x144xf32> to vector<256x144xf32>
    %c0_66 = arith.constant 0 : index
    %c0_67 = arith.constant 0 : index
    %256 = vector.load %arg10[%c0_66, %c0_67] : memref<144x3xf32, #tpu.memory_space<vmem>>, vector<144x3xf32>
    %cst_68 = arith.constant dense<0.000000e+00> : vector<256x3xf32>
    %257 = tpu.matmul %255, %256, %cst_68 {dimension_numbers = #tpu.dot_dimension_numbers<[1], [0], [0], [1], [0, 0, 1, 1], [], []>} : vector<256x144xf32>, vector<144x3xf32>, vector<256x3xf32> -> vector<256x3xf32>
    %c0_69 = arith.constant 0 : index
    %c0_70 = arith.constant 0 : index
    %258 = vector.load %arg11[%c0_69, %c0_70] : memref<1x3xf32, #tpu.memory_space<vmem>>, vector<1x3xf32>
    %259 = vector.broadcast %258 : vector<1x3xf32> to vector<256x3xf32>
    %260 = arith.addf %257, %259 : vector<256x3xf32>
    %261 = arith.negf %260 : vector<256x3xf32>
    %262 = math.exp %261 : vector<256x3xf32>
    %cst_71 = arith.constant 1.000000e+00 : f32
    %263 = vector.broadcast %cst_71 : f32 to vector<256x3xf32>
    %264 = arith.addf %263, %262 : vector<256x3xf32>
    %265 = arith.divf %263, %264 : vector<256x3xf32>
    %cst_72 = arith.constant 5.000000e-01 : f32
    %266 = vector.broadcast %cst_72 : f32 to vector<256x3xf32>
    %267 = arith.subf %265, %266 : vector<256x3xf32>
    %268 = vector.shape_cast %267 : vector<256x3xf32> to vector<1x16x16x3xf32>
    %c0_73 = arith.constant 0 : index
    %c0_74 = arith.constant 0 : index
    %c0_75 = arith.constant 0 : index
    %c0_76 = arith.constant 0 : index
    %269 = vector.load %arg12[%c0_73, %c0_74, %c0_75, %c0_76] : memref<1x16x16x3xf32, #tpu.memory_space<vmem>>, vector<1x16x16x3xf32>
    tpu.vector_store %arg12[%c0_73, %c0_74, %c0_75, %c0_76], %268 {strides = array<i32>} : memref<1x16x16x3xf32, #tpu.memory_space<vmem>>, vector<1x16x16x3xf32>,
    return
  }
  func.func @transform_0(%arg0: i32) -> (i32, i32, i32, i32) {
    %c0_i32 = arith.constant 0 : i32
    %c0_i32_0 = arith.constant 0 : i32
    %c0_i32_1 = arith.constant 0 : i32
    %c0_i32_2 = arith.constant 0 : i32
    return %arg0, %c0_i32, %c0_i32_0, %c0_i32_1 : i32, i32, i32, i32
  }
  func.func @transform_1(%arg0: i32) -> (i32, i32) {
    %c0_i32 = arith.constant 0 : i32
    %c0_i32_0 = arith.constant 0 : i32
    %c0_i32_1 = arith.constant 0 : i32
    return %c0_i32, %c0_i32_0 : i32, i32
  }
  func.func @transform_2(%arg0: i32) -> (i32, i32) {
    %c0_i32 = arith.constant 0 : i32
    %c0_i32_0 = arith.constant 0 : i32
    %c0_i32_1 = arith.constant 0 : i32
    return %c0_i32, %c0_i32_0 : i32, i32
  }
  func.func @transform_3(%arg0: i32) -> (i32, i32, i32, i32) {
    %c0_i32 = arith.constant 0 : i32
    %c0_i32_0 = arith.constant 0 : i32
    %c0_i32_1 = arith.constant 0 : i32
    %c0_i32_2 = arith.constant 0 : i32
    %c0_i32_3 = arith.constant 0 : i32
    return %c0_i32, %c0_i32_0, %c0_i32_1, %c0_i32_2 : i32, i32, i32, i32
  }
  func.func @transform_4(%arg0: i32) -> (i32, i32) {
    %c0_i32 = arith.constant 0 : i32
    %c0_i32_0 = arith.constant 0 : i32
    %c0_i32_1 = arith.constant 0 : i32
    return %c0_i32, %c0_i32_0 : i32, i32
  }
  func.func @transform_5(%arg0: i32) -> (i32, i32, i32) {
    %c0_i32 = arith.constant 0 : i32
    %c0_i32_0 = arith.constant 0 : i32
    %c0_i32_1 = arith.constant 0 : i32
    %c0_i32_2 = arith.constant 0 : i32
    return %c0_i32, %c0_i32_0, %c0_i32_1 : i32, i32, i32
  }
  func.func @transform_6(%arg0: i32) -> (i32, i32, i32) {
    %c0_i32 = arith.constant 0 : i32
    %c0_i32_0 = arith.constant 0 : i32
    %c0_i32_1 = arith.constant 0 : i32
    %c0_i32_2 = arith.constant 0 : i32
    return %c0_i32, %c0_i32_0, %c0_i32_1 : i32, i32, i32
  }
  func.func @transform_7(%arg0: i32) -> (i32, i32, i32) {
    %c0_i32 = arith.constant 0 : i32
    %c0_i32_0 = arith.constant 0 : i32
    %c0_i32_1 = arith.constant 0 : i32
    %c0_i32_2 = arith.constant 0 : i32
    return %c0_i32, %c0_i32_0, %c0_i32_1 : i32, i32, i32
  }
  func.func @transform_8(%arg0: i32) -> (i32, i32, i32) {
    %c0_i32 = arith.constant 0 : i32
    %c0_i32_0 = arith.constant 0 : i32
    %c0_i32_1 = arith.constant 0 : i32
    %c0_i32_2 = arith.constant 0 : i32
    return %c0_i32, %c0_i32_0, %c0_i32_1 : i32, i32, i32
  }
  func.func @transform_9(%arg0: i32) -> (i32, i32) {
    %c0_i32 = arith.constant 0 : i32
    %c0_i32_0 = arith.constant 0 : i32
    %c0_i32_1 = arith.constant 0 : i32
    return %c0_i32, %c0_i32_0 : i32, i32
  }
  func.func @transform_10(%arg0: i32) -> (i32, i32) {
    %c0_i32 = arith.constant 0 : i32
    %c0_i32_0 = arith.constant 0 : i32
    %c0_i32_1 = arith.constant 0 : i32
    return %c0_i32, %c0_i32_0 : i32, i32
  }
  func.func @transform_11(%arg0: i32) -> (i32, i32, i32, i32) {
    %c0_i32 = arith.constant 0 : i32
    %c0_i32_0 = arith.constant 0 : i32
    %c0_i32_1 = arith.constant 0 : i32
    %c0_i32_2 = arith.constant 0 : i32
    return %arg0, %c0_i32, %c0_i32_0, %c0_i32_1 : i32, i32, i32, i32
  }
}

</mosaic_0001>

<llo_original>
// kernel: decoder_forward.1
$region0: #{decoder_forward.1}
  #allocation0 [shape = 'u32[]', space=smem, size = 0x4, offset = 0x4, fixed_abs, tag = 'smem constant byte address 0x4 - core index']
  #allocation1 [shape = 'u32[72,128]{1,0:T(1,128)}', space=vmem, size = 0x9000, scoped, tag = 'internal scratch']
  %s0 = inlined_call_operand.vmem [shape: f32[2,8,8,8], index: 0, kind: input, shape index: {}]
  %s1 = inlined_call_operand.vmem [shape: f32[72,32], index: 1, kind: input, shape index: {}]
  %s2 = inlined_call_operand.vmem [shape: f32[1,32], index: 2, kind: input, shape index: {}]
  %s3 = inlined_call_operand.vmem [shape: f32[2,2,128,16], index: 3, kind: input, shape index: {}]
  %s4 = inlined_call_operand.vmem [shape: f32[1,16], index: 4, kind: input, shape index: {}]
  %s5 = inlined_call_operand.vmem [shape: f32[2,144,8], index: 5, kind: input, shape index: {}]
  %s6 = inlined_call_operand.vmem [shape: f32[2,1,8], index: 6, kind: input, shape index: {}]
  %s7 = inlined_call_operand.vmem [shape: f32[2,8,16], index: 7, kind: input, shape index: {}]
  %s8 = inlined_call_operand.vmem [shape: f32[2,1,16], index: 8, kind: input, shape index: {}]
  %s9 = inlined_call_operand.vmem [shape: f32[144,3], index: 9, kind: input, shape index: {}]
  %s10 = inlined_call_operand.vmem [shape: f32[1,3], index: 10, kind: input, shape index: {}]
  %s11 = inlined_call_operand.vmem [shape: f32[2,16,16,3], index: 11, kind: output, shape index: {}]
  %s12 = sld [smem:[#allocation0]]
  $region77: #{decoder_forward.1} parent=0
    _
  %s14 = ssub.s32 1, %s12
  %s15 = scalar_select 0, %s14, %s12
  loop: start=0, step=1, limit=4
  $region2: #{decoder_forward.1} parent=0 // loop_pre_header
    _
  $region3: #{decoder_forward.1} parent=0 // loop_header
    %s17 = sphi 0, %s21
    %p18 = scmp.ge.s32.totalorder %s17, 4
    %s27 = sphi 0, %s29
    %s30 = sphi 0, %s27
    %s31 = sphi 0, %s30
    %s47 = sphi 0, %s31
    %s51 = sphi 0, %s51
    %s53 = sphi 0, %s51
    %s54 = sphi 0, %s53
    %s68 = sphi 0, %s54
    %s72 = sphi 0, %s72
    %s74 = sphi 0, %s72
    %s75 = sphi 0, %s74
    %s89 = sphi 0, %s75
    %s93 = sphi 0, %s93
    %s95 = sphi 0, %s93
    %s96 = sphi 0, %s95
    %s110 = sphi 0, %s96
    %s114 = sphi 0, %s114
    %s116 = sphi 0, %s114
    %s117 = sphi 0, %s116
    %s131 = sphi 0, %s117
    %s135 = sphi 0, %s135
    %s137 = sphi 0, %s135
    %s138 = sphi 0, %s137
    %s152 = sphi 0, %s138
    %s156 = sphi 0, %s156
    %s158 = sphi 0, %s156
    %s159 = sphi 0, %s158
    %s173 = sphi 0, %s159
    %s177 = sphi 0, %s177
    %s179 = sphi 0, %s177
    %s180 = sphi 0, %s179
    %s194 = sphi 0, %s180
    %s198 = sphi 0, %s198
    %s200 = sphi 0, %s198
    %s201 = sphi 0, %s200
    %s215 = sphi 0, %s201
    %s219 = sphi 0, %s219
    %s221 = sphi 0, %s219
    %s222 = sphi 0, %s221
    %s236 = sphi 0, %s222
    %s240 = sphi 0, %s240
    %s242 = sphi 0, %s240
    %s243 = sphi 0, %s242
    %s257 = sphi 0, %s243
    %s263 = sphi 0, %s265
    %s266 = sphi 0, %s263
    %s267 = sphi 0, %s266
    %s283 = sphi 0, %s267
  $region4: #{decoder_forward.1} parent=0 // loop_header_branch
    %20 = sbr.rel (%p18) target = $region8
  $region5: #{decoder_forward.1} parent=0 // loop_body
    %s22 = ssub.s32 %s17, 1
    %s23 = ssub.s32 %s17, 2
    %s24 = sadd.s32 %s17, 1
    %s25 = ssub.s32 %s17, %s24
    %p26 = scmp.eq.s32.totalorder %s25, 0
    %s28 = sadd.s32 %s27, 1
    %s29 = scalar_select %p26, %s27, %s28
    %p32 = pneg %p26
    %p33 = scmp.eq.s32.totalorder %s17, 1
    %p34 = por %p32, %p33
    %p35 = scmp.ne.s32.totalorder %s27, %s30
    %p36 = scmp.eq.s32.totalorder %s17, 0
    %p37 = por %p35, %p36
    %p38 = scmp.ne.s32.totalorder %s27, %s30
    %p39 = scmp.eq.s32.totalorder %s22, 1
    %p40 = por %p38, %p39
    %p41 = scmp.ne.s32.totalorder %s30, %s31
    %p42 = scmp.eq.s32.totalorder %s22, 0
    %p43 = por %p41, %p42
    %p44 = scmp.ne.s32.totalorder %s30, %s31
    %p45 = scmp.eq.s32.totalorder %s23, 1
    %p46 = por %p44, %p45
    %p48 = scmp.ne.s32.totalorder %s31, %s47
    %p49 = scmp.eq.s32.totalorder %s23, 0
    %p50 = por %p48, %p49
    %s52 = sadd.s32 %s51, 1
    %p55 = scmp.eq.s32.totalorder %s17, 1
    %p56 = scmp.ne.s32.totalorder %s51, %s53
    %p57 = scmp.eq.s32.totalorder %s17, 0
    %p58 = por %p56, %p57
    %p59 = scmp.ne.s32.totalorder %s51, %s53
    %p60 = scmp.eq.s32.totalorder %s22, 1
    %p61 = por %p59, %p60
    %p62 = scmp.ne.s32.totalorder %s53, %s54
    %p63 = scmp.eq.s32.totalorder %s22, 0
    %p64 = por %p62, %p63
    %p65 = scmp.ne.s32.totalorder %s53, %s54
    %p66 = scmp.eq.s32.totalorder %s23, 1
    %p67 = por %p65, %p66
    %p69 = scmp.ne.s32.totalorder %s54, %s68
    %p70 = scmp.eq.s32.totalorder %s23, 0
    %p71 = por %p69, %p70
    %s73 = sadd.s32 %s72, 1
    %p76 = scmp.eq.s32.totalorder %s17, 1
    %p77 = scmp.ne.s32.totalorder %s72, %s74
    %p78 = scmp.eq.s32.totalorder %s17, 0
    %p79 = por %p77, %p78
    %p80 = scmp.ne.s32.totalorder %s72, %s74
    %p81 = scmp.eq.s32.totalorder %s22, 1
    %p82 = por %p80, %p81
    %p83 = scmp.ne.s32.totalorder %s74, %s75
    %p84 = scmp.eq.s32.totalorder %s22, 0
    %p85 = por %p83, %p84
    %p86 = scmp.ne.s32.totalorder %s74, %s75
    %p87 = scmp.eq.s32.totalorder %s23, 1
    %p88 = por %p86, %p87
    %p90 = scmp.ne.s32.totalorder %s75, %s89
    %p91 = scmp.eq.s32.totalorder %s23, 0
    %p92 = por %p90, %p91
    %s94 = sadd.s32 %s93, 1
    %p97 = scmp.eq.s32.totalorder %s17, 1
    %p98 = scmp.ne.s32.totalorder %s93, %s95
    %p99 = scmp.eq.s32.totalorder %s17, 0
    %p100 = por %p98, %p99
    %p101 = scmp.ne.s32.totalorder %s93, %s95
    %p102 = scmp.eq.s32.totalorder %s22, 1
    %p103 = por %p101, %p102
    %p104 = scmp.ne.s32.totalorder %s95, %s96
    %p105 = scmp.eq.s32.totalorder %s22, 0
    %p106 = por %p104, %p105
    %p107 = scmp.ne.s32.totalorder %s95, %s96
    %p108 = scmp.eq.s32.totalorder %s23, 1
    %p109 = por %p107, %p108
    %p111 = scmp.ne.s32.totalorder %s96, %s110
    %p112 = scmp.eq.s32.totalorder %s23, 0
    %p113 = por %p111, %p112
    %s115 = sadd.s32 %s114, 1
    %p118 = scmp.eq.s32.totalorder %s17, 1
    %p119 = scmp.ne.s32.totalorder %s114, %s116
    %p120 = scmp.eq.s32.totalorder %s17, 0
    %p121 = por %p119, %p120
    %p122 = scmp.ne.s32.totalorder %s114, %s116
    %p123 = scmp.eq.s32.totalorder %s22, 1
    %p124 = por %p122, %p123
    %p125 = scmp.ne.s32.totalorder %s116, %s117
    %p126 = scmp.eq.s32.totalorder %s22, 0
    %p127 = por %p125, %p126
    %p128 = scmp.ne.s32.totalorder %s116, %s117
    %p129 = scmp.eq.s32.totalorder %s23, 1
    %p130 = por %p128, %p129
    %p132 = scmp.ne.s32.totalorder %s117, %s131
    %p133 = scmp.eq.s32.totalorder %s23, 0
    %p134 = por %p132, %p133
    %s136 = sadd.s32 %s135, 1
    %p139 = scmp.eq.s32.totalorder %s17, 1
    %p140 = scmp.ne.s32.totalorder %s135, %s137
    %p141 = scmp.eq.s32.totalorder %s17, 0
    %p142 = por %p140, %p141
    %p143 = scmp.ne.s32.totalorder %s135, %s137
    %p144 = scmp.eq.s32.totalorder %s22, 1
    %p145 = por %p143, %p144
    %p146 = scmp.ne.s32.totalorder %s137, %s138
    %p147 = scmp.eq.s32.totalorder %s22, 0
    %p148 = por %p146, %p147
    %p149 = scmp.ne.s32.totalorder %s137, %s138
    %p150 = scmp.eq.s32.totalorder %s23, 1
    %p151 = por %p149, %p150
    %p153 = scmp.ne.s32.totalorder %s138, %s152
    %p154 = scmp.eq.s32.totalorder %s23, 0
    %p155 = por %p153, %p154
    %s157 = sadd.s32 %s156, 1
    %p160 = scmp.eq.s32.totalorder %s17, 1
    %p161 = scmp.ne.s32.totalorder %s156, %s158
    %p162 = scmp.eq.s32.totalorder %s17, 0
    %p163 = por %p161, %p162
    %p164 = scmp.ne.s32.totalorder %s156, %s158
    %p165 = scmp.eq.s32.totalorder %s22, 1
    %p166 = por %p164, %p165
    %p167 = scmp.ne.s32.totalorder %s158, %s159
    %p168 = scmp.eq.s32.totalorder %s22, 0
    %p169 = por %p167, %p168
    %p170 = scmp.ne.s32.totalorder %s158, %s159
    %p171 = scmp.eq.s32.totalorder %s23, 1
    %p172 = por %p170, %p171
    %p174 = scmp.ne.s32.totalorder %s159, %s173
    %p175 = scmp.eq.s32.totalorder %s23, 0
    %p176 = por %p174, %p175
    %s178 = sadd.s32 %s177, 1
    %p181 = scmp.eq.s32.totalorder %s17, 1
    %p182 = scmp.ne.s32.totalorder %s177, %s179
    %p183 = scmp.eq.s32.totalorder %s17, 0
    %p184 = por %p182, %p183
    %p185 = scmp.ne.s32.totalorder %s177, %s179
    %p186 = scmp.eq.s32.totalorder %s22, 1
    %p187 = por %p185, %p186
    %p188 = scmp.ne.s32.totalorder %s179, %s180
    %p189 = scmp.eq.s32.totalorder %s22, 0
    %p190 = por %p188, %p189
    %p191 = scmp.ne.s32.totalorder %s179, %s180
    %p192 = scmp.eq.s32.totalorder %s23, 1
    %p193 = por %p191, %p192
    %p195 = scmp.ne.s32.totalorder %s180, %s194
    %p196 = scmp.eq.s32.totalorder %s23, 0
    %p197 = por %p195, %p196
    %s199 = sadd.s32 %s198, 1
    %p202 = scmp.eq.s32.totalorder %s17, 1
    %p203 = scmp.ne.s32.totalorder %s198, %s200
    %p204 = scmp.eq.s32.totalorder %s17, 0
    %p205 = por %p203, %p204
    %p206 = scmp.ne.s32.totalorder %s198, %s200
    %p207 = scmp.eq.s32.totalorder %s22, 1
    %p208 = por %p206, %p207
    %p209 = scmp.ne.s32.totalorder %s200, %s201
    %p210 = scmp.eq.s32.totalorder %s22, 0
    %p211 = por %p209, %p210
    %p212 = scmp.ne.s32.totalorder %s200, %s201
    %p213 = scmp.eq.s32.totalorder %s23, 1
    %p214 = por %p212, %p213
    %p216 = scmp.ne.s32.totalorder %s201, %s215
    %p217 = scmp.eq.s32.totalorder %s23, 0
    %p218 = por %p216, %p217
    %s220 = sadd.s32 %s219, 1
    %p223 = scmp.eq.s32.totalorder %s17, 1
    %p224 = scmp.ne.s32.totalorder %s219, %s221
    %p225 = scmp.eq.s32.totalorder %s17, 0
    %p226 = por %p224, %p225
    %p227 = scmp.ne.s32.totalorder %s219, %s221
    %p228 = scmp.eq.s32.totalorder %s22, 1
    %p229 = por %p227, %p228
    %p230 = scmp.ne.s32.totalorder %s221, %s222
    %p231 = scmp.eq.s32.totalorder %s22, 0
    %p232 = por %p230, %p231
    %p233 = scmp.ne.s32.totalorder %s221, %s222
    %p234 = scmp.eq.s32.totalorder %s23, 1
    %p235 = por %p233, %p234
    %p237 = scmp.ne.s32.totalorder %s222, %s236
    %p238 = scmp.eq.s32.totalorder %s23, 0
    %p239 = por %p237, %p238
    %s241 = sadd.s32 %s240, 1
    %p244 = scmp.eq.s32.totalorder %s17, 1
    %p245 = scmp.ne.s32.totalorder %s240, %s242
    %p246 = scmp.eq.s32.totalorder %s17, 0
    %p247 = por %p245, %p246
    %p248 = scmp.ne.s32.totalorder %s240, %s242
    %p249 = scmp.eq.s32.totalorder %s22, 1
    %p250 = por %p248, %p249
    %p251 = scmp.ne.s32.totalorder %s242, %s243
    %p252 = scmp.eq.s32.totalorder %s22, 0
    %p253 = por %p251, %p252
    %p254 = scmp.ne.s32.totalorder %s242, %s243
    %p255 = scmp.eq.s32.totalorder %s23, 1
    %p256 = por %p254, %p255
    %p258 = scmp.ne.s32.totalorder %s243, %s257
    %p259 = scmp.eq.s32.totalorder %s23, 0
    %p260 = por %p258, %p259
    %s261 = ssub.s32 %s17, %s24
    %p262 = scmp.eq.s32.totalorder %s261, 0
    %s264 = sadd.s32 %s263, 1
    %s265 = scalar_select %p262, %s263, %s264
    %p268 = pneg %p262
    %p269 = scmp.eq.s32.totalorder %s17, 1
    %p270 = por %p268, %p269
    %p271 = scmp.ne.s32.totalorder %s263, %s266
    %p272 = scmp.eq.s32.totalorder %s17, 0
    %p273 = por %p271, %p272
    %p274 = scmp.ne.s32.totalorder %s263, %s266
    %p275 = scmp.eq.s32.totalorder %s22, 1
    %p276 = por %p274, %p275
    %p277 = scmp.ne.s32.totalorder %s266, %s267
    %p278 = scmp.eq.s32.totalorder %s22, 0
    %p279 = por %p277, %p278
    %p280 = scmp.ne.s32.totalorder %s266, %s267
    %p281 = scmp.eq.s32.totalorder %s23, 1
    %p282 = por %p280, %p281
    %p284 = scmp.ne.s32.totalorder %s267, %s283
    %p285 = scmp.eq.s32.totalorder %s23, 0
    %p286 = por %p284, %p285
    %p287 = scmp.le.s32.totalorder 1, %s17
    %p288 = scmp.lt.s32.totalorder %s17, 3
    %p289 = pnand %p287, %p288
    %p290 = pneg %p289
    // Predicated region
    $region9: #{decoder_forward.1} parent=5 // pred_check
      _
    $region10: #{decoder_forward.1} parent=5 // pred_check_branch
      %292 = sbr.rel (%p289) target = $region12
    $region11: #{decoder_forward.1} parent=5 // pred_region
      %s293 = ssub.s32 %s17, 1
      // Predicated region
      $region13: #{decoder_forward.1} parent=11 // pred_check
        %p294 = pneg %p64
      $region14: #{decoder_forward.1} parent=11 // pred_check_branch
        %296 = sbr.rel (%p294) target = $region16
      $region15: #{decoder_forward.1} parent=11 // pred_region
        _
      $region16: #{decoder_forward.1} parent=11 // pred_fallthru
        _
      // Predicated region
      $region17: #{decoder_forward.1} parent=11 // pred_check
        %p297 = pneg %p85
      $region18: #{decoder_forward.1} parent=11 // pred_check_branch
        %299 = sbr.rel (%p297) target = $region20
      $region19: #{decoder_forward.1} parent=11 // pred_region
        _
      $region20: #{decoder_forward.1} parent=11 // pred_fallthru
        _
      // Predicated region
      $region21: #{decoder_forward.1} parent=11 // pred_check
        %p300 = pneg %p106
      $region22: #{decoder_forward.1} parent=11 // pred_check_branch
        %302 = sbr.rel (%p300) target = $region24
      $region23: #{decoder_forward.1} parent=11 // pred_region
        _
      $region24: #{decoder_forward.1} parent=11 // pred_fallthru
        _
      // Predicated region
      $region25: #{decoder_forward.1} parent=11 // pred_check
        %p303 = pneg %p127
      $region26: #{decoder_forward.1} parent=11 // pred_check_branch
        %305 = sbr.rel (%p303) target = $region28
      $region27: #{decoder_forward.1} parent=11 // pred_region
        _
      $region28: #{decoder_forward.1} parent=11 // pred_fallthru
        _
      // Predicated region
      $region29: #{decoder_forward.1} parent=11 // pred_check
        %p306 = pneg %p148
      $region30: #{decoder_forward.1} parent=11 // pred_check_branch
        %308 = sbr.rel (%p306) target = $region32
      $region31: #{decoder_forward.1} parent=11 // pred_region
        _
      $region32: #{decoder_forward.1} parent=11 // pred_fallthru
        _
      // Predicated region
      $region33: #{decoder_forward.1} parent=11 // pred_check
        %p309 = pneg %p169
      $region34: #{decoder_forward.1} parent=11 // pred_check_branch
        %311 = sbr.rel (%p309) target = $region36
      $region35: #{decoder_forward.1} parent=11 // pred_region
        _
      $region36: #{decoder_forward.1} parent=11 // pred_fallthru
        _
      // Predicated region
      $region37: #{decoder_forward.1} parent=11 // pred_check
        %p312 = pneg %p190
      $region38: #{decoder_forward.1} parent=11 // pred_check_branch
        %314 = sbr.rel (%p312) target = $region40
      $region39: #{decoder_forward.1} parent=11 // pred_region
        _
      $region40: #{decoder_forward.1} parent=11 // pred_fallthru
        _
      // Predicated region
      $region41: #{decoder_forward.1} parent=11 // pred_check
        %p315 = pneg %p211
      $region42: #{decoder_forward.1} parent=11 // pred_check_branch
        %317 = sbr.rel (%p315) target = $region44
      $region43: #{decoder_forward.1} parent=11 // pred_region
        _
      $region44: #{decoder_forward.1} parent=11 // pred_fallthru
        _
      // Predicated region
      $region45: #{decoder_forward.1} parent=11 // pred_check
        %p318 = pneg %p232
      $region46: #{decoder_forward.1} parent=11 // pred_check_branch
        %320 = sbr.rel (%p318) target = $region48
      $region47: #{decoder_forward.1} parent=11 // pred_region
        _
      $region48: #{decoder_forward.1} parent=11 // pred_fallthru
        _
      // Predicated region
      $region49: #{decoder_forward.1} parent=11 // pred_check
        %p321 = pneg %p253
      $region50: #{decoder_forward.1} parent=11 // pred_check_branch
        %323 = sbr.rel (%p321) target = $region52
      $region51: #{decoder_forward.1} parent=11 // pred_region
        _
      $region52: #{decoder_forward.1} parent=11 // pred_fallthru
        _
    $region12: #{decoder_forward.1} parent=5 // pred_fallthru
      _
    %p324 = scmp.lt.s32.totalorder %s17, 2
    // Predicated region
    $region53: #{decoder_forward.1} parent=5 // pred_check
      %p325 = pneg %p324
    $region54: #{decoder_forward.1} parent=5 // pred_check_branch
      %327 = sbr.rel (%p325) target = $region56
    $region55: #{decoder_forward.1} parent=5 // pred_region
      // Predicated region
      $region57: #{decoder_forward.1} parent=55 // pred_check
        %p328 = pneg %p37
      $region58: #{decoder_forward.1} parent=55 // pred_check_branch
        %330 = sbr.rel (%p328) target = $region60
      $region59: #{decoder_forward.1} parent=55 // pred_region
        %p331 = scmp.lt.s32.totalorder %s17, 1
        %s332 = scalar_select %p331, %s17, 1
        %s333 = smul.addr %s332, 8
        %s334 = smul.addr %s333, 8
        %s335 = scalar_lea.vmem %s0, %s334
      $region60: #{decoder_forward.1} parent=55 // pred_fallthru
        _
    $region56: #{decoder_forward.1} parent=5 // pred_fallthru
      _
    %p336 = scmp.le.s32.totalorder 1, %s17
    %p337 = scmp.lt.s32.totalorder %s17, 3
    %p338 = pnand %p336, %p337
    %p339 = pneg %p338
    // Predicated region
    $region61: #{decoder_forward.1} parent=5 // pred_check
      _
    $region62: #{decoder_forward.1} parent=5 // pred_check_branch
      %341 = sbr.rel (%p338) target = $region64
    $region63: #{decoder_forward.1} parent=5 // pred_region
      %s342 = ssub.s32 %s17, 1
      %p343 = scmp.lt.s32.totalorder %s22, 1
      %s344 = scalar_select %p343, %s22, 1
      %s345 = smul.addr %s344, 8
      %s346 = smul.addr %s345, 8
      %s347 = scalar_lea.vmem %s0, %s346
      %p348 = pneg %p43
      %p349 = pneg %p40
      %p350 = pneg %p64
      %p351 = pneg %p61
      %p352 = pneg %p85
      %p353 = pneg %p82
      %p354 = pneg %p106
      %p355 = pneg %p103
      %p356 = pneg %p127
      %p357 = pneg %p124
      %p358 = pneg %p148
      %p359 = pneg %p145
      %p360 = pneg %p169
      %p361 = pneg %p166
      %p362 = pneg %p190
      %p363 = pneg %p187
      %p364 = pneg %p211
      %p365 = pneg %p208
      %p366 = pneg %p232
      %p367 = pneg %p229
      %p368 = pneg %p253
      %p369 = pneg %p250
      %p370 = pneg %p279
      %p371 = pneg %p276
      %p372 = scmp.lt.s32.totalorder %s22, 1
      %s373 = scalar_select %p372, %s22, 1
      %s374 = smul.addr %s373, 32
      %s375 = smul.addr %s374, 8
      %s376 = scalar_lea.vmem %s11, %s375
      %p377 = scmp.lt.s32.totalorder %s22, 1
      %s378 = scalar_select %p377, %s22, 1
      %s379 = smul.addr %s378, 8
      %s380 = smul.addr %s379, 8
      %s381 = scalar_lea.vmem %s0, %s380
      %p382 = scmp.lt.s32.totalorder %s22, 1
      %s383 = scalar_select %p382, %s22, 1
      %s384 = smul.addr %s383, 32
      %s385 = smul.addr %s384, 8
      %s386 = scalar_lea.vmem %s11, %s385
      %v387 = vld [vmem:[%s381] sm:$0xff]
      %v388 = vld [vmem:[%s381 + $0x8] sm:$0xff]
      %v389 = vld [vmem:[%s381 + $0x10] sm:$0xff]
      %v390 = vld [vmem:[%s381 + $0x18] sm:$0xff]
      %v391 = vld [vmem:[%s381 + $0x20] sm:$0xff]
      %v392 = vld [vmem:[%s381 + $0x28] sm:$0xff]
      %v393 = vld [vmem:[%s381 + $0x30] sm:$0xff]
      %v394 = vld [vmem:[%s381 + $0x38] sm:$0xff]
      %v404 = vrot.slane 0.0, 7
      %v405 = vrot.slane %v387, 7
      %v406 = vrot.slane %v388, 7
      %v407 = vrot.slane %v389, 7
      %v408 = vrot.slane %v390, 7
      %v409 = vrot.slane %v391, 7
      %v410 = vrot.slane %v392, 7
      %v411 = vrot.slane %v393, 7
      %v412 = vrot.slane %v394, 7
      %vm422 = vcmask 1040384
      %v423 = vsel %vm422, 0.0, %v404
      %v424 = vsel %vm422, 0.0, %v405
      %v425 = vsel %vm422, 0.0, %v406
      %v426 = vsel %vm422, 0.0, %v407
      %v427 = vsel %vm422, 0.0, %v408
      %v428 = vsel %vm422, 0.0, %v409
      %v429 = vsel %vm422, 0.0, %v410
      %v430 = vsel %vm422, 0.0, %v411
      %v431 = vsel %vm422, 0.0, %v412
      %v432 = vsel %vm422, %v404, 0.0
      %v433 = vsel %vm422, %v405, 0.0
      %v434 = vsel %vm422, %v406, 0.0
      %v435 = vsel %vm422, %v407, 0.0
      %v436 = vsel %vm422, %v408, 0.0
      %v437 = vsel %vm422, %v409, 0.0
      %v438 = vsel %vm422, %v410, 0.0
      %v439 = vsel %vm422, %v411, 0.0
      %v440 = vsel %vm422, %v412, 0.0
      %vm457 = vcmask 1046528
      %v458 = vrot.slane %v423, 1
      %v459 = vrot.slane %v432, 1
      %v460 = vsel %vm457, %v458, %v459
      %v461 = vrot.slane %v424, 1
      %v462 = vrot.slane %v433, 1
      %v463 = vsel %vm457, %v461, %v462
      %v464 = vrot.slane %v425, 1
      %v465 = vrot.slane %v434, 1
      %v466 = vsel %vm457, %v464, %v465
      %v467 = vrot.slane %v426, 1
      %v468 = vrot.slane %v435, 1
      %v469 = vsel %vm457, %v467, %v468
      %v470 = vrot.slane %v427, 1
      %v471 = vrot.slane %v436, 1
      %v472 = vsel %vm457, %v470, %v471
      %v473 = vrot.slane %v428, 1
      %v474 = vrot.slane %v437, 1
      %v475 = vsel %vm457, %v473, %v474
      %v476 = vrot.slane %v429, 1
      %v477 = vrot.slane %v438, 1
      %v478 = vsel %vm457, %v476, %v477
      %v479 = vrot.slane %v430, 1
      %v480 = vrot.slane %v439, 1
      %v481 = vsel %vm457, %v479, %v480
      %482 = vrot.lane.b32.xlu0 %v460, 8
      %v483 = vpop.permute.xlu0 %482
      %484 = vrot.lane.b32.xlu0 %v463, 8
      %v485 = vpop.permute.xlu0 %484
      %486 = vrot.lane.b32.xlu0 %v466, 8
      %v487 = vpop.permute.xlu0 %486
      %488 = vrot.lane.b32.xlu0 %v469, 8
      %v489 = vpop.permute.xlu0 %488
      %490 = vrot.lane.b32.xlu0 %v472, 8
      %v491 = vpop.permute.xlu0 %490
      %492 = vrot.lane.b32.xlu0 %v475, 8
      %v493 = vpop.permute.xlu0 %492
      %494 = vrot.lane.b32.xlu0 %v478, 8
      %v495 = vpop.permute.xlu0 %494
      %496 = vrot.lane.b32.xlu0 %v481, 8
      %v497 = vpop.permute.xlu0 %496
      %vm506 = vcmask 1045504
      %v507 = vrot.slane %v423, 2
      %v508 = vrot.slane %v432, 2
      %v509 = vsel %vm506, %v507, %v508
      %v510 = vrot.slane %v424, 2
      %v511 = vrot.slane %v433, 2
      %v512 = vsel %vm506, %v510, %v511
      %v513 = vrot.slane %v425, 2
      %v514 = vrot.slane %v434, 2
      %v515 = vsel %vm506, %v513, %v514
      %v516 = vrot.slane %v426, 2
      %v517 = vrot.slane %v435, 2
      %v518 = vsel %vm506, %v516, %v517
      %v519 = vrot.slane %v427, 2
      %v520 = vrot.slane %v436, 2
      %v521 = vsel %vm506, %v519, %v520
      %v522 = vrot.slane %v428, 2
      %v523 = vrot.slane %v437, 2
      %v524 = vsel %vm506, %v522, %v523
      %v525 = vrot.slane %v429, 2
      %v526 = vrot.slane %v438, 2
      %v527 = vsel %vm506, %v525, %v526
      %v528 = vrot.slane %v430, 2
      %v529 = vrot.slane %v439, 2
      %v530 = vsel %vm506, %v528, %v529
      %531 = vrot.lane.b32.xlu0 %v509, 16
      %v532 = vpop.permute.xlu0 %531
      %533 = vrot.lane.b32.xlu0 %v512, 16
      %v534 = vpop.permute.xlu0 %533
      %535 = vrot.lane.b32.xlu0 %v515, 16
      %v536 = vpop.permute.xlu0 %535
      %537 = vrot.lane.b32.xlu0 %v518, 16
      %v538 = vpop.permute.xlu0 %537
      %539 = vrot.lane.b32.xlu0 %v521, 16
      %v540 = vpop.permute.xlu0 %539
      %541 = vrot.lane.b32.xlu0 %v524, 16
      %v542 = vpop.permute.xlu0 %541
      %543 = vrot.lane.b32.xlu0 %v527, 16
      %v544 = vpop.permute.xlu0 %543
      %545 = vrot.lane.b32.xlu0 %v530, 16
      %v546 = vpop.permute.xlu0 %545
      %556 = vrot.lane.b32.xlu0 %v424, 24
      %v557 = vpop.permute.xlu0 %556
      %558 = vrot.lane.b32.xlu0 %v425, 24
      %v559 = vpop.permute.xlu0 %558
      %560 = vrot.lane.b32.xlu0 %v426, 24
      %v561 = vpop.permute.xlu0 %560
      %562 = vrot.lane.b32.xlu0 %v427, 24
      %v563 = vpop.permute.xlu0 %562
      %564 = vrot.lane.b32.xlu0 %v428, 24
      %v565 = vpop.permute.xlu0 %564
      %566 = vrot.lane.b32.xlu0 %v429, 24
      %v567 = vpop.permute.xlu0 %566
      %568 = vrot.lane.b32.xlu0 %v430, 24
      %v569 = vpop.permute.xlu0 %568
      %570 = vrot.lane.b32.xlu0 %v431, 24
      %v571 = vpop.permute.xlu0 %570
      %v581 = vrot.slane %v431, 1
      %v582 = vrot.slane %v440, 1
      %v583 = vsel %vm457, %v581, %v582
      %584 = vrot.lane.b32.xlu0 %v463, 32
      %v585 = vpop.permute.xlu0 %584
      %586 = vrot.lane.b32.xlu0 %v466, 32
      %v587 = vpop.permute.xlu0 %586
      %588 = vrot.lane.b32.xlu0 %v469, 32
      %v589 = vpop.permute.xlu0 %588
      %590 = vrot.lane.b32.xlu0 %v472, 32
      %v591 = vpop.permute.xlu0 %590
      %592 = vrot.lane.b32.xlu0 %v475, 32
      %v593 = vpop.permute.xlu0 %592
      %594 = vrot.lane.b32.xlu0 %v478, 32
      %v595 = vpop.permute.xlu0 %594
      %596 = vrot.lane.b32.xlu0 %v481, 32
      %v597 = vpop.permute.xlu0 %596
      %598 = vrot.lane.b32.xlu0 %v583, 32
      %v599 = vpop.permute.xlu0 %598
      %v608 = vrot.slane %v431, 2
      %v609 = vrot.slane %v440, 2
      %v610 = vsel %vm506, %v608, %v609
      %611 = vrot.lane.b32.xlu0 %v512, 40
      %v612 = vpop.permute.xlu0 %611
      %613 = vrot.lane.b32.xlu0 %v515, 40
      %v614 = vpop.permute.xlu0 %613
      %615 = vrot.lane.b32.xlu0 %v518, 40
      %v616 = vpop.permute.xlu0 %615
      %617 = vrot.lane.b32.xlu0 %v521, 40
      %v618 = vpop.permute.xlu0 %617
      %619 = vrot.lane.b32.xlu0 %v524, 40
      %v620 = vpop.permute.xlu0 %619
      %621 = vrot.lane.b32.xlu0 %v527, 40
      %v622 = vpop.permute.xlu0 %621
      %623 = vrot.lane.b32.xlu0 %v530, 40
      %v624 = vpop.permute.xlu0 %623
      %625 = vrot.lane.b32.xlu0 %v610, 40
      %v626 = vpop.permute.xlu0 %625
      %635 = vrot.lane.b32.xlu0 %v425, 48
      %v636 = vpop.permute.xlu0 %635
      %637 = vrot.lane.b32.xlu0 %v426, 48
      %v638 = vpop.permute.xlu0 %637
      %639 = vrot.lane.b32.xlu0 %v427, 48
      %v640 = vpop.permute.xlu0 %639
      %641 = vrot.lane.b32.xlu0 %v428, 48
      %v642 = vpop.permute.xlu0 %641
      %643 = vrot.lane.b32.xlu0 %v429, 48
      %v644 = vpop.permute.xlu0 %643
      %645 = vrot.lane.b32.xlu0 %v430, 48
      %v646 = vpop.permute.xlu0 %645
      %647 = vrot.lane.b32.xlu0 %v431, 48
      %v648 = vpop.permute.xlu0 %647
      %649 = vrot.lane.b32.xlu0 %v423, 48
      %v650 = vpop.permute.xlu0 %649
      %659 = vrot.lane.b32.xlu0 %v466, 56
      %v660 = vpop.permute.xlu0 %659
      %661 = vrot.lane.b32.xlu0 %v469, 56
      %v662 = vpop.permute.xlu0 %661
      %663 = vrot.lane.b32.xlu0 %v472, 56
      %v664 = vpop.permute.xlu0 %663
      %665 = vrot.lane.b32.xlu0 %v475, 56
      %v666 = vpop.permute.xlu0 %665
      %667 = vrot.lane.b32.xlu0 %v478, 56
      %v668 = vpop.permute.xlu0 %667
      %669 = vrot.lane.b32.xlu0 %v481, 56
      %v670 = vpop.permute.xlu0 %669
      %671 = vrot.lane.b32.xlu0 %v583, 56
      %v672 = vpop.permute.xlu0 %671
      %673 = vrot.lane.b32.xlu0 %v460, 56
      %v674 = vpop.permute.xlu0 %673
      %683 = vrot.lane.b32.xlu0 %v515, 64
      %v684 = vpop.permute.xlu0 %683
      %685 = vrot.lane.b32.xlu0 %v518, 64
      %v686 = vpop.permute.xlu0 %685
      %687 = vrot.lane.b32.xlu0 %v521, 64
      %v688 = vpop.permute.xlu0 %687
      %689 = vrot.lane.b32.xlu0 %v524, 64
      %v690 = vpop.permute.xlu0 %689
      %691 = vrot.lane.b32.xlu0 %v527, 64
      %v692 = vpop.permute.xlu0 %691
      %693 = vrot.lane.b32.xlu0 %v530, 64
      %v694 = vpop.permute.xlu0 %693
      %695 = vrot.lane.b32.xlu0 %v610, 64
      %v696 = vpop.permute.xlu0 %695
      %697 = vrot.lane.b32.xlu0 %v509, 64
      %v698 = vpop.permute.xlu0 %697
      %vm707 = vcmask 64512
      %v708 = vsel %vm707, %v423, %v483
      %v709 = vsel %vm707, %v424, %v485
      %v710 = vsel %vm707, %v425, %v487
      %v711 = vsel %vm707, %v426, %v489
      %v712 = vsel %vm707, %v427, %v491
      %v713 = vsel %vm707, %v428, %v493
      %v714 = vsel %vm707, %v429, %v495
      %v715 = vsel %vm707, %v430, %v497
      %vm716 = vcmask 130048
      %v717 = vsel %vm716, %v708, %v532
      %v718 = vsel %vm716, %v709, %v534
      %v719 = vsel %vm716, %v710, %v536
      %v720 = vsel %vm716, %v711, %v538
      %v721 = vsel %vm716, %v712, %v540
      %v722 = vsel %vm716, %v713, %v542
      %v723 = vsel %vm716, %v714, %v544
      %v724 = vsel %vm716, %v715, %v546
      %vm725 = vcmask 195584
      %v726 = vsel %vm725, %v717, %v557
      %v727 = vsel %vm725, %v718, %v559
      %v728 = vsel %vm725, %v719, %v561
      %v729 = vsel %vm725, %v720, %v563
      %v730 = vsel %vm725, %v721, %v565
      %v731 = vsel %vm725, %v722, %v567
      %v732 = vsel %vm725, %v723, %v569
      %v733 = vsel %vm725, %v724, %v571
      %vm734 = vcmask 261120
      %v735 = vsel %vm734, %v726, %v585
      %v736 = vsel %vm734, %v727, %v587
      %v737 = vsel %vm734, %v728, %v589
      %v738 = vsel %vm734, %v729, %v591
      %v739 = vsel %vm734, %v730, %v593
      %v740 = vsel %vm734, %v731, %v595
      %v741 = vsel %vm734, %v732, %v597
      %v742 = vsel %vm734, %v733, %v599
      %vm743 = vcmask 326656
      %v744 = vsel %vm743, %v735, %v612
      %v745 = vsel %vm743, %v736, %v614
      %v746 = vsel %vm743, %v737, %v616
      %v747 = vsel %vm743, %v738, %v618
      %v748 = vsel %vm743, %v739, %v620
      %v749 = vsel %vm743, %v740, %v622
      %v750 = vsel %vm743, %v741, %v624
      %v751 = vsel %vm743, %v742, %v626
      %vm752 = vcmask 392192
      %v753 = vsel %vm752, %v744, %v636
      %v754 = vsel %vm752, %v745, %v638
      %v755 = vsel %vm752, %v746, %v640
      %v756 = vsel %vm752, %v747, %v642
      %v757 = vsel %vm752, %v748, %v644
      %v758 = vsel %vm752, %v749, %v646
      %v759 = vsel %vm752, %v750, %v648
      %v760 = vsel %vm752, %v751, %v650
      %vm761 = vcmask 457728
      %v762 = vsel %vm761, %v753, %v660
      %v763 = vsel %vm761, %v754, %v662
      %v764 = vsel %vm761, %v755, %v664
      %v765 = vsel %vm761, %v756, %v666
      %v766 = vsel %vm761, %v757, %v668
      %v767 = vsel %vm761, %v758, %v670
      %v768 = vsel %vm761, %v759, %v672
      %v769 = vsel %vm761, %v760, %v674
      %vm770 = vcmask 523264
      %v771 = vsel %vm770, %v762, %v684
      %v772 = vsel %vm770, %v763, %v686
      %v773 = vsel %vm770, %v764, %v688
      %v774 = vsel %vm770, %v765, %v690
      %v775 = vsel %vm770, %v766, %v692
      %v776 = vsel %vm770, %v767, %v694
      %v777 = vsel %vm770, %v768, %v696
      %v778 = vsel %vm770, %v769, %v698
      %v779 = vld [vmem:[%s1] sm:$0xff]
      %v780 = vld [vmem:[%s1 + $0x8] sm:$0xff]
      %v781 = vld [vmem:[%s1 + $0x10] sm:$0xff]
      %v782 = vld [vmem:[%s1 + $0x18] sm:$0xff]
      %v783 = vld [vmem:[%s1 + $0x20] sm:$0xff]
      %v784 = vld [vmem:[%s1 + $0x28] sm:$0xff]
      %v785 = vld [vmem:[%s1 + $0x30] sm:$0xff]
      %v786 = vld [vmem:[%s1 + $0x38] sm:$0xff]
      %v787 = vld [vmem:[%s1 + $0x40] sm:$0xff]
      %v788 = vld [vmem:[%s2] sm:$0x1]
      %v790 = vperm.slane %v788, 0
      %vm792 = vcmask 588800
      %v794 = vsel %vm792, %v771, 0
      %v797 = vsel %vm792, %v772, 0
      %v800 = vsel %vm792, %v773, 0
      %v803 = vsel %vm792, %v774, 0
      %v806 = vsel %vm792, %v775, 0
      %v809 = vsel %vm792, %v776, 0
      %v812 = vsel %vm792, %v777, 0
      %v815 = vsel %vm792, %v778, 0
      %817 = vmatpush.msra.mxu0 0.0
      %818 = vmatpush.msra.mxu0 0.0
      %819 = vmatpush.msra.mxu0 0.0
      %820 = vmatpush.msra.mxu0 0.0
      %821 = vmatpush.msra.mxu0 0.0
      %822 = vmatpush.msra.mxu0 0.0
      %823 = vmatpush.msra.mxu0 0.0
      %824 = vmatpush.msra.mxu0 %v787
      %825 = vmatpush.msra.mxu0 %v786
      %826 = vmatpush.msra.mxu0 %v785
      %827 = vmatpush.msra.mxu0 %v784
      %828 = vmatpush.msra.mxu0 %v783
      %829 = vmatpush.msra.mxu0 %v782
      %830 = vmatpush.msra.mxu0 %v781
      %831 = vmatpush.msra.mxu0 %v780
      %832 = vmatpush.msra.mxu0 %v779
      %833 = vmatmul.f32.gmra.mxu0 %v794
      %v834 = vpop.f32.mrf.mxu0
      %v835 = vadd.f32 %v790, %v834
      %836 = vmatmul.f32.gmra.mxu0 %v797
      %v837 = vpop.f32.mrf.mxu0
      %v838 = vadd.f32 %v790, %v837
      %839 = vmatmul.f32.gmra.mxu0 %v800
      %v840 = vpop.f32.mrf.mxu0
      %v841 = vadd.f32 %v790, %v840
      %842 = vmatmul.f32.gmra.mxu0 %v803
      %v843 = vpop.f32.mrf.mxu0
      %v844 = vadd.f32 %v790, %v843
      %845 = vmatmul.f32.gmra.mxu0 %v806
      %v846 = vpop.f32.mrf.mxu0
      %v847 = vadd.f32 %v790, %v846
      %848 = vmatmul.f32.gmra.mxu0 %v809
      %v849 = vpop.f32.mrf.mxu0
      %v850 = vadd.f32 %v790, %v849
      %851 = vmatmul.f32.gmra.mxu0 %v812
      %v852 = vpop.f32.mrf.mxu0
      %v853 = vadd.f32 %v790, %v852
      %854 = vmatmul.f32.gmra.mxu0 %v815
      %v855 = vpop.f32.mrf.mxu0
      %v856 = vadd.f32 %v790, %v855
      %857 = vdwg.mxu0
      %v866 = vrot.slane %v835, 7
      %v867 = vrot.slane %v838, 7
      %v868 = vrot.slane %v841, 7
      %v869 = vrot.slane %v844, 7
      %v870 = vrot.slane %v847, 7
      %v871 = vrot.slane %v850, 7
      %v872 = vrot.slane %v853, 7
      %v873 = vrot.slane %v856, 7
      %v882 = vsel %vm422, 0.0, %v866
      %v883 = vsel %vm422, 0.0, %v867
      %v884 = vsel %vm422, 0.0, %v868
      %v885 = vsel %vm422, 0.0, %v869
      %v886 = vsel %vm422, 0.0, %v870
      %v887 = vsel %vm422, 0.0, %v871
      %v888 = vsel %vm422, 0.0, %v872
      %v889 = vsel %vm422, 0.0, %v873
      %v890 = vsel %vm422, %v866, 0.0
      %v891 = vsel %vm422, %v867, 0.0
      %v892 = vsel %vm422, %v868, 0.0
      %v893 = vsel %vm422, %v869, 0.0
      %v894 = vsel %vm422, %v870, 0.0
      %v895 = vsel %vm422, %v871, 0.0
      %v896 = vsel %vm422, %v872, 0.0
      %v897 = vsel %vm422, %v873, 0.0
      %v898 = vld [vmem:[%s3] sm:$0xff]
      %v899 = vld [vmem:[%s3 + $0x8] sm:$0xff]
      %v900 = vld [vmem:[%s3 + $0x10] sm:$0xff]
      %v901 = vld [vmem:[%s3 + $0x18] sm:$0xff]
      %v902 = vld [vmem:[%s3 + $0x20] sm:$0xff]
      %v903 = vld [vmem:[%s3 + $0x28] sm:$0xff]
      %v904 = vld [vmem:[%s3 + $0x30] sm:$0xff]
      %v905 = vld [vmem:[%s3 + $0x38] sm:$0xff]
      %v906 = vld [vmem:[%s3 + $0x40] sm:$0xff]
      %v907 = vld [vmem:[%s3 + $0x48] sm:$0xff]
      %v908 = vld [vmem:[%s3 + $0x50] sm:$0xff]
      %v909 = vld [vmem:[%s3 + $0x58] sm:$0xff]
      %v910 = vld [vmem:[%s3 + $0x60] sm:$0xff]
      %v911 = vld [vmem:[%s3 + $0x68] sm:$0xff]
      %v912 = vld [vmem:[%s3 + $0x70] sm:$0xff]
      %v913 = vld [vmem:[%s3 + $0x78] sm:$0xff]
      %v914 = vld [vmem:[%s3 + $0x80] sm:$0xff]
      %v915 = vld [vmem:[%s3 + $0x88] sm:$0xff]
      %v916 = vld [vmem:[%s3 + $0x90] sm:$0xff]
      %v917 = vld [vmem:[%s3 + $0x98] sm:$0xff]
      %v918 = vld [vmem:[%s3 + $0xa0] sm:$0xff]
      %v919 = vld [vmem:[%s3 + $0xa8] sm:$0xff]
      %v920 = vld [vmem:[%s3 + $0xb0] sm:$0xff]
      %v921 = vld [vmem:[%s3 + $0xb8] sm:$0xff]
      %v922 = vld [vmem:[%s3 + $0xc0] sm:$0xff]
      %v923 = vld [vmem:[%s3 + $0xc8] sm:$0xff]
      %v924 = vld [vmem:[%s3 + $0xd0] sm:$0xff]
      %v925 = vld [vmem:[%s3 + $0xd8] sm:$0xff]
      %v926 = vld [vmem:[%s3 + $0xe0] sm:$0xff]
      %v927 = vld [vmem:[%s3 + $0xe8] sm:$0xff]
      %v928 = vld [vmem:[%s3 + $0xf0] sm:$0xff]
      %v929 = vld [vmem:[%s3 + $0xf8] sm:$0xff]
      %v930 = vld [vmem:[%s3 + $0x100] sm:$0xff]
      %v931 = vld [vmem:[%s3 + $0x108] sm:$0xff]
      %v932 = vld [vmem:[%s3 + $0x110] sm:$0xff]
      %v933 = vld [vmem:[%s3 + $0x118] sm:$0xff]
      %v934 = vld [vmem:[%s3 + $0x120] sm:$0xff]
      %v935 = vld [vmem:[%s3 + $0x128] sm:$0xff]
      %v936 = vld [vmem:[%s3 + $0x130] sm:$0xff]
      %v937 = vld [vmem:[%s3 + $0x138] sm:$0xff]
      %v938 = vld [vmem:[%s3 + $0x140] sm:$0xff]
      %v939 = vld [vmem:[%s3 + $0x148] sm:$0xff]
      %v940 = vld [vmem:[%s3 + $0x150] sm:$0xff]
      %v941 = vld [vmem:[%s3 + $0x158] sm:$0xff]
      %v942 = vld [vmem:[%s3 + $0x160] sm:$0xff]
      %v943 = vld [vmem:[%s3 + $0x168] sm:$0xff]
      %v944 = vld [vmem:[%s3 + $0x170] sm:$0xff]
      %v945 = vld [vmem:[%s3 + $0x178] sm:$0xff]
      %v946 = vld [vmem:[%s3 + $0x180] sm:$0xff]
      %v947 = vld [vmem:[%s3 + $0x188] sm:$0xff]
      %v948 = vld [vmem:[%s3 + $0x190] sm:$0xff]
      %v949 = vld [vmem:[%s3 + $0x198] sm:$0xff]
      %v950 = vld [vmem:[%s3 + $0x1a0] sm:$0xff]
      %v951 = vld [vmem:[%s3 + $0x1a8] sm:$0xff]
      %v952 = vld [vmem:[%s3 + $0x1b0] sm:$0xff]
      %v953 = vld [vmem:[%s3 + $0x1b8] sm:$0xff]
      %v954 = vld [vmem:[%s3 + $0x1c0] sm:$0xff]
      %v955 = vld [vmem:[%s3 + $0x1c8] sm:$0xff]
      %v956 = vld [vmem:[%s3 + $0x1d0] sm:$0xff]
      %v957 = vld [vmem:[%s3 + $0x1d8] sm:$0xff]
      %v958 = vld [vmem:[%s3 + $0x1e0] sm:$0xff]
      %v959 = vld [vmem:[%s3 + $0x1e8] sm:$0xff]
      %v960 = vld [vmem:[%s3 + $0x1f0] sm:$0xff]
      %v961 = vld [vmem:[%s3 + $0x1f8] sm:$0xff]
      %v962 = vld [vmem:[%s4] sm:$0x1]
      %v977 = vrot.slane %v882, 1
      %v978 = vrot.slane %v890, 1
      %v979 = vsel %vm457, %v977, %v978
      %v980 = vrot.slane %v883, 1
      %v981 = vrot.slane %v891, 1
      %v982 = vsel %vm457, %v980, %v981
      %v983 = vrot.slane %v884, 1
      %v984 = vrot.slane %v892, 1
      %v985 = vsel %vm457, %v983, %v984
      %v986 = vrot.slane %v885, 1
      %v987 = vrot.slane %v893, 1
      %v988 = vsel %vm457, %v986, %v987
      %v989 = vrot.slane %v886, 1
      %v990 = vrot.slane %v894, 1
      %v991 = vsel %vm457, %v989, %v990
      %v992 = vrot.slane %v887, 1
      %v993 = vrot.slane %v895, 1
      %v994 = vsel %vm457, %v992, %v993
      %v995 = vrot.slane %v888, 1
      %v996 = vrot.slane %v896, 1
      %v997 = vsel %vm457, %v995, %v996
      %998 = vrot.lane.b32.xlu0 %v460, 32
      %v999 = vpop.permute.xlu0 %998
      %1000 = vrot.lane.b32.xlu0 %v979, 32
      %v1001 = vpop.permute.xlu0 %1000
      %1002 = vrot.lane.b32.xlu0 %v982, 32
      %v1003 = vpop.permute.xlu0 %1002
      %1004 = vrot.lane.b32.xlu0 %v985, 32
      %v1005 = vpop.permute.xlu0 %1004
      %1006 = vrot.lane.b32.xlu0 %v988, 32
      %v1007 = vpop.permute.xlu0 %1006
      %1008 = vrot.lane.b32.xlu0 %v991, 32
      %v1009 = vpop.permute.xlu0 %1008
      %1010 = vrot.lane.b32.xlu0 %v994, 32
      %v1011 = vpop.permute.xlu0 %1010
      %1012 = vrot.lane.b32.xlu0 %v997, 32
      %v1013 = vpop.permute.xlu0 %1012
      %1023 = vrot.lane.b32.xlu0 %v882, 64
      %v1024 = vpop.permute.xlu0 %1023
      %1025 = vrot.lane.b32.xlu0 %v883, 64
      %v1026 = vpop.permute.xlu0 %1025
      %1027 = vrot.lane.b32.xlu0 %v884, 64
      %v1028 = vpop.permute.xlu0 %1027
      %1029 = vrot.lane.b32.xlu0 %v885, 64
      %v1030 = vpop.permute.xlu0 %1029
      %1031 = vrot.lane.b32.xlu0 %v886, 64
      %v1032 = vpop.permute.xlu0 %1031
      %1033 = vrot.lane.b32.xlu0 %v887, 64
      %v1034 = vpop.permute.xlu0 %1033
      %1035 = vrot.lane.b32.xlu0 %v888, 64
      %v1036 = vpop.permute.xlu0 %1035
      %1037 = vrot.lane.b32.xlu0 %v889, 64
      %v1038 = vpop.permute.xlu0 %1037
      %v1048 = vrot.slane %v889, 1
      %v1049 = vrot.slane %v897, 1
      %v1050 = vsel %vm457, %v1048, %v1049
      %1051 = vrot.lane.b32.xlu0 %v979, 96
      %v1052 = vpop.permute.xlu0 %1051
      %1053 = vrot.lane.b32.xlu0 %v982, 96
      %v1054 = vpop.permute.xlu0 %1053
      %1055 = vrot.lane.b32.xlu0 %v985, 96
      %v1056 = vpop.permute.xlu0 %1055
      %1057 = vrot.lane.b32.xlu0 %v988, 96
      %v1058 = vpop.permute.xlu0 %1057
      %1059 = vrot.lane.b32.xlu0 %v991, 96
      %v1060 = vpop.permute.xlu0 %1059
      %1061 = vrot.lane.b32.xlu0 %v994, 96
      %v1062 = vpop.permute.xlu0 %1061
      %1063 = vrot.lane.b32.xlu0 %v997, 96
      %v1064 = vpop.permute.xlu0 %1063
      %1065 = vrot.lane.b32.xlu0 %v1050, 96
      %v1066 = vpop.permute.xlu0 %1065
      %v1075 = vsel %vm734, %v423, %v999
      %v1076 = vsel %vm734, %v882, %v1001
      %v1077 = vsel %vm734, %v883, %v1003
      %v1078 = vsel %vm734, %v884, %v1005
      %v1079 = vsel %vm734, %v885, %v1007
      %v1080 = vsel %vm734, %v886, %v1009
      %v1081 = vsel %vm734, %v887, %v1011
      %v1082 = vsel %vm734, %v888, %v1013
      %v1083 = vsel %vm770, %v1075, %v1024
      %v1084 = vsel %vm770, %v1076, %v1026
      %v1085 = vsel %vm770, %v1077, %v1028
      %v1086 = vsel %vm770, %v1078, %v1030
      %v1087 = vsel %vm770, %v1079, %v1032
      %v1088 = vsel %vm770, %v1080, %v1034
      %v1089 = vsel %vm770, %v1081, %v1036
      %v1090 = vsel %vm770, %v1082, %v1038
      %vm1091 = vcmask 785408
      %v1092 = vsel %vm1091, %v1083, %v1052
      %v1093 = vsel %vm1091, %v1084, %v1054
      %v1094 = vsel %vm1091, %v1085, %v1056
      %v1095 = vsel %vm1091, %v1086, %v1058
      %v1096 = vsel %vm1091, %v1087, %v1060
      %v1097 = vsel %vm1091, %v1088, %v1062
      %v1098 = vsel %vm1091, %v1089, %v1064
      %v1099 = vsel %vm1091, %v1090, %v1066
      %v1101 = vperm.slane %v962, 0
      %1103 = vmatpush.msra.mxu0 %v913
      %1104 = vmatpush.msra.mxu0 %v912
      %1105 = vmatpush.msra.mxu0 %v911
      %1106 = vmatpush.msra.mxu0 %v910
      %1107 = vmatpush.msra.mxu0 %v909
      %1108 = vmatpush.msra.mxu0 %v908
      %1109 = vmatpush.msra.mxu0 %v907
      %1110 = vmatpush.msra.mxu0 %v906
      %1111 = vmatpush.msra.mxu0 %v905
      %1112 = vmatpush.msra.mxu0 %v904
      %1113 = vmatpush.msra.mxu0 %v903
      %1114 = vmatpush.msra.mxu0 %v902
      %1115 = vmatpush.msra.mxu0 %v901
      %1116 = vmatpush.msra.mxu0 %v900
      %1117 = vmatpush.msra.mxu0 %v899
      %1118 = vmatpush.msra.mxu0 %v898
      %1119 = vmatmul.f32.gmra.mxu0 %v1092
      %v1120 = vpop.f32.mrf.mxu0
      %v1121 = vadd.f32 %v1101, %v1120
      %1122 = vmatmul.f32.gmra.mxu0 %v1093
      %v1123 = vpop.f32.mrf.mxu0
      %v1124 = vadd.f32 %v1101, %v1123
      %1125 = vmatmul.f32.gmra.mxu0 %v1094
      %v1126 = vpop.f32.mrf.mxu0
      %v1127 = vadd.f32 %v1101, %v1126
      %1128 = vmatmul.f32.gmra.mxu0 %v1095
      %v1129 = vpop.f32.mrf.mxu0
      %v1130 = vadd.f32 %v1101, %v1129
      %1131 = vmatmul.f32.gmra.mxu0 %v1096
      %v1132 = vpop.f32.mrf.mxu0
      %v1133 = vadd.f32 %v1101, %v1132
      %1134 = vmatmul.f32.gmra.mxu0 %v1097
      %v1135 = vpop.f32.mrf.mxu0
      %v1136 = vadd.f32 %v1101, %v1135
      %1137 = vmatmul.f32.gmra.mxu0 %v1098
      %v1138 = vpop.f32.mrf.mxu0
      %v1139 = vadd.f32 %v1101, %v1138
      %1140 = vmatmul.f32.gmra.mxu0 %v1099
      %v1141 = vpop.f32.mrf.mxu0
      %v1142 = vadd.f32 %v1101, %v1141
      %1143 = vdwg.mxu0
      %1144 = vrot.lane.b32.xlu0 %v459, 32
      %v1145 = vpop.permute.xlu0 %1144
      %1146 = vrot.lane.b32.xlu0 %v978, 32
      %v1147 = vpop.permute.xlu0 %1146
      %1148 = vrot.lane.b32.xlu0 %v981, 32
      %v1149 = vpop.permute.xlu0 %1148
      %1150 = vrot.lane.b32.xlu0 %v984, 32
      %v1151 = vpop.permute.xlu0 %1150
      %1152 = vrot.lane.b32.xlu0 %v987, 32
      %v1153 = vpop.permute.xlu0 %1152
      %1154 = vrot.lane.b32.xlu0 %v990, 32
      %v1155 = vpop.permute.xlu0 %1154
      %1156 = vrot.lane.b32.xlu0 %v993, 32
      %v1157 = vpop.permute.xlu0 %1156
      %1158 = vrot.lane.b32.xlu0 %v996, 32
      %v1159 = vpop.permute.xlu0 %1158
      %1168 = vrot.lane.b32.xlu0 %v890, 64
      %v1169 = vpop.permute.xlu0 %1168
      %1170 = vrot.lane.b32.xlu0 %v891, 64
      %v1171 = vpop.permute.xlu0 %1170
      %1172 = vrot.lane.b32.xlu0 %v892, 64
      %v1173 = vpop.permute.xlu0 %1172
      %1174 = vrot.lane.b32.xlu0 %v893, 64
      %v1175 = vpop.permute.xlu0 %1174
      %1176 = vrot.lane.b32.xlu0 %v894, 64
      %v1177 = vpop.permute.xlu0 %1176
      %1178 = vrot.lane.b32.xlu0 %v895, 64
      %v1179 = vpop.permute.xlu0 %1178
      %1180 = vrot.lane.b32.xlu0 %v896, 64
      %v1181 = vpop.permute.xlu0 %1180
      %1182 = vrot.lane.b32.xlu0 %v897, 64
      %v1183 = vpop.permute.xlu0 %1182
      %1192 = vrot.lane.b32.xlu0 %v978, 96
      %v1193 = vpop.permute.xlu0 %1192
      %1194 = vrot.lane.b32.xlu0 %v981, 96
      %v1195 = vpop.permute.xlu0 %1194
      %1196 = vrot.lane.b32.xlu0 %v984, 96
      %v1197 = vpop.permute.xlu0 %1196
      %1198 = vrot.lane.b32.xlu0 %v987, 96
      %v1199 = vpop.permute.xlu0 %1198
      %1200 = vrot.lane.b32.xlu0 %v990, 96
      %v1201 = vpop.permute.xlu0 %1200
      %1202 = vrot.lane.b32.xlu0 %v993, 96
      %v1203 = vpop.permute.xlu0 %1202
      %1204 = vrot.lane.b32.xlu0 %v996, 96
      %v1205 = vpop.permute.xlu0 %1204
      %1206 = vrot.lane.b32.xlu0 %v1049, 96
      %v1207 = vpop.permute.xlu0 %1206
      %v1216 = vsel %vm734, %v432, %v1145
      %v1217 = vsel %vm734, %v890, %v1147
      %v1218 = vsel %vm734, %v891, %v1149
      %v1219 = vsel %vm734, %v892, %v1151
      %v1220 = vsel %vm734, %v893, %v1153
      %v1221 = vsel %vm734, %v894, %v1155
      %v1222 = vsel %vm734, %v895, %v1157
      %v1223 = vsel %vm734, %v896, %v1159
      %v1224 = vsel %vm770, %v1216, %v1169
      %v1225 = vsel %vm770, %v1217, %v1171
      %v1226 = vsel %vm770, %v1218, %v1173
      %v1227 = vsel %vm770, %v1219, %v1175
      %v1228 = vsel %vm770, %v1220, %v1177
      %v1229 = vsel %vm770, %v1221, %v1179
      %v1230 = vsel %vm770, %v1222, %v1181
      %v1231 = vsel %vm770, %v1223, %v1183
      %v1232 = vsel %vm1091, %v1224, %v1193
      %v1233 = vsel %vm1091, %v1225, %v1195
      %v1234 = vsel %vm1091, %v1226, %v1197
      %v1235 = vsel %vm1091, %v1227, %v1199
      %v1236 = vsel %vm1091, %v1228, %v1201
      %v1237 = vsel %vm1091, %v1229, %v1203
      %v1238 = vsel %vm1091, %v1230, %v1205
      %v1239 = vsel %vm1091, %v1231, %v1207
      %v1256 = vrot.slane %v1092, 1
      %v1257 = vrot.slane %v1232, 1
      %v1258 = vsel %vm457, %v1256, %v1257
      %v1259 = vrot.slane %v1093, 1
      %v1260 = vrot.slane %v1233, 1
      %v1261 = vsel %vm457, %v1259, %v1260
      %v1262 = vrot.slane %v1094, 1
      %v1263 = vrot.slane %v1234, 1
      %v1264 = vsel %vm457, %v1262, %v1263
      %v1265 = vrot.slane %v1095, 1
      %v1266 = vrot.slane %v1235, 1
      %v1267 = vsel %vm457, %v1265, %v1266
      %v1268 = vrot.slane %v1096, 1
      %v1269 = vrot.slane %v1236, 1
      %v1270 = vsel %vm457, %v1268, %v1269
      %v1271 = vrot.slane %v1097, 1
      %v1272 = vrot.slane %v1237, 1
      %v1273 = vsel %vm457, %v1271, %v1272
      %v1274 = vrot.slane %v1098, 1
      %v1275 = vrot.slane %v1238, 1
      %v1276 = vsel %vm457, %v1274, %v1275
      %v1277 = vrot.slane %v1099, 1
      %v1278 = vrot.slane %v1239, 1
      %v1279 = vsel %vm457, %v1277, %v1278
      %1288 = vmatpush.msra.mxu0 %v929
      %1289 = vmatpush.msra.mxu0 %v928
      %1290 = vmatpush.msra.mxu0 %v927
      %1291 = vmatpush.msra.mxu0 %v926
      %1292 = vmatpush.msra.mxu0 %v925
      %1293 = vmatpush.msra.mxu0 %v924
      %1294 = vmatpush.msra.mxu0 %v923
      %1295 = vmatpush.msra.mxu0 %v922
      %1296 = vmatpush.msra.mxu0 %v921
      %1297 = vmatpush.msra.mxu0 %v920
      %1298 = vmatpush.msra.mxu0 %v919
      %1299 = vmatpush.msra.mxu0 %v918
      %1300 = vmatpush.msra.mxu0 %v917
      %1301 = vmatpush.msra.mxu0 %v916
      %1302 = vmatpush.msra.mxu0 %v915
      %1303 = vmatpush.msra.mxu0 %v914
      %1304 = vmatmul.f32.gmra.mxu0 %v1258
      %v1305 = vpop.f32.mrf.mxu0
      %v1306 = vadd.f32 %v1101, %v1305
      %1307 = vmatmul.f32.gmra.mxu0 %v1261
      %v1308 = vpop.f32.mrf.mxu0
      %v1309 = vadd.f32 %v1101, %v1308
      %1310 = vmatmul.f32.gmra.mxu0 %v1264
      %v1311 = vpop.f32.mrf.mxu0
      %v1312 = vadd.f32 %v1101, %v1311
      %1313 = vmatmul.f32.gmra.mxu0 %v1267
      %v1314 = vpop.f32.mrf.mxu0
      %v1315 = vadd.f32 %v1101, %v1314
      %1316 = vmatmul.f32.gmra.mxu0 %v1270
      %v1317 = vpop.f32.mrf.mxu0
      %v1318 = vadd.f32 %v1101, %v1317
      %1319 = vmatmul.f32.gmra.mxu0 %v1273
      %v1320 = vpop.f32.mrf.mxu0
      %v1321 = vadd.f32 %v1101, %v1320
      %1322 = vmatmul.f32.gmra.mxu0 %v1276
      %v1323 = vpop.f32.mrf.mxu0
      %v1324 = vadd.f32 %v1101, %v1323
      %1325 = vmatmul.f32.gmra.mxu0 %v1279
      %v1326 = vpop.f32.mrf.mxu0
      %v1327 = vadd.f32 %v1101, %v1326
      %1328 = vdwg.mxu0
      %1329 = vrot.lane.b32.xlu0 %v1050, 32
      %v1330 = vpop.permute.xlu0 %1329
      %1332 = vrot.lane.b32.xlu0 %v423, 64
      %v1333 = vpop.permute.xlu0 %1332
      %1335 = vrot.lane.b32.xlu0 %v460, 96
      %v1336 = vpop.permute.xlu0 %1335
      %v1338 = vsel %vm734, %v889, %v1330
      %v1339 = vsel %vm770, %v1338, %v1333
      %v1340 = vsel %vm1091, %v1339, %v1336
      %1341 = vmatpush.msra.mxu0 %v945
      %1342 = vmatpush.msra.mxu0 %v944
      %1343 = vmatpush.msra.mxu0 %v943
      %1344 = vmatpush.msra.mxu0 %v942
      %1345 = vmatpush.msra.mxu0 %v941
      %1346 = vmatpush.msra.mxu0 %v940
      %1347 = vmatpush.msra.mxu0 %v939
      %1348 = vmatpush.msra.mxu0 %v938
      %1349 = vmatpush.msra.mxu0 %v937
      %1350 = vmatpush.msra.mxu0 %v936
      %1351 = vmatpush.msra.mxu0 %v935
      %1352 = vmatpush.msra.mxu0 %v934
      %1353 = vmatpush.msra.mxu0 %v933
      %1354 = vmatpush.msra.mxu0 %v932
      %1355 = vmatpush.msra.mxu0 %v931
      %1356 = vmatpush.msra.mxu0 %v930
      %1357 = vmatmul.f32.gmra.mxu0 %v1093
      %v1358 = vpop.f32.mrf.mxu0
      %v1359 = vadd.f32 %v1101, %v1358
      %1360 = vmatmul.f32.gmra.mxu0 %v1094
      %v1361 = vpop.f32.mrf.mxu0
      %v1362 = vadd.f32 %v1101, %v1361
      %1363 = vmatmul.f32.gmra.mxu0 %v1095
      %v1364 = vpop.f32.mrf.mxu0
      %v1365 = vadd.f32 %v1101, %v1364
      %1366 = vmatmul.f32.gmra.mxu0 %v1096
      %v1367 = vpop.f32.mrf.mxu0
      %v1368 = vadd.f32 %v1101, %v1367
      %1369 = vmatmul.f32.gmra.mxu0 %v1097
      %v1370 = vpop.f32.mrf.mxu0
      %v1371 = vadd.f32 %v1101, %v1370
      %1372 = vmatmul.f32.gmra.mxu0 %v1098
      %v1373 = vpop.f32.mrf.mxu0
      %v1374 = vadd.f32 %v1101, %v1373
      %1375 = vmatmul.f32.gmra.mxu0 %v1099
      %v1376 = vpop.f32.mrf.mxu0
      %v1377 = vadd.f32 %v1101, %v1376
      %1378 = vmatmul.f32.gmra.mxu0 %v1340
      %v1379 = vpop.f32.mrf.mxu0
      %v1380 = vadd.f32 %v1101, %v1379
      %1381 = vdwg.mxu0
      %1382 = vrot.lane.b32.xlu0 %v1049, 32
      %v1383 = vpop.permute.xlu0 %1382
      %1385 = vrot.lane.b32.xlu0 %v432, 64
      %v1386 = vpop.permute.xlu0 %1385
      %1388 = vrot.lane.b32.xlu0 %v459, 96
      %v1389 = vpop.permute.xlu0 %1388
      %v1391 = vsel %vm734, %v897, %v1383
      %v1392 = vsel %vm770, %v1391, %v1386
      %v1393 = vsel %vm1091, %v1392, %v1389
      %v1396 = vrot.slane %v1340, 1
      %v1397 = vrot.slane %v1393, 1
      %v1398 = vsel %vm457, %v1396, %v1397
      %1400 = vmatpush.msra.mxu0 %v961
      %1401 = vmatpush.msra.mxu0 %v960
      %1402 = vmatpush.msra.mxu0 %v959
      %1403 = vmatpush.msra.mxu0 %v958
      %1404 = vmatpush.msra.mxu0 %v957
      %1405 = vmatpush.msra.mxu0 %v956
      %1406 = vmatpush.msra.mxu0 %v955
      %1407 = vmatpush.msra.mxu0 %v954
      %1408 = vmatpush.msra.mxu0 %v953
      %1409 = vmatpush.msra.mxu0 %v952
      %1410 = vmatpush.msra.mxu0 %v951
      %1411 = vmatpush.msra.mxu0 %v950
      %1412 = vmatpush.msra.mxu0 %v949
      %1413 = vmatpush.msra.mxu0 %v948
      %1414 = vmatpush.msra.mxu0 %v947
      %1415 = vmatpush.msra.mxu0 %v946
      %1416 = vmatmul.f32.gmra.mxu0 %v1261
      %v1417 = vpop.f32.mrf.mxu0
      %v1418 = vadd.f32 %v1101, %v1417
      %1419 = vmatmul.f32.gmra.mxu0 %v1264
      %v1420 = vpop.f32.mrf.mxu0
      %v1421 = vadd.f32 %v1101, %v1420
      %1422 = vmatmul.f32.gmra.mxu0 %v1267
      %v1423 = vpop.f32.mrf.mxu0
      %v1424 = vadd.f32 %v1101, %v1423
      %1425 = vmatmul.f32.gmra.mxu0 %v1270
      %v1426 = vpop.f32.mrf.mxu0
      %v1427 = vadd.f32 %v1101, %v1426
      %1428 = vmatmul.f32.gmra.mxu0 %v1273
      %v1429 = vpop.f32.mrf.mxu0
      %v1430 = vadd.f32 %v1101, %v1429
      %1431 = vmatmul.f32.gmra.mxu0 %v1276
      %v1432 = vpop.f32.mrf.mxu0
      %v1433 = vadd.f32 %v1101, %v1432
      %1434 = vmatmul.f32.gmra.mxu0 %v1279
      %v1435 = vpop.f32.mrf.mxu0
      %v1436 = vadd.f32 %v1101, %v1435
      %1437 = vmatmul.f32.gmra.mxu0 %v1398
      %v1438 = vpop.f32.mrf.mxu0
      %v1439 = vadd.f32 %v1101, %v1438
      %1440 = vdwg.mxu0
      %v1449 = vrot.slane %v1121, 1
      %v1450 = vrot.slane %v1121, 2
      %v1451 = vrot.slane %v1121, 3
      %v1452 = vrot.slane %v1121, 4
      %v1453 = vrot.slane %v1121, 5
      %v1454 = vrot.slane %v1121, 6
      %v1455 = vrot.slane %v1121, 7
      %v1456 = vrot.slane %v1124, 1
      %v1457 = vrot.slane %v1124, 2
      %v1458 = vrot.slane %v1124, 3
      %v1459 = vrot.slane %v1124, 4
      %v1460 = vrot.slane %v1124, 5
      %v1461 = vrot.slane %v1124, 6
      %v1462 = vrot.slane %v1124, 7
      %v1463 = vrot.slane %v1127, 1
      %v1464 = vrot.slane %v1127, 2
      %v1465 = vrot.slane %v1127, 3
      %v1466 = vrot.slane %v1127, 4
      %v1467 = vrot.slane %v1127, 5
      %v1468 = vrot.slane %v1127, 6
      %v1469 = vrot.slane %v1127, 7
      %v1470 = vrot.slane %v1130, 1
      %v1471 = vrot.slane %v1130, 2
      %v1472 = vrot.slane %v1130, 3
      %v1473 = vrot.slane %v1130, 4
      %v1474 = vrot.slane %v1130, 5
      %v1475 = vrot.slane %v1130, 6
      %v1476 = vrot.slane %v1130, 7
      %v1477 = vrot.slane %v1133, 1
      %v1478 = vrot.slane %v1133, 2
      %v1479 = vrot.slane %v1133, 3
      %v1480 = vrot.slane %v1133, 4
      %v1481 = vrot.slane %v1133, 5
      %v1482 = vrot.slane %v1133, 6
      %v1483 = vrot.slane %v1133, 7
      %v1484 = vrot.slane %v1136, 1
      %v1485 = vrot.slane %v1136, 2
      %v1486 = vrot.slane %v1136, 3
      %v1487 = vrot.slane %v1136, 4
      %v1488 = vrot.slane %v1136, 5
      %v1489 = vrot.slane %v1136, 6
      %v1490 = vrot.slane %v1136, 7
      %v1491 = vrot.slane %v1139, 1
      %v1492 = vrot.slane %v1139, 2
      %v1493 = vrot.slane %v1139, 3
      %v1494 = vrot.slane %v1139, 4
      %v1495 = vrot.slane %v1139, 5
      %v1496 = vrot.slane %v1139, 6
      %v1497 = vrot.slane %v1139, 7
      %v1498 = vrot.slane %v1142, 1
      %v1499 = vrot.slane %v1142, 2
      %v1500 = vrot.slane %v1142, 3
      %v1501 = vrot.slane %v1142, 4
      %v1502 = vrot.slane %v1142, 5
      %v1503 = vrot.slane %v1142, 6
      %v1504 = vrot.slane %v1142, 7
      %v1505 = vperm.slane %v1121, 0
      %v1506 = vperm.slane %v1449, 0
      %v1507 = vperm.slane %v1450, 0
      %v1508 = vperm.slane %v1451, 0
      %v1509 = vperm.slane %v1452, 0
      %v1510 = vperm.slane %v1453, 0
      %v1511 = vperm.slane %v1454, 0
      %v1512 = vperm.slane %v1455, 0
      %v1513 = vperm.slane %v1124, 0
      %v1514 = vperm.slane %v1456, 0
      %v1515 = vperm.slane %v1457, 0
      %v1516 = vperm.slane %v1458, 0
      %v1517 = vperm.slane %v1459, 0
      %v1518 = vperm.slane %v1460, 0
      %v1519 = vperm.slane %v1461, 0
      %v1520 = vperm.slane %v1462, 0
      %v1521 = vperm.slane %v1127, 0
      %v1522 = vperm.slane %v1463, 0
      %v1523 = vperm.slane %v1464, 0
      %v1524 = vperm.slane %v1465, 0
      %v1525 = vperm.slane %v1466, 0
      %v1526 = vperm.slane %v1467, 0
      %v1527 = vperm.slane %v1468, 0
      %v1528 = vperm.slane %v1469, 0
      %v1529 = vperm.slane %v1130, 0
      %v1530 = vperm.slane %v1470, 0
      %v1531 = vperm.slane %v1471, 0
      %v1532 = vperm.slane %v1472, 0
      %v1533 = vperm.slane %v1473, 0
      %v1534 = vperm.slane %v1474, 0
      %v1535 = vperm.slane %v1475, 0
      %v1536 = vperm.slane %v1476, 0
      %v1537 = vperm.slane %v1133, 0
      %v1538 = vperm.slane %v1477, 0
      %v1539 = vperm.slane %v1478, 0
      %v1540 = vperm.slane %v1479, 0
      %v1541 = vperm.slane %v1480, 0
      %v1542 = vperm.slane %v1481, 0
      %v1543 = vperm.slane %v1482, 0
      %v1544 = vperm.slane %v1483, 0
      %v1545 = vperm.slane %v1136, 0
      %v1546 = vperm.slane %v1484, 0
      %v1547 = vperm.slane %v1485, 0
      %v1548 = vperm.slane %v1486, 0
      %v1549 = vperm.slane %v1487, 0
      %v1550 = vperm.slane %v1488, 0
      %v1551 = vperm.slane %v1489, 0
      %v1552 = vperm.slane %v1490, 0
      %v1553 = vperm.slane %v1139, 0
      %v1554 = vperm.slane %v1491, 0
      %v1555 = vperm.slane %v1492, 0
      %v1556 = vperm.slane %v1493, 0
      %v1557 = vperm.slane %v1494, 0
      %v1558 = vperm.slane %v1495, 0
      %v1559 = vperm.slane %v1496, 0
      %v1560 = vperm.slane %v1497, 0
      %v1561 = vperm.slane %v1142, 0
      %v1562 = vperm.slane %v1498, 0
      %v1563 = vperm.slane %v1499, 0
      %v1564 = vperm.slane %v1500, 0
      %v1565 = vperm.slane %v1501, 0
      %v1566 = vperm.slane %v1502, 0
      %v1567 = vperm.slane %v1503, 0
      %v1568 = vperm.slane %v1504, 0
      %v1577 = vrot.slane %v1306, 1
      %v1578 = vrot.slane %v1306, 2
      %v1579 = vrot.slane %v1306, 3
      %v1580 = vrot.slane %v1306, 4
      %v1581 = vrot.slane %v1306, 5
      %v1582 = vrot.slane %v1306, 6
      %v1583 = vrot.slane %v1306, 7
      %v1584 = vrot.slane %v1309, 1
      %v1585 = vrot.slane %v1309, 2
      %v1586 = vrot.slane %v1309, 3
      %v1587 = vrot.slane %v1309, 4
      %v1588 = vrot.slane %v1309, 5
      %v1589 = vrot.slane %v1309, 6
      %v1590 = vrot.slane %v1309, 7
      %v1591 = vrot.slane %v1312, 1
      %v1592 = vrot.slane %v1312, 2
      %v1593 = vrot.slane %v1312, 3
      %v1594 = vrot.slane %v1312, 4
      %v1595 = vrot.slane %v1312, 5
      %v1596 = vrot.slane %v1312, 6
      %v1597 = vrot.slane %v1312, 7
      %v1598 = vrot.slane %v1315, 1
      %v1599 = vrot.slane %v1315, 2
      %v1600 = vrot.slane %v1315, 3
      %v1601 = vrot.slane %v1315, 4
      %v1602 = vrot.slane %v1315, 5
      %v1603 = vrot.slane %v1315, 6
      %v1604 = vrot.slane %v1315, 7
      %v1605 = vrot.slane %v1318, 1
      %v1606 = vrot.slane %v1318, 2
      %v1607 = vrot.slane %v1318, 3
      %v1608 = vrot.slane %v1318, 4
      %v1609 = vrot.slane %v1318, 5
      %v1610 = vrot.slane %v1318, 6
      %v1611 = vrot.slane %v1318, 7
      %v1612 = vrot.slane %v1321, 1
      %v1613 = vrot.slane %v1321, 2
      %v1614 = vrot.slane %v1321, 3
      %v1615 = vrot.slane %v1321, 4
      %v1616 = vrot.slane %v1321, 5
      %v1617 = vrot.slane %v1321, 6
      %v1618 = vrot.slane %v1321, 7
      %v1619 = vrot.slane %v1324, 1
      %v1620 = vrot.slane %v1324, 2
      %v1621 = vrot.slane %v1324, 3
      %v1622 = vrot.slane %v1324, 4
      %v1623 = vrot.slane %v1324, 5
      %v1624 = vrot.slane %v1324, 6
      %v1625 = vrot.slane %v1324, 7
      %v1626 = vrot.slane %v1327, 1
      %v1627 = vrot.slane %v1327, 2
      %v1628 = vrot.slane %v1327, 3
      %v1629 = vrot.slane %v1327, 4
      %v1630 = vrot.slane %v1327, 5
      %v1631 = vrot.slane %v1327, 6
      %v1632 = vrot.slane %v1327, 7
      %v1633 = vperm.slane %v1306, 0
      %v1634 = vperm.slane %v1577, 0
      %v1635 = vperm.slane %v1578, 0
      %v1636 = vperm.slane %v1579, 0
      %v1637 = vperm.slane %v1580, 0
      %v1638 = vperm.slane %v1581, 0
      %v1639 = vperm.slane %v1582, 0
      %v1640 = vperm.slane %v1583, 0
      %v1641 = vperm.slane %v1309, 0
      %v1642 = vperm.slane %v1584, 0
      %v1643 = vperm.slane %v1585, 0
      %v1644 = vperm.slane %v1586, 0
      %v1645 = vperm.slane %v1587, 0
      %v1646 = vperm.slane %v1588, 0
      %v1647 = vperm.slane %v1589, 0
      %v1648 = vperm.slane %v1590, 0
      %v1649 = vperm.slane %v1312, 0
      %v1650 = vperm.slane %v1591, 0
      %v1651 = vperm.slane %v1592, 0
      %v1652 = vperm.slane %v1593, 0
      %v1653 = vperm.slane %v1594, 0
      %v1654 = vperm.slane %v1595, 0
      %v1655 = vperm.slane %v1596, 0
      %v1656 = vperm.slane %v1597, 0
      %v1657 = vperm.slane %v1315, 0
      %v1658 = vperm.slane %v1598, 0
      %v1659 = vperm.slane %v1599, 0
      %v1660 = vperm.slane %v1600, 0
      %v1661 = vperm.slane %v1601, 0
      %v1662 = vperm.slane %v1602, 0
      %v1663 = vperm.slane %v1603, 0
      %v1664 = vperm.slane %v1604, 0
      %v1665 = vperm.slane %v1318, 0
      %v1666 = vperm.slane %v1605, 0
      %v1667 = vperm.slane %v1606, 0
      %v1668 = vperm.slane %v1607, 0
      %v1669 = vperm.slane %v1608, 0
      %v1670 = vperm.slane %v1609, 0
      %v1671 = vperm.slane %v1610, 0
      %v1672 = vperm.slane %v1611, 0
      %v1673 = vperm.slane %v1321, 0
      %v1674 = vperm.slane %v1612, 0
      %v1675 = vperm.slane %v1613, 0
      %v1676 = vperm.slane %v1614, 0
      %v1677 = vperm.slane %v1615, 0
      %v1678 = vperm.slane %v1616, 0
      %v1679 = vperm.slane %v1617, 0
      %v1680 = vperm.slane %v1618, 0
      %v1681 = vperm.slane %v1324, 0
      %v1682 = vperm.slane %v1619, 0
      %v1683 = vperm.slane %v1620, 0
      %v1684 = vperm.slane %v1621, 0
      %v1685 = vperm.slane %v1622, 0
      %v1686 = vperm.slane %v1623, 0
      %v1687 = vperm.slane %v1624, 0
      %v1688 = vperm.slane %v1625, 0
      %v1689 = vperm.slane %v1327, 0
      %v1690 = vperm.slane %v1626, 0
      %v1691 = vperm.slane %v1627, 0
      %v1692 = vperm.slane %v1628, 0
      %v1693 = vperm.slane %v1629, 0
      %v1694 = vperm.slane %v1630, 0
      %v1695 = vperm.slane %v1631, 0
      %v1696 = vperm.slane %v1632, 0
      %v1697 = vlaneseq
      %v1698 = vshrl.u32 %v1697, 7
      %v1699 = vadd.s32 %v1698, 8
      %vm1700 = vcmp.lt.s32.totalorder %v1698, 0
      %v1701 = vsub.s32 0, %v1698
      %v1702 = vsel %vm1700, %v1701, %v1698
      %v1703 = vshrl.u32 %v1702, 1
      %v1704 = vand.u32 %v1702, 1
      %v1705 = vsub.s32 0, %v1704
      %v1706 = vsel %vm1700, %v1705, %v1704
      %vm1707 = vcmp.lt.s32.totalorder %v1699, 0
      %v1708 = vsub.s32 0, %v1699
      %v1709 = vsel %vm1707, %v1708, %v1699
      %v1710 = vshrl.u32 %v1709, 1
      %v1711 = vand.u32 %v1709, 1
      %v1712 = vsub.s32 0, %v1711
      %v1713 = vsel %vm1707, %v1712, %v1711
      %vm1714 = vcmp.ne.s32.totalorder %v1706, 0
      %vm1715 = vcmp.ne.s32.totalorder %v1713, 0
      %vm1716 = vcmp.lt.s32.totalorder %v1706, 0
      %vm1717 = vcmp.lt.s32.totalorder %v1713, 0
      %vm1718 = vmand %vm1716, %vm1714
      %vm1719 = vmand %vm1717, %vm1715
      %v1720 = vadd.s32 %v1706, 2
      %v1721 = vadd.s32 %v1713, 2
      %v1722 = vsel %vm1718, %v1720, %v1706
      %v1723 = vsel %vm1719, %v1721, %v1713
      %vm1724 = vcmp.eq.s32.totalorder %v1722, 0
      %vm1725 = vcmp.eq.s32.totalorder %v1723, 0
      %1726 = vst [vmem:[#allocation1] ss:$4 sm:$0xff] %v1505
      %s1727 = scalar_lea.vmem [#allocation1], 1
      %1728 = vst [vmem:[%s1727] ss:$4 sm:$0xff] %v1506
      %s1729 = scalar_lea.vmem [#allocation1], 2
      %1730 = vst [vmem:[%s1729] ss:$4 sm:$0xff] %v1507
      %s1731 = scalar_lea.vmem [#allocation1], 3
      %1732 = vst [vmem:[%s1731] ss:$4 sm:$0xff] %v1508
      %s1733 = scalar_lea.vmem [#allocation1], 32
      %1734 = vst [vmem:[%s1733] ss:$4 sm:$0xff] %v1509
      %s1735 = scalar_lea.vmem [#allocation1], 33
      %1736 = vst [vmem:[%s1735] ss:$4 sm:$0xff] %v1510
      %s1737 = scalar_lea.vmem [#allocation1], 34
      %1738 = vst [vmem:[%s1737] ss:$4 sm:$0xff] %v1511
      %s1739 = scalar_lea.vmem [#allocation1], 35
      %1740 = vst [vmem:[%s1739] ss:$4 sm:$0xff] %v1512
      %v1741 = vld.sshfl [vmem:[#allocation1] sm:$0xff pattern:$0x73625140]
      %v1742 = vld.sshfl [vmem:[#allocation1 + $0x20] sm:$0xff pattern:$0x73625140]
      %1743 = vst [vmem:[#allocation1] ss:$4 sm:$0xff] %v1513
      %1744 = vst [vmem:[%s1727] ss:$4 sm:$0xff] %v1514
      %1745 = vst [vmem:[%s1729] ss:$4 sm:$0xff] %v1515
      %1746 = vst [vmem:[%s1731] ss:$4 sm:$0xff] %v1516
      %1747 = vst [vmem:[%s1733] ss:$4 sm:$0xff] %v1517
      %1748 = vst [vmem:[%s1735] ss:$4 sm:$0xff] %v1518
      %1749 = vst [vmem:[%s1737] ss:$4 sm:$0xff] %v1519
      %1750 = vst [vmem:[%s1739] ss:$4 sm:$0xff] %v1520
      %v1751 = vld.sshfl [vmem:[#allocation1] sm:$0xff pattern:$0x73625140]
      %v1752 = vld.sshfl [vmem:[#allocation1 + $0x20] sm:$0xff pattern:$0x73625140]
      %1753 = vst [vmem:[#allocation1] ss:$4 sm:$0xff] %v1521
      %1754 = vst [vmem:[%s1727] ss:$4 sm:$0xff] %v1522
      %1755 = vst [vmem:[%s1729] ss:$4 sm:$0xff] %v1523
      %1756 = vst [vmem:[%s1731] ss:$4 sm:$0xff] %v1524
      %1757 = vst [vmem:[%s1733] ss:$4 sm:$0xff] %v1525
      %1758 = vst [vmem:[%s1735] ss:$4 sm:$0xff] %v1526
      %1759 = vst [vmem:[%s1737] ss:$4 sm:$0xff] %v1527
      %1760 = vst [vmem:[%s1739] ss:$4 sm:$0xff] %v1528
      %v1761 = vld.sshfl [vmem:[#allocation1] sm:$0xff pattern:$0x73625140]
      %v1762 = vld.sshfl [vmem:[#allocation1 + $0x20] sm:$0xff pattern:$0x73625140]
      %1763 = vst [vmem:[#allocation1] ss:$4 sm:$0xff] %v1529
      %1764 = vst [vmem:[%s1727] ss:$4 sm:$0xff] %v1530
      %1765 = vst [vmem:[%s1729] ss:$4 sm:$0xff] %v1531
      %1766 = vst [vmem:[%s1731] ss:$4 sm:$0xff] %v1532
      %1767 = vst [vmem:[%s1733] ss:$4 sm:$0xff] %v1533
      %1768 = vst [vmem:[%s1735] ss:$4 sm:$0xff] %v1534
      %1769 = vst [vmem:[%s1737] ss:$4 sm:$0xff] %v1535
      %1770 = vst [vmem:[%s1739] ss:$4 sm:$0xff] %v1536
      %v1771 = vld.sshfl [vmem:[#allocation1] sm:$0xff pattern:$0x73625140]
      %v1772 = vld.sshfl [vmem:[#allocation1 + $0x20] sm:$0xff pattern:$0x73625140]
      %1773 = vst [vmem:[#allocation1] ss:$4 sm:$0xff] %v1537
      %1774 = vst [vmem:[%s1727] ss:$4 sm:$0xff] %v1538
      %1775 = vst [vmem:[%s1729] ss:$4 sm:$0xff] %v1539
      %1776 = vst [vmem:[%s1731] ss:$4 sm:$0xff] %v1540
      %1777 = vst [vmem:[%s1733] ss:$4 sm:$0xff] %v1541
      %1778 = vst [vmem:[%s1735] ss:$4 sm:$0xff] %v1542
      %1779 = vst [vmem:[%s1737] ss:$4 sm:$0xff] %v1543
      %1780 = vst [vmem:[%s1739] ss:$4 sm:$0xff] %v1544
      %v1781 = vld.sshfl [vmem:[#allocation1] sm:$0xff pattern:$0x73625140]
      %v1782 = vld.sshfl [vmem:[#allocation1 + $0x20] sm:$0xff pattern:$0x73625140]
      %1783 = vst [vmem:[#allocation1] ss:$4 sm:$0xff] %v1545
      %1784 = vst [vmem:[%s1727] ss:$4 sm:$0xff] %v1546
      %1785 = vst [vmem:[%s1729] ss:$4 sm:$0xff] %v1547
      %1786 = vst [vmem:[%s1731] ss:$4 sm:$0xff] %v1548
      %1787 = vst [vmem:[%s1733] ss:$4 sm:$0xff] %v1549
      %1788 = vst [vmem:[%s1735] ss:$4 sm:$0xff] %v1550
      %1789 = vst [vmem:[%s1737] ss:$4 sm:$0xff] %v1551
      %1790 = vst [vmem:[%s1739] ss:$4 sm:$0xff] %v1552
      %v1791 = vld.sshfl [vmem:[#allocation1] sm:$0xff pattern:$0x73625140]
      %v1792 = vld.sshfl [vmem:[#allocation1 + $0x20] sm:$0xff pattern:$0x73625140]
      %1793 = vst [vmem:[#allocation1] ss:$4 sm:$0xff] %v1553
      %1794 = vst [vmem:[%s1727] ss:$4 sm:$0xff] %v1554
      %1795 = vst [vmem:[%s1729] ss:$4 sm:$0xff] %v1555
      %1796 = vst [vmem:[%s1731] ss:$4 sm:$0xff] %v1556
      %1797 = vst [vmem:[%s1733] ss:$4 sm:$0xff] %v1557
      %1798 = vst [vmem:[%s1735] ss:$4 sm:$0xff] %v1558
      %1799 = vst [vmem:[%s1737] ss:$4 sm:$0xff] %v1559
      %1800 = vst [vmem:[%s1739] ss:$4 sm:$0xff] %v1560
      %v1801 = vld.sshfl [vmem:[#allocation1] sm:$0xff pattern:$0x73625140]
      %v1802 = vld.sshfl [vmem:[#allocation1 + $0x20] sm:$0xff pattern:$0x73625140]
      %1803 = vst [vmem:[#allocation1] ss:$4 sm:$0xff] %v1561
      %1804 = vst [vmem:[%s1727] ss:$4 sm:$0xff] %v1562
      %1805 = vst [vmem:[%s1729] ss:$4 sm:$0xff] %v1563
      %1806 = vst [vmem:[%s1731] ss:$4 sm:$0xff] %v1564
      %1807 = vst [vmem:[%s1733] ss:$4 sm:$0xff] %v1565
      %1808 = vst [vmem:[%s1735] ss:$4 sm:$0xff] %v1566
      %1809 = vst [vmem:[%s1737] ss:$4 sm:$0xff] %v1567
      %1810 = vst [vmem:[%s1739] ss:$4 sm:$0xff] %v1568
      %v1811 = vld.sshfl [vmem:[#allocation1] sm:$0xff pattern:$0x73625140]
      %v1812 = vld.sshfl [vmem:[#allocation1 + $0x20] sm:$0xff pattern:$0x73625140]
      %1829 = vst [vmem:[#allocation1] ss:$4 sm:$0xff] %v1633
      %s1830 = scalar_lea.vmem [#allocation1], 1
      %1831 = vst [vmem:[%s1830] ss:$4 sm:$0xff] %v1634
      %s1832 = scalar_lea.vmem [#allocation1], 2
      %1833 = vst [vmem:[%s1832] ss:$4 sm:$0xff] %v1635
      %s1834 = scalar_lea.vmem [#allocation1], 3
      %1835 = vst [vmem:[%s1834] ss:$4 sm:$0xff] %v1636
      %s1836 = scalar_lea.vmem [#allocation1], 32
      %1837 = vst [vmem:[%s1836] ss:$4 sm:$0xff] %v1637
      %s1838 = scalar_lea.vmem [#allocation1], 33
      %1839 = vst [vmem:[%s1838] ss:$4 sm:$0xff] %v1638
      %s1840 = scalar_lea.vmem [#allocation1], 34
      %1841 = vst [vmem:[%s1840] ss:$4 sm:$0xff] %v1639
      %s1842 = scalar_lea.vmem [#allocation1], 35
      %1843 = vst [vmem:[%s1842] ss:$4 sm:$0xff] %v1640
      %v1844 = vld.sshfl [vmem:[#allocation1] sm:$0xff pattern:$0x73625140]
      %v1845 = vld.sshfl [vmem:[#allocation1 + $0x20] sm:$0xff pattern:$0x73625140]
      %1846 = vst [vmem:[#allocation1] ss:$4 sm:$0xff] %v1641
      %1847 = vst [vmem:[%s1830] ss:$4 sm:$0xff] %v1642
      %1848 = vst [vmem:[%s1832] ss:$4 sm:$0xff] %v1643
      %1849 = vst [vmem:[%s1834] ss:$4 sm:$0xff] %v1644
      %1850 = vst [vmem:[%s1836] ss:$4 sm:$0xff] %v1645
      %1851 = vst [vmem:[%s1838] ss:$4 sm:$0xff] %v1646
      %1852 = vst [vmem:[%s1840] ss:$4 sm:$0xff] %v1647
      %1853 = vst [vmem:[%s1842] ss:$4 sm:$0xff] %v1648
      %v1854 = vld.sshfl [vmem:[#allocation1] sm:$0xff pattern:$0x73625140]
      %v1855 = vld.sshfl [vmem:[#allocation1 + $0x20] sm:$0xff pattern:$0x73625140]
      %1856 = vst [vmem:[#allocation1] ss:$4 sm:$0xff] %v1649
      %1857 = vst [vmem:[%s1830] ss:$4 sm:$0xff] %v1650
      %1858 = vst [vmem:[%s1832] ss:$4 sm:$0xff] %v1651
      %1859 = vst [vmem:[%s1834] ss:$4 sm:$0xff] %v1652
      %1860 = vst [vmem:[%s1836] ss:$4 sm:$0xff] %v1653
      %1861 = vst [vmem:[%s1838] ss:$4 sm:$0xff] %v1654
      %1862 = vst [vmem:[%s1840] ss:$4 sm:$0xff] %v1655
      %1863 = vst [vmem:[%s1842] ss:$4 sm:$0xff] %v1656
      %v1864 = vld.sshfl [vmem:[#allocation1] sm:$0xff pattern:$0x73625140]
      %v1865 = vld.sshfl [vmem:[#allocation1 + $0x20] sm:$0xff pattern:$0x73625140]
      %1866 = vst [vmem:[#allocation1] ss:$4 sm:$0xff] %v1657
      %1867 = vst [vmem:[%s1830] ss:$4 sm:$0xff] %v1658
      %1868 = vst [vmem:[%s1832] ss:$4 sm:$0xff] %v1659
      %1869 = vst [vmem:[%s1834] ss:$4 sm:$0xff] %v1660
      %1870 = vst [vmem:[%s1836] ss:$4 sm:$0xff] %v1661
      %1871 = vst [vmem:[%s1838] ss:$4 sm:$0xff] %v1662
      %1872 = vst [vmem:[%s1840] ss:$4 sm:$0xff] %v1663
      %1873 = vst [vmem:[%s1842] ss:$4 sm:$0xff] %v1664
      %v1874 = vld.sshfl [vmem:[#allocation1] sm:$0xff pattern:$0x73625140]
      %v1875 = vld.sshfl [vmem:[#allocation1 + $0x20] sm:$0xff pattern:$0x73625140]
      %1876 = vst [vmem:[#allocation1] ss:$4 sm:$0xff] %v1665
      %1877 = vst [vmem:[%s1830] ss:$4 sm:$0xff] %v1666
      %1878 = vst [vmem:[%s1832] ss:$4 sm:$0xff] %v1667
      %1879 = vst [vmem:[%s1834] ss:$4 sm:$0xff] %v1668
      %1880 = vst [vmem:[%s1836] ss:$4 sm:$0xff] %v1669
      %1881 = vst [vmem:[%s1838] ss:$4 sm:$0xff] %v1670
      %1882 = vst [vmem:[%s1840] ss:$4 sm:$0xff] %v1671
      %1883 = vst [vmem:[%s1842] ss:$4 sm:$0xff] %v1672
      %v1884 = vld.sshfl [vmem:[#allocation1] sm:$0xff pattern:$0x73625140]
      %v1885 = vld.sshfl [vmem:[#allocation1 + $0x20] sm:$0xff pattern:$0x73625140]
      %1886 = vst [vmem:[#allocation1] ss:$4 sm:$0xff] %v1673
      %1887 = vst [vmem:[%s1830] ss:$4 sm:$0xff] %v1674
      %1888 = vst [vmem:[%s1832] ss:$4 sm:$0xff] %v1675
      %1889 = vst [vmem:[%s1834] ss:$4 sm:$0xff] %v1676
      %1890 = vst [vmem:[%s1836] ss:$4 sm:$0xff] %v1677
      %1891 = vst [vmem:[%s1838] ss:$4 sm:$0xff] %v1678
      %1892 = vst [vmem:[%s1840] ss:$4 sm:$0xff] %v1679
      %1893 = vst [vmem:[%s1842] ss:$4 sm:$0xff] %v1680
      %v1894 = vld.sshfl [vmem:[#allocation1] sm:$0xff pattern:$0x73625140]
      %v1895 = vld.sshfl [vmem:[#allocation1 + $0x20] sm:$0xff pattern:$0x73625140]
      %1896 = vst [vmem:[#allocation1] ss:$4 sm:$0xff] %v1681
      %1897 = vst [vmem:[%s1830] ss:$4 sm:$0xff] %v1682
      %1898 = vst [vmem:[%s1832] ss:$4 sm:$0xff] %v1683
      %1899 = vst [vmem:[%s1834] ss:$4 sm:$0xff] %v1684
      %1900 = vst [vmem:[%s1836] ss:$4 sm:$0xff] %v1685
      %1901 = vst [vmem:[%s1838] ss:$4 sm:$0xff] %v1686
      %1902 = vst [vmem:[%s1840] ss:$4 sm:$0xff] %v1687
      %1903 = vst [vmem:[%s1842] ss:$4 sm:$0xff] %v1688
      %v1904 = vld.sshfl [vmem:[#allocation1] sm:$0xff pattern:$0x73625140]
      %v1905 = vld.sshfl [vmem:[#allocation1 + $0x20] sm:$0xff pattern:$0x73625140]
      %1906 = vst [vmem:[#allocation1] ss:$4 sm:$0xff] %v1689
      %1907 = vst [vmem:[%s1830] ss:$4 sm:$0xff] %v1690
      %1908 = vst [vmem:[%s1832] ss:$4 sm:$0xff] %v1691
      %1909 = vst [vmem:[%s1834] ss:$4 sm:$0xff] %v1692
      %1910 = vst [vmem:[%s1836] ss:$4 sm:$0xff] %v1693
      %1911 = vst [vmem:[%s1838] ss:$4 sm:$0xff] %v1694
      %1912 = vst [vmem:[%s1840] ss:$4 sm:$0xff] %v1695
      %1913 = vst [vmem:[%s1842] ss:$4 sm:$0xff] %v1696
      %v1914 = vld.sshfl [vmem:[#allocation1] sm:$0xff pattern:$0x73625140]
      %v1915 = vld.sshfl [vmem:[#allocation1 + $0x20] sm:$0xff pattern:$0x73625140]
      %v1932 = vsel %vm1724, %v1741, %v1844
      %v1933 = vsel %vm1725, %v1742, %v1845
      %v1934 = vsel %vm1724, %v1751, %v1854
      %v1935 = vsel %vm1725, %v1752, %v1855
      %v1936 = vsel %vm1724, %v1761, %v1864
      %v1937 = vsel %vm1725, %v1762, %v1865
      %v1938 = vsel %vm1724, %v1771, %v1874
      %v1939 = vsel %vm1725, %v1772, %v1875
      %v1940 = vsel %vm1724, %v1781, %v1884
      %v1941 = vsel %vm1725, %v1782, %v1885
      %v1942 = vsel %vm1724, %v1791, %v1894
      %v1943 = vsel %vm1725, %v1792, %v1895
      %v1944 = vsel %vm1724, %v1801, %v1904
      %v1945 = vsel %vm1725, %v1802, %v1905
      %v1946 = vsel %vm1724, %v1811, %v1914
      %v1947 = vsel %vm1725, %v1812, %v1915
      %v1956 = vrot.slane %v1359, 1
      %v1957 = vrot.slane %v1359, 2
      %v1958 = vrot.slane %v1359, 3
      %v1959 = vrot.slane %v1359, 4
      %v1960 = vrot.slane %v1359, 5
      %v1961 = vrot.slane %v1359, 6
      %v1962 = vrot.slane %v1359, 7
      %v1963 = vrot.slane %v1362, 1
      %v1964 = vrot.slane %v1362, 2
      %v1965 = vrot.slane %v1362, 3
      %v1966 = vrot.slane %v1362, 4
      %v1967 = vrot.slane %v1362, 5
      %v1968 = vrot.slane %v1362, 6
      %v1969 = vrot.slane %v1362, 7
      %v1970 = vrot.slane %v1365, 1
      %v1971 = vrot.slane %v1365, 2
      %v1972 = vrot.slane %v1365, 3
      %v1973 = vrot.slane %v1365, 4
      %v1974 = vrot.slane %v1365, 5
      %v1975 = vrot.slane %v1365, 6
      %v1976 = vrot.slane %v1365, 7
      %v1977 = vrot.slane %v1368, 1
      %v1978 = vrot.slane %v1368, 2
      %v1979 = vrot.slane %v1368, 3
      %v1980 = vrot.slane %v1368, 4
      %v1981 = vrot.slane %v1368, 5
      %v1982 = vrot.slane %v1368, 6
      %v1983 = vrot.slane %v1368, 7
      %v1984 = vrot.slane %v1371, 1
      %v1985 = vrot.slane %v1371, 2
      %v1986 = vrot.slane %v1371, 3
      %v1987 = vrot.slane %v1371, 4
      %v1988 = vrot.slane %v1371, 5
      %v1989 = vrot.slane %v1371, 6
      %v1990 = vrot.slane %v1371, 7
      %v1991 = vrot.slane %v1374, 1
      %v1992 = vrot.slane %v1374, 2
      %v1993 = vrot.slane %v1374, 3
      %v1994 = vrot.slane %v1374, 4
      %v1995 = vrot.slane %v1374, 5
      %v1996 = vrot.slane %v1374, 6
      %v1997 = vrot.slane %v1374, 7
      %v1998 = vrot.slane %v1377, 1
      %v1999 = vrot.slane %v1377, 2
      %v2000 = vrot.slane %v1377, 3
      %v2001 = vrot.slane %v1377, 4
      %v2002 = vrot.slane %v1377, 5
      %v2003 = vrot.slane %v1377, 6
      %v2004 = vrot.slane %v1377, 7
      %v2005 = vrot.slane %v1380, 1
      %v2006 = vrot.slane %v1380, 2
      %v2007 = vrot.slane %v1380, 3
      %v2008 = vrot.slane %v1380, 4
      %v2009 = vrot.slane %v1380, 5
      %v2010 = vrot.slane %v1380, 6
      %v2011 = vrot.slane %v1380, 7
      %v2012 = vperm.slane %v1359, 0
      %v2013 = vperm.slane %v1956, 0
      %v2014 = vperm.slane %v1957, 0
      %v2015 = vperm.slane %v1958, 0
      %v2016 = vperm.slane %v1959, 0
      %v2017 = vperm.slane %v1960, 0
      %v2018 = vperm.slane %v1961, 0
      %v2019 = vperm.slane %v1962, 0
      %v2020 = vperm.slane %v1362, 0
      %v2021 = vperm.slane %v1963, 0
      %v2022 = vperm.slane %v1964, 0
      %v2023 = vperm.slane %v1965, 0
      %v2024 = vperm.slane %v1966, 0
      %v2025 = vperm.slane %v1967, 0
      %v2026 = vperm.slane %v1968, 0
      %v2027 = vperm.slane %v1969, 0
      %v2028 = vperm.slane %v1365, 0
      %v2029 = vperm.slane %v1970, 0
      %v2030 = vperm.slane %v1971, 0
      %v2031 = vperm.slane %v1972, 0
      %v2032 = vperm.slane %v1973, 0
      %v2033 = vperm.slane %v1974, 0
      %v2034 = vperm.slane %v1975, 0
      %v2035 = vperm.slane %v1976, 0
      %v2036 = vperm.slane %v1368, 0
      %v2037 = vperm.slane %v1977, 0
      %v2038 = vperm.slane %v1978, 0
      %v2039 = vperm.slane %v1979, 0
      %v2040 = vperm.slane %v1980, 0
      %v2041 = vperm.slane %v1981, 0
      %v2042 = vperm.slane %v1982, 0
      %v2043 = vperm.slane %v1983, 0
      %v2044 = vperm.slane %v1371, 0
      %v2045 = vperm.slane %v1984, 0
      %v2046 = vperm.slane %v1985, 0
      %v2047 = vperm.slane %v1986, 0
      %v2048 = vperm.slane %v1987, 0
      %v2049 = vperm.slane %v1988, 0
      %v2050 = vperm.slane %v1989, 0
      %v2051 = vperm.slane %v1990, 0
      %v2052 = vperm.slane %v1374, 0
      %v2053 = vperm.slane %v1991, 0
      %v2054 = vperm.slane %v1992, 0
      %v2055 = vperm.slane %v1993, 0
      %v2056 = vperm.slane %v1994, 0
      %v2057 = vperm.slane %v1995, 0
      %v2058 = vperm.slane %v1996, 0
      %v2059 = vperm.slane %v1997, 0
      %v2060 = vperm.slane %v1377, 0
      %v2061 = vperm.slane %v1998, 0
      %v2062 = vperm.slane %v1999, 0
      %v2063 = vperm.slane %v2000, 0
      %v2064 = vperm.slane %v2001, 0
      %v2065 = vperm.slane %v2002, 0
      %v2066 = vperm.slane %v2003, 0
      %v2067 = vperm.slane %v2004, 0
      %v2068 = vperm.slane %v1380, 0
      %v2069 = vperm.slane %v2005, 0
      %v2070 = vperm.slane %v2006, 0
      %v2071 = vperm.slane %v2007, 0
      %v2072 = vperm.slane %v2008, 0
      %v2073 = vperm.slane %v2009, 0
      %v2074 = vperm.slane %v2010, 0
      %v2075 = vperm.slane %v2011, 0
      %v2084 = vrot.slane %v1418, 1
      %v2085 = vrot.slane %v1418, 2
      %v2086 = vrot.slane %v1418, 3
      %v2087 = vrot.slane %v1418, 4
      %v2088 = vrot.slane %v1418, 5
      %v2089 = vrot.slane %v1418, 6
      %v2090 = vrot.slane %v1418, 7
      %v2091 = vrot.slane %v1421, 1
      %v2092 = vrot.slane %v1421, 2
      %v2093 = vrot.slane %v1421, 3
      %v2094 = vrot.slane %v1421, 4
      %v2095 = vrot.slane %v1421, 5
      %v2096 = vrot.slane %v1421, 6
      %v2097 = vrot.slane %v1421, 7
      %v2098 = vrot.slane %v1424, 1
      %v2099 = vrot.slane %v1424, 2
      %v2100 = vrot.slane %v1424, 3
      %v2101 = vrot.slane %v1424, 4
      %v2102 = vrot.slane %v1424, 5
      %v2103 = vrot.slane %v1424, 6
      %v2104 = vrot.slane %v1424, 7
      %v2105 = vrot.slane %v1427, 1
      %v2106 = vrot.slane %v1427, 2
      %v2107 = vrot.slane %v1427, 3
      %v2108 = vrot.slane %v1427, 4
      %v2109 = vrot.slane %v1427, 5
      %v2110 = vrot.slane %v1427, 6
      %v2111 = vrot.slane %v1427, 7
      %v2112 = vrot.slane %v1430, 1
      %v2113 = vrot.slane %v1430, 2
      %v2114 = vrot.slane %v1430, 3
      %v2115 = vrot.slane %v1430, 4
      %v2116 = vrot.slane %v1430, 5
      %v2117 = vrot.slane %v1430, 6
      %v2118 = vrot.slane %v1430, 7
      %v2119 = vrot.slane %v1433, 1
      %v2120 = vrot.slane %v1433, 2
      %v2121 = vrot.slane %v1433, 3
      %v2122 = vrot.slane %v1433, 4
      %v2123 = vrot.slane %v1433, 5
      %v2124 = vrot.slane %v1433, 6
      %v2125 = vrot.slane %v1433, 7
      %v2126 = vrot.slane %v1436, 1
      %v2127 = vrot.slane %v1436, 2
      %v2128 = vrot.slane %v1436, 3
      %v2129 = vrot.slane %v1436, 4
      %v2130 = vrot.slane %v1436, 5
      %v2131 = vrot.slane %v1436, 6
      %v2132 = vrot.slane %v1436, 7
      %v2133 = vrot.slane %v1439, 1
      %v2134 = vrot.slane %v1439, 2
      %v2135 = vrot.slane %v1439, 3
      %v2136 = vrot.slane %v1439, 4
      %v2137 = vrot.slane %v1439, 5
      %v2138 = vrot.slane %v1439, 6
      %v2139 = vrot.slane %v1439, 7
      %v2140 = vperm.slane %v1418, 0
      %v2141 = vperm.slane %v2084, 0
      %v2142 = vperm.slane %v2085, 0
      %v2143 = vperm.slane %v2086, 0
      %v2144 = vperm.slane %v2087, 0
      %v2145 = vperm.slane %v2088, 0
      %v2146 = vperm.slane %v2089, 0
      %v2147 = vperm.slane %v2090, 0
      %v2148 = vperm.slane %v1421, 0
      %v2149 = vperm.slane %v2091, 0
      %v2150 = vperm.slane %v2092, 0
      %v2151 = vperm.slane %v2093, 0
      %v2152 = vperm.slane %v2094, 0
      %v2153 = vperm.slane %v2095, 0
      %v2154 = vperm.slane %v2096, 0
      %v2155 = vperm.slane %v2097, 0
      %v2156 = vperm.slane %v1424, 0
      %v2157 = vperm.slane %v2098, 0
      %v2158 = vperm.slane %v2099, 0
      %v2159 = vperm.slane %v2100, 0
      %v2160 = vperm.slane %v2101, 0
      %v2161 = vperm.slane %v2102, 0
      %v2162 = vperm.slane %v2103, 0
      %v2163 = vperm.slane %v2104, 0
      %v2164 = vperm.slane %v1427, 0
      %v2165 = vperm.slane %v2105, 0
      %v2166 = vperm.slane %v2106, 0
      %v2167 = vperm.slane %v2107, 0
      %v2168 = vperm.slane %v2108, 0
      %v2169 = vperm.slane %v2109, 0
      %v2170 = vperm.slane %v2110, 0
      %v2171 = vperm.slane %v2111, 0
      %v2172 = vperm.slane %v1430, 0
      %v2173 = vperm.slane %v2112, 0
      %v2174 = vperm.slane %v2113, 0
      %v2175 = vperm.slane %v2114, 0
      %v2176 = vperm.slane %v2115, 0
      %v2177 = vperm.slane %v2116, 0
      %v2178 = vperm.slane %v2117, 0
      %v2179 = vperm.slane %v2118, 0
      %v2180 = vperm.slane %v1433, 0
      %v2181 = vperm.slane %v2119, 0
      %v2182 = vperm.slane %v2120, 0
      %v2183 = vperm.slane %v2121, 0
      %v2184 = vperm.slane %v2122, 0
      %v2185 = vperm.slane %v2123, 0
      %v2186 = vperm.slane %v2124, 0
      %v2187 = vperm.slane %v2125, 0
      %v2188 = vperm.slane %v1436, 0
      %v2189 = vperm.slane %v2126, 0
      %v2190 = vperm.slane %v2127, 0
      %v2191 = vperm.slane %v2128, 0
      %v2192 = vperm.slane %v2129, 0
      %v2193 = vperm.slane %v2130, 0
      %v2194 = vperm.slane %v2131, 0
      %v2195 = vperm.slane %v2132, 0
      %v2196 = vperm.slane %v1439, 0
      %v2197 = vperm.slane %v2133, 0
      %v2198 = vperm.slane %v2134, 0
      %v2199 = vperm.slane %v2135, 0
      %v2200 = vperm.slane %v2136, 0
      %v2201 = vperm.slane %v2137, 0
      %v2202 = vperm.slane %v2138, 0
      %v2203 = vperm.slane %v2139, 0
      %2204 = vst [vmem:[#allocation1] ss:$4 sm:$0xff] %v2012
      %s2205 = scalar_lea.vmem [#allocation1], 1
      %2206 = vst [vmem:[%s2205] ss:$4 sm:$0xff] %v2013
      %s2207 = scalar_lea.vmem [#allocation1], 2
      %2208 = vst [vmem:[%s2207] ss:$4 sm:$0xff] %v2014
      %s2209 = scalar_lea.vmem [#allocation1], 3
      %2210 = vst [vmem:[%s2209] ss:$4 sm:$0xff] %v2015
      %s2211 = scalar_lea.vmem [#allocation1], 32
      %2212 = vst [vmem:[%s2211] ss:$4 sm:$0xff] %v2016
      %s2213 = scalar_lea.vmem [#allocation1], 33
      %2214 = vst [vmem:[%s2213] ss:$4 sm:$0xff] %v2017
      %s2215 = scalar_lea.vmem [#allocation1], 34
      %2216 = vst [vmem:[%s2215] ss:$4 sm:$0xff] %v2018
      %s2217 = scalar_lea.vmem [#allocation1], 35
      %2218 = vst [vmem:[%s2217] ss:$4 sm:$0xff] %v2019
      %v2219 = vld.sshfl [vmem:[#allocation1] sm:$0xff pattern:$0x73625140]
      %v2220 = vld.sshfl [vmem:[#allocation1 + $0x20] sm:$0xff pattern:$0x73625140]
      %2221 = vst [vmem:[#allocation1] ss:$4 sm:$0xff] %v2020
      %2222 = vst [vmem:[%s2205] ss:$4 sm:$0xff] %v2021
      %2223 = vst [vmem:[%s2207] ss:$4 sm:$0xff] %v2022
      %2224 = vst [vmem:[%s2209] ss:$4 sm:$0xff] %v2023
      %2225 = vst [vmem:[%s2211] ss:$4 sm:$0xff] %v2024
      %2226 = vst [vmem:[%s2213] ss:$4 sm:$0xff] %v2025
      %2227 = vst [vmem:[%s2215] ss:$4 sm:$0xff] %v2026
      %2228 = vst [vmem:[%s2217] ss:$4 sm:$0xff] %v2027
      %v2229 = vld.sshfl [vmem:[#allocation1] sm:$0xff pattern:$0x73625140]
      %v2230 = vld.sshfl [vmem:[#allocation1 + $0x20] sm:$0xff pattern:$0x73625140]
      %2231 = vst [vmem:[#allocation1] ss:$4 sm:$0xff] %v2028
      %2232 = vst [vmem:[%s2205] ss:$4 sm:$0xff] %v2029
      %2233 = vst [vmem:[%s2207] ss:$4 sm:$0xff] %v2030
      %2234 = vst [vmem:[%s2209] ss:$4 sm:$0xff] %v2031
      %2235 = vst [vmem:[%s2211] ss:$4 sm:$0xff] %v2032
      %2236 = vst [vmem:[%s2213] ss:$4 sm:$0xff] %v2033
      %2237 = vst [vmem:[%s2215] ss:$4 sm:$0xff] %v2034
      %2238 = vst [vmem:[%s2217] ss:$4 sm:$0xff] %v2035
      %v2239 = vld.sshfl [vmem:[#allocation1] sm:$0xff pattern:$0x73625140]
      %v2240 = vld.sshfl [vmem:[#allocation1 + $0x20] sm:$0xff pattern:$0x73625140]
      %2241 = vst [vmem:[#allocation1] ss:$4 sm:$0xff] %v2036
      %2242 = vst [vmem:[%s2205] ss:$4 sm:$0xff] %v2037
      %2243 = vst [vmem:[%s2207] ss:$4 sm:$0xff] %v2038
      %2244 = vst [vmem:[%s2209] ss:$4 sm:$0xff] %v2039
      %2245 = vst [vmem:[%s2211] ss:$4 sm:$0xff] %v2040
      %2246 = vst [vmem:[%s2213] ss:$4 sm:$0xff] %v2041
      %2247 = vst [vmem:[%s2215] ss:$4 sm:$0xff] %v2042
      %2248 = vst [vmem:[%s2217] ss:$4 sm:$0xff] %v2043
      %v2249 = vld.sshfl [vmem:[#allocation1] sm:$0xff pattern:$0x73625140]
      %v2250 = vld.sshfl [vmem:[#allocation1 + $0x20] sm:$0xff pattern:$0x73625140]
      %2251 = vst [vmem:[#allocation1] ss:$4 sm:$0xff] %v2044
      %2252 = vst [vmem:[%s2205] ss:$4 sm:$0xff] %v2045
      %2253 = vst [vmem:[%s2207] ss:$4 sm:$0xff] %v2046
      %2254 = vst [vmem:[%s2209] ss:$4 sm:$0xff] %v2047
      %2255 = vst [vmem:[%s2211] ss:$4 sm:$0xff] %v2048
      %2256 = vst [vmem:[%s2213] ss:$4 sm:$0xff] %v2049
      %2257 = vst [vmem:[%s2215] ss:$4 sm:$0xff] %v2050
      %2258 = vst [vmem:[%s2217] ss:$4 sm:$0xff] %v2051
      %v2259 = vld.sshfl [vmem:[#allocation1] sm:$0xff pattern:$0x73625140]
      %v2260 = vld.sshfl [vmem:[#allocation1 + $0x20] sm:$0xff pattern:$0x73625140]
      %2261 = vst [vmem:[#allocation1] ss:$4 sm:$0xff] %v2052
      %2262 = vst [vmem:[%s2205] ss:$4 sm:$0xff] %v2053
      %2263 = vst [vmem:[%s2207] ss:$4 sm:$0xff] %v2054
      %2264 = vst [vmem:[%s2209] ss:$4 sm:$0xff] %v2055
      %2265 = vst [vmem:[%s2211] ss:$4 sm:$0xff] %v2056
      %2266 = vst [vmem:[%s2213] ss:$4 sm:$0xff] %v2057
      %2267 = vst [vmem:[%s2215] ss:$4 sm:$0xff] %v2058
      %2268 = vst [vmem:[%s2217] ss:$4 sm:$0xff] %v2059
      %v2269 = vld.sshfl [vmem:[#allocation1] sm:$0xff pattern:$0x73625140]
      %v2270 = vld.sshfl [vmem:[#allocation1 + $0x20] sm:$0xff pattern:$0x73625140]
      %2271 = vst [vmem:[#allocation1] ss:$4 sm:$0xff] %v2060
      %2272 = vst [vmem:[%s2205] ss:$4 sm:$0xff] %v2061
      %2273 = vst [vmem:[%s2207] ss:$4 sm:$0xff] %v2062
      %2274 = vst [vmem:[%s2209] ss:$4 sm:$0xff] %v2063
      %2275 = vst [vmem:[%s2211] ss:$4 sm:$0xff] %v2064
      %2276 = vst [vmem:[%s2213] ss:$4 sm:$0xff] %v2065
      %2277 = vst [vmem:[%s2215] ss:$4 sm:$0xff] %v2066
      %2278 = vst [vmem:[%s2217] ss:$4 sm:$0xff] %v2067
      %v2279 = vld.sshfl [vmem:[#allocation1] sm:$0xff pattern:$0x73625140]
      %v2280 = vld.sshfl [vmem:[#allocation1 + $0x20] sm:$0xff pattern:$0x73625140]
      %2281 = vst [vmem:[#allocation1] ss:$4 sm:$0xff] %v2068
      %2282 = vst [vmem:[%s2205] ss:$4 sm:$0xff] %v2069
      %2283 = vst [vmem:[%s2207] ss:$4 sm:$0xff] %v2070
      %2284 = vst [vmem:[%s2209] ss:$4 sm:$0xff] %v2071
      %2285 = vst [vmem:[%s2211] ss:$4 sm:$0xff] %v2072
      %2286 = vst [vmem:[%s2213] ss:$4 sm:$0xff] %v2073
      %2287 = vst [vmem:[%s2215] ss:$4 sm:$0xff] %v2074
      %2288 = vst [vmem:[%s2217] ss:$4 sm:$0xff] %v2075
      %v2289 = vld.sshfl [vmem:[#allocation1] sm:$0xff pattern:$0x73625140]
      %v2290 = vld.sshfl [vmem:[#allocation1 + $0x20] sm:$0xff pattern:$0x73625140]
      %2307 = vst [vmem:[#allocation1] ss:$4 sm:$0xff] %v2140
      %s2308 = scalar_lea.vmem [#allocation1], 1
      %2309 = vst [vmem:[%s2308] ss:$4 sm:$0xff] %v2141
      %s2310 = scalar_lea.vmem [#allocation1], 2
      %2311 = vst [vmem:[%s2310] ss:$4 sm:$0xff] %v2142
      %s2312 = scalar_lea.vmem [#allocation1], 3
      %2313 = vst [vmem:[%s2312] ss:$4 sm:$0xff] %v2143
      %s2314 = scalar_lea.vmem [#allocation1], 32
      %2315 = vst [vmem:[%s2314] ss:$4 sm:$0xff] %v2144
      %s2316 = scalar_lea.vmem [#allocation1], 33
      %2317 = vst [vmem:[%s2316] ss:$4 sm:$0xff] %v2145
      %s2318 = scalar_lea.vmem [#allocation1], 34
      %2319 = vst [vmem:[%s2318] ss:$4 sm:$0xff] %v2146
      %s2320 = scalar_lea.vmem [#allocation1], 35
      %2321 = vst [vmem:[%s2320] ss:$4 sm:$0xff] %v2147
      %v2322 = vld.sshfl [vmem:[#allocation1] sm:$0xff pattern:$0x73625140]
      %v2323 = vld.sshfl [vmem:[#allocation1 + $0x20] sm:$0xff pattern:$0x73625140]
      %2324 = vst [vmem:[#allocation1] ss:$4 sm:$0xff] %v2148
      %2325 = vst [vmem:[%s2308] ss:$4 sm:$0xff] %v2149
      %2326 = vst [vmem:[%s2310] ss:$4 sm:$0xff] %v2150
      %2327 = vst [vmem:[%s2312] ss:$4 sm:$0xff] %v2151
      %2328 = vst [vmem:[%s2314] ss:$4 sm:$0xff] %v2152
      %2329 = vst [vmem:[%s2316] ss:$4 sm:$0xff] %v2153
      %2330 = vst [vmem:[%s2318] ss:$4 sm:$0xff] %v2154
      %2331 = vst [vmem:[%s2320] ss:$4 sm:$0xff] %v2155
      %v2332 = vld.sshfl [vmem:[#allocation1] sm:$0xff pattern:$0x73625140]
      %v2333 = vld.sshfl [vmem:[#allocation1 + $0x20] sm:$0xff pattern:$0x73625140]
      %2334 = vst [vmem:[#allocation1] ss:$4 sm:$0xff] %v2156
      %2335 = vst [vmem:[%s2308] ss:$4 sm:$0xff] %v2157
      %2336 = vst [vmem:[%s2310] ss:$4 sm:$0xff] %v2158
      %2337 = vst [vmem:[%s2312] ss:$4 sm:$0xff] %v2159
      %2338 = vst [vmem:[%s2314] ss:$4 sm:$0xff] %v2160
      %2339 = vst [vmem:[%s2316] ss:$4 sm:$0xff] %v2161
      %2340 = vst [vmem:[%s2318] ss:$4 sm:$0xff] %v2162
      %2341 = vst [vmem:[%s2320] ss:$4 sm:$0xff] %v2163
      %v2342 = vld.sshfl [vmem:[#allocation1] sm:$0xff pattern:$0x73625140]
      %v2343 = vld.sshfl [vmem:[#allocation1 + $0x20] sm:$0xff pattern:$0x73625140]
      %2344 = vst [vmem:[#allocation1] ss:$4 sm:$0xff] %v2164
      %2345 = vst [vmem:[%s2308] ss:$4 sm:$0xff] %v2165
      %2346 = vst [vmem:[%s2310] ss:$4 sm:$0xff] %v2166
      %2347 = vst [vmem:[%s2312] ss:$4 sm:$0xff] %v2167
      %2348 = vst [vmem:[%s2314] ss:$4 sm:$0xff] %v2168
      %2349 = vst [vmem:[%s2316] ss:$4 sm:$0xff] %v2169
      %2350 = vst [vmem:[%s2318] ss:$4 sm:$0xff] %v2170
      %2351 = vst [vmem:[%s2320] ss:$4 sm:$0xff] %v2171
      %v2352 = vld.sshfl [vmem:[#allocation1] sm:$0xff pattern:$0x73625140]
      %v2353 = vld.sshfl [vmem:[#allocation1 + $0x20] sm:$0xff pattern:$0x73625140]
      %2354 = vst [vmem:[#allocation1] ss:$4 sm:$0xff] %v2172
      %2355 = vst [vmem:[%s2308] ss:$4 sm:$0xff] %v2173
      %2356 = vst [vmem:[%s2310] ss:$4 sm:$0xff] %v2174
      %2357 = vst [vmem:[%s2312] ss:$4 sm:$0xff] %v2175
      %2358 = vst [vmem:[%s2314] ss:$4 sm:$0xff] %v2176
      %2359 = vst [vmem:[%s2316] ss:$4 sm:$0xff] %v2177
      %2360 = vst [vmem:[%s2318] ss:$4 sm:$0xff] %v2178
      %2361 = vst [vmem:[%s2320] ss:$4 sm:$0xff] %v2179
      %v2362 = vld.sshfl [vmem:[#allocation1] sm:$0xff pattern:$0x73625140]
      %v2363 = vld.sshfl [vmem:[#allocation1 + $0x20] sm:$0xff pattern:$0x73625140]
      %2364 = vst [vmem:[#allocation1] ss:$4 sm:$0xff] %v2180
      %2365 = vst [vmem:[%s2308] ss:$4 sm:$0xff] %v2181
      %2366 = vst [vmem:[%s2310] ss:$4 sm:$0xff] %v2182
      %2367 = vst [vmem:[%s2312] ss:$4 sm:$0xff] %v2183
      %2368 = vst [vmem:[%s2314] ss:$4 sm:$0xff] %v2184
      %2369 = vst [vmem:[%s2316] ss:$4 sm:$0xff] %v2185
      %2370 = vst [vmem:[%s2318] ss:$4 sm:$0xff] %v2186
      %2371 = vst [vmem:[%s2320] ss:$4 sm:$0xff] %v2187
      %v2372 = vld.sshfl [vmem:[#allocation1] sm:$0xff pattern:$0x73625140]
      %v2373 = vld.sshfl [vmem:[#allocation1 + $0x20] sm:$0xff pattern:$0x73625140]
      %2374 = vst [vmem:[#allocation1] ss:$4 sm:$0xff] %v2188
      %2375 = vst [vmem:[%s2308] ss:$4 sm:$0xff] %v2189
      %2376 = vst [vmem:[%s2310] ss:$4 sm:$0xff] %v2190
      %2377 = vst [vmem:[%s2312] ss:$4 sm:$0xff] %v2191
      %2378 = vst [vmem:[%s2314] ss:$4 sm:$0xff] %v2192
      %2379 = vst [vmem:[%s2316] ss:$4 sm:$0xff] %v2193
      %2380 = vst [vmem:[%s2318] ss:$4 sm:$0xff] %v2194
      %2381 = vst [vmem:[%s2320] ss:$4 sm:$0xff] %v2195
      %v2382 = vld.sshfl [vmem:[#allocation1] sm:$0xff pattern:$0x73625140]
      %v2383 = vld.sshfl [vmem:[#allocation1 + $0x20] sm:$0xff pattern:$0x73625140]
      %2384 = vst [vmem:[#allocation1] ss:$4 sm:$0xff] %v2196
      %2385 = vst [vmem:[%s2308] ss:$4 sm:$0xff] %v2197
      %2386 = vst [vmem:[%s2310] ss:$4 sm:$0xff] %v2198
      %2387 = vst [vmem:[%s2312] ss:$4 sm:$0xff] %v2199
      %2388 = vst [vmem:[%s2314] ss:$4 sm:$0xff] %v2200
      %2389 = vst [vmem:[%s2316] ss:$4 sm:$0xff] %v2201
      %2390 = vst [vmem:[%s2318] ss:$4 sm:$0xff] %v2202
      %2391 = vst [vmem:[%s2320] ss:$4 sm:$0xff] %v2203
      %v2392 = vld.sshfl [vmem:[#allocation1] sm:$0xff pattern:$0x73625140]
      %v2393 = vld.sshfl [vmem:[#allocation1 + $0x20] sm:$0xff pattern:$0x73625140]
      %v2410 = vsel %vm1724, %v2219, %v2322
      %v2411 = vsel %vm1725, %v2220, %v2323
      %v2412 = vsel %vm1724, %v2229, %v2332
      %v2413 = vsel %vm1725, %v2230, %v2333
      %v2414 = vsel %vm1724, %v2239, %v2342
      %v2415 = vsel %vm1725, %v2240, %v2343
      %v2416 = vsel %vm1724, %v2249, %v2352
      %v2417 = vsel %vm1725, %v2250, %v2353
      %v2418 = vsel %vm1724, %v2259, %v2362
      %v2419 = vsel %vm1725, %v2260, %v2363
      %v2420 = vsel %vm1724, %v2269, %v2372
      %v2421 = vsel %vm1725, %v2270, %v2373
      %v2422 = vsel %vm1724, %v2279, %v2382
      %v2423 = vsel %vm1725, %v2280, %v2383
      %v2424 = vsel %vm1724, %v2289, %v2392
      %v2425 = vsel %vm1725, %v2290, %v2393
      %v2426 = vsel 1, %v1932, %v2410
      %v2427 = vsel 1, %v1933, %v2411
      %v2428 = vsel 0, %v1932, %v2410
      %v2429 = vsel 0, %v1933, %v2411
      %v2430 = vsel 1, %v1934, %v2412
      %v2431 = vsel 1, %v1935, %v2413
      %v2432 = vsel 0, %v1934, %v2412
      %v2433 = vsel 0, %v1935, %v2413
      %v2434 = vsel 1, %v1936, %v2414
      %v2435 = vsel 1, %v1937, %v2415
      %v2436 = vsel 0, %v1936, %v2414
      %v2437 = vsel 0, %v1937, %v2415
      %v2438 = vsel 1, %v1938, %v2416
      %v2439 = vsel 1, %v1939, %v2417
      %v2440 = vsel 0, %v1938, %v2416
      %v2441 = vsel 0, %v1939, %v2417
      %v2442 = vsel 1, %v1940, %v2418
      %v2443 = vsel 1, %v1941, %v2419
      %v2444 = vsel 0, %v1940, %v2418
      %v2445 = vsel 0, %v1941, %v2419
      %v2446 = vsel 1, %v1942, %v2420
      %v2447 = vsel 1, %v1943, %v2421
      %v2448 = vsel 0, %v1942, %v2420
      %v2449 = vsel 0, %v1943, %v2421
      %v2450 = vsel 1, %v1944, %v2422
      %v2451 = vsel 1, %v1945, %v2423
      %v2452 = vsel 0, %v1944, %v2422
      %v2453 = vsel 0, %v1945, %v2423
      %v2454 = vsel 1, %v1946, %v2424
      %v2455 = vsel 1, %v1947, %v2425
      %v2456 = vsel 0, %v1946, %v2424
      %v2457 = vsel 0, %v1947, %v2425
      %v2458 = vld [vmem:[%s5] sm:$0xff]
      %v2459 = vld [vmem:[%s5 + $0x8] sm:$0xff]
      %v2460 = vld [vmem:[%s5 + $0x10] sm:$0xff]
      %v2461 = vld [vmem:[%s5 + $0x18] sm:$0xff]
      %v2462 = vld [vmem:[%s5 + $0x20] sm:$0xff]
      %v2463 = vld [vmem:[%s5 + $0x28] sm:$0xff]
      %v2464 = vld [vmem:[%s5 + $0x30] sm:$0xff]
      %v2465 = vld [vmem:[%s5 + $0x38] sm:$0xff]
      %v2466 = vld [vmem:[%s5 + $0x40] sm:$0xff]
      %v2467 = vld [vmem:[%s5 + $0x48] sm:$0xff]
      %v2468 = vld [vmem:[%s5 + $0x50] sm:$0xff]
      %v2469 = vld [vmem:[%s5 + $0x58] sm:$0xff]
      %v2470 = vld [vmem:[%s5 + $0x60] sm:$0xff]
      %v2471 = vld [vmem:[%s5 + $0x68] sm:$0xff]
      %v2472 = vld [vmem:[%s5 + $0x70] sm:$0xff]
      %v2473 = vld [vmem:[%s5 + $0x78] sm:$0xff]
      %v2474 = vld [vmem:[%s5 + $0x80] sm:$0xff]
      %v2475 = vld [vmem:[%s5 + $0x88] sm:$0xff]
      %v2476 = vld [vmem:[%s5 + $0x90] sm:$0xff]
      %v2477 = vld [vmem:[%s5 + $0x98] sm:$0xff]
      %v2478 = vld [vmem:[%s5 + $0xa0] sm:$0xff]
      %v2479 = vld [vmem:[%s5 + $0xa8] sm:$0xff]
      %v2480 = vld [vmem:[%s5 + $0xb0] sm:$0xff]
      %v2481 = vld [vmem:[%s5 + $0xb8] sm:$0xff]
      %v2482 = vld [vmem:[%s5 + $0xc0] sm:$0xff]
      %v2483 = vld [vmem:[%s5 + $0xc8] sm:$0xff]
      %v2484 = vld [vmem:[%s5 + $0xd0] sm:$0xff]
      %v2485 = vld [vmem:[%s5 + $0xd8] sm:$0xff]
      %v2486 = vld [vmem:[%s5 + $0xe0] sm:$0xff]
      %v2487 = vld [vmem:[%s5 + $0xe8] sm:$0xff]
      %v2488 = vld [vmem:[%s5 + $0xf0] sm:$0xff]
      %v2489 = vld [vmem:[%s5 + $0xf8] sm:$0xff]
      %v2490 = vld [vmem:[%s5 + $0x100] sm:$0xff]
      %v2491 = vld [vmem:[%s5 + $0x108] sm:$0xff]
      %v2492 = vld [vmem:[%s5 + $0x110] sm:$0xff]
      %v2493 = vld [vmem:[%s5 + $0x118] sm:$0xff]
      %v2494 = vld [vmem:[%s6] sm:$0x1]
      %v2495 = vld [vmem:[%s6 + $0x1] sm:$0x1]
      %v2496 = vld [vmem:[%s7] sm:$0xff]
      %v2497 = vld [vmem:[%s7 + $0x8] sm:$0xff]
      %v2498 = vld [vmem:[%s8] sm:$0x1]
      %v2499 = vld [vmem:[%s8 + $0x1] sm:$0x1]
      %v2500 = vmax.f32 %v2426, 0.0
      %v2501 = vmax.f32 %v2427, 0.0
      %v2502 = vmax.f32 %v2428, 0.0
      %v2503 = vmax.f32 %v2429, 0.0
      %v2504 = vmax.f32 %v2430, 0.0
      %v2505 = vmax.f32 %v2431, 0.0
      %v2506 = vmax.f32 %v2432, 0.0
      %v2507 = vmax.f32 %v2433, 0.0
      %v2508 = vmax.f32 %v2434, 0.0
      %v2509 = vmax.f32 %v2435, 0.0
      %v2510 = vmax.f32 %v2436, 0.0
      %v2511 = vmax.f32 %v2437, 0.0
      %v2512 = vmax.f32 %v2438, 0.0
      %v2513 = vmax.f32 %v2439, 0.0
      %v2514 = vmax.f32 %v2440, 0.0
      %v2515 = vmax.f32 %v2441, 0.0
      %v2516 = vmax.f32 %v2442, 0.0
      %v2517 = vmax.f32 %v2443, 0.0
      %v2518 = vmax.f32 %v2444, 0.0
      %v2519 = vmax.f32 %v2445, 0.0
      %v2520 = vmax.f32 %v2446, 0.0
      %v2521 = vmax.f32 %v2447, 0.0
      %v2522 = vmax.f32 %v2448, 0.0
      %v2523 = vmax.f32 %v2449, 0.0
      %v2524 = vmax.f32 %v2450, 0.0
      %v2525 = vmax.f32 %v2451, 0.0
      %v2526 = vmax.f32 %v2452, 0.0
      %v2527 = vmax.f32 %v2453, 0.0
      %v2528 = vmax.f32 %v2454, 0.0
      %v2529 = vmax.f32 %v2455, 0.0
      %v2530 = vmax.f32 %v2456, 0.0
      %v2531 = vmax.f32 %v2457, 0.0
      %v2564 = vsel %vm422, %v404, %v404
      %v2565 = vrot.slane %v2500, 7
      %v2566 = vrot.slane %v2501, 7
      %v2567 = vsel %vm422, %v2565, %v2566
      %v2568 = vrot.slane %v2502, 7
      %v2569 = vrot.slane %v2503, 7
      %v2570 = vsel %vm422, %v2568, %v2569
      %v2571 = vrot.slane %v2504, 7
      %v2572 = vrot.slane %v2505, 7
      %v2573 = vsel %vm422, %v2571, %v2572
      %v2574 = vrot.slane %v2506, 7
      %v2575 = vrot.slane %v2507, 7
      %v2576 = vsel %vm422, %v2574, %v2575
      %v2577 = vrot.slane %v2508, 7
      %v2578 = vrot.slane %v2509, 7
      %v2579 = vsel %vm422, %v2577, %v2578
      %v2580 = vrot.slane %v2510, 7
      %v2581 = vrot.slane %v2511, 7
      %v2582 = vsel %vm422, %v2580, %v2581
      %v2583 = vrot.slane %v2512, 7
      %v2584 = vrot.slane %v2513, 7
      %v2585 = vsel %vm422, %v2583, %v2584
      %v2586 = vrot.slane %v2514, 7
      %v2587 = vrot.slane %v2515, 7
      %v2588 = vsel %vm422, %v2586, %v2587
      %v2589 = vrot.slane %v2516, 7
      %v2590 = vrot.slane %v2517, 7
      %v2591 = vsel %vm422, %v2589, %v2590
      %v2592 = vrot.slane %v2518, 7
      %v2593 = vrot.slane %v2519, 7
      %v2594 = vsel %vm422, %v2592, %v2593
      %v2595 = vrot.slane %v2520, 7
      %v2596 = vrot.slane %v2521, 7
      %v2597 = vsel %vm422, %v2595, %v2596
      %v2598 = vrot.slane %v2522, 7
      %v2599 = vrot.slane %v2523, 7
      %v2600 = vsel %vm422, %v2598, %v2599
      %v2601 = vrot.slane %v2524, 7
      %v2602 = vrot.slane %v2525, 7
      %v2603 = vsel %vm422, %v2601, %v2602
      %v2604 = vrot.slane %v2526, 7
      %v2605 = vrot.slane %v2527, 7
      %v2606 = vsel %vm422, %v2604, %v2605
      %v2607 = vrot.slane %v2528, 7
      %v2608 = vrot.slane %v2529, 7
      %v2609 = vsel %vm422, %v2607, %v2608
      %v2610 = vrot.slane %v2530, 7
      %v2611 = vrot.slane %v2531, 7
      %v2612 = vsel %vm422, %v2610, %v2611
      %v2661 = vsel %vm422, 0.0, %v2565
      %v2662 = vsel %vm422, 0.0, %v2568
      %v2663 = vsel %vm422, 0.0, %v2571
      %v2664 = vsel %vm422, 0.0, %v2574
      %v2665 = vsel %vm422, 0.0, %v2577
      %v2666 = vsel %vm422, 0.0, %v2580
      %v2667 = vsel %vm422, 0.0, %v2583
      %v2668 = vsel %vm422, 0.0, %v2586
      %v2669 = vsel %vm422, 0.0, %v2589
      %v2670 = vsel %vm422, 0.0, %v2592
      %v2671 = vsel %vm422, 0.0, %v2595
      %v2672 = vsel %vm422, 0.0, %v2598
      %v2673 = vsel %vm422, 0.0, %v2601
      %v2674 = vsel %vm422, 0.0, %v2604
      %v2675 = vsel %vm422, 0.0, %v2607
      %v2676 = vsel %vm422, 0.0, %v2610
      %v2677 = vsel %vm422, %v2566, 0.0
      %v2678 = vsel %vm422, %v2569, 0.0
      %v2679 = vsel %vm422, %v2572, 0.0
      %v2680 = vsel %vm422, %v2575, 0.0
      %v2681 = vsel %vm422, %v2578, 0.0
      %v2682 = vsel %vm422, %v2581, 0.0
      %v2683 = vsel %vm422, %v2584, 0.0
      %v2684 = vsel %vm422, %v2587, 0.0
      %v2685 = vsel %vm422, %v2590, 0.0
      %v2686 = vsel %vm422, %v2593, 0.0
      %v2687 = vsel %vm422, %v2596, 0.0
      %v2688 = vsel %vm422, %v2599, 0.0
      %v2689 = vsel %vm422, %v2602, 0.0
      %v2690 = vsel %vm422, %v2605, 0.0
      %v2691 = vsel %vm422, %v2608, 0.0
      %v2692 = vsel %vm422, %v2611, 0.0
      %v2723 = vrot.slane %v2564, 1
      %v2724 = vsel %vm457, %v458, %v2723
      %v2725 = vsel %vm457, %v2723, %v459
      %v2726 = vrot.slane %v2661, 1
      %v2727 = vrot.slane %v2567, 1
      %v2728 = vsel %vm457, %v2726, %v2727
      %v2729 = vrot.slane %v2677, 1
      %v2730 = vsel %vm457, %v2727, %v2729
      %v2731 = vrot.slane %v2662, 1
      %v2732 = vrot.slane %v2570, 1
      %v2733 = vsel %vm457, %v2731, %v2732
      %v2734 = vrot.slane %v2678, 1
      %v2735 = vsel %vm457, %v2732, %v2734
      %v2736 = vrot.slane %v2663, 1
      %v2737 = vrot.slane %v2573, 1
      %v2738 = vsel %vm457, %v2736, %v2737
      %v2739 = vrot.slane %v2679, 1
      %v2740 = vsel %vm457, %v2737, %v2739
      %v2741 = vrot.slane %v2664, 1
      %v2742 = vrot.slane %v2576, 1
      %v2743 = vsel %vm457, %v2741, %v2742
      %v2744 = vrot.slane %v2680, 1
      %v2745 = vsel %vm457, %v2742, %v2744
      %v2746 = vrot.slane %v2665, 1
      %v2747 = vrot.slane %v2579, 1
      %v2748 = vsel %vm457, %v2746, %v2747
      %v2749 = vrot.slane %v2681, 1
      %v2750 = vsel %vm457, %v2747, %v2749
      %v2751 = vrot.slane %v2666, 1
      %v2752 = vrot.slane %v2582, 1
      %v2753 = vsel %vm457, %v2751, %v2752
      %v2754 = vrot.slane %v2682, 1
      %v2755 = vsel %vm457, %v2752, %v2754
      %v2756 = vrot.slane %v2667, 1
      %v2757 = vrot.slane %v2585, 1
      %v2758 = vsel %vm457, %v2756, %v2757
      %v2759 = vrot.slane %v2683, 1
      %v2760 = vsel %vm457, %v2757, %v2759
      %v2761 = vrot.slane %v2668, 1
      %v2762 = vrot.slane %v2588, 1
      %v2763 = vsel %vm457, %v2761, %v2762
      %v2764 = vrot.slane %v2684, 1
      %v2765 = vsel %vm457, %v2762, %v2764
      %v2766 = vrot.slane %v2669, 1
      %v2767 = vrot.slane %v2591, 1
      %v2768 = vsel %vm457, %v2766, %v2767
      %v2769 = vrot.slane %v2685, 1
      %v2770 = vsel %vm457, %v2767, %v2769
      %v2771 = vrot.slane %v2670, 1
      %v2772 = vrot.slane %v2594, 1
      %v2773 = vsel %vm457, %v2771, %v2772
      %v2774 = vrot.slane %v2686, 1
      %v2775 = vsel %vm457, %v2772, %v2774
      %v2776 = vrot.slane %v2671, 1
      %v2777 = vrot.slane %v2597, 1
      %v2778 = vsel %vm457, %v2776, %v2777
      %v2779 = vrot.slane %v2687, 1
      %v2780 = vsel %vm457, %v2777, %v2779
      %v2781 = vrot.slane %v2672, 1
      %v2782 = vrot.slane %v2600, 1
      %v2783 = vsel %vm457, %v2781, %v2782
      %v2784 = vrot.slane %v2688, 1
      %v2785 = vsel %vm457, %v2782, %v2784
      %v2786 = vrot.slane %v2673, 1
      %v2787 = vrot.slane %v2603, 1
      %v2788 = vsel %vm457, %v2786, %v2787
      %v2789 = vrot.slane %v2689, 1
      %v2790 = vsel %vm457, %v2787, %v2789
      %v2791 = vrot.slane %v2674, 1
      %v2792 = vrot.slane %v2606, 1
      %v2793 = vsel %vm457, %v2791, %v2792
      %v2794 = vrot.slane %v2690, 1
      %v2795 = vsel %vm457, %v2792, %v2794
      %v2796 = vrot.slane %v2675, 1
      %v2797 = vrot.slane %v2609, 1
      %v2798 = vsel %vm457, %v2796, %v2797
      %v2799 = vrot.slane %v2691, 1
      %v2800 = vsel %vm457, %v2797, %v2799
      %2801 = vrot.lane.b32.xlu0 %v2724, 16
      %v2802 = vpop.permute.xlu0 %2801
      %2803 = vrot.lane.b32.xlu0 %v2725, 16
      %v2804 = vpop.permute.xlu0 %2803
      %2805 = vrot.lane.b32.xlu0 %v2728, 16
      %v2806 = vpop.permute.xlu0 %2805
      %2807 = vrot.lane.b32.xlu0 %v2730, 16
      %v2808 = vpop.permute.xlu0 %2807
      %2809 = vrot.lane.b32.xlu0 %v2733, 16
      %v2810 = vpop.permute.xlu0 %2809
      %2811 = vrot.lane.b32.xlu0 %v2735, 16
      %v2812 = vpop.permute.xlu0 %2811
      %2813 = vrot.lane.b32.xlu0 %v2738, 16
      %v2814 = vpop.permute.xlu0 %2813
      %2815 = vrot.lane.b32.xlu0 %v2740, 16
      %v2816 = vpop.permute.xlu0 %2815
      %2817 = vrot.lane.b32.xlu0 %v2743, 16
      %v2818 = vpop.permute.xlu0 %2817
      %2819 = vrot.lane.b32.xlu0 %v2745, 16
      %v2820 = vpop.permute.xlu0 %2819
      %2821 = vrot.lane.b32.xlu0 %v2748, 16
      %v2822 = vpop.permute.xlu0 %2821
      %2823 = vrot.lane.b32.xlu0 %v2750, 16
      %v2824 = vpop.permute.xlu0 %2823
      %2825 = vrot.lane.b32.xlu0 %v2753, 16
      %v2826 = vpop.permute.xlu0 %2825
      %2827 = vrot.lane.b32.xlu0 %v2755, 16
      %v2828 = vpop.permute.xlu0 %2827
      %2829 = vrot.lane.b32.xlu0 %v2758, 16
      %v2830 = vpop.permute.xlu0 %2829
      %2831 = vrot.lane.b32.xlu0 %v2760, 16
      %v2832 = vpop.permute.xlu0 %2831
      %2833 = vrot.lane.b32.xlu0 %v2763, 16
      %v2834 = vpop.permute.xlu0 %2833
      %2835 = vrot.lane.b32.xlu0 %v2765, 16
      %v2836 = vpop.permute.xlu0 %2835
      %2837 = vrot.lane.b32.xlu0 %v2768, 16
      %v2838 = vpop.permute.xlu0 %2837
      %2839 = vrot.lane.b32.xlu0 %v2770, 16
      %v2840 = vpop.permute.xlu0 %2839
      %2841 = vrot.lane.b32.xlu0 %v2773, 16
      %v2842 = vpop.permute.xlu0 %2841
      %2843 = vrot.lane.b32.xlu0 %v2775, 16
      %v2844 = vpop.permute.xlu0 %2843
      %2845 = vrot.lane.b32.xlu0 %v2778, 16
      %v2846 = vpop.permute.xlu0 %2845
      %2847 = vrot.lane.b32.xlu0 %v2780, 16
      %v2848 = vpop.permute.xlu0 %2847
      %2849 = vrot.lane.b32.xlu0 %v2783, 16
      %v2850 = vpop.permute.xlu0 %2849
      %2851 = vrot.lane.b32.xlu0 %v2785, 16
      %v2852 = vpop.permute.xlu0 %2851
      %2853 = vrot.lane.b32.xlu0 %v2788, 16
      %v2854 = vpop.permute.xlu0 %2853
      %2855 = vrot.lane.b32.xlu0 %v2790, 16
      %v2856 = vpop.permute.xlu0 %2855
      %2857 = vrot.lane.b32.xlu0 %v2793, 16
      %v2858 = vpop.permute.xlu0 %2857
      %2859 = vrot.lane.b32.xlu0 %v2795, 16
      %v2860 = vpop.permute.xlu0 %2859
      %2861 = vrot.lane.b32.xlu0 %v2798, 16
      %v2862 = vpop.permute.xlu0 %2861
      %2863 = vrot.lane.b32.xlu0 %v2800, 16
      %v2864 = vpop.permute.xlu0 %2863
      %v2897 = vrot.slane %v2564, 2
      %v2898 = vsel %vm506, %v507, %v2897
      %v2899 = vsel %vm506, %v2897, %v508
      %v2900 = vrot.slane %v2661, 2
      %v2901 = vrot.slane %v2567, 2
      %v2902 = vsel %vm506, %v2900, %v2901
      %v2903 = vrot.slane %v2677, 2
      %v2904 = vsel %vm506, %v2901, %v2903
      %v2905 = vrot.slane %v2662, 2
      %v2906 = vrot.slane %v2570, 2
      %v2907 = vsel %vm506, %v2905, %v2906
      %v2908 = vrot.slane %v2678, 2
      %v2909 = vsel %vm506, %v2906, %v2908
      %v2910 = vrot.slane %v2663, 2
      %v2911 = vrot.slane %v2573, 2
      %v2912 = vsel %vm506, %v2910, %v2911
      %v2913 = vrot.slane %v2679, 2
      %v2914 = vsel %vm506, %v2911, %v2913
      %v2915 = vrot.slane %v2664, 2
      %v2916 = vrot.slane %v2576, 2
      %v2917 = vsel %vm506, %v2915, %v2916
      %v2918 = vrot.slane %v2680, 2
      %v2919 = vsel %vm506, %v2916, %v2918
      %v2920 = vrot.slane %v2665, 2
      %v2921 = vrot.slane %v2579, 2
      %v2922 = vsel %vm506, %v2920, %v2921
      %v2923 = vrot.slane %v2681, 2
      %v2924 = vsel %vm506, %v2921, %v2923
      %v2925 = vrot.slane %v2666, 2
      %v2926 = vrot.slane %v2582, 2
      %v2927 = vsel %vm506, %v2925, %v2926
      %v2928 = vrot.slane %v2682, 2
      %v2929 = vsel %vm506, %v2926, %v2928
      %v2930 = vrot.slane %v2667, 2
      %v2931 = vrot.slane %v2585, 2
      %v2932 = vsel %vm506, %v2930, %v2931
      %v2933 = vrot.slane %v2683, 2
      %v2934 = vsel %vm506, %v2931, %v2933
      %v2935 = vrot.slane %v2668, 2
      %v2936 = vrot.slane %v2588, 2
      %v2937 = vsel %vm506, %v2935, %v2936
      %v2938 = vrot.slane %v2684, 2
      %v2939 = vsel %vm506, %v2936, %v2938
      %v2940 = vrot.slane %v2669, 2
      %v2941 = vrot.slane %v2591, 2
      %v2942 = vsel %vm506, %v2940, %v2941
      %v2943 = vrot.slane %v2685, 2
      %v2944 = vsel %vm506, %v2941, %v2943
      %v2945 = vrot.slane %v2670, 2
      %v2946 = vrot.slane %v2594, 2
      %v2947 = vsel %vm506, %v2945, %v2946
      %v2948 = vrot.slane %v2686, 2
      %v2949 = vsel %vm506, %v2946, %v2948
      %v2950 = vrot.slane %v2671, 2
      %v2951 = vrot.slane %v2597, 2
      %v2952 = vsel %vm506, %v2950, %v2951
      %v2953 = vrot.slane %v2687, 2
      %v2954 = vsel %vm506, %v2951, %v2953
      %v2955 = vrot.slane %v2672, 2
      %v2956 = vrot.slane %v2600, 2
      %v2957 = vsel %vm506, %v2955, %v2956
      %v2958 = vrot.slane %v2688, 2
      %v2959 = vsel %vm506, %v2956, %v2958
      %v2960 = vrot.slane %v2673, 2
      %v2961 = vrot.slane %v2603, 2
      %v2962 = vsel %vm506, %v2960, %v2961
      %v2963 = vrot.slane %v2689, 2
      %v2964 = vsel %vm506, %v2961, %v2963
      %v2965 = vrot.slane %v2674, 2
      %v2966 = vrot.slane %v2606, 2
      %v2967 = vsel %vm506, %v2965, %v2966
      %v2968 = vrot.slane %v2690, 2
      %v2969 = vsel %vm506, %v2966, %v2968
      %v2970 = vrot.slane %v2675, 2
      %v2971 = vrot.slane %v2609, 2
      %v2972 = vsel %vm506, %v2970, %v2971
      %v2973 = vrot.slane %v2691, 2
      %v2974 = vsel %vm506, %v2971, %v2973
      %2975 = vrot.lane.b32.xlu0 %v2898, 32
      %v2976 = vpop.permute.xlu0 %2975
      %2977 = vrot.lane.b32.xlu0 %v2899, 32
      %v2978 = vpop.permute.xlu0 %2977
      %2979 = vrot.lane.b32.xlu0 %v2902, 32
      %v2980 = vpop.permute.xlu0 %2979
      %2981 = vrot.lane.b32.xlu0 %v2904, 32
      %v2982 = vpop.permute.xlu0 %2981
      %2983 = vrot.lane.b32.xlu0 %v2907, 32
      %v2984 = vpop.permute.xlu0 %2983
      %2985 = vrot.lane.b32.xlu0 %v2909, 32
      %v2986 = vpop.permute.xlu0 %2985
      %2987 = vrot.lane.b32.xlu0 %v2912, 32
      %v2988 = vpop.permute.xlu0 %2987
      %2989 = vrot.lane.b32.xlu0 %v2914, 32
      %v2990 = vpop.permute.xlu0 %2989
      %2991 = vrot.lane.b32.xlu0 %v2917, 32
      %v2992 = vpop.permute.xlu0 %2991
      %2993 = vrot.lane.b32.xlu0 %v2919, 32
      %v2994 = vpop.permute.xlu0 %2993
      %2995 = vrot.lane.b32.xlu0 %v2922, 32
      %v2996 = vpop.permute.xlu0 %2995
      %2997 = vrot.lane.b32.xlu0 %v2924, 32
      %v2998 = vpop.permute.xlu0 %2997
      %2999 = vrot.lane.b32.xlu0 %v2927, 32
      %v3000 = vpop.permute.xlu0 %2999
      %3001 = vrot.lane.b32.xlu0 %v2929, 32
      %v3002 = vpop.permute.xlu0 %3001
      %3003 = vrot.lane.b32.xlu0 %v2932, 32
      %v3004 = vpop.permute.xlu0 %3003
      %3005 = vrot.lane.b32.xlu0 %v2934, 32
      %v3006 = vpop.permute.xlu0 %3005
      %3007 = vrot.lane.b32.xlu0 %v2937, 32
      %v3008 = vpop.permute.xlu0 %3007
      %3009 = vrot.lane.b32.xlu0 %v2939, 32
      %v3010 = vpop.permute.xlu0 %3009
      %3011 = vrot.lane.b32.xlu0 %v2942, 32
      %v3012 = vpop.permute.xlu0 %3011
      %3013 = vrot.lane.b32.xlu0 %v2944, 32
      %v3014 = vpop.permute.xlu0 %3013
      %3015 = vrot.lane.b32.xlu0 %v2947, 32
      %v3016 = vpop.permute.xlu0 %3015
      %3017 = vrot.lane.b32.xlu0 %v2949, 32
      %v3018 = vpop.permute.xlu0 %3017
      %3019 = vrot.lane.b32.xlu0 %v2952, 32
      %v3020 = vpop.permute.xlu0 %3019
      %3021 = vrot.lane.b32.xlu0 %v2954, 32
      %v3022 = vpop.permute.xlu0 %3021
      %3023 = vrot.lane.b32.xlu0 %v2957, 32
      %v3024 = vpop.permute.xlu0 %3023
      %3025 = vrot.lane.b32.xlu0 %v2959, 32
      %v3026 = vpop.permute.xlu0 %3025
      %3027 = vrot.lane.b32.xlu0 %v2962, 32
      %v3028 = vpop.permute.xlu0 %3027
      %3029 = vrot.lane.b32.xlu0 %v2964, 32
      %v3030 = vpop.permute.xlu0 %3029
      %3031 = vrot.lane.b32.xlu0 %v2967, 32
      %v3032 = vpop.permute.xlu0 %3031
      %3033 = vrot.lane.b32.xlu0 %v2969, 32
      %v3034 = vpop.permute.xlu0 %3033
      %3035 = vrot.lane.b32.xlu0 %v2972, 32
      %v3036 = vpop.permute.xlu0 %3035
      %3037 = vrot.lane.b32.xlu0 %v2974, 32
      %v3038 = vpop.permute.xlu0 %3037
      %3072 = vrot.lane.b32.xlu0 %v2661, 48
      %v3073 = vpop.permute.xlu0 %3072
      %3074 = vrot.lane.b32.xlu0 %v2567, 48
      %v3075 = vpop.permute.xlu0 %3074
      %3076 = vrot.lane.b32.xlu0 %v2662, 48
      %v3077 = vpop.permute.xlu0 %3076
      %3078 = vrot.lane.b32.xlu0 %v2570, 48
      %v3079 = vpop.permute.xlu0 %3078
      %3080 = vrot.lane.b32.xlu0 %v2663, 48
      %v3081 = vpop.permute.xlu0 %3080
      %3082 = vrot.lane.b32.xlu0 %v2573, 48
      %v3083 = vpop.permute.xlu0 %3082
      %3084 = vrot.lane.b32.xlu0 %v2664, 48
      %v3085 = vpop.permute.xlu0 %3084
      %3086 = vrot.lane.b32.xlu0 %v2576, 48
      %v3087 = vpop.permute.xlu0 %3086
      %3088 = vrot.lane.b32.xlu0 %v2665, 48
      %v3089 = vpop.permute.xlu0 %3088
      %3090 = vrot.lane.b32.xlu0 %v2579, 48
      %v3091 = vpop.permute.xlu0 %3090
      %3092 = vrot.lane.b32.xlu0 %v2666, 48
      %v3093 = vpop.permute.xlu0 %3092
      %3094 = vrot.lane.b32.xlu0 %v2582, 48
      %v3095 = vpop.permute.xlu0 %3094
      %3096 = vrot.lane.b32.xlu0 %v2667, 48
      %v3097 = vpop.permute.xlu0 %3096
      %3098 = vrot.lane.b32.xlu0 %v2585, 48
      %v3099 = vpop.permute.xlu0 %3098
      %3100 = vrot.lane.b32.xlu0 %v2668, 48
      %v3101 = vpop.permute.xlu0 %3100
      %3102 = vrot.lane.b32.xlu0 %v2588, 48
      %v3103 = vpop.permute.xlu0 %3102
      %3104 = vrot.lane.b32.xlu0 %v2669, 48
      %v3105 = vpop.permute.xlu0 %3104
      %3106 = vrot.lane.b32.xlu0 %v2591, 48
      %v3107 = vpop.permute.xlu0 %3106
      %3108 = vrot.lane.b32.xlu0 %v2670, 48
      %v3109 = vpop.permute.xlu0 %3108
      %3110 = vrot.lane.b32.xlu0 %v2594, 48
      %v3111 = vpop.permute.xlu0 %3110
      %3112 = vrot.lane.b32.xlu0 %v2671, 48
      %v3113 = vpop.permute.xlu0 %3112
      %3114 = vrot.lane.b32.xlu0 %v2597, 48
      %v3115 = vpop.permute.xlu0 %3114
      %3116 = vrot.lane.b32.xlu0 %v2672, 48
      %v3117 = vpop.permute.xlu0 %3116
      %3118 = vrot.lane.b32.xlu0 %v2600, 48
      %v3119 = vpop.permute.xlu0 %3118
      %3120 = vrot.lane.b32.xlu0 %v2673, 48
      %v3121 = vpop.permute.xlu0 %3120
      %3122 = vrot.lane.b32.xlu0 %v2603, 48
      %v3123 = vpop.permute.xlu0 %3122
      %3124 = vrot.lane.b32.xlu0 %v2674, 48
      %v3125 = vpop.permute.xlu0 %3124
      %3126 = vrot.lane.b32.xlu0 %v2606, 48
      %v3127 = vpop.permute.xlu0 %3126
      %3128 = vrot.lane.b32.xlu0 %v2675, 48
      %v3129 = vpop.permute.xlu0 %3128
      %3130 = vrot.lane.b32.xlu0 %v2609, 48
      %v3131 = vpop.permute.xlu0 %3130
      %3132 = vrot.lane.b32.xlu0 %v2676, 48
      %v3133 = vpop.permute.xlu0 %3132
      %3134 = vrot.lane.b32.xlu0 %v2612, 48
      %v3135 = vpop.permute.xlu0 %3134
      %v3169 = vrot.slane %v2676, 1
      %v3170 = vrot.slane %v2612, 1
      %v3171 = vsel %vm457, %v3169, %v3170
      %v3172 = vrot.slane %v2692, 1
      %v3173 = vsel %vm457, %v3170, %v3172
      %3174 = vrot.lane.b32.xlu0 %v2728, 64
      %v3175 = vpop.permute.xlu0 %3174
      %3176 = vrot.lane.b32.xlu0 %v2730, 64
      %v3177 = vpop.permute.xlu0 %3176
      %3178 = vrot.lane.b32.xlu0 %v2733, 64
      %v3179 = vpop.permute.xlu0 %3178
      %3180 = vrot.lane.b32.xlu0 %v2735, 64
      %v3181 = vpop.permute.xlu0 %3180
      %3182 = vrot.lane.b32.xlu0 %v2738, 64
      %v3183 = vpop.permute.xlu0 %3182
      %3184 = vrot.lane.b32.xlu0 %v2740, 64
      %v3185 = vpop.permute.xlu0 %3184
      %3186 = vrot.lane.b32.xlu0 %v2743, 64
      %v3187 = vpop.permute.xlu0 %3186
      %3188 = vrot.lane.b32.xlu0 %v2745, 64
      %v3189 = vpop.permute.xlu0 %3188
      %3190 = vrot.lane.b32.xlu0 %v2748, 64
      %v3191 = vpop.permute.xlu0 %3190
      %3192 = vrot.lane.b32.xlu0 %v2750, 64
      %v3193 = vpop.permute.xlu0 %3192
      %3194 = vrot.lane.b32.xlu0 %v2753, 64
      %v3195 = vpop.permute.xlu0 %3194
      %3196 = vrot.lane.b32.xlu0 %v2755, 64
      %v3197 = vpop.permute.xlu0 %3196
      %3198 = vrot.lane.b32.xlu0 %v2758, 64
      %v3199 = vpop.permute.xlu0 %3198
      %3200 = vrot.lane.b32.xlu0 %v2760, 64
      %v3201 = vpop.permute.xlu0 %3200
      %3202 = vrot.lane.b32.xlu0 %v2763, 64
      %v3203 = vpop.permute.xlu0 %3202
      %3204 = vrot.lane.b32.xlu0 %v2765, 64
      %v3205 = vpop.permute.xlu0 %3204
      %3206 = vrot.lane.b32.xlu0 %v2768, 64
      %v3207 = vpop.permute.xlu0 %3206
      %3208 = vrot.lane.b32.xlu0 %v2770, 64
      %v3209 = vpop.permute.xlu0 %3208
      %3210 = vrot.lane.b32.xlu0 %v2773, 64
      %v3211 = vpop.permute.xlu0 %3210
      %3212 = vrot.lane.b32.xlu0 %v2775, 64
      %v3213 = vpop.permute.xlu0 %3212
      %3214 = vrot.lane.b32.xlu0 %v2778, 64
      %v3215 = vpop.permute.xlu0 %3214
      %3216 = vrot.lane.b32.xlu0 %v2780, 64
      %v3217 = vpop.permute.xlu0 %3216
      %3218 = vrot.lane.b32.xlu0 %v2783, 64
      %v3219 = vpop.permute.xlu0 %3218
      %3220 = vrot.lane.b32.xlu0 %v2785, 64
      %v3221 = vpop.permute.xlu0 %3220
      %3222 = vrot.lane.b32.xlu0 %v2788, 64
      %v3223 = vpop.permute.xlu0 %3222
      %3224 = vrot.lane.b32.xlu0 %v2790, 64
      %v3225 = vpop.permute.xlu0 %3224
      %3226 = vrot.lane.b32.xlu0 %v2793, 64
      %v3227 = vpop.permute.xlu0 %3226
      %3228 = vrot.lane.b32.xlu0 %v2795, 64
      %v3229 = vpop.permute.xlu0 %3228
      %3230 = vrot.lane.b32.xlu0 %v2798, 64
      %v3231 = vpop.permute.xlu0 %3230
      %3232 = vrot.lane.b32.xlu0 %v2800, 64
      %v3233 = vpop.permute.xlu0 %3232
      %3234 = vrot.lane.b32.xlu0 %v3171, 64
      %v3235 = vpop.permute.xlu0 %3234
      %3236 = vrot.lane.b32.xlu0 %v3173, 64
      %v3237 = vpop.permute.xlu0 %3236
      %v3270 = vrot.slane %v2676, 2
      %v3271 = vrot.slane %v2612, 2
      %v3272 = vsel %vm506, %v3270, %v3271
      %v3273 = vrot.slane %v2692, 2
      %v3274 = vsel %vm506, %v3271, %v3273
      %3275 = vrot.lane.b32.xlu0 %v2902, 80
      %v3276 = vpop.permute.xlu0 %3275
      %3277 = vrot.lane.b32.xlu0 %v2904, 80
      %v3278 = vpop.permute.xlu0 %3277
      %3279 = vrot.lane.b32.xlu0 %v2907, 80
      %v3280 = vpop.permute.xlu0 %3279
      %3281 = vrot.lane.b32.xlu0 %v2909, 80
      %v3282 = vpop.permute.xlu0 %3281
      %3283 = vrot.lane.b32.xlu0 %v2912, 80
      %v3284 = vpop.permute.xlu0 %3283
      %3285 = vrot.lane.b32.xlu0 %v2914, 80
      %v3286 = vpop.permute.xlu0 %3285
      %3287 = vrot.lane.b32.xlu0 %v2917, 80
      %v3288 = vpop.permute.xlu0 %3287
      %3289 = vrot.lane.b32.xlu0 %v2919, 80
      %v3290 = vpop.permute.xlu0 %3289
      %3291 = vrot.lane.b32.xlu0 %v2922, 80
      %v3292 = vpop.permute.xlu0 %3291
      %3293 = vrot.lane.b32.xlu0 %v2924, 80
      %v3294 = vpop.permute.xlu0 %3293
      %3295 = vrot.lane.b32.xlu0 %v2927, 80
      %v3296 = vpop.permute.xlu0 %3295
      %3297 = vrot.lane.b32.xlu0 %v2929, 80
      %v3298 = vpop.permute.xlu0 %3297
      %3299 = vrot.lane.b32.xlu0 %v2932, 80
      %v3300 = vpop.permute.xlu0 %3299
      %3301 = vrot.lane.b32.xlu0 %v2934, 80
      %v3302 = vpop.permute.xlu0 %3301
      %3303 = vrot.lane.b32.xlu0 %v2937, 80
      %v3304 = vpop.permute.xlu0 %3303
      %3305 = vrot.lane.b32.xlu0 %v2939, 80
      %v3306 = vpop.permute.xlu0 %3305
      %3307 = vrot.lane.b32.xlu0 %v2942, 80
      %v3308 = vpop.permute.xlu0 %3307
      %3309 = vrot.lane.b32.xlu0 %v2944, 80
      %v3310 = vpop.permute.xlu0 %3309
      %3311 = vrot.lane.b32.xlu0 %v2947, 80
      %v3312 = vpop.permute.xlu0 %3311
      %3313 = vrot.lane.b32.xlu0 %v2949, 80
      %v3314 = vpop.permute.xlu0 %3313
      %3315 = vrot.lane.b32.xlu0 %v2952, 80
      %v3316 = vpop.permute.xlu0 %3315
      %3317 = vrot.lane.b32.xlu0 %v2954, 80
      %v3318 = vpop.permute.xlu0 %3317
      %3319 = vrot.lane.b32.xlu0 %v2957, 80
      %v3320 = vpop.permute.xlu0 %3319
      %3321 = vrot.lane.b32.xlu0 %v2959, 80
      %v3322 = vpop.permute.xlu0 %3321
      %3323 = vrot.lane.b32.xlu0 %v2962, 80
      %v3324 = vpop.permute.xlu0 %3323
      %3325 = vrot.lane.b32.xlu0 %v2964, 80
      %v3326 = vpop.permute.xlu0 %3325
      %3327 = vrot.lane.b32.xlu0 %v2967, 80
      %v3328 = vpop.permute.xlu0 %3327
      %3329 = vrot.lane.b32.xlu0 %v2969, 80
      %v3330 = vpop.permute.xlu0 %3329
      %3331 = vrot.lane.b32.xlu0 %v2972, 80
      %v3332 = vpop.permute.xlu0 %3331
      %3333 = vrot.lane.b32.xlu0 %v2974, 80
      %v3334 = vpop.permute.xlu0 %3333
      %3335 = vrot.lane.b32.xlu0 %v3272, 80
      %v3336 = vpop.permute.xlu0 %3335
      %3337 = vrot.lane.b32.xlu0 %v3274, 80
      %v3338 = vpop.permute.xlu0 %3337
      %3371 = vrot.lane.b32.xlu0 %v2662, 96
      %v3372 = vpop.permute.xlu0 %3371
      %3373 = vrot.lane.b32.xlu0 %v2570, 96
      %v3374 = vpop.permute.xlu0 %3373
      %3375 = vrot.lane.b32.xlu0 %v2663, 96
      %v3376 = vpop.permute.xlu0 %3375
      %3377 = vrot.lane.b32.xlu0 %v2573, 96
      %v3378 = vpop.permute.xlu0 %3377
      %3379 = vrot.lane.b32.xlu0 %v2664, 96
      %v3380 = vpop.permute.xlu0 %3379
      %3381 = vrot.lane.b32.xlu0 %v2576, 96
      %v3382 = vpop.permute.xlu0 %3381
      %3383 = vrot.lane.b32.xlu0 %v2665, 96
      %v3384 = vpop.permute.xlu0 %3383
      %3385 = vrot.lane.b32.xlu0 %v2579, 96
      %v3386 = vpop.permute.xlu0 %3385
      %3387 = vrot.lane.b32.xlu0 %v2666, 96
      %v3388 = vpop.permute.xlu0 %3387
      %3389 = vrot.lane.b32.xlu0 %v2582, 96
      %v3390 = vpop.permute.xlu0 %3389
      %3391 = vrot.lane.b32.xlu0 %v2667, 96
      %v3392 = vpop.permute.xlu0 %3391
      %3393 = vrot.lane.b32.xlu0 %v2585, 96
      %v3394 = vpop.permute.xlu0 %3393
      %3395 = vrot.lane.b32.xlu0 %v2668, 96
      %v3396 = vpop.permute.xlu0 %3395
      %3397 = vrot.lane.b32.xlu0 %v2588, 96
      %v3398 = vpop.permute.xlu0 %3397
      %3399 = vrot.lane.b32.xlu0 %v2669, 96
      %v3400 = vpop.permute.xlu0 %3399
      %3401 = vrot.lane.b32.xlu0 %v2591, 96
      %v3402 = vpop.permute.xlu0 %3401
      %3403 = vrot.lane.b32.xlu0 %v2670, 96
      %v3404 = vpop.permute.xlu0 %3403
      %3405 = vrot.lane.b32.xlu0 %v2594, 96
      %v3406 = vpop.permute.xlu0 %3405
      %3407 = vrot.lane.b32.xlu0 %v2671, 96
      %v3408 = vpop.permute.xlu0 %3407
      %3409 = vrot.lane.b32.xlu0 %v2597, 96
      %v3410 = vpop.permute.xlu0 %3409
      %3411 = vrot.lane.b32.xlu0 %v2672, 96
      %v3412 = vpop.permute.xlu0 %3411
      %3413 = vrot.lane.b32.xlu0 %v2600, 96
      %v3414 = vpop.permute.xlu0 %3413
      %3415 = vrot.lane.b32.xlu0 %v2673, 96
      %v3416 = vpop.permute.xlu0 %3415
      %3417 = vrot.lane.b32.xlu0 %v2603, 96
      %v3418 = vpop.permute.xlu0 %3417
      %3419 = vrot.lane.b32.xlu0 %v2674, 96
      %v3420 = vpop.permute.xlu0 %3419
      %3421 = vrot.lane.b32.xlu0 %v2606, 96
      %v3422 = vpop.permute.xlu0 %3421
      %3423 = vrot.lane.b32.xlu0 %v2675, 96
      %v3424 = vpop.permute.xlu0 %3423
      %3425 = vrot.lane.b32.xlu0 %v2609, 96
      %v3426 = vpop.permute.xlu0 %3425
      %3427 = vrot.lane.b32.xlu0 %v2676, 96
      %v3428 = vpop.permute.xlu0 %3427
      %3429 = vrot.lane.b32.xlu0 %v2612, 96
      %v3430 = vpop.permute.xlu0 %3429
      %3431 = vrot.lane.b32.xlu0 %v423, 96
      %v3432 = vpop.permute.xlu0 %3431
      %3433 = vrot.lane.b32.xlu0 %v2564, 96
      %v3434 = vpop.permute.xlu0 %3433
      %3467 = vrot.lane.b32.xlu0 %v2733, 112
      %v3468 = vpop.permute.xlu0 %3467
      %3469 = vrot.lane.b32.xlu0 %v2735, 112
      %v3470 = vpop.permute.xlu0 %3469
      %3471 = vrot.lane.b32.xlu0 %v2738, 112
      %v3472 = vpop.permute.xlu0 %3471
      %3473 = vrot.lane.b32.xlu0 %v2740, 112
      %v3474 = vpop.permute.xlu0 %3473
      %3475 = vrot.lane.b32.xlu0 %v2743, 112
      %v3476 = vpop.permute.xlu0 %3475
      %3477 = vrot.lane.b32.xlu0 %v2745, 112
      %v3478 = vpop.permute.xlu0 %3477
      %3479 = vrot.lane.b32.xlu0 %v2748, 112
      %v3480 = vpop.permute.xlu0 %3479
      %3481 = vrot.lane.b32.xlu0 %v2750, 112
      %v3482 = vpop.permute.xlu0 %3481
      %3483 = vrot.lane.b32.xlu0 %v2753, 112
      %v3484 = vpop.permute.xlu0 %3483
      %3485 = vrot.lane.b32.xlu0 %v2755, 112
      %v3486 = vpop.permute.xlu0 %3485
      %3487 = vrot.lane.b32.xlu0 %v2758, 112
      %v3488 = vpop.permute.xlu0 %3487
      %3489 = vrot.lane.b32.xlu0 %v2760, 112
      %v3490 = vpop.permute.xlu0 %3489
      %3491 = vrot.lane.b32.xlu0 %v2763, 112
      %v3492 = vpop.permute.xlu0 %3491
      %3493 = vrot.lane.b32.xlu0 %v2765, 112
      %v3494 = vpop.permute.xlu0 %3493
      %3495 = vrot.lane.b32.xlu0 %v2768, 112
      %v3496 = vpop.permute.xlu0 %3495
      %3497 = vrot.lane.b32.xlu0 %v2770, 112
      %v3498 = vpop.permute.xlu0 %3497
      %3499 = vrot.lane.b32.xlu0 %v2773, 112
      %v3500 = vpop.permute.xlu0 %3499
      %3501 = vrot.lane.b32.xlu0 %v2775, 112
      %v3502 = vpop.permute.xlu0 %3501
      %3503 = vrot.lane.b32.xlu0 %v2778, 112
      %v3504 = vpop.permute.xlu0 %3503
      %3505 = vrot.lane.b32.xlu0 %v2780, 112
      %v3506 = vpop.permute.xlu0 %3505
      %3507 = vrot.lane.b32.xlu0 %v2783, 112
      %v3508 = vpop.permute.xlu0 %3507
      %3509 = vrot.lane.b32.xlu0 %v2785, 112
      %v3510 = vpop.permute.xlu0 %3509
      %3511 = vrot.lane.b32.xlu0 %v2788, 112
      %v3512 = vpop.permute.xlu0 %3511
      %3513 = vrot.lane.b32.xlu0 %v2790, 112
      %v3514 = vpop.permute.xlu0 %3513
      %3515 = vrot.lane.b32.xlu0 %v2793, 112
      %v3516 = vpop.permute.xlu0 %3515
      %3517 = vrot.lane.b32.xlu0 %v2795, 112
      %v3518 = vpop.permute.xlu0 %3517
      %3519 = vrot.lane.b32.xlu0 %v2798, 112
      %v3520 = vpop.permute.xlu0 %3519
      %3521 = vrot.lane.b32.xlu0 %v2800, 112
      %v3522 = vpop.permute.xlu0 %3521
      %3523 = vrot.lane.b32.xlu0 %v3171, 112
      %v3524 = vpop.permute.xlu0 %3523
      %3525 = vrot.lane.b32.xlu0 %v3173, 112
      %v3526 = vpop.permute.xlu0 %3525
      %3527 = vrot.lane.b32.xlu0 %v2724, 112
      %v3528 = vpop.permute.xlu0 %3527
      %3529 = vrot.lane.b32.xlu0 %v2725, 112
      %v3530 = vpop.permute.xlu0 %3529
      %v3563 = vsel %vm716, %v423, %v2802
      %v3564 = vsel %vm716, %v2564, %v2804
      %v3565 = vsel %vm716, %v2661, %v2806
      %v3566 = vsel %vm716, %v2567, %v2808
      %v3567 = vsel %vm716, %v2662, %v2810
      %v3568 = vsel %vm716, %v2570, %v2812
      %v3569 = vsel %vm716, %v2663, %v2814
      %v3570 = vsel %vm716, %v2573, %v2816
      %v3571 = vsel %vm716, %v2664, %v2818
      %v3572 = vsel %vm716, %v2576, %v2820
      %v3573 = vsel %vm716, %v2665, %v2822
      %v3574 = vsel %vm716, %v2579, %v2824
      %v3575 = vsel %vm716, %v2666, %v2826
      %v3576 = vsel %vm716, %v2582, %v2828
      %v3577 = vsel %vm716, %v2667, %v2830
      %v3578 = vsel %vm716, %v2585, %v2832
      %v3579 = vsel %vm716, %v2668, %v2834
      %v3580 = vsel %vm716, %v2588, %v2836
      %v3581 = vsel %vm716, %v2669, %v2838
      %v3582 = vsel %vm716, %v2591, %v2840
      %v3583 = vsel %vm716, %v2670, %v2842
      %v3584 = vsel %vm716, %v2594, %v2844
      %v3585 = vsel %vm716, %v2671, %v2846
      %v3586 = vsel %vm716, %v2597, %v2848
      %v3587 = vsel %vm716, %v2672, %v2850
      %v3588 = vsel %vm716, %v2600, %v2852
      %v3589 = vsel %vm716, %v2673, %v2854
      %v3590 = vsel %vm716, %v2603, %v2856
      %v3591 = vsel %vm716, %v2674, %v2858
      %v3592 = vsel %vm716, %v2606, %v2860
      %v3593 = vsel %vm716, %v2675, %v2862
      %v3594 = vsel %vm716, %v2609, %v2864
      %v3595 = vsel %vm734, %v3563, %v2976
      %v3596 = vsel %vm734, %v3564, %v2978
      %v3597 = vsel %vm734, %v3565, %v2980
      %v3598 = vsel %vm734, %v3566, %v2982
      %v3599 = vsel %vm734, %v3567, %v2984
      %v3600 = vsel %vm734, %v3568, %v2986
      %v3601 = vsel %vm734, %v3569, %v2988
      %v3602 = vsel %vm734, %v3570, %v2990
      %v3603 = vsel %vm734, %v3571, %v2992
      %v3604 = vsel %vm734, %v3572, %v2994
      %v3605 = vsel %vm734, %v3573, %v2996
      %v3606 = vsel %vm734, %v3574, %v2998
      %v3607 = vsel %vm734, %v3575, %v3000
      %v3608 = vsel %vm734, %v3576, %v3002
      %v3609 = vsel %vm734, %v3577, %v3004
      %v3610 = vsel %vm734, %v3578, %v3006
      %v3611 = vsel %vm734, %v3579, %v3008
      %v3612 = vsel %vm734, %v3580, %v3010
      %v3613 = vsel %vm734, %v3581, %v3012
      %v3614 = vsel %vm734, %v3582, %v3014
      %v3615 = vsel %vm734, %v3583, %v3016
      %v3616 = vsel %vm734, %v3584, %v3018
      %v3617 = vsel %vm734, %v3585, %v3020
      %v3618 = vsel %vm734, %v3586, %v3022
      %v3619 = vsel %vm734, %v3587, %v3024
      %v3620 = vsel %vm734, %v3588, %v3026
      %v3621 = vsel %vm734, %v3589, %v3028
      %v3622 = vsel %vm734, %v3590, %v3030
      %v3623 = vsel %vm734, %v3591, %v3032
      %v3624 = vsel %vm734, %v3592, %v3034
      %v3625 = vsel %vm734, %v3593, %v3036
      %v3626 = vsel %vm734, %v3594, %v3038
      %v3627 = vsel %vm752, %v3595, %v3073
      %v3628 = vsel %vm752, %v3596, %v3075
      %v3629 = vsel %vm752, %v3597, %v3077
      %v3630 = vsel %vm752, %v3598, %v3079
      %v3631 = vsel %vm752, %v3599, %v3081
      %v3632 = vsel %vm752, %v3600, %v3083
      %v3633 = vsel %vm752, %v3601, %v3085
      %v3634 = vsel %vm752, %v3602, %v3087
      %v3635 = vsel %vm752, %v3603, %v3089
      %v3636 = vsel %vm752, %v3604, %v3091
      %v3637 = vsel %vm752, %v3605, %v3093
      %v3638 = vsel %vm752, %v3606, %v3095
      %v3639 = vsel %vm752, %v3607, %v3097
      %v3640 = vsel %vm752, %v3608, %v3099
      %v3641 = vsel %vm752, %v3609, %v3101
      %v3642 = vsel %vm752, %v3610, %v3103
      %v3643 = vsel %vm752, %v3611, %v3105
      %v3644 = vsel %vm752, %v3612, %v3107
      %v3645 = vsel %vm752, %v3613, %v3109
      %v3646 = vsel %vm752, %v3614, %v3111
      %v3647 = vsel %vm752, %v3615, %v3113
      %v3648 = vsel %vm752, %v3616, %v3115
      %v3649 = vsel %vm752, %v3617, %v3117
      %v3650 = vsel %vm752, %v3618, %v3119
      %v3651 = vsel %vm752, %v3619, %v3121
      %v3652 = vsel %vm752, %v3620, %v3123
      %v3653 = vsel %vm752, %v3621, %v3125
      %v3654 = vsel %vm752, %v3622, %v3127
      %v3655 = vsel %vm752, %v3623, %v3129
      %v3656 = vsel %vm752, %v3624, %v3131
      %v3657 = vsel %vm752, %v3625, %v3133
      %v3658 = vsel %vm752, %v3626, %v3135
      %v3659 = vsel %vm770, %v3627, %v3175
      %v3660 = vsel %vm770, %v3628, %v3177
      %v3661 = vsel %vm770, %v3629, %v3179
      %v3662 = vsel %vm770, %v3630, %v3181
      %v3663 = vsel %vm770, %v3631, %v3183
      %v3664 = vsel %vm770, %v3632, %v3185
      %v3665 = vsel %vm770, %v3633, %v3187
      %v3666 = vsel %vm770, %v3634, %v3189
      %v3667 = vsel %vm770, %v3635, %v3191
      %v3668 = vsel %vm770, %v3636, %v3193
      %v3669 = vsel %vm770, %v3637, %v3195
      %v3670 = vsel %vm770, %v3638, %v3197
      %v3671 = vsel %vm770, %v3639, %v3199
      %v3672 = vsel %vm770, %v3640, %v3201
      %v3673 = vsel %vm770, %v3641, %v3203
      %v3674 = vsel %vm770, %v3642, %v3205
      %v3675 = vsel %vm770, %v3643, %v3207
      %v3676 = vsel %vm770, %v3644, %v3209
      %v3677 = vsel %vm770, %v3645, %v3211
      %v3678 = vsel %vm770, %v3646, %v3213
      %v3679 = vsel %vm770, %v3647, %v3215
      %v3680 = vsel %vm770, %v3648, %v3217
      %v3681 = vsel %vm770, %v3649, %v3219
      %v3682 = vsel %vm770, %v3650, %v3221
      %v3683 = vsel %vm770, %v3651, %v3223
      %v3684 = vsel %vm770, %v3652, %v3225
      %v3685 = vsel %vm770, %v3653, %v3227
      %v3686 = vsel %vm770, %v3654, %v3229
      %v3687 = vsel %vm770, %v3655, %v3231
      %v3688 = vsel %vm770, %v3656, %v3233
      %v3689 = vsel %vm770, %v3657, %v3235
      %v3690 = vsel %vm770, %v3658, %v3237
      %vm3691 = vcmask 654336
      %v3692 = vsel %vm3691, %v3659, %v3276
      %v3693 = vsel %vm3691, %v3660, %v3278
      %v3694 = vsel %vm3691, %v3661, %v3280
      %v3695 = vsel %vm3691, %v3662, %v3282
      %v3696 = vsel %vm3691, %v3663, %v3284
      %v3697 = vsel %vm3691, %v3664, %v3286
      %v3698 = vsel %vm3691, %v3665, %v3288
      %v3699 = vsel %vm3691, %v3666, %v3290
      %v3700 = vsel %vm3691, %v3667, %v3292
      %v3701 = vsel %vm3691, %v3668, %v3294
      %v3702 = vsel %vm3691, %v3669, %v3296
      %v3703 = vsel %vm3691, %v3670, %v3298
      %v3704 = vsel %vm3691, %v3671, %v3300
      %v3705 = vsel %vm3691, %v3672, %v3302
      %v3706 = vsel %vm3691, %v3673, %v3304
      %v3707 = vsel %vm3691, %v3674, %v3306
      %v3708 = vsel %vm3691, %v3675, %v3308
      %v3709 = vsel %vm3691, %v3676, %v3310
      %v3710 = vsel %vm3691, %v3677, %v3312
      %v3711 = vsel %vm3691, %v3678, %v3314
      %v3712 = vsel %vm3691, %v3679, %v3316
      %v3713 = vsel %vm3691, %v3680, %v3318
      %v3714 = vsel %vm3691, %v3681, %v3320
      %v3715 = vsel %vm3691, %v3682, %v3322
      %v3716 = vsel %vm3691, %v3683, %v3324
      %v3717 = vsel %vm3691, %v3684, %v3326
      %v3718 = vsel %vm3691, %v3685, %v3328
      %v3719 = vsel %vm3691, %v3686, %v3330
      %v3720 = vsel %vm3691, %v3687, %v3332
      %v3721 = vsel %vm3691, %v3688, %v3334
      %v3722 = vsel %vm3691, %v3689, %v3336
      %v3723 = vsel %vm3691, %v3690, %v3338
      %v3724 = vsel %vm1091, %v3692, %v3372
      %v3725 = vsel %vm1091, %v3693, %v3374
      %v3726 = vsel %vm1091, %v3694, %v3376
      %v3727 = vsel %vm1091, %v3695, %v3378
      %v3728 = vsel %vm1091, %v3696, %v3380
      %v3729 = vsel %vm1091, %v3697, %v3382
      %v3730 = vsel %vm1091, %v3698, %v3384
      %v3731 = vsel %vm1091, %v3699, %v3386
      %v3732 = vsel %vm1091, %v3700, %v3388
      %v3733 = vsel %vm1091, %v3701, %v3390
      %v3734 = vsel %vm1091, %v3702, %v3392
      %v3735 = vsel %vm1091, %v3703, %v3394
      %v3736 = vsel %vm1091, %v3704, %v3396
      %v3737 = vsel %vm1091, %v3705, %v3398
      %v3738 = vsel %vm1091, %v3706, %v3400
      %v3739 = vsel %vm1091, %v3707, %v3402
      %v3740 = vsel %vm1091, %v3708, %v3404
      %v3741 = vsel %vm1091, %v3709, %v3406
      %v3742 = vsel %vm1091, %v3710, %v3408
      %v3743 = vsel %vm1091, %v3711, %v3410
      %v3744 = vsel %vm1091, %v3712, %v3412
      %v3745 = vsel %vm1091, %v3713, %v3414
      %v3746 = vsel %vm1091, %v3714, %v3416
      %v3747 = vsel %vm1091, %v3715, %v3418
      %v3748 = vsel %vm1091, %v3716, %v3420
      %v3749 = vsel %vm1091, %v3717, %v3422
      %v3750 = vsel %vm1091, %v3718, %v3424
      %v3751 = vsel %vm1091, %v3719, %v3426
      %v3752 = vsel %vm1091, %v3720, %v3428
      %v3753 = vsel %vm1091, %v3721, %v3430
      %v3754 = vsel %vm1091, %v3722, %v3432
      %v3755 = vsel %vm1091, %v3723, %v3434
      %vm3756 = vcmask 916480
      %v3757 = vsel %vm3756, %v3724, %v3468
      %v3758 = vsel %vm3756, %v3725, %v3470
      %v3759 = vsel %vm3756, %v3726, %v3472
      %v3760 = vsel %vm3756, %v3727, %v3474
      %v3761 = vsel %vm3756, %v3728, %v3476
      %v3762 = vsel %vm3756, %v3729, %v3478
      %v3763 = vsel %vm3756, %v3730, %v3480
      %v3764 = vsel %vm3756, %v3731, %v3482
      %v3765 = vsel %vm3756, %v3732, %v3484
      %v3766 = vsel %vm3756, %v3733, %v3486
      %v3767 = vsel %vm3756, %v3734, %v3488
      %v3768 = vsel %vm3756, %v3735, %v3490
      %v3769 = vsel %vm3756, %v3736, %v3492
      %v3770 = vsel %vm3756, %v3737, %v3494
      %v3771 = vsel %vm3756, %v3738, %v3496
      %v3772 = vsel %vm3756, %v3739, %v3498
      %v3773 = vsel %vm3756, %v3740, %v3500
      %v3774 = vsel %vm3756, %v3741, %v3502
      %v3775 = vsel %vm3756, %v3742, %v3504
      %v3776 = vsel %vm3756, %v3743, %v3506
      %v3777 = vsel %vm3756, %v3744, %v3508
      %v3778 = vsel %vm3756, %v3745, %v3510
      %v3779 = vsel %vm3756, %v3746, %v3512
      %v3780 = vsel %vm3756, %v3747, %v3514
      %v3781 = vsel %vm3756, %v3748, %v3516
      %v3782 = vsel %vm3756, %v3749, %v3518
      %v3783 = vsel %vm3756, %v3750, %v3520
      %v3784 = vsel %vm3756, %v3751, %v3522
      %v3785 = vsel %vm3756, %v3752, %v3524
      %v3786 = vsel %vm3756, %v3753, %v3526
      %v3787 = vsel %vm3756, %v3754, %v3528
      %v3788 = vsel %vm3756, %v3755, %v3530
      %v3790 = vperm.slane %v2494, 0
      %v3792 = vsel %vm716, %v2907, 0
      %v3794 = vsel %vm716, %v2909, 0
      %v3796 = vsel %vm716, %v2912, 0
      %v3798 = vsel %vm716, %v2914, 0
      %v3800 = vsel %vm716, %v2917, 0
      %v3802 = vsel %vm716, %v2919, 0
      %v3804 = vsel %vm716, %v2922, 0
      %v3806 = vsel %vm716, %v2924, 0
      %v3808 = vsel %vm716, %v2927, 0
      %v3810 = vsel %vm716, %v2929, 0
      %v3812 = vsel %vm716, %v2932, 0
      %v3814 = vsel %vm716, %v2934, 0
      %v3816 = vsel %vm716, %v2937, 0
      %v3818 = vsel %vm716, %v2939, 0
      %v3820 = vsel %vm716, %v2942, 0
      %v3822 = vsel %vm716, %v2944, 0
      %v3824 = vsel %vm716, %v2947, 0
      %v3826 = vsel %vm716, %v2949, 0
      %v3828 = vsel %vm716, %v2952, 0
      %v3830 = vsel %vm716, %v2954, 0
      %v3832 = vsel %vm716, %v2957, 0
      %v3834 = vsel %vm716, %v2959, 0
      %v3836 = vsel %vm716, %v2962, 0
      %v3838 = vsel %vm716, %v2964, 0
      %v3840 = vsel %vm716, %v2967, 0
      %v3842 = vsel %vm716, %v2969, 0
      %v3844 = vsel %vm716, %v2972, 0
      %v3846 = vsel %vm716, %v2974, 0
      %v3848 = vsel %vm716, %v3272, 0
      %v3850 = vsel %vm716, %v3274, 0
      %v3852 = vsel %vm716, %v2898, 0
      %v3854 = vsel %vm716, %v2899, 0
      %3856 = vmatpush.msra.mxu0 %v2473
      %3857 = vmatpush.msra.mxu0 %v2472
      %3858 = vmatpush.msra.mxu0 %v2471
      %3859 = vmatpush.msra.mxu0 %v2470
      %3860 = vmatpush.msra.mxu0 %v2469
      %3861 = vmatpush.msra.mxu0 %v2468
      %3862 = vmatpush.msra.mxu0 %v2467
      %3863 = vmatpush.msra.mxu0 %v2466
      %3864 = vmatpush.msra.mxu0 %v2465
      %3865 = vmatpush.msra.mxu0 %v2464
      %3866 = vmatpush.msra.mxu0 %v2463
      %3867 = vmatpush.msra.mxu0 %v2462
      %3868 = vmatpush.msra.mxu0 %v2461
      %3869 = vmatpush.msra.mxu0 %v2460
      %3870 = vmatpush.msra.mxu0 %v2459
      %3871 = vmatpush.msra.mxu0 %v2458
      %3872 = vmatmul.f32.gmra.mxu0 %v3757
      %v3873 = vpop.f32.mrf.mxu0
      %v3874 = vadd.f32 %v3790, %v3873
      %3875 = vmatmul.f32.gmra.mxu0 %v3758
      %v3876 = vpop.f32.mrf.mxu0
      %v3877 = vadd.f32 %v3790, %v3876
      %3878 = vmatmul.f32.gmra.mxu0 %v3759
      %v3879 = vpop.f32.mrf.mxu0
      %v3880 = vadd.f32 %v3790, %v3879
      %3881 = vmatmul.f32.gmra.mxu0 %v3760
      %v3882 = vpop.f32.mrf.mxu0
      %v3883 = vadd.f32 %v3790, %v3882
      %3884 = vmatmul.f32.gmra.mxu0 %v3761
      %v3885 = vpop.f32.mrf.mxu0
      %v3886 = vadd.f32 %v3790, %v3885
      %3887 = vmatmul.f32.gmra.mxu0 %v3762
      %v3888 = vpop.f32.mrf.mxu0
      %v3889 = vadd.f32 %v3790, %v3888
      %3890 = vmatmul.f32.gmra.mxu0 %v3763
      %v3891 = vpop.f32.mrf.mxu0
      %v3892 = vadd.f32 %v3790, %v3891
      %3893 = vmatmul.f32.gmra.mxu0 %v3764
      %v3894 = vpop.f32.mrf.mxu0
      %v3895 = vadd.f32 %v3790, %v3894
      %3896 = vmatmul.f32.gmra.mxu0 %v3765
      %v3897 = vpop.f32.mrf.mxu0
      %v3898 = vadd.f32 %v3790, %v3897
      %3899 = vmatmul.f32.gmra.mxu0 %v3766
      %v3900 = vpop.f32.mrf.mxu0
      %v3901 = vadd.f32 %v3790, %v3900
      %3902 = vmatmul.f32.gmra.mxu0 %v3767
      %v3903 = vpop.f32.mrf.mxu0
      %v3904 = vadd.f32 %v3790, %v3903
      %3905 = vmatmul.f32.gmra.mxu0 %v3768
      %v3906 = vpop.f32.mrf.mxu0
      %v3907 = vadd.f32 %v3790, %v3906
      %3908 = vmatmul.f32.gmra.mxu0 %v3769
      %v3909 = vpop.f32.mrf.mxu0
      %v3910 = vadd.f32 %v3790, %v3909
      %3911 = vmatmul.f32.gmra.mxu0 %v3770
      %v3912 = vpop.f32.mrf.mxu0
      %v3913 = vadd.f32 %v3790, %v3912
      %3914 = vmatmul.f32.gmra.mxu0 %v3771
      %v3915 = vpop.f32.mrf.mxu0
      %v3916 = vadd.f32 %v3790, %v3915
      %3917 = vmatmul.f32.gmra.mxu0 %v3772
      %v3918 = vpop.f32.mrf.mxu0
      %v3919 = vadd.f32 %v3790, %v3918
      %3920 = vmatmul.f32.gmra.mxu0 %v3773
      %v3921 = vpop.f32.mrf.mxu0
      %v3922 = vadd.f32 %v3790, %v3921
      %3923 = vmatmul.f32.gmra.mxu0 %v3774
      %v3924 = vpop.f32.mrf.mxu0
      %v3925 = vadd.f32 %v3790, %v3924
      %3926 = vmatmul.f32.gmra.mxu0 %v3775
      %v3927 = vpop.f32.mrf.mxu0
      %v3928 = vadd.f32 %v3790, %v3927
      %3929 = vmatmul.f32.gmra.mxu0 %v3776
      %v3930 = vpop.f32.mrf.mxu0
      %v3931 = vadd.f32 %v3790, %v3930
      %3932 = vmatmul.f32.gmra.mxu0 %v3777
      %v3933 = vpop.f32.mrf.mxu0
      %v3934 = vadd.f32 %v3790, %v3933
      %3935 = vmatmul.f32.gmra.mxu0 %v3778
      %v3936 = vpop.f32.mrf.mxu0
      %v3937 = vadd.f32 %v3790, %v3936
      %3938 = vmatmul.f32.gmra.mxu0 %v3779
      %v3939 = vpop.f32.mrf.mxu0
      %v3940 = vadd.f32 %v3790, %v3939
      %3941 = vmatmul.f32.gmra.mxu0 %v3780
      %v3942 = vpop.f32.mrf.mxu0
      %v3943 = vadd.f32 %v3790, %v3942
      %3944 = vmatmul.f32.gmra.mxu0 %v3781
      %v3945 = vpop.f32.mrf.mxu0
      %v3946 = vadd.f32 %v3790, %v3945
      %3947 = vmatmul.f32.gmra.mxu0 %v3782
      %v3948 = vpop.f32.mrf.mxu0
      %v3949 = vadd.f32 %v3790, %v3948
      %3950 = vmatmul.f32.gmra.mxu0 %v3783
      %v3951 = vpop.f32.mrf.mxu0
      %v3952 = vadd.f32 %v3790, %v3951
      %3953 = vmatmul.f32.gmra.mxu0 %v3784
      %v3954 = vpop.f32.mrf.mxu0
      %v3955 = vadd.f32 %v3790, %v3954
      %3956 = vmatmul.f32.gmra.mxu0 %v3785
      %v3957 = vpop.f32.mrf.mxu0
      %v3958 = vadd.f32 %v3790, %v3957
      %3959 = vmatmul.f32.gmra.mxu0 %v3786
      %v3960 = vpop.f32.mrf.mxu0
      %v3961 = vadd.f32 %v3790, %v3960
      %3962 = vmatmul.f32.gmra.mxu0 %v3787
      %v3963 = vpop.f32.mrf.mxu0
      %v3964 = vadd.f32 %v3790, %v3963
      %3965 = vmatmul.f32.gmra.mxu0 %v3788
      %v3966 = vpop.f32.mrf.mxu0
      %v3967 = vadd.f32 %v3790, %v3966
      %3968 = vdwg.mxu0
      %3969 = vmatpush.msra.mxu0 0.0
      %3970 = vmatpush.msra.mxu0 0.0
      %3971 = vmatpush.msra.mxu0 0.0
      %3972 = vmatpush.msra.mxu0 0.0
      %3973 = vmatpush.msra.mxu0 0.0
      %3974 = vmatpush.msra.mxu0 0.0
      %3975 = vmatpush.msra.mxu0 0.0
      %3976 = vmatpush.msra.mxu0 0.0
      %3977 = vmatpush.msra.mxu0 0.0
      %3978 = vmatpush.msra.mxu0 0.0
      %3979 = vmatpush.msra.mxu0 0.0
      %3980 = vmatpush.msra.mxu0 0.0
      %3981 = vmatpush.msra.mxu0 0.0
      %3982 = vmatpush.msra.mxu0 0.0
      %3983 = vmatpush.msra.mxu0 %v2475
      %3984 = vmatpush.msra.mxu0 %v2474
      %3985 = vmatmul.f32.gmra.mxu0 %v3792
      %v3986 = vpop.f32.mrf.mxu0
      %v3987 = vadd.f32 %v3874, %v3986
      %3988 = vmatmul.f32.gmra.mxu0 %v3794
      %v3989 = vpop.f32.mrf.mxu0
      %v3990 = vadd.f32 %v3877, %v3989
      %3991 = vmatmul.f32.gmra.mxu0 %v3796
      %v3992 = vpop.f32.mrf.mxu0
      %v3993 = vadd.f32 %v3880, %v3992
      %3994 = vmatmul.f32.gmra.mxu0 %v3798
      %v3995 = vpop.f32.mrf.mxu0
      %v3996 = vadd.f32 %v3883, %v3995
      %3997 = vmatmul.f32.gmra.mxu0 %v3800
      %v3998 = vpop.f32.mrf.mxu0
      %v3999 = vadd.f32 %v3886, %v3998
      %4000 = vmatmul.f32.gmra.mxu0 %v3802
      %v4001 = vpop.f32.mrf.mxu0
      %v4002 = vadd.f32 %v3889, %v4001
      %4003 = vmatmul.f32.gmra.mxu0 %v3804
      %v4004 = vpop.f32.mrf.mxu0
      %v4005 = vadd.f32 %v3892, %v4004
      %4006 = vmatmul.f32.gmra.mxu0 %v3806
      %v4007 = vpop.f32.mrf.mxu0
      %v4008 = vadd.f32 %v3895, %v4007
      %4009 = vmatmul.f32.gmra.mxu0 %v3808
      %v4010 = vpop.f32.mrf.mxu0
      %v4011 = vadd.f32 %v3898, %v4010
      %4012 = vmatmul.f32.gmra.mxu0 %v3810
      %v4013 = vpop.f32.mrf.mxu0
      %v4014 = vadd.f32 %v3901, %v4013
      %4015 = vmatmul.f32.gmra.mxu0 %v3812
      %v4016 = vpop.f32.mrf.mxu0
      %v4017 = vadd.f32 %v3904, %v4016
      %4018 = vmatmul.f32.gmra.mxu0 %v3814
      %v4019 = vpop.f32.mrf.mxu0
      %v4020 = vadd.f32 %v3907, %v4019
      %4021 = vmatmul.f32.gmra.mxu0 %v3816
      %v4022 = vpop.f32.mrf.mxu0
      %v4023 = vadd.f32 %v3910, %v4022
      %4024 = vmatmul.f32.gmra.mxu0 %v3818
      %v4025 = vpop.f32.mrf.mxu0
      %v4026 = vadd.f32 %v3913, %v4025
      %4027 = vmatmul.f32.gmra.mxu0 %v3820
      %v4028 = vpop.f32.mrf.mxu0
      %v4029 = vadd.f32 %v3916, %v4028
      %4030 = vmatmul.f32.gmra.mxu0 %v3822
      %v4031 = vpop.f32.mrf.mxu0
      %v4032 = vadd.f32 %v3919, %v4031
      %4033 = vmatmul.f32.gmra.mxu0 %v3824
      %v4034 = vpop.f32.mrf.mxu0
      %v4035 = vadd.f32 %v3922, %v4034
      %4036 = vmatmul.f32.gmra.mxu0 %v3826
      %v4037 = vpop.f32.mrf.mxu0
      %v4038 = vadd.f32 %v3925, %v4037
      %4039 = vmatmul.f32.gmra.mxu0 %v3828
      %v4040 = vpop.f32.mrf.mxu0
      %v4041 = vadd.f32 %v3928, %v4040
      %4042 = vmatmul.f32.gmra.mxu0 %v3830
      %v4043 = vpop.f32.mrf.mxu0
      %v4044 = vadd.f32 %v3931, %v4043
      %4045 = vmatmul.f32.gmra.mxu0 %v3832
      %v4046 = vpop.f32.mrf.mxu0
      %v4047 = vadd.f32 %v3934, %v4046
      %4048 = vmatmul.f32.gmra.mxu0 %v3834
      %v4049 = vpop.f32.mrf.mxu0
      %v4050 = vadd.f32 %v3937, %v4049
      %4051 = vmatmul.f32.gmra.mxu0 %v3836
      %v4052 = vpop.f32.mrf.mxu0
      %v4053 = vadd.f32 %v3940, %v4052
      %4054 = vmatmul.f32.gmra.mxu0 %v3838
      %v4055 = vpop.f32.mrf.mxu0
      %v4056 = vadd.f32 %v3943, %v4055
      %4057 = vmatmul.f32.gmra.mxu0 %v3840
      %v4058 = vpop.f32.mrf.mxu0
      %v4059 = vadd.f32 %v3946, %v4058
      %4060 = vmatmul.f32.gmra.mxu0 %v3842
      %v4061 = vpop.f32.mrf.mxu0
      %v4062 = vadd.f32 %v3949, %v4061
      %4063 = vmatmul.f32.gmra.mxu0 %v3844
      %v4064 = vpop.f32.mrf.mxu0
      %v4065 = vadd.f32 %v3952, %v4064
      %4066 = vmatmul.f32.gmra.mxu0 %v3846
      %v4067 = vpop.f32.mrf.mxu0
      %v4068 = vadd.f32 %v3955, %v4067
      %4069 = vmatmul.f32.gmra.mxu0 %v3848
      %v4070 = vpop.f32.mrf.mxu0
      %v4071 = vadd.f32 %v3958, %v4070
      %4072 = vmatmul.f32.gmra.mxu0 %v3850
      %v4073 = vpop.f32.mrf.mxu0
      %v4074 = vadd.f32 %v3961, %v4073
      %4075 = vmatmul.f32.gmra.mxu0 %v3852
      %v4076 = vpop.f32.mrf.mxu0
      %v4077 = vadd.f32 %v3964, %v4076
      %4078 = vmatmul.f32.gmra.mxu0 %v3854
      %v4079 = vpop.f32.mrf.mxu0
      %v4080 = vadd.f32 %v3967, %v4079
      %4081 = vdwg.mxu0
      %v4082 = vmax.f32 %v3987, 0.0
      %v4083 = vmax.f32 %v3990, 0.0
      %v4084 = vmax.f32 %v3993, 0.0
      %v4085 = vmax.f32 %v3996, 0.0
      %v4086 = vmax.f32 %v3999, 0.0
      %v4087 = vmax.f32 %v4002, 0.0
      %v4088 = vmax.f32 %v4005, 0.0
      %v4089 = vmax.f32 %v4008, 0.0
      %v4090 = vmax.f32 %v4011, 0.0
      %v4091 = vmax.f32 %v4014, 0.0
      %v4092 = vmax.f32 %v4017, 0.0
      %v4093 = vmax.f32 %v4020, 0.0
      %v4094 = vmax.f32 %v4023, 0.0
      %v4095 = vmax.f32 %v4026, 0.0
      %v4096 = vmax.f32 %v4029, 0.0
      %v4097 = vmax.f32 %v4032, 0.0
      %v4098 = vmax.f32 %v4035, 0.0
      %v4099 = vmax.f32 %v4038, 0.0
      %v4100 = vmax.f32 %v4041, 0.0
      %v4101 = vmax.f32 %v4044, 0.0
      %v4102 = vmax.f32 %v4047, 0.0
      %v4103 = vmax.f32 %v4050, 0.0
      %v4104 = vmax.f32 %v4053, 0.0
      %v4105 = vmax.f32 %v4056, 0.0
      %v4106 = vmax.f32 %v4059, 0.0
      %v4107 = vmax.f32 %v4062, 0.0
      %v4108 = vmax.f32 %v4065, 0.0
      %v4109 = vmax.f32 %v4068, 0.0
      %v4110 = vmax.f32 %v4071, 0.0
      %v4111 = vmax.f32 %v4074, 0.0
      %v4112 = vmax.f32 %v4077, 0.0
      %v4113 = vmax.f32 %v4080, 0.0
      %v4115 = vperm.slane %v2498, 0
      %v4118 = vsel %vm707, %v4082, 0
      %v4121 = vsel %vm707, %v4083, 0
      %v4124 = vsel %vm707, %v4084, 0
      %v4127 = vsel %vm707, %v4085, 0
      %v4130 = vsel %vm707, %v4086, 0
      %v4133 = vsel %vm707, %v4087, 0
      %v4136 = vsel %vm707, %v4088, 0
      %v4139 = vsel %vm707, %v4089, 0
      %v4142 = vsel %vm707, %v4090, 0
      %v4145 = vsel %vm707, %v4091, 0
      %v4148 = vsel %vm707, %v4092, 0
      %v4151 = vsel %vm707, %v4093, 0
      %v4154 = vsel %vm707, %v4094, 0
      %v4157 = vsel %vm707, %v4095, 0
      %v4160 = vsel %vm707, %v4096, 0
      %v4163 = vsel %vm707, %v4097, 0
      %v4166 = vsel %vm707, %v4098, 0
      %v4169 = vsel %vm707, %v4099, 0
      %v4172 = vsel %vm707, %v4100, 0
      %v4175 = vsel %vm707, %v4101, 0
      %v4178 = vsel %vm707, %v4102, 0
      %v4181 = vsel %vm707, %v4103, 0
      %v4184 = vsel %vm707, %v4104, 0
      %v4187 = vsel %vm707, %v4105, 0
      %v4190 = vsel %vm707, %v4106, 0
      %v4193 = vsel %vm707, %v4107, 0
      %v4196 = vsel %vm707, %v4108, 0
      %v4199 = vsel %vm707, %v4109, 0
      %v4202 = vsel %vm707, %v4110, 0
      %v4205 = vsel %vm707, %v4111, 0
      %v4208 = vsel %vm707, %v4112, 0
      %v4211 = vsel %vm707, %v4113, 0
      %4213 = vmatpush.msra.mxu0 0.0
      %4214 = vmatpush.msra.mxu0 0.0
      %4215 = vmatpush.msra.mxu0 0.0
      %4216 = vmatpush.msra.mxu0 0.0
      %4217 = vmatpush.msra.mxu0 0.0
      %4218 = vmatpush.msra.mxu0 0.0
      %4219 = vmatpush.msra.mxu0 0.0
      %4220 = vmatpush.msra.mxu0 0.0
      %4221 = vmatpush.msra.mxu0 0.0
      %4222 = vmatpush.msra.mxu0 0.0
      %4223 = vmatpush.msra.mxu0 0.0
      %4224 = vmatpush.msra.mxu0 0.0
      %4225 = vmatpush.msra.mxu0 0.0
      %4226 = vmatpush.msra.mxu0 0.0
      %4227 = vmatpush.msra.mxu0 0.0
      %4228 = vmatpush.msra.mxu0 %v2496
      %4229 = vmatmul.f32.gmra.mxu0 %v4118
      %v4230 = vpop.f32.mrf.mxu0
      %v4231 = vadd.f32 %v4115, %v4230
      %4232 = vmatmul.f32.gmra.mxu0 %v4121
      %v4233 = vpop.f32.mrf.mxu0
      %v4234 = vadd.f32 %v4115, %v4233
      %4235 = vmatmul.f32.gmra.mxu0 %v4124
      %v4236 = vpop.f32.mrf.mxu0
      %v4237 = vadd.f32 %v4115, %v4236
      %4238 = vmatmul.f32.gmra.mxu0 %v4127
      %v4239 = vpop.f32.mrf.mxu0
      %v4240 = vadd.f32 %v4115, %v4239
      %4241 = vmatmul.f32.gmra.mxu0 %v4130
      %v4242 = vpop.f32.mrf.mxu0
      %v4243 = vadd.f32 %v4115, %v4242
      %4244 = vmatmul.f32.gmra.mxu0 %v4133
      %v4245 = vpop.f32.mrf.mxu0
      %v4246 = vadd.f32 %v4115, %v4245
      %4247 = vmatmul.f32.gmra.mxu0 %v4136
      %v4248 = vpop.f32.mrf.mxu0
      %v4249 = vadd.f32 %v4115, %v4248
      %4250 = vmatmul.f32.gmra.mxu0 %v4139
      %v4251 = vpop.f32.mrf.mxu0
      %v4252 = vadd.f32 %v4115, %v4251
      %4253 = vmatmul.f32.gmra.mxu0 %v4142
      %v4254 = vpop.f32.mrf.mxu0
      %v4255 = vadd.f32 %v4115, %v4254
      %4256 = vmatmul.f32.gmra.mxu0 %v4145
      %v4257 = vpop.f32.mrf.mxu0
      %v4258 = vadd.f32 %v4115, %v4257
      %4259 = vmatmul.f32.gmra.mxu0 %v4148
      %v4260 = vpop.f32.mrf.mxu0
      %v4261 = vadd.f32 %v4115, %v4260
      %4262 = vmatmul.f32.gmra.mxu0 %v4151
      %v4263 = vpop.f32.mrf.mxu0
      %v4264 = vadd.f32 %v4115, %v4263
      %4265 = vmatmul.f32.gmra.mxu0 %v4154
      %v4266 = vpop.f32.mrf.mxu0
      %v4267 = vadd.f32 %v4115, %v4266
      %4268 = vmatmul.f32.gmra.mxu0 %v4157
      %v4269 = vpop.f32.mrf.mxu0
      %v4270 = vadd.f32 %v4115, %v4269
      %4271 = vmatmul.f32.gmra.mxu0 %v4160
      %v4272 = vpop.f32.mrf.mxu0
      %v4273 = vadd.f32 %v4115, %v4272
      %4274 = vmatmul.f32.gmra.mxu0 %v4163
      %v4275 = vpop.f32.mrf.mxu0
      %v4276 = vadd.f32 %v4115, %v4275
      %4277 = vmatmul.f32.gmra.mxu0 %v4166
      %v4278 = vpop.f32.mrf.mxu0
      %v4279 = vadd.f32 %v4115, %v4278
      %4280 = vmatmul.f32.gmra.mxu0 %v4169
      %v4281 = vpop.f32.mrf.mxu0
      %v4282 = vadd.f32 %v4115, %v4281
      %4283 = vmatmul.f32.gmra.mxu0 %v4172
      %v4284 = vpop.f32.mrf.mxu0
      %v4285 = vadd.f32 %v4115, %v4284
      %4286 = vmatmul.f32.gmra.mxu0 %v4175
      %v4287 = vpop.f32.mrf.mxu0
      %v4288 = vadd.f32 %v4115, %v4287
      %4289 = vmatmul.f32.gmra.mxu0 %v4178
      %v4290 = vpop.f32.mrf.mxu0
      %v4291 = vadd.f32 %v4115, %v4290
      %4292 = vmatmul.f32.gmra.mxu0 %v4181
      %v4293 = vpop.f32.mrf.mxu0
      %v4294 = vadd.f32 %v4115, %v4293
      %4295 = vmatmul.f32.gmra.mxu0 %v4184
      %v4296 = vpop.f32.mrf.mxu0
      %v4297 = vadd.f32 %v4115, %v4296
      %4298 = vmatmul.f32.gmra.mxu0 %v4187
      %v4299 = vpop.f32.mrf.mxu0
      %v4300 = vadd.f32 %v4115, %v4299
      %4301 = vmatmul.f32.gmra.mxu0 %v4190
      %v4302 = vpop.f32.mrf.mxu0
      %v4303 = vadd.f32 %v4115, %v4302
      %4304 = vmatmul.f32.gmra.mxu0 %v4193
      %v4305 = vpop.f32.mrf.mxu0
      %v4306 = vadd.f32 %v4115, %v4305
      %4307 = vmatmul.f32.gmra.mxu0 %v4196
      %v4308 = vpop.f32.mrf.mxu0
      %v4309 = vadd.f32 %v4115, %v4308
      %4310 = vmatmul.f32.gmra.mxu0 %v4199
      %v4311 = vpop.f32.mrf.mxu0
      %v4312 = vadd.f32 %v4115, %v4311
      %4313 = vmatmul.f32.gmra.mxu0 %v4202
      %v4314 = vpop.f32.mrf.mxu0
      %v4315 = vadd.f32 %v4115, %v4314
      %4316 = vmatmul.f32.gmra.mxu0 %v4205
      %v4317 = vpop.f32.mrf.mxu0
      %v4318 = vadd.f32 %v4115, %v4317
      %4319 = vmatmul.f32.gmra.mxu0 %v4208
      %v4320 = vpop.f32.mrf.mxu0
      %v4321 = vadd.f32 %v4115, %v4320
      %4322 = vmatmul.f32.gmra.mxu0 %v4211
      %v4323 = vpop.f32.mrf.mxu0
      %v4324 = vadd.f32 %v4115, %v4323
      %4325 = vdwg.mxu0
      %v4326 = vadd.f32 %v2426, %v4231
      %v4327 = vadd.f32 %v2427, %v4234
      %v4328 = vadd.f32 %v2428, %v4237
      %v4329 = vadd.f32 %v2429, %v4240
      %v4330 = vadd.f32 %v2430, %v4243
      %v4331 = vadd.f32 %v2431, %v4246
      %v4332 = vadd.f32 %v2432, %v4249
      %v4333 = vadd.f32 %v2433, %v4252
      %v4334 = vadd.f32 %v2434, %v4255
      %v4335 = vadd.f32 %v2435, %v4258
      %v4336 = vadd.f32 %v2436, %v4261
      %v4337 = vadd.f32 %v2437, %v4264
      %v4338 = vadd.f32 %v2438, %v4267
      %v4339 = vadd.f32 %v2439, %v4270
      %v4340 = vadd.f32 %v2440, %v4273
      %v4341 = vadd.f32 %v2441, %v4276
      %v4342 = vadd.f32 %v2442, %v4279
      %v4343 = vadd.f32 %v2443, %v4282
      %v4344 = vadd.f32 %v2444, %v4285
      %v4345 = vadd.f32 %v2445, %v4288
      %v4346 = vadd.f32 %v2446, %v4291
      %v4347 = vadd.f32 %v2447, %v4294
      %v4348 = vadd.f32 %v2448, %v4297
      %v4349 = vadd.f32 %v2449, %v4300
      %v4350 = vadd.f32 %v2450, %v4303
      %v4351 = vadd.f32 %v2451, %v4306
      %v4352 = vadd.f32 %v2452, %v4309
      %v4353 = vadd.f32 %v2453, %v4312
      %v4354 = vadd.f32 %v2454, %v4315
      %v4355 = vadd.f32 %v2455, %v4318
      %v4356 = vadd.f32 %v2456, %v4321
      %v4357 = vadd.f32 %v2457, %v4324
      %v4358 = vmax.f32 %v4326, 0.0
      %v4359 = vmax.f32 %v4327, 0.0
      %v4360 = vmax.f32 %v4328, 0.0
      %v4361 = vmax.f32 %v4329, 0.0
      %v4362 = vmax.f32 %v4330, 0.0
      %v4363 = vmax.f32 %v4331, 0.0
      %v4364 = vmax.f32 %v4332, 0.0
      %v4365 = vmax.f32 %v4333, 0.0
      %v4366 = vmax.f32 %v4334, 0.0
      %v4367 = vmax.f32 %v4335, 0.0
      %v4368 = vmax.f32 %v4336, 0.0
      %v4369 = vmax.f32 %v4337, 0.0
      %v4370 = vmax.f32 %v4338, 0.0
      %v4371 = vmax.f32 %v4339, 0.0
      %v4372 = vmax.f32 %v4340, 0.0
      %v4373 = vmax.f32 %v4341, 0.0
      %v4374 = vmax.f32 %v4342, 0.0
      %v4375 = vmax.f32 %v4343, 0.0
      %v4376 = vmax.f32 %v4344, 0.0
      %v4377 = vmax.f32 %v4345, 0.0
      %v4378 = vmax.f32 %v4346, 0.0
      %v4379 = vmax.f32 %v4347, 0.0
      %v4380 = vmax.f32 %v4348, 0.0
      %v4381 = vmax.f32 %v4349, 0.0
      %v4382 = vmax.f32 %v4350, 0.0
      %v4383 = vmax.f32 %v4351, 0.0
      %v4384 = vmax.f32 %v4352, 0.0
      %v4385 = vmax.f32 %v4353, 0.0
      %v4386 = vmax.f32 %v4354, 0.0
      %v4387 = vmax.f32 %v4355, 0.0
      %v4388 = vmax.f32 %v4356, 0.0
      %v4389 = vmax.f32 %v4357, 0.0
      %v4422 = vrot.slane %v4358, 7
      %v4423 = vrot.slane %v4359, 7
      %v4424 = vsel %vm422, %v4422, %v4423
      %v4425 = vrot.slane %v4360, 7
      %v4426 = vrot.slane %v4361, 7
      %v4427 = vsel %vm422, %v4425, %v4426
      %v4428 = vrot.slane %v4362, 7
      %v4429 = vrot.slane %v4363, 7
      %v4430 = vsel %vm422, %v4428, %v4429
      %v4431 = vrot.slane %v4364, 7
      %v4432 = vrot.slane %v4365, 7
      %v4433 = vsel %vm422, %v4431, %v4432
      %v4434 = vrot.slane %v4366, 7
      %v4435 = vrot.slane %v4367, 7
      %v4436 = vsel %vm422, %v4434, %v4435
      %v4437 = vrot.slane %v4368, 7
      %v4438 = vrot.slane %v4369, 7
      %v4439 = vsel %vm422, %v4437, %v4438
      %v4440 = vrot.slane %v4370, 7
      %v4441 = vrot.slane %v4371, 7
      %v4442 = vsel %vm422, %v4440, %v4441
      %v4443 = vrot.slane %v4372, 7
      %v4444 = vrot.slane %v4373, 7
      %v4445 = vsel %vm422, %v4443, %v4444
      %v4446 = vrot.slane %v4374, 7
      %v4447 = vrot.slane %v4375, 7
      %v4448 = vsel %vm422, %v4446, %v4447
      %v4449 = vrot.slane %v4376, 7
      %v4450 = vrot.slane %v4377, 7
      %v4451 = vsel %vm422, %v4449, %v4450
      %v4452 = vrot.slane %v4378, 7
      %v4453 = vrot.slane %v4379, 7
      %v4454 = vsel %vm422, %v4452, %v4453
      %v4455 = vrot.slane %v4380, 7
      %v4456 = vrot.slane %v4381, 7
      %v4457 = vsel %vm422, %v4455, %v4456
      %v4458 = vrot.slane %v4382, 7
      %v4459 = vrot.slane %v4383, 7
      %v4460 = vsel %vm422, %v4458, %v4459
      %v4461 = vrot.slane %v4384, 7
      %v4462 = vrot.slane %v4385, 7
      %v4463 = vsel %vm422, %v4461, %v4462
      %v4464 = vrot.slane %v4386, 7
      %v4465 = vrot.slane %v4387, 7
      %v4466 = vsel %vm422, %v4464, %v4465
      %v4467 = vrot.slane %v4388, 7
      %v4468 = vrot.slane %v4389, 7
      %v4469 = vsel %vm422, %v4467, %v4468
      %v4517 = vsel %vm422, 0.0, %v4422
      %v4518 = vsel %vm422, 0.0, %v4425
      %v4519 = vsel %vm422, 0.0, %v4428
      %v4520 = vsel %vm422, 0.0, %v4431
      %v4521 = vsel %vm422, 0.0, %v4434
      %v4522 = vsel %vm422, 0.0, %v4437
      %v4523 = vsel %vm422, 0.0, %v4440
      %v4524 = vsel %vm422, 0.0, %v4443
      %v4525 = vsel %vm422, 0.0, %v4446
      %v4526 = vsel %vm422, 0.0, %v4449
      %v4527 = vsel %vm422, 0.0, %v4452
      %v4528 = vsel %vm422, 0.0, %v4455
      %v4529 = vsel %vm422, 0.0, %v4458
      %v4530 = vsel %vm422, 0.0, %v4461
      %v4531 = vsel %vm422, 0.0, %v4464
      %v4532 = vsel %vm422, 0.0, %v4467
      %v4533 = vsel %vm422, %v4423, 0.0
      %v4534 = vsel %vm422, %v4426, 0.0
      %v4535 = vsel %vm422, %v4429, 0.0
      %v4536 = vsel %vm422, %v4432, 0.0
      %v4537 = vsel %vm422, %v4435, 0.0
      %v4538 = vsel %vm422, %v4438, 0.0
      %v4539 = vsel %vm422, %v4441, 0.0
      %v4540 = vsel %vm422, %v4444, 0.0
      %v4541 = vsel %vm422, %v4447, 0.0
      %v4542 = vsel %vm422, %v4450, 0.0
      %v4543 = vsel %vm422, %v4453, 0.0
      %v4544 = vsel %vm422, %v4456, 0.0
      %v4545 = vsel %vm422, %v4459, 0.0
      %v4546 = vsel %vm422, %v4462, 0.0
      %v4547 = vsel %vm422, %v4465, 0.0
      %v4548 = vsel %vm422, %v4468, 0.0
      %v4579 = vrot.slane %v4517, 1
      %v4580 = vrot.slane %v4424, 1
      %v4581 = vsel %vm457, %v4579, %v4580
      %v4582 = vrot.slane %v4533, 1
      %v4583 = vsel %vm457, %v4580, %v4582
      %v4584 = vrot.slane %v4518, 1
      %v4585 = vrot.slane %v4427, 1
      %v4586 = vsel %vm457, %v4584, %v4585
      %v4587 = vrot.slane %v4534, 1
      %v4588 = vsel %vm457, %v4585, %v4587
      %v4589 = vrot.slane %v4519, 1
      %v4590 = vrot.slane %v4430, 1
      %v4591 = vsel %vm457, %v4589, %v4590
      %v4592 = vrot.slane %v4535, 1
      %v4593 = vsel %vm457, %v4590, %v4592
      %v4594 = vrot.slane %v4520, 1
      %v4595 = vrot.slane %v4433, 1
      %v4596 = vsel %vm457, %v4594, %v4595
      %v4597 = vrot.slane %v4536, 1
      %v4598 = vsel %vm457, %v4595, %v4597
      %v4599 = vrot.slane %v4521, 1
      %v4600 = vrot.slane %v4436, 1
      %v4601 = vsel %vm457, %v4599, %v4600
      %v4602 = vrot.slane %v4537, 1
      %v4603 = vsel %vm457, %v4600, %v4602
      %v4604 = vrot.slane %v4522, 1
      %v4605 = vrot.slane %v4439, 1
      %v4606 = vsel %vm457, %v4604, %v4605
      %v4607 = vrot.slane %v4538, 1
      %v4608 = vsel %vm457, %v4605, %v4607
      %v4609 = vrot.slane %v4523, 1
      %v4610 = vrot.slane %v4442, 1
      %v4611 = vsel %vm457, %v4609, %v4610
      %v4612 = vrot.slane %v4539, 1
      %v4613 = vsel %vm457, %v4610, %v4612
      %v4614 = vrot.slane %v4524, 1
      %v4615 = vrot.slane %v4445, 1
      %v4616 = vsel %vm457, %v4614, %v4615
      %v4617 = vrot.slane %v4540, 1
      %v4618 = vsel %vm457, %v4615, %v4617
      %v4619 = vrot.slane %v4525, 1
      %v4620 = vrot.slane %v4448, 1
      %v4621 = vsel %vm457, %v4619, %v4620
      %v4622 = vrot.slane %v4541, 1
      %v4623 = vsel %vm457, %v4620, %v4622
      %v4624 = vrot.slane %v4526, 1
      %v4625 = vrot.slane %v4451, 1
      %v4626 = vsel %vm457, %v4624, %v4625
      %v4627 = vrot.slane %v4542, 1
      %v4628 = vsel %vm457, %v4625, %v4627
      %v4629 = vrot.slane %v4527, 1
      %v4630 = vrot.slane %v4454, 1
      %v4631 = vsel %vm457, %v4629, %v4630
      %v4632 = vrot.slane %v4543, 1
      %v4633 = vsel %vm457, %v4630, %v4632
      %v4634 = vrot.slane %v4528, 1
      %v4635 = vrot.slane %v4457, 1
      %v4636 = vsel %vm457, %v4634, %v4635
      %v4637 = vrot.slane %v4544, 1
      %v4638 = vsel %vm457, %v4635, %v4637
      %v4639 = vrot.slane %v4529, 1
      %v4640 = vrot.slane %v4460, 1
      %v4641 = vsel %vm457, %v4639, %v4640
      %v4642 = vrot.slane %v4545, 1
      %v4643 = vsel %vm457, %v4640, %v4642
      %v4644 = vrot.slane %v4530, 1
      %v4645 = vrot.slane %v4463, 1
      %v4646 = vsel %vm457, %v4644, %v4645
      %v4647 = vrot.slane %v4546, 1
      %v4648 = vsel %vm457, %v4645, %v4647
      %v4649 = vrot.slane %v4531, 1
      %v4650 = vrot.slane %v4466, 1
      %v4651 = vsel %vm457, %v4649, %v4650
      %v4652 = vrot.slane %v4547, 1
      %v4653 = vsel %vm457, %v4650, %v4652
      %4654 = vrot.lane.b32.xlu0 %v4581, 16
      %v4655 = vpop.permute.xlu0 %4654
      %4656 = vrot.lane.b32.xlu0 %v4583, 16
      %v4657 = vpop.permute.xlu0 %4656
      %4658 = vrot.lane.b32.xlu0 %v4586, 16
      %v4659 = vpop.permute.xlu0 %4658
      %4660 = vrot.lane.b32.xlu0 %v4588, 16
      %v4661 = vpop.permute.xlu0 %4660
      %4662 = vrot.lane.b32.xlu0 %v4591, 16
      %v4663 = vpop.permute.xlu0 %4662
      %4664 = vrot.lane.b32.xlu0 %v4593, 16
      %v4665 = vpop.permute.xlu0 %4664
      %4666 = vrot.lane.b32.xlu0 %v4596, 16
      %v4667 = vpop.permute.xlu0 %4666
      %4668 = vrot.lane.b32.xlu0 %v4598, 16
      %v4669 = vpop.permute.xlu0 %4668
      %4670 = vrot.lane.b32.xlu0 %v4601, 16
      %v4671 = vpop.permute.xlu0 %4670
      %4672 = vrot.lane.b32.xlu0 %v4603, 16
      %v4673 = vpop.permute.xlu0 %4672
      %4674 = vrot.lane.b32.xlu0 %v4606, 16
      %v4675 = vpop.permute.xlu0 %4674
      %4676 = vrot.lane.b32.xlu0 %v4608, 16
      %v4677 = vpop.permute.xlu0 %4676
      %4678 = vrot.lane.b32.xlu0 %v4611, 16
      %v4679 = vpop.permute.xlu0 %4678
      %4680 = vrot.lane.b32.xlu0 %v4613, 16
      %v4681 = vpop.permute.xlu0 %4680
      %4682 = vrot.lane.b32.xlu0 %v4616, 16
      %v4683 = vpop.permute.xlu0 %4682
      %4684 = vrot.lane.b32.xlu0 %v4618, 16
      %v4685 = vpop.permute.xlu0 %4684
      %4686 = vrot.lane.b32.xlu0 %v4621, 16
      %v4687 = vpop.permute.xlu0 %4686
      %4688 = vrot.lane.b32.xlu0 %v4623, 16
      %v4689 = vpop.permute.xlu0 %4688
      %4690 = vrot.lane.b32.xlu0 %v4626, 16
      %v4691 = vpop.permute.xlu0 %4690
      %4692 = vrot.lane.b32.xlu0 %v4628, 16
      %v4693 = vpop.permute.xlu0 %4692
      %4694 = vrot.lane.b32.xlu0 %v4631, 16
      %v4695 = vpop.permute.xlu0 %4694
      %4696 = vrot.lane.b32.xlu0 %v4633, 16
      %v4697 = vpop.permute.xlu0 %4696
      %4698 = vrot.lane.b32.xlu0 %v4636, 16
      %v4699 = vpop.permute.xlu0 %4698
      %4700 = vrot.lane.b32.xlu0 %v4638, 16
      %v4701 = vpop.permute.xlu0 %4700
      %4702 = vrot.lane.b32.xlu0 %v4641, 16
      %v4703 = vpop.permute.xlu0 %4702
      %4704 = vrot.lane.b32.xlu0 %v4643, 16
      %v4705 = vpop.permute.xlu0 %4704
      %4706 = vrot.lane.b32.xlu0 %v4646, 16
      %v4707 = vpop.permute.xlu0 %4706
      %4708 = vrot.lane.b32.xlu0 %v4648, 16
      %v4709 = vpop.permute.xlu0 %4708
      %4710 = vrot.lane.b32.xlu0 %v4651, 16
      %v4711 = vpop.permute.xlu0 %4710
      %4712 = vrot.lane.b32.xlu0 %v4653, 16
      %v4713 = vpop.permute.xlu0 %4712
      %v4744 = vrot.slane %v4517, 2
      %v4745 = vrot.slane %v4424, 2
      %v4746 = vsel %vm506, %v4744, %v4745
      %v4747 = vrot.slane %v4533, 2
      %v4748 = vsel %vm506, %v4745, %v4747
      %v4749 = vrot.slane %v4518, 2
      %v4750 = vrot.slane %v4427, 2
      %v4751 = vsel %vm506, %v4749, %v4750
      %v4752 = vrot.slane %v4534, 2
      %v4753 = vsel %vm506, %v4750, %v4752
      %v4754 = vrot.slane %v4519, 2
      %v4755 = vrot.slane %v4430, 2
      %v4756 = vsel %vm506, %v4754, %v4755
      %v4757 = vrot.slane %v4535, 2
      %v4758 = vsel %vm506, %v4755, %v4757
      %v4759 = vrot.slane %v4520, 2
      %v4760 = vrot.slane %v4433, 2
      %v4761 = vsel %vm506, %v4759, %v4760
      %v4762 = vrot.slane %v4536, 2
      %v4763 = vsel %vm506, %v4760, %v4762
      %v4764 = vrot.slane %v4521, 2
      %v4765 = vrot.slane %v4436, 2
      %v4766 = vsel %vm506, %v4764, %v4765
      %v4767 = vrot.slane %v4537, 2
      %v4768 = vsel %vm506, %v4765, %v4767
      %v4769 = vrot.slane %v4522, 2
      %v4770 = vrot.slane %v4439, 2
      %v4771 = vsel %vm506, %v4769, %v4770
      %v4772 = vrot.slane %v4538, 2
      %v4773 = vsel %vm506, %v4770, %v4772
      %v4774 = vrot.slane %v4523, 2
      %v4775 = vrot.slane %v4442, 2
      %v4776 = vsel %vm506, %v4774, %v4775
      %v4777 = vrot.slane %v4539, 2
      %v4778 = vsel %vm506, %v4775, %v4777
      %v4779 = vrot.slane %v4524, 2
      %v4780 = vrot.slane %v4445, 2
      %v4781 = vsel %vm506, %v4779, %v4780
      %v4782 = vrot.slane %v4540, 2
      %v4783 = vsel %vm506, %v4780, %v4782
      %v4784 = vrot.slane %v4525, 2
      %v4785 = vrot.slane %v4448, 2
      %v4786 = vsel %vm506, %v4784, %v4785
      %v4787 = vrot.slane %v4541, 2
      %v4788 = vsel %vm506, %v4785, %v4787
      %v4789 = vrot.slane %v4526, 2
      %v4790 = vrot.slane %v4451, 2
      %v4791 = vsel %vm506, %v4789, %v4790
      %v4792 = vrot.slane %v4542, 2
      %v4793 = vsel %vm506, %v4790, %v4792
      %v4794 = vrot.slane %v4527, 2
      %v4795 = vrot.slane %v4454, 2
      %v4796 = vsel %vm506, %v4794, %v4795
      %v4797 = vrot.slane %v4543, 2
      %v4798 = vsel %vm506, %v4795, %v4797
      %v4799 = vrot.slane %v4528, 2
      %v4800 = vrot.slane %v4457, 2
      %v4801 = vsel %vm506, %v4799, %v4800
      %v4802 = vrot.slane %v4544, 2
      %v4803 = vsel %vm506, %v4800, %v4802
      %v4804 = vrot.slane %v4529, 2
      %v4805 = vrot.slane %v4460, 2
      %v4806 = vsel %vm506, %v4804, %v4805
      %v4807 = vrot.slane %v4545, 2
      %v4808 = vsel %vm506, %v4805, %v4807
      %v4809 = vrot.slane %v4530, 2
      %v4810 = vrot.slane %v4463, 2
      %v4811 = vsel %vm506, %v4809, %v4810
      %v4812 = vrot.slane %v4546, 2
      %v4813 = vsel %vm506, %v4810, %v4812
      %v4814 = vrot.slane %v4531, 2
      %v4815 = vrot.slane %v4466, 2
      %v4816 = vsel %vm506, %v4814, %v4815
      %v4817 = vrot.slane %v4547, 2
      %v4818 = vsel %vm506, %v4815, %v4817
      %4819 = vrot.lane.b32.xlu0 %v4746, 32
      %v4820 = vpop.permute.xlu0 %4819
      %4821 = vrot.lane.b32.xlu0 %v4748, 32
      %v4822 = vpop.permute.xlu0 %4821
      %4823 = vrot.lane.b32.xlu0 %v4751, 32
      %v4824 = vpop.permute.xlu0 %4823
      %4825 = vrot.lane.b32.xlu0 %v4753, 32
      %v4826 = vpop.permute.xlu0 %4825
      %4827 = vrot.lane.b32.xlu0 %v4756, 32
      %v4828 = vpop.permute.xlu0 %4827
      %4829 = vrot.lane.b32.xlu0 %v4758, 32
      %v4830 = vpop.permute.xlu0 %4829
      %4831 = vrot.lane.b32.xlu0 %v4761, 32
      %v4832 = vpop.permute.xlu0 %4831
      %4833 = vrot.lane.b32.xlu0 %v4763, 32
      %v4834 = vpop.permute.xlu0 %4833
      %4835 = vrot.lane.b32.xlu0 %v4766, 32
      %v4836 = vpop.permute.xlu0 %4835
      %4837 = vrot.lane.b32.xlu0 %v4768, 32
      %v4838 = vpop.permute.xlu0 %4837
      %4839 = vrot.lane.b32.xlu0 %v4771, 32
      %v4840 = vpop.permute.xlu0 %4839
      %4841 = vrot.lane.b32.xlu0 %v4773, 32
      %v4842 = vpop.permute.xlu0 %4841
      %4843 = vrot.lane.b32.xlu0 %v4776, 32
      %v4844 = vpop.permute.xlu0 %4843
      %4845 = vrot.lane.b32.xlu0 %v4778, 32
      %v4846 = vpop.permute.xlu0 %4845
      %4847 = vrot.lane.b32.xlu0 %v4781, 32
      %v4848 = vpop.permute.xlu0 %4847
      %4849 = vrot.lane.b32.xlu0 %v4783, 32
      %v4850 = vpop.permute.xlu0 %4849
      %4851 = vrot.lane.b32.xlu0 %v4786, 32
      %v4852 = vpop.permute.xlu0 %4851
      %4853 = vrot.lane.b32.xlu0 %v4788, 32
      %v4854 = vpop.permute.xlu0 %4853
      %4855 = vrot.lane.b32.xlu0 %v4791, 32
      %v4856 = vpop.permute.xlu0 %4855
      %4857 = vrot.lane.b32.xlu0 %v4793, 32
      %v4858 = vpop.permute.xlu0 %4857
      %4859 = vrot.lane.b32.xlu0 %v4796, 32
      %v4860 = vpop.permute.xlu0 %4859
      %4861 = vrot.lane.b32.xlu0 %v4798, 32
      %v4862 = vpop.permute.xlu0 %4861
      %4863 = vrot.lane.b32.xlu0 %v4801, 32
      %v4864 = vpop.permute.xlu0 %4863
      %4865 = vrot.lane.b32.xlu0 %v4803, 32
      %v4866 = vpop.permute.xlu0 %4865
      %4867 = vrot.lane.b32.xlu0 %v4806, 32
      %v4868 = vpop.permute.xlu0 %4867
      %4869 = vrot.lane.b32.xlu0 %v4808, 32
      %v4870 = vpop.permute.xlu0 %4869
      %4871 = vrot.lane.b32.xlu0 %v4811, 32
      %v4872 = vpop.permute.xlu0 %4871
      %4873 = vrot.lane.b32.xlu0 %v4813, 32
      %v4874 = vpop.permute.xlu0 %4873
      %4875 = vrot.lane.b32.xlu0 %v4816, 32
      %v4876 = vpop.permute.xlu0 %4875
      %4877 = vrot.lane.b32.xlu0 %v4818, 32
      %v4878 = vpop.permute.xlu0 %4877
      %4910 = vrot.lane.b32.xlu0 %v4517, 48
      %v4911 = vpop.permute.xlu0 %4910
      %4912 = vrot.lane.b32.xlu0 %v4424, 48
      %v4913 = vpop.permute.xlu0 %4912
      %4914 = vrot.lane.b32.xlu0 %v4518, 48
      %v4915 = vpop.permute.xlu0 %4914
      %4916 = vrot.lane.b32.xlu0 %v4427, 48
      %v4917 = vpop.permute.xlu0 %4916
      %4918 = vrot.lane.b32.xlu0 %v4519, 48
      %v4919 = vpop.permute.xlu0 %4918
      %4920 = vrot.lane.b32.xlu0 %v4430, 48
      %v4921 = vpop.permute.xlu0 %4920
      %4922 = vrot.lane.b32.xlu0 %v4520, 48
      %v4923 = vpop.permute.xlu0 %4922
      %4924 = vrot.lane.b32.xlu0 %v4433, 48
      %v4925 = vpop.permute.xlu0 %4924
      %4926 = vrot.lane.b32.xlu0 %v4521, 48
      %v4927 = vpop.permute.xlu0 %4926
      %4928 = vrot.lane.b32.xlu0 %v4436, 48
      %v4929 = vpop.permute.xlu0 %4928
      %4930 = vrot.lane.b32.xlu0 %v4522, 48
      %v4931 = vpop.permute.xlu0 %4930
      %4932 = vrot.lane.b32.xlu0 %v4439, 48
      %v4933 = vpop.permute.xlu0 %4932
      %4934 = vrot.lane.b32.xlu0 %v4523, 48
      %v4935 = vpop.permute.xlu0 %4934
      %4936 = vrot.lane.b32.xlu0 %v4442, 48
      %v4937 = vpop.permute.xlu0 %4936
      %4938 = vrot.lane.b32.xlu0 %v4524, 48
      %v4939 = vpop.permute.xlu0 %4938
      %4940 = vrot.lane.b32.xlu0 %v4445, 48
      %v4941 = vpop.permute.xlu0 %4940
      %4942 = vrot.lane.b32.xlu0 %v4525, 48
      %v4943 = vpop.permute.xlu0 %4942
      %4944 = vrot.lane.b32.xlu0 %v4448, 48
      %v4945 = vpop.permute.xlu0 %4944
      %4946 = vrot.lane.b32.xlu0 %v4526, 48
      %v4947 = vpop.permute.xlu0 %4946
      %4948 = vrot.lane.b32.xlu0 %v4451, 48
      %v4949 = vpop.permute.xlu0 %4948
      %4950 = vrot.lane.b32.xlu0 %v4527, 48
      %v4951 = vpop.permute.xlu0 %4950
      %4952 = vrot.lane.b32.xlu0 %v4454, 48
      %v4953 = vpop.permute.xlu0 %4952
      %4954 = vrot.lane.b32.xlu0 %v4528, 48
      %v4955 = vpop.permute.xlu0 %4954
      %4956 = vrot.lane.b32.xlu0 %v4457, 48
      %v4957 = vpop.permute.xlu0 %4956
      %4958 = vrot.lane.b32.xlu0 %v4529, 48
      %v4959 = vpop.permute.xlu0 %4958
      %4960 = vrot.lane.b32.xlu0 %v4460, 48
      %v4961 = vpop.permute.xlu0 %4960
      %4962 = vrot.lane.b32.xlu0 %v4530, 48
      %v4963 = vpop.permute.xlu0 %4962
      %4964 = vrot.lane.b32.xlu0 %v4463, 48
      %v4965 = vpop.permute.xlu0 %4964
      %4966 = vrot.lane.b32.xlu0 %v4531, 48
      %v4967 = vpop.permute.xlu0 %4966
      %4968 = vrot.lane.b32.xlu0 %v4466, 48
      %v4969 = vpop.permute.xlu0 %4968
      %4970 = vrot.lane.b32.xlu0 %v4532, 48
      %v4971 = vpop.permute.xlu0 %4970
      %4972 = vrot.lane.b32.xlu0 %v4469, 48
      %v4973 = vpop.permute.xlu0 %4972
      %v5007 = vrot.slane %v4532, 1
      %v5008 = vrot.slane %v4469, 1
      %v5009 = vsel %vm457, %v5007, %v5008
      %v5010 = vrot.slane %v4548, 1
      %v5011 = vsel %vm457, %v5008, %v5010
      %5012 = vrot.lane.b32.xlu0 %v4581, 64
      %v5013 = vpop.permute.xlu0 %5012
      %5014 = vrot.lane.b32.xlu0 %v4583, 64
      %v5015 = vpop.permute.xlu0 %5014
      %5016 = vrot.lane.b32.xlu0 %v4586, 64
      %v5017 = vpop.permute.xlu0 %5016
      %5018 = vrot.lane.b32.xlu0 %v4588, 64
      %v5019 = vpop.permute.xlu0 %5018
      %5020 = vrot.lane.b32.xlu0 %v4591, 64
      %v5021 = vpop.permute.xlu0 %5020
      %5022 = vrot.lane.b32.xlu0 %v4593, 64
      %v5023 = vpop.permute.xlu0 %5022
      %5024 = vrot.lane.b32.xlu0 %v4596, 64
      %v5025 = vpop.permute.xlu0 %5024
      %5026 = vrot.lane.b32.xlu0 %v4598, 64
      %v5027 = vpop.permute.xlu0 %5026
      %5028 = vrot.lane.b32.xlu0 %v4601, 64
      %v5029 = vpop.permute.xlu0 %5028
      %5030 = vrot.lane.b32.xlu0 %v4603, 64
      %v5031 = vpop.permute.xlu0 %5030
      %5032 = vrot.lane.b32.xlu0 %v4606, 64
      %v5033 = vpop.permute.xlu0 %5032
      %5034 = vrot.lane.b32.xlu0 %v4608, 64
      %v5035 = vpop.permute.xlu0 %5034
      %5036 = vrot.lane.b32.xlu0 %v4611, 64
      %v5037 = vpop.permute.xlu0 %5036
      %5038 = vrot.lane.b32.xlu0 %v4613, 64
      %v5039 = vpop.permute.xlu0 %5038
      %5040 = vrot.lane.b32.xlu0 %v4616, 64
      %v5041 = vpop.permute.xlu0 %5040
      %5042 = vrot.lane.b32.xlu0 %v4618, 64
      %v5043 = vpop.permute.xlu0 %5042
      %5044 = vrot.lane.b32.xlu0 %v4621, 64
      %v5045 = vpop.permute.xlu0 %5044
      %5046 = vrot.lane.b32.xlu0 %v4623, 64
      %v5047 = vpop.permute.xlu0 %5046
      %5048 = vrot.lane.b32.xlu0 %v4626, 64
      %v5049 = vpop.permute.xlu0 %5048
      %5050 = vrot.lane.b32.xlu0 %v4628, 64
      %v5051 = vpop.permute.xlu0 %5050
      %5052 = vrot.lane.b32.xlu0 %v4631, 64
      %v5053 = vpop.permute.xlu0 %5052
      %5054 = vrot.lane.b32.xlu0 %v4633, 64
      %v5055 = vpop.permute.xlu0 %5054
      %5056 = vrot.lane.b32.xlu0 %v4636, 64
      %v5057 = vpop.permute.xlu0 %5056
      %5058 = vrot.lane.b32.xlu0 %v4638, 64
      %v5059 = vpop.permute.xlu0 %5058
      %5060 = vrot.lane.b32.xlu0 %v4641, 64
      %v5061 = vpop.permute.xlu0 %5060
      %5062 = vrot.lane.b32.xlu0 %v4643, 64
      %v5063 = vpop.permute.xlu0 %5062
      %5064 = vrot.lane.b32.xlu0 %v4646, 64
      %v5065 = vpop.permute.xlu0 %5064
      %5066 = vrot.lane.b32.xlu0 %v4648, 64
      %v5067 = vpop.permute.xlu0 %5066
      %5068 = vrot.lane.b32.xlu0 %v4651, 64
      %v5069 = vpop.permute.xlu0 %5068
      %5070 = vrot.lane.b32.xlu0 %v4653, 64
      %v5071 = vpop.permute.xlu0 %5070
      %5072 = vrot.lane.b32.xlu0 %v5009, 64
      %v5073 = vpop.permute.xlu0 %5072
      %5074 = vrot.lane.b32.xlu0 %v5011, 64
      %v5075 = vpop.permute.xlu0 %5074
      %v5108 = vrot.slane %v4532, 2
      %v5109 = vrot.slane %v4469, 2
      %v5110 = vsel %vm506, %v5108, %v5109
      %v5111 = vrot.slane %v4548, 2
      %v5112 = vsel %vm506, %v5109, %v5111
      %5113 = vrot.lane.b32.xlu0 %v4746, 80
      %v5114 = vpop.permute.xlu0 %5113
      %5115 = vrot.lane.b32.xlu0 %v4748, 80
      %v5116 = vpop.permute.xlu0 %5115
      %5117 = vrot.lane.b32.xlu0 %v4751, 80
      %v5118 = vpop.permute.xlu0 %5117
      %5119 = vrot.lane.b32.xlu0 %v4753, 80
      %v5120 = vpop.permute.xlu0 %5119
      %5121 = vrot.lane.b32.xlu0 %v4756, 80
      %v5122 = vpop.permute.xlu0 %5121
      %5123 = vrot.lane.b32.xlu0 %v4758, 80
      %v5124 = vpop.permute.xlu0 %5123
      %5125 = vrot.lane.b32.xlu0 %v4761, 80
      %v5126 = vpop.permute.xlu0 %5125
      %5127 = vrot.lane.b32.xlu0 %v4763, 80
      %v5128 = vpop.permute.xlu0 %5127
      %5129 = vrot.lane.b32.xlu0 %v4766, 80
      %v5130 = vpop.permute.xlu0 %5129
      %5131 = vrot.lane.b32.xlu0 %v4768, 80
      %v5132 = vpop.permute.xlu0 %5131
      %5133 = vrot.lane.b32.xlu0 %v4771, 80
      %v5134 = vpop.permute.xlu0 %5133
      %5135 = vrot.lane.b32.xlu0 %v4773, 80
      %v5136 = vpop.permute.xlu0 %5135
      %5137 = vrot.lane.b32.xlu0 %v4776, 80
      %v5138 = vpop.permute.xlu0 %5137
      %5139 = vrot.lane.b32.xlu0 %v4778, 80
      %v5140 = vpop.permute.xlu0 %5139
      %5141 = vrot.lane.b32.xlu0 %v4781, 80
      %v5142 = vpop.permute.xlu0 %5141
      %5143 = vrot.lane.b32.xlu0 %v4783, 80
      %v5144 = vpop.permute.xlu0 %5143
      %5145 = vrot.lane.b32.xlu0 %v4786, 80
      %v5146 = vpop.permute.xlu0 %5145
      %5147 = vrot.lane.b32.xlu0 %v4788, 80
      %v5148 = vpop.permute.xlu0 %5147
      %5149 = vrot.lane.b32.xlu0 %v4791, 80
      %v5150 = vpop.permute.xlu0 %5149
      %5151 = vrot.lane.b32.xlu0 %v4793, 80
      %v5152 = vpop.permute.xlu0 %5151
      %5153 = vrot.lane.b32.xlu0 %v4796, 80
      %v5154 = vpop.permute.xlu0 %5153
      %5155 = vrot.lane.b32.xlu0 %v4798, 80
      %v5156 = vpop.permute.xlu0 %5155
      %5157 = vrot.lane.b32.xlu0 %v4801, 80
      %v5158 = vpop.permute.xlu0 %5157
      %5159 = vrot.lane.b32.xlu0 %v4803, 80
      %v5160 = vpop.permute.xlu0 %5159
      %5161 = vrot.lane.b32.xlu0 %v4806, 80
      %v5162 = vpop.permute.xlu0 %5161
      %5163 = vrot.lane.b32.xlu0 %v4808, 80
      %v5164 = vpop.permute.xlu0 %5163
      %5165 = vrot.lane.b32.xlu0 %v4811, 80
      %v5166 = vpop.permute.xlu0 %5165
      %5167 = vrot.lane.b32.xlu0 %v4813, 80
      %v5168 = vpop.permute.xlu0 %5167
      %5169 = vrot.lane.b32.xlu0 %v4816, 80
      %v5170 = vpop.permute.xlu0 %5169
      %5171 = vrot.lane.b32.xlu0 %v4818, 80
      %v5172 = vpop.permute.xlu0 %5171
      %5173 = vrot.lane.b32.xlu0 %v5110, 80
      %v5174 = vpop.permute.xlu0 %5173
      %5175 = vrot.lane.b32.xlu0 %v5112, 80
      %v5176 = vpop.permute.xlu0 %5175
      %5209 = vrot.lane.b32.xlu0 %v4518, 96
      %v5210 = vpop.permute.xlu0 %5209
      %5211 = vrot.lane.b32.xlu0 %v4427, 96
      %v5212 = vpop.permute.xlu0 %5211
      %5213 = vrot.lane.b32.xlu0 %v4519, 96
      %v5214 = vpop.permute.xlu0 %5213
      %5215 = vrot.lane.b32.xlu0 %v4430, 96
      %v5216 = vpop.permute.xlu0 %5215
      %5217 = vrot.lane.b32.xlu0 %v4520, 96
      %v5218 = vpop.permute.xlu0 %5217
      %5219 = vrot.lane.b32.xlu0 %v4433, 96
      %v5220 = vpop.permute.xlu0 %5219
      %5221 = vrot.lane.b32.xlu0 %v4521, 96
      %v5222 = vpop.permute.xlu0 %5221
      %5223 = vrot.lane.b32.xlu0 %v4436, 96
      %v5224 = vpop.permute.xlu0 %5223
      %5225 = vrot.lane.b32.xlu0 %v4522, 96
      %v5226 = vpop.permute.xlu0 %5225
      %5227 = vrot.lane.b32.xlu0 %v4439, 96
      %v5228 = vpop.permute.xlu0 %5227
      %5229 = vrot.lane.b32.xlu0 %v4523, 96
      %v5230 = vpop.permute.xlu0 %5229
      %5231 = vrot.lane.b32.xlu0 %v4442, 96
      %v5232 = vpop.permute.xlu0 %5231
      %5233 = vrot.lane.b32.xlu0 %v4524, 96
      %v5234 = vpop.permute.xlu0 %5233
      %5235 = vrot.lane.b32.xlu0 %v4445, 96
      %v5236 = vpop.permute.xlu0 %5235
      %5237 = vrot.lane.b32.xlu0 %v4525, 96
      %v5238 = vpop.permute.xlu0 %5237
      %5239 = vrot.lane.b32.xlu0 %v4448, 96
      %v5240 = vpop.permute.xlu0 %5239
      %5241 = vrot.lane.b32.xlu0 %v4526, 96
      %v5242 = vpop.permute.xlu0 %5241
      %5243 = vrot.lane.b32.xlu0 %v4451, 96
      %v5244 = vpop.permute.xlu0 %5243
      %5245 = vrot.lane.b32.xlu0 %v4527, 96
      %v5246 = vpop.permute.xlu0 %5245
      %5247 = vrot.lane.b32.xlu0 %v4454, 96
      %v5248 = vpop.permute.xlu0 %5247
      %5249 = vrot.lane.b32.xlu0 %v4528, 96
      %v5250 = vpop.permute.xlu0 %5249
      %5251 = vrot.lane.b32.xlu0 %v4457, 96
      %v5252 = vpop.permute.xlu0 %5251
      %5253 = vrot.lane.b32.xlu0 %v4529, 96
      %v5254 = vpop.permute.xlu0 %5253
      %5255 = vrot.lane.b32.xlu0 %v4460, 96
      %v5256 = vpop.permute.xlu0 %5255
      %5257 = vrot.lane.b32.xlu0 %v4530, 96
      %v5258 = vpop.permute.xlu0 %5257
      %5259 = vrot.lane.b32.xlu0 %v4463, 96
      %v5260 = vpop.permute.xlu0 %5259
      %5261 = vrot.lane.b32.xlu0 %v4531, 96
      %v5262 = vpop.permute.xlu0 %5261
      %5263 = vrot.lane.b32.xlu0 %v4466, 96
      %v5264 = vpop.permute.xlu0 %5263
      %5265 = vrot.lane.b32.xlu0 %v4532, 96
      %v5266 = vpop.permute.xlu0 %5265
      %5267 = vrot.lane.b32.xlu0 %v4469, 96
      %v5268 = vpop.permute.xlu0 %5267
      %5299 = vrot.lane.b32.xlu0 %v4586, 112
      %v5300 = vpop.permute.xlu0 %5299
      %5301 = vrot.lane.b32.xlu0 %v4588, 112
      %v5302 = vpop.permute.xlu0 %5301
      %5303 = vrot.lane.b32.xlu0 %v4591, 112
      %v5304 = vpop.permute.xlu0 %5303
      %5305 = vrot.lane.b32.xlu0 %v4593, 112
      %v5306 = vpop.permute.xlu0 %5305
      %5307 = vrot.lane.b32.xlu0 %v4596, 112
      %v5308 = vpop.permute.xlu0 %5307
      %5309 = vrot.lane.b32.xlu0 %v4598, 112
      %v5310 = vpop.permute.xlu0 %5309
      %5311 = vrot.lane.b32.xlu0 %v4601, 112
      %v5312 = vpop.permute.xlu0 %5311
      %5313 = vrot.lane.b32.xlu0 %v4603, 112
      %v5314 = vpop.permute.xlu0 %5313
      %5315 = vrot.lane.b32.xlu0 %v4606, 112
      %v5316 = vpop.permute.xlu0 %5315
      %5317 = vrot.lane.b32.xlu0 %v4608, 112
      %v5318 = vpop.permute.xlu0 %5317
      %5319 = vrot.lane.b32.xlu0 %v4611, 112
      %v5320 = vpop.permute.xlu0 %5319
      %5321 = vrot.lane.b32.xlu0 %v4613, 112
      %v5322 = vpop.permute.xlu0 %5321
      %5323 = vrot.lane.b32.xlu0 %v4616, 112
      %v5324 = vpop.permute.xlu0 %5323
      %5325 = vrot.lane.b32.xlu0 %v4618, 112
      %v5326 = vpop.permute.xlu0 %5325
      %5327 = vrot.lane.b32.xlu0 %v4621, 112
      %v5328 = vpop.permute.xlu0 %5327
      %5329 = vrot.lane.b32.xlu0 %v4623, 112
      %v5330 = vpop.permute.xlu0 %5329
      %5331 = vrot.lane.b32.xlu0 %v4626, 112
      %v5332 = vpop.permute.xlu0 %5331
      %5333 = vrot.lane.b32.xlu0 %v4628, 112
      %v5334 = vpop.permute.xlu0 %5333
      %5335 = vrot.lane.b32.xlu0 %v4631, 112
      %v5336 = vpop.permute.xlu0 %5335
      %5337 = vrot.lane.b32.xlu0 %v4633, 112
      %v5338 = vpop.permute.xlu0 %5337
      %5339 = vrot.lane.b32.xlu0 %v4636, 112
      %v5340 = vpop.permute.xlu0 %5339
      %5341 = vrot.lane.b32.xlu0 %v4638, 112
      %v5342 = vpop.permute.xlu0 %5341
      %5343 = vrot.lane.b32.xlu0 %v4641, 112
      %v5344 = vpop.permute.xlu0 %5343
      %5345 = vrot.lane.b32.xlu0 %v4643, 112
      %v5346 = vpop.permute.xlu0 %5345
      %5347 = vrot.lane.b32.xlu0 %v4646, 112
      %v5348 = vpop.permute.xlu0 %5347
      %5349 = vrot.lane.b32.xlu0 %v4648, 112
      %v5350 = vpop.permute.xlu0 %5349
      %5351 = vrot.lane.b32.xlu0 %v4651, 112
      %v5352 = vpop.permute.xlu0 %5351
      %5353 = vrot.lane.b32.xlu0 %v4653, 112
      %v5354 = vpop.permute.xlu0 %5353
      %5355 = vrot.lane.b32.xlu0 %v5009, 112
      %v5356 = vpop.permute.xlu0 %5355
      %5357 = vrot.lane.b32.xlu0 %v5011, 112
      %v5358 = vpop.permute.xlu0 %5357
      %v5389 = vsel %vm716, %v4517, %v4655
      %v5390 = vsel %vm716, %v4424, %v4657
      %v5391 = vsel %vm716, %v4518, %v4659
      %v5392 = vsel %vm716, %v4427, %v4661
      %v5393 = vsel %vm716, %v4519, %v4663
      %v5394 = vsel %vm716, %v4430, %v4665
      %v5395 = vsel %vm716, %v4520, %v4667
      %v5396 = vsel %vm716, %v4433, %v4669
      %v5397 = vsel %vm716, %v4521, %v4671
      %v5398 = vsel %vm716, %v4436, %v4673
      %v5399 = vsel %vm716, %v4522, %v4675
      %v5400 = vsel %vm716, %v4439, %v4677
      %v5401 = vsel %vm716, %v4523, %v4679
      %v5402 = vsel %vm716, %v4442, %v4681
      %v5403 = vsel %vm716, %v4524, %v4683
      %v5404 = vsel %vm716, %v4445, %v4685
      %v5405 = vsel %vm716, %v4525, %v4687
      %v5406 = vsel %vm716, %v4448, %v4689
      %v5407 = vsel %vm716, %v4526, %v4691
      %v5408 = vsel %vm716, %v4451, %v4693
      %v5409 = vsel %vm716, %v4527, %v4695
      %v5410 = vsel %vm716, %v4454, %v4697
      %v5411 = vsel %vm716, %v4528, %v4699
      %v5412 = vsel %vm716, %v4457, %v4701
      %v5413 = vsel %vm716, %v4529, %v4703
      %v5414 = vsel %vm716, %v4460, %v4705
      %v5415 = vsel %vm716, %v4530, %v4707
      %v5416 = vsel %vm716, %v4463, %v4709
      %v5417 = vsel %vm716, %v4531, %v4711
      %v5418 = vsel %vm716, %v4466, %v4713
      %v5419 = vsel %vm734, %v5389, %v4820
      %v5420 = vsel %vm734, %v5390, %v4822
      %v5421 = vsel %vm734, %v5391, %v4824
      %v5422 = vsel %vm734, %v5392, %v4826
      %v5423 = vsel %vm734, %v5393, %v4828
      %v5424 = vsel %vm734, %v5394, %v4830
      %v5425 = vsel %vm734, %v5395, %v4832
      %v5426 = vsel %vm734, %v5396, %v4834
      %v5427 = vsel %vm734, %v5397, %v4836
      %v5428 = vsel %vm734, %v5398, %v4838
      %v5429 = vsel %vm734, %v5399, %v4840
      %v5430 = vsel %vm734, %v5400, %v4842
      %v5431 = vsel %vm734, %v5401, %v4844
      %v5432 = vsel %vm734, %v5402, %v4846
      %v5433 = vsel %vm734, %v5403, %v4848
      %v5434 = vsel %vm734, %v5404, %v4850
      %v5435 = vsel %vm734, %v5405, %v4852
      %v5436 = vsel %vm734, %v5406, %v4854
      %v5437 = vsel %vm734, %v5407, %v4856
      %v5438 = vsel %vm734, %v5408, %v4858
      %v5439 = vsel %vm734, %v5409, %v4860
      %v5440 = vsel %vm734, %v5410, %v4862
      %v5441 = vsel %vm734, %v5411, %v4864
      %v5442 = vsel %vm734, %v5412, %v4866
      %v5443 = vsel %vm734, %v5413, %v4868
      %v5444 = vsel %vm734, %v5414, %v4870
      %v5445 = vsel %vm734, %v5415, %v4872
      %v5446 = vsel %vm734, %v5416, %v4874
      %v5447 = vsel %vm734, %v5417, %v4876
      %v5448 = vsel %vm734, %v5418, %v4878
      %v5449 = vsel %vm752, %v3595, %v4911
      %v5450 = vsel %vm752, %v3596, %v4913
      %v5451 = vsel %vm752, %v5419, %v4915
      %v5452 = vsel %vm752, %v5420, %v4917
      %v5453 = vsel %vm752, %v5421, %v4919
      %v5454 = vsel %vm752, %v5422, %v4921
      %v5455 = vsel %vm752, %v5423, %v4923
      %v5456 = vsel %vm752, %v5424, %v4925
      %v5457 = vsel %vm752, %v5425, %v4927
      %v5458 = vsel %vm752, %v5426, %v4929
      %v5459 = vsel %vm752, %v5427, %v4931
      %v5460 = vsel %vm752, %v5428, %v4933
      %v5461 = vsel %vm752, %v5429, %v4935
      %v5462 = vsel %vm752, %v5430, %v4937
      %v5463 = vsel %vm752, %v5431, %v4939
      %v5464 = vsel %vm752, %v5432, %v4941
      %v5465 = vsel %vm752, %v5433, %v4943
      %v5466 = vsel %vm752, %v5434, %v4945
      %v5467 = vsel %vm752, %v5435, %v4947
      %v5468 = vsel %vm752, %v5436, %v4949
      %v5469 = vsel %vm752, %v5437, %v4951
      %v5470 = vsel %vm752, %v5438, %v4953
      %v5471 = vsel %vm752, %v5439, %v4955
      %v5472 = vsel %vm752, %v5440, %v4957
      %v5473 = vsel %vm752, %v5441, %v4959
      %v5474 = vsel %vm752, %v5442, %v4961
      %v5475 = vsel %vm752, %v5443, %v4963
      %v5476 = vsel %vm752, %v5444, %v4965
      %v5477 = vsel %vm752, %v5445, %v4967
      %v5478 = vsel %vm752, %v5446, %v4969
      %v5479 = vsel %vm752, %v5447, %v4971
      %v5480 = vsel %vm752, %v5448, %v4973
      %v5481 = vsel %vm770, %v5449, %v5013
      %v5482 = vsel %vm770, %v5450, %v5015
      %v5483 = vsel %vm770, %v5451, %v5017
      %v5484 = vsel %vm770, %v5452, %v5019
      %v5485 = vsel %vm770, %v5453, %v5021
      %v5486 = vsel %vm770, %v5454, %v5023
      %v5487 = vsel %vm770, %v5455, %v5025
      %v5488 = vsel %vm770, %v5456, %v5027
      %v5489 = vsel %vm770, %v5457, %v5029
      %v5490 = vsel %vm770, %v5458, %v5031
      %v5491 = vsel %vm770, %v5459, %v5033
      %v5492 = vsel %vm770, %v5460, %v5035
      %v5493 = vsel %vm770, %v5461, %v5037
      %v5494 = vsel %vm770, %v5462, %v5039
      %v5495 = vsel %vm770, %v5463, %v5041
      %v5496 = vsel %vm770, %v5464, %v5043
      %v5497 = vsel %vm770, %v5465, %v5045
      %v5498 = vsel %vm770, %v5466, %v5047
      %v5499 = vsel %vm770, %v5467, %v5049
      %v5500 = vsel %vm770, %v5468, %v5051
      %v5501 = vsel %vm770, %v5469, %v5053
      %v5502 = vsel %vm770, %v5470, %v5055
      %v5503 = vsel %vm770, %v5471, %v5057
      %v5504 = vsel %vm770, %v5472, %v5059
      %v5505 = vsel %vm770, %v5473, %v5061
      %v5506 = vsel %vm770, %v5474, %v5063
      %v5507 = vsel %vm770, %v5475, %v5065
      %v5508 = vsel %vm770, %v5476, %v5067
      %v5509 = vsel %vm770, %v5477, %v5069
      %v5510 = vsel %vm770, %v5478, %v5071
      %v5511 = vsel %vm770, %v5479, %v5073
      %v5512 = vsel %vm770, %v5480, %v5075
      %v5513 = vsel %vm3691, %v5481, %v5114
      %v5514 = vsel %vm3691, %v5482, %v5116
      %v5515 = vsel %vm3691, %v5483, %v5118
      %v5516 = vsel %vm3691, %v5484, %v5120
      %v5517 = vsel %vm3691, %v5485, %v5122
      %v5518 = vsel %vm3691, %v5486, %v5124
      %v5519 = vsel %vm3691, %v5487, %v5126
      %v5520 = vsel %vm3691, %v5488, %v5128
      %v5521 = vsel %vm3691, %v5489, %v5130
      %v5522 = vsel %vm3691, %v5490, %v5132
      %v5523 = vsel %vm3691, %v5491, %v5134
      %v5524 = vsel %vm3691, %v5492, %v5136
      %v5525 = vsel %vm3691, %v5493, %v5138
      %v5526 = vsel %vm3691, %v5494, %v5140
      %v5527 = vsel %vm3691, %v5495, %v5142
      %v5528 = vsel %vm3691, %v5496, %v5144
      %v5529 = vsel %vm3691, %v5497, %v5146
      %v5530 = vsel %vm3691, %v5498, %v5148
      %v5531 = vsel %vm3691, %v5499, %v5150
      %v5532 = vsel %vm3691, %v5500, %v5152
      %v5533 = vsel %vm3691, %v5501, %v5154
      %v5534 = vsel %vm3691, %v5502, %v5156
      %v5535 = vsel %vm3691, %v5503, %v5158
      %v5536 = vsel %vm3691, %v5504, %v5160
      %v5537 = vsel %vm3691, %v5505, %v5162
      %v5538 = vsel %vm3691, %v5506, %v5164
      %v5539 = vsel %vm3691, %v5507, %v5166
      %v5540 = vsel %vm3691, %v5508, %v5168
      %v5541 = vsel %vm3691, %v5509, %v5170
      %v5542 = vsel %vm3691, %v5510, %v5172
      %v5543 = vsel %vm3691, %v5511, %v5174
      %v5544 = vsel %vm3691, %v5512, %v5176
      %v5545 = vsel %vm1091, %v5513, %v5210
      %v5546 = vsel %vm1091, %v5514, %v5212
      %v5547 = vsel %vm1091, %v5515, %v5214
      %v5548 = vsel %vm1091, %v5516, %v5216
      %v5549 = vsel %vm1091, %v5517, %v5218
      %v5550 = vsel %vm1091, %v5518, %v5220
      %v5551 = vsel %vm1091, %v5519, %v5222
      %v5552 = vsel %vm1091, %v5520, %v5224
      %v5553 = vsel %vm1091, %v5521, %v5226
      %v5554 = vsel %vm1091, %v5522, %v5228
      %v5555 = vsel %vm1091, %v5523, %v5230
      %v5556 = vsel %vm1091, %v5524, %v5232
      %v5557 = vsel %vm1091, %v5525, %v5234
      %v5558 = vsel %vm1091, %v5526, %v5236
      %v5559 = vsel %vm1091, %v5527, %v5238
      %v5560 = vsel %vm1091, %v5528, %v5240
      %v5561 = vsel %vm1091, %v5529, %v5242
      %v5562 = vsel %vm1091, %v5530, %v5244
      %v5563 = vsel %vm1091, %v5531, %v5246
      %v5564 = vsel %vm1091, %v5532, %v5248
      %v5565 = vsel %vm1091, %v5533, %v5250
      %v5566 = vsel %vm1091, %v5534, %v5252
      %v5567 = vsel %vm1091, %v5535, %v5254
      %v5568 = vsel %vm1091, %v5536, %v5256
      %v5569 = vsel %vm1091, %v5537, %v5258
      %v5570 = vsel %vm1091, %v5538, %v5260
      %v5571 = vsel %vm1091, %v5539, %v5262
      %v5572 = vsel %vm1091, %v5540, %v5264
      %v5573 = vsel %vm1091, %v5541, %v5266
      %v5574 = vsel %vm1091, %v5542, %v5268
      %v5575 = vsel %vm1091, %v5543, %v3432
      %v5576 = vsel %vm1091, %v5544, %v3434
      %v5577 = vsel %vm3756, %v5545, %v5300
      %v5578 = vsel %vm3756, %v5546, %v5302
      %v5579 = vsel %vm3756, %v5547, %v5304
      %v5580 = vsel %vm3756, %v5548, %v5306
      %v5581 = vsel %vm3756, %v5549, %v5308
      %v5582 = vsel %vm3756, %v5550, %v5310
      %v5583 = vsel %vm3756, %v5551, %v5312
      %v5584 = vsel %vm3756, %v5552, %v5314
      %v5585 = vsel %vm3756, %v5553, %v5316
      %v5586 = vsel %vm3756, %v5554, %v5318
      %v5587 = vsel %vm3756, %v5555, %v5320
      %v5588 = vsel %vm3756, %v5556, %v5322
      %v5589 = vsel %vm3756, %v5557, %v5324
      %v5590 = vsel %vm3756, %v5558, %v5326
      %v5591 = vsel %vm3756, %v5559, %v5328
      %v5592 = vsel %vm3756, %v5560, %v5330
      %v5593 = vsel %vm3756, %v5561, %v5332
      %v5594 = vsel %vm3756, %v5562, %v5334
      %v5595 = vsel %vm3756, %v5563, %v5336
      %v5596 = vsel %vm3756, %v5564, %v5338
      %v5597 = vsel %vm3756, %v5565, %v5340
      %v5598 = vsel %vm3756, %v5566, %v5342
      %v5599 = vsel %vm3756, %v5567, %v5344
      %v5600 = vsel %vm3756, %v5568, %v5346
      %v5601 = vsel %vm3756, %v5569, %v5348
      %v5602 = vsel %vm3756, %v5570, %v5350
      %v5603 = vsel %vm3756, %v5571, %v5352
      %v5604 = vsel %vm3756, %v5572, %v5354
      %v5605 = vsel %vm3756, %v5573, %v5356
      %v5606 = vsel %vm3756, %v5574, %v5358
      %v5607 = vsel %vm3756, %v5575, %v3528
      %v5608 = vsel %vm3756, %v5576, %v3530
      %v5610 = vperm.slane %v2495, 0
      %v5612 = vsel %vm716, %v4751, 0
      %v5614 = vsel %vm716, %v4753, 0
      %v5616 = vsel %vm716, %v4756, 0
      %v5618 = vsel %vm716, %v4758, 0
      %v5620 = vsel %vm716, %v4761, 0
      %v5622 = vsel %vm716, %v4763, 0
      %v5624 = vsel %vm716, %v4766, 0
      %v5626 = vsel %vm716, %v4768, 0
      %v5628 = vsel %vm716, %v4771, 0
      %v5630 = vsel %vm716, %v4773, 0
      %v5632 = vsel %vm716, %v4776, 0
      %v5634 = vsel %vm716, %v4778, 0
      %v5636 = vsel %vm716, %v4781, 0
      %v5638 = vsel %vm716, %v4783, 0
      %v5640 = vsel %vm716, %v4786, 0
      %v5642 = vsel %vm716, %v4788, 0
      %v5644 = vsel %vm716, %v4791, 0
      %v5646 = vsel %vm716, %v4793, 0
      %v5648 = vsel %vm716, %v4796, 0
      %v5650 = vsel %vm716, %v4798, 0
      %v5652 = vsel %vm716, %v4801, 0
      %v5654 = vsel %vm716, %v4803, 0
      %v5656 = vsel %vm716, %v4806, 0
      %v5658 = vsel %vm716, %v4808, 0
      %v5660 = vsel %vm716, %v4811, 0
      %v5662 = vsel %vm716, %v4813, 0
      %v5664 = vsel %vm716, %v4816, 0
      %v5666 = vsel %vm716, %v4818, 0
      %v5668 = vsel %vm716, %v5110, 0
      %v5670 = vsel %vm716, %v5112, 0
      %5672 = vmatpush.msra.mxu0 %v2491
      %5673 = vmatpush.msra.mxu0 %v2490
      %5674 = vmatpush.msra.mxu0 %v2489
      %5675 = vmatpush.msra.mxu0 %v2488
      %5676 = vmatpush.msra.mxu0 %v2487
      %5677 = vmatpush.msra.mxu0 %v2486
      %5678 = vmatpush.msra.mxu0 %v2485
      %5679 = vmatpush.msra.mxu0 %v2484
      %5680 = vmatpush.msra.mxu0 %v2483
      %5681 = vmatpush.msra.mxu0 %v2482
      %5682 = vmatpush.msra.mxu0 %v2481
      %5683 = vmatpush.msra.mxu0 %v2480
      %5684 = vmatpush.msra.mxu0 %v2479
      %5685 = vmatpush.msra.mxu0 %v2478
      %5686 = vmatpush.msra.mxu0 %v2477
      %5687 = vmatpush.msra.mxu0 %v2476
      %5688 = vmatmul.f32.gmra.mxu0 %v5577
      %v5689 = vpop.f32.mrf.mxu0
      %v5690 = vadd.f32 %v5610, %v5689
      %5691 = vmatmul.f32.gmra.mxu0 %v5578
      %v5692 = vpop.f32.mrf.mxu0
      %v5693 = vadd.f32 %v5610, %v5692
      %5694 = vmatmul.f32.gmra.mxu0 %v5579
      %v5695 = vpop.f32.mrf.mxu0
      %v5696 = vadd.f32 %v5610, %v5695
      %5697 = vmatmul.f32.gmra.mxu0 %v5580
      %v5698 = vpop.f32.mrf.mxu0
      %v5699 = vadd.f32 %v5610, %v5698
      %5700 = vmatmul.f32.gmra.mxu0 %v5581
      %v5701 = vpop.f32.mrf.mxu0
      %v5702 = vadd.f32 %v5610, %v5701
      %5703 = vmatmul.f32.gmra.mxu0 %v5582
      %v5704 = vpop.f32.mrf.mxu0
      %v5705 = vadd.f32 %v5610, %v5704
      %5706 = vmatmul.f32.gmra.mxu0 %v5583
      %v5707 = vpop.f32.mrf.mxu0
      %v5708 = vadd.f32 %v5610, %v5707
      %5709 = vmatmul.f32.gmra.mxu0 %v5584
      %v5710 = vpop.f32.mrf.mxu0
      %v5711 = vadd.f32 %v5610, %v5710
      %5712 = vmatmul.f32.gmra.mxu0 %v5585
      %v5713 = vpop.f32.mrf.mxu0
      %v5714 = vadd.f32 %v5610, %v5713
      %5715 = vmatmul.f32.gmra.mxu0 %v5586
      %v5716 = vpop.f32.mrf.mxu0
      %v5717 = vadd.f32 %v5610, %v5716
      %5718 = vmatmul.f32.gmra.mxu0 %v5587
      %v5719 = vpop.f32.mrf.mxu0
      %v5720 = vadd.f32 %v5610, %v5719
      %5721 = vmatmul.f32.gmra.mxu0 %v5588
      %v5722 = vpop.f32.mrf.mxu0
      %v5723 = vadd.f32 %v5610, %v5722
      %5724 = vmatmul.f32.gmra.mxu0 %v5589
      %v5725 = vpop.f32.mrf.mxu0
      %v5726 = vadd.f32 %v5610, %v5725
      %5727 = vmatmul.f32.gmra.mxu0 %v5590
      %v5728 = vpop.f32.mrf.mxu0
      %v5729 = vadd.f32 %v5610, %v5728
      %5730 = vmatmul.f32.gmra.mxu0 %v5591
      %v5731 = vpop.f32.mrf.mxu0
      %v5732 = vadd.f32 %v5610, %v5731
      %5733 = vmatmul.f32.gmra.mxu0 %v5592
      %v5734 = vpop.f32.mrf.mxu0
      %v5735 = vadd.f32 %v5610, %v5734
      %5736 = vmatmul.f32.gmra.mxu0 %v5593
      %v5737 = vpop.f32.mrf.mxu0
      %v5738 = vadd.f32 %v5610, %v5737
      %5739 = vmatmul.f32.gmra.mxu0 %v5594
      %v5740 = vpop.f32.mrf.mxu0
      %v5741 = vadd.f32 %v5610, %v5740
      %5742 = vmatmul.f32.gmra.mxu0 %v5595
      %v5743 = vpop.f32.mrf.mxu0
      %v5744 = vadd.f32 %v5610, %v5743
      %5745 = vmatmul.f32.gmra.mxu0 %v5596
      %v5746 = vpop.f32.mrf.mxu0
      %v5747 = vadd.f32 %v5610, %v5746
      %5748 = vmatmul.f32.gmra.mxu0 %v5597
      %v5749 = vpop.f32.mrf.mxu0
      %v5750 = vadd.f32 %v5610, %v5749
      %5751 = vmatmul.f32.gmra.mxu0 %v5598
      %v5752 = vpop.f32.mrf.mxu0
      %v5753 = vadd.f32 %v5610, %v5752
      %5754 = vmatmul.f32.gmra.mxu0 %v5599
      %v5755 = vpop.f32.mrf.mxu0
      %v5756 = vadd.f32 %v5610, %v5755
      %5757 = vmatmul.f32.gmra.mxu0 %v5600
      %v5758 = vpop.f32.mrf.mxu0
      %v5759 = vadd.f32 %v5610, %v5758
      %5760 = vmatmul.f32.gmra.mxu0 %v5601
      %v5761 = vpop.f32.mrf.mxu0
      %v5762 = vadd.f32 %v5610, %v5761
      %5763 = vmatmul.f32.gmra.mxu0 %v5602
      %v5764 = vpop.f32.mrf.mxu0
      %v5765 = vadd.f32 %v5610, %v5764
      %5766 = vmatmul.f32.gmra.mxu0 %v5603
      %v5767 = vpop.f32.mrf.mxu0
      %v5768 = vadd.f32 %v5610, %v5767
      %5769 = vmatmul.f32.gmra.mxu0 %v5604
      %v5770 = vpop.f32.mrf.mxu0
      %v5771 = vadd.f32 %v5610, %v5770
      %5772 = vmatmul.f32.gmra.mxu0 %v5605
      %v5773 = vpop.f32.mrf.mxu0
      %v5774 = vadd.f32 %v5610, %v5773
      %5775 = vmatmul.f32.gmra.mxu0 %v5606
      %v5776 = vpop.f32.mrf.mxu0
      %v5777 = vadd.f32 %v5610, %v5776
      %5778 = vmatmul.f32.gmra.mxu0 %v5607
      %v5779 = vpop.f32.mrf.mxu0
      %v5780 = vadd.f32 %v5610, %v5779
      %5781 = vmatmul.f32.gmra.mxu0 %v5608
      %v5782 = vpop.f32.mrf.mxu0
      %v5783 = vadd.f32 %v5610, %v5782
      %5784 = vdwg.mxu0
      %5785 = vmatpush.msra.mxu0 0.0
      %5786 = vmatpush.msra.mxu0 0.0
      %5787 = vmatpush.msra.mxu0 0.0
      %5788 = vmatpush.msra.mxu0 0.0
      %5789 = vmatpush.msra.mxu0 0.0
      %5790 = vmatpush.msra.mxu0 0.0
      %5791 = vmatpush.msra.mxu0 0.0
      %5792 = vmatpush.msra.mxu0 0.0
      %5793 = vmatpush.msra.mxu0 0.0
      %5794 = vmatpush.msra.mxu0 0.0
      %5795 = vmatpush.msra.mxu0 0.0
      %5796 = vmatpush.msra.mxu0 0.0
      %5797 = vmatpush.msra.mxu0 0.0
      %5798 = vmatpush.msra.mxu0 0.0
      %5799 = vmatpush.msra.mxu0 %v2493
      %5800 = vmatpush.msra.mxu0 %v2492
      %5801 = vmatmul.f32.gmra.mxu0 %v5612
      %v5802 = vpop.f32.mrf.mxu0
      %v5803 = vadd.f32 %v5690, %v5802
      %5804 = vmatmul.f32.gmra.mxu0 %v5614
      %v5805 = vpop.f32.mrf.mxu0
      %v5806 = vadd.f32 %v5693, %v5805
      %5807 = vmatmul.f32.gmra.mxu0 %v5616
      %v5808 = vpop.f32.mrf.mxu0
      %v5809 = vadd.f32 %v5696, %v5808
      %5810 = vmatmul.f32.gmra.mxu0 %v5618
      %v5811 = vpop.f32.mrf.mxu0
      %v5812 = vadd.f32 %v5699, %v5811
      %5813 = vmatmul.f32.gmra.mxu0 %v5620
      %v5814 = vpop.f32.mrf.mxu0
      %v5815 = vadd.f32 %v5702, %v5814
      %5816 = vmatmul.f32.gmra.mxu0 %v5622
      %v5817 = vpop.f32.mrf.mxu0
      %v5818 = vadd.f32 %v5705, %v5817
      %5819 = vmatmul.f32.gmra.mxu0 %v5624
      %v5820 = vpop.f32.mrf.mxu0
      %v5821 = vadd.f32 %v5708, %v5820
      %5822 = vmatmul.f32.gmra.mxu0 %v5626
      %v5823 = vpop.f32.mrf.mxu0
      %v5824 = vadd.f32 %v5711, %v5823
      %5825 = vmatmul.f32.gmra.mxu0 %v5628
      %v5826 = vpop.f32.mrf.mxu0
      %v5827 = vadd.f32 %v5714, %v5826
      %5828 = vmatmul.f32.gmra.mxu0 %v5630
      %v5829 = vpop.f32.mrf.mxu0
      %v5830 = vadd.f32 %v5717, %v5829
      %5831 = vmatmul.f32.gmra.mxu0 %v5632
      %v5832 = vpop.f32.mrf.mxu0
      %v5833 = vadd.f32 %v5720, %v5832
      %5834 = vmatmul.f32.gmra.mxu0 %v5634
      %v5835 = vpop.f32.mrf.mxu0
      %v5836 = vadd.f32 %v5723, %v5835
      %5837 = vmatmul.f32.gmra.mxu0 %v5636
      %v5838 = vpop.f32.mrf.mxu0
      %v5839 = vadd.f32 %v5726, %v5838
      %5840 = vmatmul.f32.gmra.mxu0 %v5638
      %v5841 = vpop.f32.mrf.mxu0
      %v5842 = vadd.f32 %v5729, %v5841
      %5843 = vmatmul.f32.gmra.mxu0 %v5640
      %v5844 = vpop.f32.mrf.mxu0
      %v5845 = vadd.f32 %v5732, %v5844
      %5846 = vmatmul.f32.gmra.mxu0 %v5642
      %v5847 = vpop.f32.mrf.mxu0
      %v5848 = vadd.f32 %v5735, %v5847
      %5849 = vmatmul.f32.gmra.mxu0 %v5644
      %v5850 = vpop.f32.mrf.mxu0
      %v5851 = vadd.f32 %v5738, %v5850
      %5852 = vmatmul.f32.gmra.mxu0 %v5646
      %v5853 = vpop.f32.mrf.mxu0
      %v5854 = vadd.f32 %v5741, %v5853
      %5855 = vmatmul.f32.gmra.mxu0 %v5648
      %v5856 = vpop.f32.mrf.mxu0
      %v5857 = vadd.f32 %v5744, %v5856
      %5858 = vmatmul.f32.gmra.mxu0 %v5650
      %v5859 = vpop.f32.mrf.mxu0
      %v5860 = vadd.f32 %v5747, %v5859
      %5861 = vmatmul.f32.gmra.mxu0 %v5652
      %v5862 = vpop.f32.mrf.mxu0
      %v5863 = vadd.f32 %v5750, %v5862
      %5864 = vmatmul.f32.gmra.mxu0 %v5654
      %v5865 = vpop.f32.mrf.mxu0
      %v5866 = vadd.f32 %v5753, %v5865
      %5867 = vmatmul.f32.gmra.mxu0 %v5656
      %v5868 = vpop.f32.mrf.mxu0
      %v5869 = vadd.f32 %v5756, %v5868
      %5870 = vmatmul.f32.gmra.mxu0 %v5658
      %v5871 = vpop.f32.mrf.mxu0
      %v5872 = vadd.f32 %v5759, %v5871
      %5873 = vmatmul.f32.gmra.mxu0 %v5660
      %v5874 = vpop.f32.mrf.mxu0
      %v5875 = vadd.f32 %v5762, %v5874
      %5876 = vmatmul.f32.gmra.mxu0 %v5662
      %v5877 = vpop.f32.mrf.mxu0
      %v5878 = vadd.f32 %v5765, %v5877
      %5879 = vmatmul.f32.gmra.mxu0 %v5664
      %v5880 = vpop.f32.mrf.mxu0
      %v5881 = vadd.f32 %v5768, %v5880
      %5882 = vmatmul.f32.gmra.mxu0 %v5666
      %v5883 = vpop.f32.mrf.mxu0
      %v5884 = vadd.f32 %v5771, %v5883
      %5885 = vmatmul.f32.gmra.mxu0 %v5668
      %v5886 = vpop.f32.mrf.mxu0
      %v5887 = vadd.f32 %v5774, %v5886
      %5888 = vmatmul.f32.gmra.mxu0 %v5670
      %v5889 = vpop.f32.mrf.mxu0
      %v5890 = vadd.f32 %v5777, %v5889
      %5891 = vmatmul.f32.gmra.mxu0 %v3852
      %v5892 = vpop.f32.mrf.mxu0
      %v5893 = vadd.f32 %v5780, %v5892
      %5894 = vmatmul.f32.gmra.mxu0 %v3854
      %v5895 = vpop.f32.mrf.mxu0
      %v5896 = vadd.f32 %v5783, %v5895
      %5897 = vdwg.mxu0
      %v5898 = vmax.f32 %v5803, 0.0
      %v5899 = vmax.f32 %v5806, 0.0
      %v5900 = vmax.f32 %v5809, 0.0
      %v5901 = vmax.f32 %v5812, 0.0
      %v5902 = vmax.f32 %v5815, 0.0
      %v5903 = vmax.f32 %v5818, 0.0
      %v5904 = vmax.f32 %v5821, 0.0
      %v5905 = vmax.f32 %v5824, 0.0
      %v5906 = vmax.f32 %v5827, 0.0
      %v5907 = vmax.f32 %v5830, 0.0
      %v5908 = vmax.f32 %v5833, 0.0
      %v5909 = vmax.f32 %v5836, 0.0
      %v5910 = vmax.f32 %v5839, 0.0
      %v5911 = vmax.f32 %v5842, 0.0
      %v5912 = vmax.f32 %v5845, 0.0
      %v5913 = vmax.f32 %v5848, 0.0
      %v5914 = vmax.f32 %v5851, 0.0
      %v5915 = vmax.f32 %v5854, 0.0
      %v5916 = vmax.f32 %v5857, 0.0
      %v5917 = vmax.f32 %v5860, 0.0
      %v5918 = vmax.f32 %v5863, 0.0
      %v5919 = vmax.f32 %v5866, 0.0
      %v5920 = vmax.f32 %v5869, 0.0
      %v5921 = vmax.f32 %v5872, 0.0
      %v5922 = vmax.f32 %v5875, 0.0
      %v5923 = vmax.f32 %v5878, 0.0
      %v5924 = vmax.f32 %v5881, 0.0
      %v5925 = vmax.f32 %v5884, 0.0
      %v5926 = vmax.f32 %v5887, 0.0
      %v5927 = vmax.f32 %v5890, 0.0
      %v5928 = vmax.f32 %v5893, 0.0
      %v5929 = vmax.f32 %v5896, 0.0
      %v5931 = vperm.slane %v2499, 0
      %v5934 = vsel %vm707, %v5898, 0
      %v5937 = vsel %vm707, %v5899, 0
      %v5940 = vsel %vm707, %v5900, 0
      %v5943 = vsel %vm707, %v5901, 0
      %v5946 = vsel %vm707, %v5902, 0
      %v5949 = vsel %vm707, %v5903, 0
      %v5952 = vsel %vm707, %v5904, 0
      %v5955 = vsel %vm707, %v5905, 0
      %v5958 = vsel %vm707, %v5906, 0
      %v5961 = vsel %vm707, %v5907, 0
      %v5964 = vsel %vm707, %v5908, 0
      %v5967 = vsel %vm707, %v5909, 0
      %v5970 = vsel %vm707, %v5910, 0
      %v5973 = vsel %vm707, %v5911, 0
      %v5976 = vsel %vm707, %v5912, 0
      %v5979 = vsel %vm707, %v5913, 0
      %v5982 = vsel %vm707, %v5914, 0
      %v5985 = vsel %vm707, %v5915, 0
      %v5988 = vsel %vm707, %v5916, 0
      %v5991 = vsel %vm707, %v5917, 0
      %v5994 = vsel %vm707, %v5918, 0
      %v5997 = vsel %vm707, %v5919, 0
      %v6000 = vsel %vm707, %v5920, 0
      %v6003 = vsel %vm707, %v5921, 0
      %v6006 = vsel %vm707, %v5922, 0
      %v6009 = vsel %vm707, %v5923, 0
      %v6012 = vsel %vm707, %v5924, 0
      %v6015 = vsel %vm707, %v5925, 0
      %v6018 = vsel %vm707, %v5926, 0
      %v6021 = vsel %vm707, %v5927, 0
      %v6024 = vsel %vm707, %v5928, 0
      %v6027 = vsel %vm707, %v5929, 0
      %6029 = vmatpush.msra.mxu0 0.0
      %6030 = vmatpush.msra.mxu0 0.0
      %6031 = vmatpush.msra.mxu0 0.0
      %6032 = vmatpush.msra.mxu0 0.0
      %6033 = vmatpush.msra.mxu0 0.0
      %6034 = vmatpush.msra.mxu0 0.0
      %6035 = vmatpush.msra.mxu0 0.0
      %6036 = vmatpush.msra.mxu0 0.0
      %6037 = vmatpush.msra.mxu0 0.0
      %6038 = vmatpush.msra.mxu0 0.0
      %6039 = vmatpush.msra.mxu0 0.0
      %6040 = vmatpush.msra.mxu0 0.0
      %6041 = vmatpush.msra.mxu0 0.0
      %6042 = vmatpush.msra.mxu0 0.0
      %6043 = vmatpush.msra.mxu0 0.0
      %6044 = vmatpush.msra.mxu0 %v2497
      %6045 = vmatmul.f32.gmra.mxu0 %v5934
      %v6046 = vpop.f32.mrf.mxu0
      %v6047 = vadd.f32 %v5931, %v6046
      %6048 = vmatmul.f32.gmra.mxu0 %v5937
      %v6049 = vpop.f32.mrf.mxu0
      %v6050 = vadd.f32 %v5931, %v6049
      %6051 = vmatmul.f32.gmra.mxu0 %v5940
      %v6052 = vpop.f32.mrf.mxu0
      %v6053 = vadd.f32 %v5931, %v6052
      %6054 = vmatmul.f32.gmra.mxu0 %v5943
      %v6055 = vpop.f32.mrf.mxu0
      %v6056 = vadd.f32 %v5931, %v6055
      %6057 = vmatmul.f32.gmra.mxu0 %v5946
      %v6058 = vpop.f32.mrf.mxu0
      %v6059 = vadd.f32 %v5931, %v6058
      %6060 = vmatmul.f32.gmra.mxu0 %v5949
      %v6061 = vpop.f32.mrf.mxu0
      %v6062 = vadd.f32 %v5931, %v6061
      %6063 = vmatmul.f32.gmra.mxu0 %v5952
      %v6064 = vpop.f32.mrf.mxu0
      %v6065 = vadd.f32 %v5931, %v6064
      %6066 = vmatmul.f32.gmra.mxu0 %v5955
      %v6067 = vpop.f32.mrf.mxu0
      %v6068 = vadd.f32 %v5931, %v6067
      %6069 = vmatmul.f32.gmra.mxu0 %v5958
      %v6070 = vpop.f32.mrf.mxu0
      %v6071 = vadd.f32 %v5931, %v6070
      %6072 = vmatmul.f32.gmra.mxu0 %v5961
      %v6073 = vpop.f32.mrf.mxu0
      %v6074 = vadd.f32 %v5931, %v6073
      %6075 = vmatmul.f32.gmra.mxu0 %v5964
      %v6076 = vpop.f32.mrf.mxu0
      %v6077 = vadd.f32 %v5931, %v6076
      %6078 = vmatmul.f32.gmra.mxu0 %v5967
      %v6079 = vpop.f32.mrf.mxu0
      %v6080 = vadd.f32 %v5931, %v6079
      %6081 = vmatmul.f32.gmra.mxu0 %v5970
      %v6082 = vpop.f32.mrf.mxu0
      %v6083 = vadd.f32 %v5931, %v6082
      %6084 = vmatmul.f32.gmra.mxu0 %v5973
      %v6085 = vpop.f32.mrf.mxu0
      %v6086 = vadd.f32 %v5931, %v6085
      %6087 = vmatmul.f32.gmra.mxu0 %v5976
      %v6088 = vpop.f32.mrf.mxu0
      %v6089 = vadd.f32 %v5931, %v6088
      %6090 = vmatmul.f32.gmra.mxu0 %v5979
      %v6091 = vpop.f32.mrf.mxu0
      %v6092 = vadd.f32 %v5931, %v6091
      %6093 = vmatmul.f32.gmra.mxu0 %v5982
      %v6094 = vpop.f32.mrf.mxu0
      %v6095 = vadd.f32 %v5931, %v6094
      %6096 = vmatmul.f32.gmra.mxu0 %v5985
      %v6097 = vpop.f32.mrf.mxu0
      %v6098 = vadd.f32 %v5931, %v6097
      %6099 = vmatmul.f32.gmra.mxu0 %v5988
      %v6100 = vpop.f32.mrf.mxu0
      %v6101 = vadd.f32 %v5931, %v6100
      %6102 = vmatmul.f32.gmra.mxu0 %v5991
      %v6103 = vpop.f32.mrf.mxu0
      %v6104 = vadd.f32 %v5931, %v6103
      %6105 = vmatmul.f32.gmra.mxu0 %v5994
      %v6106 = vpop.f32.mrf.mxu0
      %v6107 = vadd.f32 %v5931, %v6106
      %6108 = vmatmul.f32.gmra.mxu0 %v5997
      %v6109 = vpop.f32.mrf.mxu0
      %v6110 = vadd.f32 %v5931, %v6109
      %6111 = vmatmul.f32.gmra.mxu0 %v6000
      %v6112 = vpop.f32.mrf.mxu0
      %v6113 = vadd.f32 %v5931, %v6112
      %6114 = vmatmul.f32.gmra.mxu0 %v6003
      %v6115 = vpop.f32.mrf.mxu0
      %v6116 = vadd.f32 %v5931, %v6115
      %6117 = vmatmul.f32.gmra.mxu0 %v6006
      %v6118 = vpop.f32.mrf.mxu0
      %v6119 = vadd.f32 %v5931, %v6118
      %6120 = vmatmul.f32.gmra.mxu0 %v6009
      %v6121 = vpop.f32.mrf.mxu0
      %v6122 = vadd.f32 %v5931, %v6121
      %6123 = vmatmul.f32.gmra.mxu0 %v6012
      %v6124 = vpop.f32.mrf.mxu0
      %v6125 = vadd.f32 %v5931, %v6124
      %6126 = vmatmul.f32.gmra.mxu0 %v6015
      %v6127 = vpop.f32.mrf.mxu0
      %v6128 = vadd.f32 %v5931, %v6127
      %6129 = vmatmul.f32.gmra.mxu0 %v6018
      %v6130 = vpop.f32.mrf.mxu0
      %v6131 = vadd.f32 %v5931, %v6130
      %6132 = vmatmul.f32.gmra.mxu0 %v6021
      %v6133 = vpop.f32.mrf.mxu0
      %v6134 = vadd.f32 %v5931, %v6133
      %6135 = vmatmul.f32.gmra.mxu0 %v6024
      %v6136 = vpop.f32.mrf.mxu0
      %v6137 = vadd.f32 %v5931, %v6136
      %6138 = vmatmul.f32.gmra.mxu0 %v6027
      %v6139 = vpop.f32.mrf.mxu0
      %v6140 = vadd.f32 %v5931, %v6139
      %6141 = vdwg.mxu0
      %v6142 = vadd.f32 %v4326, %v6047
      %v6143 = vadd.f32 %v4327, %v6050
      %v6144 = vadd.f32 %v4328, %v6053
      %v6145 = vadd.f32 %v4329, %v6056
      %v6146 = vadd.f32 %v4330, %v6059
      %v6147 = vadd.f32 %v4331, %v6062
      %v6148 = vadd.f32 %v4332, %v6065
      %v6149 = vadd.f32 %v4333, %v6068
      %v6150 = vadd.f32 %v4334, %v6071
      %v6151 = vadd.f32 %v4335, %v6074
      %v6152 = vadd.f32 %v4336, %v6077
      %v6153 = vadd.f32 %v4337, %v6080
      %v6154 = vadd.f32 %v4338, %v6083
      %v6155 = vadd.f32 %v4339, %v6086
      %v6156 = vadd.f32 %v4340, %v6089
      %v6157 = vadd.f32 %v4341, %v6092
      %v6158 = vadd.f32 %v4342, %v6095
      %v6159 = vadd.f32 %v4343, %v6098
      %v6160 = vadd.f32 %v4344, %v6101
      %v6161 = vadd.f32 %v4345, %v6104
      %v6162 = vadd.f32 %v4346, %v6107
      %v6163 = vadd.f32 %v4347, %v6110
      %v6164 = vadd.f32 %v4348, %v6113
      %v6165 = vadd.f32 %v4349, %v6116
      %v6166 = vadd.f32 %v4350, %v6119
      %v6167 = vadd.f32 %v4351, %v6122
      %v6168 = vadd.f32 %v4352, %v6125
      %v6169 = vadd.f32 %v4353, %v6128
      %v6170 = vadd.f32 %v4354, %v6131
      %v6171 = vadd.f32 %v4355, %v6134
      %v6172 = vadd.f32 %v4356, %v6137
      %v6173 = vadd.f32 %v4357, %v6140
      %v6174 = vmax.f32 %v6142, 0.0
      %v6175 = vmax.f32 %v6143, 0.0
      %v6176 = vmax.f32 %v6144, 0.0
      %v6177 = vmax.f32 %v6145, 0.0
      %v6178 = vmax.f32 %v6146, 0.0
      %v6179 = vmax.f32 %v6147, 0.0
      %v6180 = vmax.f32 %v6148, 0.0
      %v6181 = vmax.f32 %v6149, 0.0
      %v6182 = vmax.f32 %v6150, 0.0
      %v6183 = vmax.f32 %v6151, 0.0
      %v6184 = vmax.f32 %v6152, 0.0
      %v6185 = vmax.f32 %v6153, 0.0
      %v6186 = vmax.f32 %v6154, 0.0
      %v6187 = vmax.f32 %v6155, 0.0
      %v6188 = vmax.f32 %v6156, 0.0
      %v6189 = vmax.f32 %v6157, 0.0
      %v6190 = vmax.f32 %v6158, 0.0
      %v6191 = vmax.f32 %v6159, 0.0
      %v6192 = vmax.f32 %v6160, 0.0
      %v6193 = vmax.f32 %v6161, 0.0
      %v6194 = vmax.f32 %v6162, 0.0
      %v6195 = vmax.f32 %v6163, 0.0
      %v6196 = vmax.f32 %v6164, 0.0
      %v6197 = vmax.f32 %v6165, 0.0
      %v6198 = vmax.f32 %v6166, 0.0
      %v6199 = vmax.f32 %v6167, 0.0
      %v6200 = vmax.f32 %v6168, 0.0
      %v6201 = vmax.f32 %v6169, 0.0
      %v6202 = vmax.f32 %v6170, 0.0
      %v6203 = vmax.f32 %v6171, 0.0
      %v6204 = vmax.f32 %v6172, 0.0
      %v6205 = vmax.f32 %v6173, 0.0
      %v6238 = vrot.slane %v6174, 7
      %v6239 = vrot.slane %v6175, 7
      %v6240 = vsel %vm422, %v6238, %v6239
      %v6241 = vrot.slane %v6176, 7
      %v6242 = vrot.slane %v6177, 7
      %v6243 = vsel %vm422, %v6241, %v6242
      %v6244 = vrot.slane %v6178, 7
      %v6245 = vrot.slane %v6179, 7
      %v6246 = vsel %vm422, %v6244, %v6245
      %v6247 = vrot.slane %v6180, 7
      %v6248 = vrot.slane %v6181, 7
      %v6249 = vsel %vm422, %v6247, %v6248
      %v6250 = vrot.slane %v6182, 7
      %v6251 = vrot.slane %v6183, 7
      %v6252 = vsel %vm422, %v6250, %v6251
      %v6253 = vrot.slane %v6184, 7
      %v6254 = vrot.slane %v6185, 7
      %v6255 = vsel %vm422, %v6253, %v6254
      %v6256 = vrot.slane %v6186, 7
      %v6257 = vrot.slane %v6187, 7
      %v6258 = vsel %vm422, %v6256, %v6257
      %v6259 = vrot.slane %v6188, 7
      %v6260 = vrot.slane %v6189, 7
      %v6261 = vsel %vm422, %v6259, %v6260
      %v6262 = vrot.slane %v6190, 7
      %v6263 = vrot.slane %v6191, 7
      %v6264 = vsel %vm422, %v6262, %v6263
      %v6265 = vrot.slane %v6192, 7
      %v6266 = vrot.slane %v6193, 7
      %v6267 = vsel %vm422, %v6265, %v6266
      %v6268 = vrot.slane %v6194, 7
      %v6269 = vrot.slane %v6195, 7
      %v6270 = vsel %vm422, %v6268, %v6269
      %v6271 = vrot.slane %v6196, 7
      %v6272 = vrot.slane %v6197, 7
      %v6273 = vsel %vm422, %v6271, %v6272
      %v6274 = vrot.slane %v6198, 7
      %v6275 = vrot.slane %v6199, 7
      %v6276 = vsel %vm422, %v6274, %v6275
      %v6277 = vrot.slane %v6200, 7
      %v6278 = vrot.slane %v6201, 7
      %v6279 = vsel %vm422, %v6277, %v6278
      %v6280 = vrot.slane %v6202, 7
      %v6281 = vrot.slane %v6203, 7
      %v6282 = vsel %vm422, %v6280, %v6281
      %v6283 = vrot.slane %v6204, 7
      %v6284 = vrot.slane %v6205, 7
      %v6285 = vsel %vm422, %v6283, %v6284
      %v6333 = vsel %vm422, 0.0, %v6238
      %v6334 = vsel %vm422, 0.0, %v6241
      %v6335 = vsel %vm422, 0.0, %v6244
      %v6336 = vsel %vm422, 0.0, %v6247
      %v6337 = vsel %vm422, 0.0, %v6250
      %v6338 = vsel %vm422, 0.0, %v6253
      %v6339 = vsel %vm422, 0.0, %v6256
      %v6340 = vsel %vm422, 0.0, %v6259
      %v6341 = vsel %vm422, 0.0, %v6262
      %v6342 = vsel %vm422, 0.0, %v6265
      %v6343 = vsel %vm422, 0.0, %v6268
      %v6344 = vsel %vm422, 0.0, %v6271
      %v6345 = vsel %vm422, 0.0, %v6274
      %v6346 = vsel %vm422, 0.0, %v6277
      %v6347 = vsel %vm422, 0.0, %v6280
      %v6348 = vsel %vm422, 0.0, %v6283
      %v6349 = vsel %vm422, %v6239, 0.0
      %v6350 = vsel %vm422, %v6242, 0.0
      %v6351 = vsel %vm422, %v6245, 0.0
      %v6352 = vsel %vm422, %v6248, 0.0
      %v6353 = vsel %vm422, %v6251, 0.0
      %v6354 = vsel %vm422, %v6254, 0.0
      %v6355 = vsel %vm422, %v6257, 0.0
      %v6356 = vsel %vm422, %v6260, 0.0
      %v6357 = vsel %vm422, %v6263, 0.0
      %v6358 = vsel %vm422, %v6266, 0.0
      %v6359 = vsel %vm422, %v6269, 0.0
      %v6360 = vsel %vm422, %v6272, 0.0
      %v6361 = vsel %vm422, %v6275, 0.0
      %v6362 = vsel %vm422, %v6278, 0.0
      %v6363 = vsel %vm422, %v6281, 0.0
      %v6364 = vsel %vm422, %v6284, 0.0
      %v6395 = vrot.slane %v6333, 1
      %v6396 = vrot.slane %v6240, 1
      %v6397 = vsel %vm457, %v6395, %v6396
      %v6398 = vrot.slane %v6349, 1
      %v6399 = vsel %vm457, %v6396, %v6398
      %v6400 = vrot.slane %v6334, 1
      %v6401 = vrot.slane %v6243, 1
      %v6402 = vsel %vm457, %v6400, %v6401
      %v6403 = vrot.slane %v6350, 1
      %v6404 = vsel %vm457, %v6401, %v6403
      %v6405 = vrot.slane %v6335, 1
      %v6406 = vrot.slane %v6246, 1
      %v6407 = vsel %vm457, %v6405, %v6406
      %v6408 = vrot.slane %v6351, 1
      %v6409 = vsel %vm457, %v6406, %v6408
      %v6410 = vrot.slane %v6336, 1
      %v6411 = vrot.slane %v6249, 1
      %v6412 = vsel %vm457, %v6410, %v6411
      %v6413 = vrot.slane %v6352, 1
      %v6414 = vsel %vm457, %v6411, %v6413
      %v6415 = vrot.slane %v6337, 1
      %v6416 = vrot.slane %v6252, 1
      %v6417 = vsel %vm457, %v6415, %v6416
      %v6418 = vrot.slane %v6353, 1
      %v6419 = vsel %vm457, %v6416, %v6418
      %v6420 = vrot.slane %v6338, 1
      %v6421 = vrot.slane %v6255, 1
      %v6422 = vsel %vm457, %v6420, %v6421
      %v6423 = vrot.slane %v6354, 1
      %v6424 = vsel %vm457, %v6421, %v6423
      %v6425 = vrot.slane %v6339, 1
      %v6426 = vrot.slane %v6258, 1
      %v6427 = vsel %vm457, %v6425, %v6426
      %v6428 = vrot.slane %v6355, 1
      %v6429 = vsel %vm457, %v6426, %v6428
      %v6430 = vrot.slane %v6340, 1
      %v6431 = vrot.slane %v6261, 1
      %v6432 = vsel %vm457, %v6430, %v6431
      %v6433 = vrot.slane %v6356, 1
      %v6434 = vsel %vm457, %v6431, %v6433
      %v6435 = vrot.slane %v6341, 1
      %v6436 = vrot.slane %v6264, 1
      %v6437 = vsel %vm457, %v6435, %v6436
      %v6438 = vrot.slane %v6357, 1
      %v6439 = vsel %vm457, %v6436, %v6438
      %v6440 = vrot.slane %v6342, 1
      %v6441 = vrot.slane %v6267, 1
      %v6442 = vsel %vm457, %v6440, %v6441
      %v6443 = vrot.slane %v6358, 1
      %v6444 = vsel %vm457, %v6441, %v6443
      %v6445 = vrot.slane %v6343, 1
      %v6446 = vrot.slane %v6270, 1
      %v6447 = vsel %vm457, %v6445, %v6446
      %v6448 = vrot.slane %v6359, 1
      %v6449 = vsel %vm457, %v6446, %v6448
      %v6450 = vrot.slane %v6344, 1
      %v6451 = vrot.slane %v6273, 1
      %v6452 = vsel %vm457, %v6450, %v6451
      %v6453 = vrot.slane %v6360, 1
      %v6454 = vsel %vm457, %v6451, %v6453
      %v6455 = vrot.slane %v6345, 1
      %v6456 = vrot.slane %v6276, 1
      %v6457 = vsel %vm457, %v6455, %v6456
      %v6458 = vrot.slane %v6361, 1
      %v6459 = vsel %vm457, %v6456, %v6458
      %v6460 = vrot.slane %v6346, 1
      %v6461 = vrot.slane %v6279, 1
      %v6462 = vsel %vm457, %v6460, %v6461
      %v6463 = vrot.slane %v6362, 1
      %v6464 = vsel %vm457, %v6461, %v6463
      %v6465 = vrot.slane %v6347, 1
      %v6466 = vrot.slane %v6282, 1
      %v6467 = vsel %vm457, %v6465, %v6466
      %v6468 = vrot.slane %v6363, 1
      %v6469 = vsel %vm457, %v6466, %v6468
      %6470 = vrot.lane.b32.xlu0 %v6397, 16
      %v6471 = vpop.permute.xlu0 %6470
      %6472 = vrot.lane.b32.xlu0 %v6399, 16
      %v6473 = vpop.permute.xlu0 %6472
      %6474 = vrot.lane.b32.xlu0 %v6402, 16
      %v6475 = vpop.permute.xlu0 %6474
      %6476 = vrot.lane.b32.xlu0 %v6404, 16
      %v6477 = vpop.permute.xlu0 %6476
      %6478 = vrot.lane.b32.xlu0 %v6407, 16
      %v6479 = vpop.permute.xlu0 %6478
      %6480 = vrot.lane.b32.xlu0 %v6409, 16
      %v6481 = vpop.permute.xlu0 %6480
      %6482 = vrot.lane.b32.xlu0 %v6412, 16
      %v6483 = vpop.permute.xlu0 %6482
      %6484 = vrot.lane.b32.xlu0 %v6414, 16
      %v6485 = vpop.permute.xlu0 %6484
      %6486 = vrot.lane.b32.xlu0 %v6417, 16
      %v6487 = vpop.permute.xlu0 %6486
      %6488 = vrot.lane.b32.xlu0 %v6419, 16
      %v6489 = vpop.permute.xlu0 %6488
      %6490 = vrot.lane.b32.xlu0 %v6422, 16
      %v6491 = vpop.permute.xlu0 %6490
      %6492 = vrot.lane.b32.xlu0 %v6424, 16
      %v6493 = vpop.permute.xlu0 %6492
      %6494 = vrot.lane.b32.xlu0 %v6427, 16
      %v6495 = vpop.permute.xlu0 %6494
      %6496 = vrot.lane.b32.xlu0 %v6429, 16
      %v6497 = vpop.permute.xlu0 %6496
      %6498 = vrot.lane.b32.xlu0 %v6432, 16
      %v6499 = vpop.permute.xlu0 %6498
      %6500 = vrot.lane.b32.xlu0 %v6434, 16
      %v6501 = vpop.permute.xlu0 %6500
      %6502 = vrot.lane.b32.xlu0 %v6437, 16
      %v6503 = vpop.permute.xlu0 %6502
      %6504 = vrot.lane.b32.xlu0 %v6439, 16
      %v6505 = vpop.permute.xlu0 %6504
      %6506 = vrot.lane.b32.xlu0 %v6442, 16
      %v6507 = vpop.permute.xlu0 %6506
      %6508 = vrot.lane.b32.xlu0 %v6444, 16
      %v6509 = vpop.permute.xlu0 %6508
      %6510 = vrot.lane.b32.xlu0 %v6447, 16
      %v6511 = vpop.permute.xlu0 %6510
      %6512 = vrot.lane.b32.xlu0 %v6449, 16
      %v6513 = vpop.permute.xlu0 %6512
      %6514 = vrot.lane.b32.xlu0 %v6452, 16
      %v6515 = vpop.permute.xlu0 %6514
      %6516 = vrot.lane.b32.xlu0 %v6454, 16
      %v6517 = vpop.permute.xlu0 %6516
      %6518 = vrot.lane.b32.xlu0 %v6457, 16
      %v6519 = vpop.permute.xlu0 %6518
      %6520 = vrot.lane.b32.xlu0 %v6459, 16
      %v6521 = vpop.permute.xlu0 %6520
      %6522 = vrot.lane.b32.xlu0 %v6462, 16
      %v6523 = vpop.permute.xlu0 %6522
      %6524 = vrot.lane.b32.xlu0 %v6464, 16
      %v6525 = vpop.permute.xlu0 %6524
      %6526 = vrot.lane.b32.xlu0 %v6467, 16
      %v6527 = vpop.permute.xlu0 %6526
      %6528 = vrot.lane.b32.xlu0 %v6469, 16
      %v6529 = vpop.permute.xlu0 %6528
      %v6560 = vrot.slane %v6333, 2
      %v6561 = vrot.slane %v6240, 2
      %v6562 = vsel %vm506, %v6560, %v6561
      %v6563 = vrot.slane %v6349, 2
      %v6564 = vsel %vm506, %v6561, %v6563
      %v6565 = vrot.slane %v6334, 2
      %v6566 = vrot.slane %v6243, 2
      %v6567 = vsel %vm506, %v6565, %v6566
      %v6568 = vrot.slane %v6350, 2
      %v6569 = vsel %vm506, %v6566, %v6568
      %v6570 = vrot.slane %v6335, 2
      %v6571 = vrot.slane %v6246, 2
      %v6572 = vsel %vm506, %v6570, %v6571
      %v6573 = vrot.slane %v6351, 2
      %v6574 = vsel %vm506, %v6571, %v6573
      %v6575 = vrot.slane %v6336, 2
      %v6576 = vrot.slane %v6249, 2
      %v6577 = vsel %vm506, %v6575, %v6576
      %v6578 = vrot.slane %v6352, 2
      %v6579 = vsel %vm506, %v6576, %v6578
      %v6580 = vrot.slane %v6337, 2
      %v6581 = vrot.slane %v6252, 2
      %v6582 = vsel %vm506, %v6580, %v6581
      %v6583 = vrot.slane %v6353, 2
      %v6584 = vsel %vm506, %v6581, %v6583
      %v6585 = vrot.slane %v6338, 2
      %v6586 = vrot.slane %v6255, 2
      %v6587 = vsel %vm506, %v6585, %v6586
      %v6588 = vrot.slane %v6354, 2
      %v6589 = vsel %vm506, %v6586, %v6588
      %v6590 = vrot.slane %v6339, 2
      %v6591 = vrot.slane %v6258, 2
      %v6592 = vsel %vm506, %v6590, %v6591
      %v6593 = vrot.slane %v6355, 2
      %v6594 = vsel %vm506, %v6591, %v6593
      %v6595 = vrot.slane %v6340, 2
      %v6596 = vrot.slane %v6261, 2
      %v6597 = vsel %vm506, %v6595, %v6596
      %v6598 = vrot.slane %v6356, 2
      %v6599 = vsel %vm506, %v6596, %v6598
      %v6600 = vrot.slane %v6341, 2
      %v6601 = vrot.slane %v6264, 2
      %v6602 = vsel %vm506, %v6600, %v6601
      %v6603 = vrot.slane %v6357, 2
      %v6604 = vsel %vm506, %v6601, %v6603
      %v6605 = vrot.slane %v6342, 2
      %v6606 = vrot.slane %v6267, 2
      %v6607 = vsel %vm506, %v6605, %v6606
      %v6608 = vrot.slane %v6358, 2
      %v6609 = vsel %vm506, %v6606, %v6608
      %v6610 = vrot.slane %v6343, 2
      %v6611 = vrot.slane %v6270, 2
      %v6612 = vsel %vm506, %v6610, %v6611
      %v6613 = vrot.slane %v6359, 2
      %v6614 = vsel %vm506, %v6611, %v6613
      %v6615 = vrot.slane %v6344, 2
      %v6616 = vrot.slane %v6273, 2
      %v6617 = vsel %vm506, %v6615, %v6616
      %v6618 = vrot.slane %v6360, 2
      %v6619 = vsel %vm506, %v6616, %v6618
      %v6620 = vrot.slane %v6345, 2
      %v6621 = vrot.slane %v6276, 2
      %v6622 = vsel %vm506, %v6620, %v6621
      %v6623 = vrot.slane %v6361, 2
      %v6624 = vsel %vm506, %v6621, %v6623
      %v6625 = vrot.slane %v6346, 2
      %v6626 = vrot.slane %v6279, 2
      %v6627 = vsel %vm506, %v6625, %v6626
      %v6628 = vrot.slane %v6362, 2
      %v6629 = vsel %vm506, %v6626, %v6628
      %v6630 = vrot.slane %v6347, 2
      %v6631 = vrot.slane %v6282, 2
      %v6632 = vsel %vm506, %v6630, %v6631
      %v6633 = vrot.slane %v6363, 2
      %v6634 = vsel %vm506, %v6631, %v6633
      %6635 = vrot.lane.b32.xlu0 %v6562, 32
      %v6636 = vpop.permute.xlu0 %6635
      %6637 = vrot.lane.b32.xlu0 %v6564, 32
      %v6638 = vpop.permute.xlu0 %6637
      %6639 = vrot.lane.b32.xlu0 %v6567, 32
      %v6640 = vpop.permute.xlu0 %6639
      %6641 = vrot.lane.b32.xlu0 %v6569, 32
      %v6642 = vpop.permute.xlu0 %6641
      %6643 = vrot.lane.b32.xlu0 %v6572, 32
      %v6644 = vpop.permute.xlu0 %6643
      %6645 = vrot.lane.b32.xlu0 %v6574, 32
      %v6646 = vpop.permute.xlu0 %6645
      %6647 = vrot.lane.b32.xlu0 %v6577, 32
      %v6648 = vpop.permute.xlu0 %6647
      %6649 = vrot.lane.b32.xlu0 %v6579, 32
      %v6650 = vpop.permute.xlu0 %6649
      %6651 = vrot.lane.b32.xlu0 %v6582, 32
      %v6652 = vpop.permute.xlu0 %6651
      %6653 = vrot.lane.b32.xlu0 %v6584, 32
      %v6654 = vpop.permute.xlu0 %6653
      %6655 = vrot.lane.b32.xlu0 %v6587, 32
      %v6656 = vpop.permute.xlu0 %6655
      %6657 = vrot.lane.b32.xlu0 %v6589, 32
      %v6658 = vpop.permute.xlu0 %6657
      %6659 = vrot.lane.b32.xlu0 %v6592, 32
      %v6660 = vpop.permute.xlu0 %6659
      %6661 = vrot.lane.b32.xlu0 %v6594, 32
      %v6662 = vpop.permute.xlu0 %6661
      %6663 = vrot.lane.b32.xlu0 %v6597, 32
      %v6664 = vpop.permute.xlu0 %6663
      %6665 = vrot.lane.b32.xlu0 %v6599, 32
      %v6666 = vpop.permute.xlu0 %6665
      %6667 = vrot.lane.b32.xlu0 %v6602, 32
      %v6668 = vpop.permute.xlu0 %6667
      %6669 = vrot.lane.b32.xlu0 %v6604, 32
      %v6670 = vpop.permute.xlu0 %6669
      %6671 = vrot.lane.b32.xlu0 %v6607, 32
      %v6672 = vpop.permute.xlu0 %6671
      %6673 = vrot.lane.b32.xlu0 %v6609, 32
      %v6674 = vpop.permute.xlu0 %6673
      %6675 = vrot.lane.b32.xlu0 %v6612, 32
      %v6676 = vpop.permute.xlu0 %6675
      %6677 = vrot.lane.b32.xlu0 %v6614, 32
      %v6678 = vpop.permute.xlu0 %6677
      %6679 = vrot.lane.b32.xlu0 %v6617, 32
      %v6680 = vpop.permute.xlu0 %6679
      %6681 = vrot.lane.b32.xlu0 %v6619, 32
      %v6682 = vpop.permute.xlu0 %6681
      %6683 = vrot.lane.b32.xlu0 %v6622, 32
      %v6684 = vpop.permute.xlu0 %6683
      %6685 = vrot.lane.b32.xlu0 %v6624, 32
      %v6686 = vpop.permute.xlu0 %6685
      %6687 = vrot.lane.b32.xlu0 %v6627, 32
      %v6688 = vpop.permute.xlu0 %6687
      %6689 = vrot.lane.b32.xlu0 %v6629, 32
      %v6690 = vpop.permute.xlu0 %6689
      %6691 = vrot.lane.b32.xlu0 %v6632, 32
      %v6692 = vpop.permute.xlu0 %6691
      %6693 = vrot.lane.b32.xlu0 %v6634, 32
      %v6694 = vpop.permute.xlu0 %6693
      %6726 = vrot.lane.b32.xlu0 %v6333, 48
      %v6727 = vpop.permute.xlu0 %6726
      %6728 = vrot.lane.b32.xlu0 %v6240, 48
      %v6729 = vpop.permute.xlu0 %6728
      %6730 = vrot.lane.b32.xlu0 %v6334, 48
      %v6731 = vpop.permute.xlu0 %6730
      %6732 = vrot.lane.b32.xlu0 %v6243, 48
      %v6733 = vpop.permute.xlu0 %6732
      %6734 = vrot.lane.b32.xlu0 %v6335, 48
      %v6735 = vpop.permute.xlu0 %6734
      %6736 = vrot.lane.b32.xlu0 %v6246, 48
      %v6737 = vpop.permute.xlu0 %6736
      %6738 = vrot.lane.b32.xlu0 %v6336, 48
      %v6739 = vpop.permute.xlu0 %6738
      %6740 = vrot.lane.b32.xlu0 %v6249, 48
      %v6741 = vpop.permute.xlu0 %6740
      %6742 = vrot.lane.b32.xlu0 %v6337, 48
      %v6743 = vpop.permute.xlu0 %6742
      %6744 = vrot.lane.b32.xlu0 %v6252, 48
      %v6745 = vpop.permute.xlu0 %6744
      %6746 = vrot.lane.b32.xlu0 %v6338, 48
      %v6747 = vpop.permute.xlu0 %6746
      %6748 = vrot.lane.b32.xlu0 %v6255, 48
      %v6749 = vpop.permute.xlu0 %6748
      %6750 = vrot.lane.b32.xlu0 %v6339, 48
      %v6751 = vpop.permute.xlu0 %6750
      %6752 = vrot.lane.b32.xlu0 %v6258, 48
      %v6753 = vpop.permute.xlu0 %6752
      %6754 = vrot.lane.b32.xlu0 %v6340, 48
      %v6755 = vpop.permute.xlu0 %6754
      %6756 = vrot.lane.b32.xlu0 %v6261, 48
      %v6757 = vpop.permute.xlu0 %6756
      %6758 = vrot.lane.b32.xlu0 %v6341, 48
      %v6759 = vpop.permute.xlu0 %6758
      %6760 = vrot.lane.b32.xlu0 %v6264, 48
      %v6761 = vpop.permute.xlu0 %6760
      %6762 = vrot.lane.b32.xlu0 %v6342, 48
      %v6763 = vpop.permute.xlu0 %6762
      %6764 = vrot.lane.b32.xlu0 %v6267, 48
      %v6765 = vpop.permute.xlu0 %6764
      %6766 = vrot.lane.b32.xlu0 %v6343, 48
      %v6767 = vpop.permute.xlu0 %6766
      %6768 = vrot.lane.b32.xlu0 %v6270, 48
      %v6769 = vpop.permute.xlu0 %6768
      %6770 = vrot.lane.b32.xlu0 %v6344, 48
      %v6771 = vpop.permute.xlu0 %6770
      %6772 = vrot.lane.b32.xlu0 %v6273, 48
      %v6773 = vpop.permute.xlu0 %6772
      %6774 = vrot.lane.b32.xlu0 %v6345, 48
      %v6775 = vpop.permute.xlu0 %6774
      %6776 = vrot.lane.b32.xlu0 %v6276, 48
      %v6777 = vpop.permute.xlu0 %6776
      %6778 = vrot.lane.b32.xlu0 %v6346, 48
      %v6779 = vpop.permute.xlu0 %6778
      %6780 = vrot.lane.b32.xlu0 %v6279, 48
      %v6781 = vpop.permute.xlu0 %6780
      %6782 = vrot.lane.b32.xlu0 %v6347, 48
      %v6783 = vpop.permute.xlu0 %6782
      %6784 = vrot.lane.b32.xlu0 %v6282, 48
      %v6785 = vpop.permute.xlu0 %6784
      %6786 = vrot.lane.b32.xlu0 %v6348, 48
      %v6787 = vpop.permute.xlu0 %6786
      %6788 = vrot.lane.b32.xlu0 %v6285, 48
      %v6789 = vpop.permute.xlu0 %6788
      %v6823 = vrot.slane %v6348, 1
      %v6824 = vrot.slane %v6285, 1
      %v6825 = vsel %vm457, %v6823, %v6824
      %v6826 = vrot.slane %v6364, 1
      %v6827 = vsel %vm457, %v6824, %v6826
      %6828 = vrot.lane.b32.xlu0 %v6397, 64
      %v6829 = vpop.permute.xlu0 %6828
      %6830 = vrot.lane.b32.xlu0 %v6399, 64
      %v6831 = vpop.permute.xlu0 %6830
      %6832 = vrot.lane.b32.xlu0 %v6402, 64
      %v6833 = vpop.permute.xlu0 %6832
      %6834 = vrot.lane.b32.xlu0 %v6404, 64
      %v6835 = vpop.permute.xlu0 %6834
      %6836 = vrot.lane.b32.xlu0 %v6407, 64
      %v6837 = vpop.permute.xlu0 %6836
      %6838 = vrot.lane.b32.xlu0 %v6409, 64
      %v6839 = vpop.permute.xlu0 %6838
      %6840 = vrot.lane.b32.xlu0 %v6412, 64
      %v6841 = vpop.permute.xlu0 %6840
      %6842 = vrot.lane.b32.xlu0 %v6414, 64
      %v6843 = vpop.permute.xlu0 %6842
      %6844 = vrot.lane.b32.xlu0 %v6417, 64
      %v6845 = vpop.permute.xlu0 %6844
      %6846 = vrot.lane.b32.xlu0 %v6419, 64
      %v6847 = vpop.permute.xlu0 %6846
      %6848 = vrot.lane.b32.xlu0 %v6422, 64
      %v6849 = vpop.permute.xlu0 %6848
      %6850 = vrot.lane.b32.xlu0 %v6424, 64
      %v6851 = vpop.permute.xlu0 %6850
      %6852 = vrot.lane.b32.xlu0 %v6427, 64
      %v6853 = vpop.permute.xlu0 %6852
      %6854 = vrot.lane.b32.xlu0 %v6429, 64
      %v6855 = vpop.permute.xlu0 %6854
      %6856 = vrot.lane.b32.xlu0 %v6432, 64
      %v6857 = vpop.permute.xlu0 %6856
      %6858 = vrot.lane.b32.xlu0 %v6434, 64
      %v6859 = vpop.permute.xlu0 %6858
      %6860 = vrot.lane.b32.xlu0 %v6437, 64
      %v6861 = vpop.permute.xlu0 %6860
      %6862 = vrot.lane.b32.xlu0 %v6439, 64
      %v6863 = vpop.permute.xlu0 %6862
      %6864 = vrot.lane.b32.xlu0 %v6442, 64
      %v6865 = vpop.permute.xlu0 %6864
      %6866 = vrot.lane.b32.xlu0 %v6444, 64
      %v6867 = vpop.permute.xlu0 %6866
      %6868 = vrot.lane.b32.xlu0 %v6447, 64
      %v6869 = vpop.permute.xlu0 %6868
      %6870 = vrot.lane.b32.xlu0 %v6449, 64
      %v6871 = vpop.permute.xlu0 %6870
      %6872 = vrot.lane.b32.xlu0 %v6452, 64
      %v6873 = vpop.permute.xlu0 %6872
      %6874 = vrot.lane.b32.xlu0 %v6454, 64
      %v6875 = vpop.permute.xlu0 %6874
      %6876 = vrot.lane.b32.xlu0 %v6457, 64
      %v6877 = vpop.permute.xlu0 %6876
      %6878 = vrot.lane.b32.xlu0 %v6459, 64
      %v6879 = vpop.permute.xlu0 %6878
      %6880 = vrot.lane.b32.xlu0 %v6462, 64
      %v6881 = vpop.permute.xlu0 %6880
      %6882 = vrot.lane.b32.xlu0 %v6464, 64
      %v6883 = vpop.permute.xlu0 %6882
      %6884 = vrot.lane.b32.xlu0 %v6467, 64
      %v6885 = vpop.permute.xlu0 %6884
      %6886 = vrot.lane.b32.xlu0 %v6469, 64
      %v6887 = vpop.permute.xlu0 %6886
      %6888 = vrot.lane.b32.xlu0 %v6825, 64
      %v6889 = vpop.permute.xlu0 %6888
      %6890 = vrot.lane.b32.xlu0 %v6827, 64
      %v6891 = vpop.permute.xlu0 %6890
      %v6924 = vrot.slane %v6348, 2
      %v6925 = vrot.slane %v6285, 2
      %v6926 = vsel %vm506, %v6924, %v6925
      %v6927 = vrot.slane %v6364, 2
      %v6928 = vsel %vm506, %v6925, %v6927
      %6929 = vrot.lane.b32.xlu0 %v6562, 80
      %v6930 = vpop.permute.xlu0 %6929
      %6931 = vrot.lane.b32.xlu0 %v6564, 80
      %v6932 = vpop.permute.xlu0 %6931
      %6933 = vrot.lane.b32.xlu0 %v6567, 80
      %v6934 = vpop.permute.xlu0 %6933
      %6935 = vrot.lane.b32.xlu0 %v6569, 80
      %v6936 = vpop.permute.xlu0 %6935
      %6937 = vrot.lane.b32.xlu0 %v6572, 80
      %v6938 = vpop.permute.xlu0 %6937
      %6939 = vrot.lane.b32.xlu0 %v6574, 80
      %v6940 = vpop.permute.xlu0 %6939
      %6941 = vrot.lane.b32.xlu0 %v6577, 80
      %v6942 = vpop.permute.xlu0 %6941
      %6943 = vrot.lane.b32.xlu0 %v6579, 80
      %v6944 = vpop.permute.xlu0 %6943
      %6945 = vrot.lane.b32.xlu0 %v6582, 80
      %v6946 = vpop.permute.xlu0 %6945
      %6947 = vrot.lane.b32.xlu0 %v6584, 80
      %v6948 = vpop.permute.xlu0 %6947
      %6949 = vrot.lane.b32.xlu0 %v6587, 80
      %v6950 = vpop.permute.xlu0 %6949
      %6951 = vrot.lane.b32.xlu0 %v6589, 80
      %v6952 = vpop.permute.xlu0 %6951
      %6953 = vrot.lane.b32.xlu0 %v6592, 80
      %v6954 = vpop.permute.xlu0 %6953
      %6955 = vrot.lane.b32.xlu0 %v6594, 80
      %v6956 = vpop.permute.xlu0 %6955
      %6957 = vrot.lane.b32.xlu0 %v6597, 80
      %v6958 = vpop.permute.xlu0 %6957
      %6959 = vrot.lane.b32.xlu0 %v6599, 80
      %v6960 = vpop.permute.xlu0 %6959
      %6961 = vrot.lane.b32.xlu0 %v6602, 80
      %v6962 = vpop.permute.xlu0 %6961
      %6963 = vrot.lane.b32.xlu0 %v6604, 80
      %v6964 = vpop.permute.xlu0 %6963
      %6965 = vrot.lane.b32.xlu0 %v6607, 80
      %v6966 = vpop.permute.xlu0 %6965
      %6967 = vrot.lane.b32.xlu0 %v6609, 80
      %v6968 = vpop.permute.xlu0 %6967
      %6969 = vrot.lane.b32.xlu0 %v6612, 80
      %v6970 = vpop.permute.xlu0 %6969
      %6971 = vrot.lane.b32.xlu0 %v6614, 80
      %v6972 = vpop.permute.xlu0 %6971
      %6973 = vrot.lane.b32.xlu0 %v6617, 80
      %v6974 = vpop.permute.xlu0 %6973
      %6975 = vrot.lane.b32.xlu0 %v6619, 80
      %v6976 = vpop.permute.xlu0 %6975
      %6977 = vrot.lane.b32.xlu0 %v6622, 80
      %v6978 = vpop.permute.xlu0 %6977
      %6979 = vrot.lane.b32.xlu0 %v6624, 80
      %v6980 = vpop.permute.xlu0 %6979
      %6981 = vrot.lane.b32.xlu0 %v6627, 80
      %v6982 = vpop.permute.xlu0 %6981
      %6983 = vrot.lane.b32.xlu0 %v6629, 80
      %v6984 = vpop.permute.xlu0 %6983
      %6985 = vrot.lane.b32.xlu0 %v6632, 80
      %v6986 = vpop.permute.xlu0 %6985
      %6987 = vrot.lane.b32.xlu0 %v6634, 80
      %v6988 = vpop.permute.xlu0 %6987
      %6989 = vrot.lane.b32.xlu0 %v6926, 80
      %v6990 = vpop.permute.xlu0 %6989
      %6991 = vrot.lane.b32.xlu0 %v6928, 80
      %v6992 = vpop.permute.xlu0 %6991
      %7025 = vrot.lane.b32.xlu0 %v6334, 96
      %v7026 = vpop.permute.xlu0 %7025
      %7027 = vrot.lane.b32.xlu0 %v6243, 96
      %v7028 = vpop.permute.xlu0 %7027
      %7029 = vrot.lane.b32.xlu0 %v6335, 96
      %v7030 = vpop.permute.xlu0 %7029
      %7031 = vrot.lane.b32.xlu0 %v6246, 96
      %v7032 = vpop.permute.xlu0 %7031
      %7033 = vrot.lane.b32.xlu0 %v6336, 96
      %v7034 = vpop.permute.xlu0 %7033
      %7035 = vrot.lane.b32.xlu0 %v6249, 96
      %v7036 = vpop.permute.xlu0 %7035
      %7037 = vrot.lane.b32.xlu0 %v6337, 96
      %v7038 = vpop.permute.xlu0 %7037
      %7039 = vrot.lane.b32.xlu0 %v6252, 96
      %v7040 = vpop.permute.xlu0 %7039
      %7041 = vrot.lane.b32.xlu0 %v6338, 96
      %v7042 = vpop.permute.xlu0 %7041
      %7043 = vrot.lane.b32.xlu0 %v6255, 96
      %v7044 = vpop.permute.xlu0 %7043
      %7045 = vrot.lane.b32.xlu0 %v6339, 96
      %v7046 = vpop.permute.xlu0 %7045
      %7047 = vrot.lane.b32.xlu0 %v6258, 96
      %v7048 = vpop.permute.xlu0 %7047
      %7049 = vrot.lane.b32.xlu0 %v6340, 96
      %v7050 = vpop.permute.xlu0 %7049
      %7051 = vrot.lane.b32.xlu0 %v6261, 96
      %v7052 = vpop.permute.xlu0 %7051
      %7053 = vrot.lane.b32.xlu0 %v6341, 96
      %v7054 = vpop.permute.xlu0 %7053
      %7055 = vrot.lane.b32.xlu0 %v6264, 96
      %v7056 = vpop.permute.xlu0 %7055
      %7057 = vrot.lane.b32.xlu0 %v6342, 96
      %v7058 = vpop.permute.xlu0 %7057
      %7059 = vrot.lane.b32.xlu0 %v6267, 96
      %v7060 = vpop.permute.xlu0 %7059
      %7061 = vrot.lane.b32.xlu0 %v6343, 96
      %v7062 = vpop.permute.xlu0 %7061
      %7063 = vrot.lane.b32.xlu0 %v6270, 96
      %v7064 = vpop.permute.xlu0 %7063
      %7065 = vrot.lane.b32.xlu0 %v6344, 96
      %v7066 = vpop.permute.xlu0 %7065
      %7067 = vrot.lane.b32.xlu0 %v6273, 96
      %v7068 = vpop.permute.xlu0 %7067
      %7069 = vrot.lane.b32.xlu0 %v6345, 96
      %v7070 = vpop.permute.xlu0 %7069
      %7071 = vrot.lane.b32.xlu0 %v6276, 96
      %v7072 = vpop.permute.xlu0 %7071
      %7073 = vrot.lane.b32.xlu0 %v6346, 96
      %v7074 = vpop.permute.xlu0 %7073
      %7075 = vrot.lane.b32.xlu0 %v6279, 96
      %v7076 = vpop.permute.xlu0 %7075
      %7077 = vrot.lane.b32.xlu0 %v6347, 96
      %v7078 = vpop.permute.xlu0 %7077
      %7079 = vrot.lane.b32.xlu0 %v6282, 96
      %v7080 = vpop.permute.xlu0 %7079
      %7081 = vrot.lane.b32.xlu0 %v6348, 96
      %v7082 = vpop.permute.xlu0 %7081
      %7083 = vrot.lane.b32.xlu0 %v6285, 96
      %v7084 = vpop.permute.xlu0 %7083
      %7115 = vrot.lane.b32.xlu0 %v6402, 112
      %v7116 = vpop.permute.xlu0 %7115
      %7117 = vrot.lane.b32.xlu0 %v6404, 112
      %v7118 = vpop.permute.xlu0 %7117
      %7119 = vrot.lane.b32.xlu0 %v6407, 112
      %v7120 = vpop.permute.xlu0 %7119
      %7121 = vrot.lane.b32.xlu0 %v6409, 112
      %v7122 = vpop.permute.xlu0 %7121
      %7123 = vrot.lane.b32.xlu0 %v6412, 112
      %v7124 = vpop.permute.xlu0 %7123
      %7125 = vrot.lane.b32.xlu0 %v6414, 112
      %v7126 = vpop.permute.xlu0 %7125
      %7127 = vrot.lane.b32.xlu0 %v6417, 112
      %v7128 = vpop.permute.xlu0 %7127
      %7129 = vrot.lane.b32.xlu0 %v6419, 112
      %v7130 = vpop.permute.xlu0 %7129
      %7131 = vrot.lane.b32.xlu0 %v6422, 112
      %v7132 = vpop.permute.xlu0 %7131
      %7133 = vrot.lane.b32.xlu0 %v6424, 112
      %v7134 = vpop.permute.xlu0 %7133
      %7135 = vrot.lane.b32.xlu0 %v6427, 112
      %v7136 = vpop.permute.xlu0 %7135
      %7137 = vrot.lane.b32.xlu0 %v6429, 112
      %v7138 = vpop.permute.xlu0 %7137
      %7139 = vrot.lane.b32.xlu0 %v6432, 112
      %v7140 = vpop.permute.xlu0 %7139
      %7141 = vrot.lane.b32.xlu0 %v6434, 112
      %v7142 = vpop.permute.xlu0 %7141
      %7143 = vrot.lane.b32.xlu0 %v6437, 112
      %v7144 = vpop.permute.xlu0 %7143
      %7145 = vrot.lane.b32.xlu0 %v6439, 112
      %v7146 = vpop.permute.xlu0 %7145
      %7147 = vrot.lane.b32.xlu0 %v6442, 112
      %v7148 = vpop.permute.xlu0 %7147
      %7149 = vrot.lane.b32.xlu0 %v6444, 112
      %v7150 = vpop.permute.xlu0 %7149
      %7151 = vrot.lane.b32.xlu0 %v6447, 112
      %v7152 = vpop.permute.xlu0 %7151
      %7153 = vrot.lane.b32.xlu0 %v6449, 112
      %v7154 = vpop.permute.xlu0 %7153
      %7155 = vrot.lane.b32.xlu0 %v6452, 112
      %v7156 = vpop.permute.xlu0 %7155
      %7157 = vrot.lane.b32.xlu0 %v6454, 112
      %v7158 = vpop.permute.xlu0 %7157
      %7159 = vrot.lane.b32.xlu0 %v6457, 112
      %v7160 = vpop.permute.xlu0 %7159
      %7161 = vrot.lane.b32.xlu0 %v6459, 112
      %v7162 = vpop.permute.xlu0 %7161
      %7163 = vrot.lane.b32.xlu0 %v6462, 112
      %v7164 = vpop.permute.xlu0 %7163
      %7165 = vrot.lane.b32.xlu0 %v6464, 112
      %v7166 = vpop.permute.xlu0 %7165
      %7167 = vrot.lane.b32.xlu0 %v6467, 112
      %v7168 = vpop.permute.xlu0 %7167
      %7169 = vrot.lane.b32.xlu0 %v6469, 112
      %v7170 = vpop.permute.xlu0 %7169
      %7171 = vrot.lane.b32.xlu0 %v6825, 112
      %v7172 = vpop.permute.xlu0 %7171
      %7173 = vrot.lane.b32.xlu0 %v6827, 112
      %v7174 = vpop.permute.xlu0 %7173
      %v7205 = vsel %vm716, %v6333, %v6471
      %v7206 = vsel %vm716, %v6240, %v6473
      %v7207 = vsel %vm716, %v6334, %v6475
      %v7208 = vsel %vm716, %v6243, %v6477
      %v7209 = vsel %vm716, %v6335, %v6479
      %v7210 = vsel %vm716, %v6246, %v6481
      %v7211 = vsel %vm716, %v6336, %v6483
      %v7212 = vsel %vm716, %v6249, %v6485
      %v7213 = vsel %vm716, %v6337, %v6487
      %v7214 = vsel %vm716, %v6252, %v6489
      %v7215 = vsel %vm716, %v6338, %v6491
      %v7216 = vsel %vm716, %v6255, %v6493
      %v7217 = vsel %vm716, %v6339, %v6495
      %v7218 = vsel %vm716, %v6258, %v6497
      %v7219 = vsel %vm716, %v6340, %v6499
      %v7220 = vsel %vm716, %v6261, %v6501
      %v7221 = vsel %vm716, %v6341, %v6503
      %v7222 = vsel %vm716, %v6264, %v6505
      %v7223 = vsel %vm716, %v6342, %v6507
      %v7224 = vsel %vm716, %v6267, %v6509
      %v7225 = vsel %vm716, %v6343, %v6511
      %v7226 = vsel %vm716, %v6270, %v6513
      %v7227 = vsel %vm716, %v6344, %v6515
      %v7228 = vsel %vm716, %v6273, %v6517
      %v7229 = vsel %vm716, %v6345, %v6519
      %v7230 = vsel %vm716, %v6276, %v6521
      %v7231 = vsel %vm716, %v6346, %v6523
      %v7232 = vsel %vm716, %v6279, %v6525
      %v7233 = vsel %vm716, %v6347, %v6527
      %v7234 = vsel %vm716, %v6282, %v6529
      %v7235 = vsel %vm734, %v7205, %v6636
      %v7236 = vsel %vm734, %v7206, %v6638
      %v7237 = vsel %vm734, %v7207, %v6640
      %v7238 = vsel %vm734, %v7208, %v6642
      %v7239 = vsel %vm734, %v7209, %v6644
      %v7240 = vsel %vm734, %v7210, %v6646
      %v7241 = vsel %vm734, %v7211, %v6648
      %v7242 = vsel %vm734, %v7212, %v6650
      %v7243 = vsel %vm734, %v7213, %v6652
      %v7244 = vsel %vm734, %v7214, %v6654
      %v7245 = vsel %vm734, %v7215, %v6656
      %v7246 = vsel %vm734, %v7216, %v6658
      %v7247 = vsel %vm734, %v7217, %v6660
      %v7248 = vsel %vm734, %v7218, %v6662
      %v7249 = vsel %vm734, %v7219, %v6664
      %v7250 = vsel %vm734, %v7220, %v6666
      %v7251 = vsel %vm734, %v7221, %v6668
      %v7252 = vsel %vm734, %v7222, %v6670
      %v7253 = vsel %vm734, %v7223, %v6672
      %v7254 = vsel %vm734, %v7224, %v6674
      %v7255 = vsel %vm734, %v7225, %v6676
      %v7256 = vsel %vm734, %v7226, %v6678
      %v7257 = vsel %vm734, %v7227, %v6680
      %v7258 = vsel %vm734, %v7228, %v6682
      %v7259 = vsel %vm734, %v7229, %v6684
      %v7260 = vsel %vm734, %v7230, %v6686
      %v7261 = vsel %vm734, %v7231, %v6688
      %v7262 = vsel %vm734, %v7232, %v6690
      %v7263 = vsel %vm734, %v7233, %v6692
      %v7264 = vsel %vm734, %v7234, %v6694
      %v7265 = vsel %vm752, %v3595, %v6727
      %v7266 = vsel %vm752, %v3596, %v6729
      %v7267 = vsel %vm752, %v7235, %v6731
      %v7268 = vsel %vm752, %v7236, %v6733
      %v7269 = vsel %vm752, %v7237, %v6735
      %v7270 = vsel %vm752, %v7238, %v6737
      %v7271 = vsel %vm752, %v7239, %v6739
      %v7272 = vsel %vm752, %v7240, %v6741
      %v7273 = vsel %vm752, %v7241, %v6743
      %v7274 = vsel %vm752, %v7242, %v6745
      %v7275 = vsel %vm752, %v7243, %v6747
      %v7276 = vsel %vm752, %v7244, %v6749
      %v7277 = vsel %vm752, %v7245, %v6751
      %v7278 = vsel %vm752, %v7246, %v6753
      %v7279 = vsel %vm752, %v7247, %v6755
      %v7280 = vsel %vm752, %v7248, %v6757
      %v7281 = vsel %vm752, %v7249, %v6759
      %v7282 = vsel %vm752, %v7250, %v6761
      %v7283 = vsel %vm752, %v7251, %v6763
      %v7284 = vsel %vm752, %v7252, %v6765
      %v7285 = vsel %vm752, %v7253, %v6767
      %v7286 = vsel %vm752, %v7254, %v6769
      %v7287 = vsel %vm752, %v7255, %v6771
      %v7288 = vsel %vm752, %v7256, %v6773
      %v7289 = vsel %vm752, %v7257, %v6775
      %v7290 = vsel %vm752, %v7258, %v6777
      %v7291 = vsel %vm752, %v7259, %v6779
      %v7292 = vsel %vm752, %v7260, %v6781
      %v7293 = vsel %vm752, %v7261, %v6783
      %v7294 = vsel %vm752, %v7262, %v6785
      %v7295 = vsel %vm752, %v7263, %v6787
      %v7296 = vsel %vm752, %v7264, %v6789
      %v7297 = vsel %vm770, %v7265, %v6829
      %v7298 = vsel %vm770, %v7266, %v6831
      %v7299 = vsel %vm770, %v7267, %v6833
      %v7300 = vsel %vm770, %v7268, %v6835
      %v7301 = vsel %vm770, %v7269, %v6837
      %v7302 = vsel %vm770, %v7270, %v6839
      %v7303 = vsel %vm770, %v7271, %v6841
      %v7304 = vsel %vm770, %v7272, %v6843
      %v7305 = vsel %vm770, %v7273, %v6845
      %v7306 = vsel %vm770, %v7274, %v6847
      %v7307 = vsel %vm770, %v7275, %v6849
      %v7308 = vsel %vm770, %v7276, %v6851
      %v7309 = vsel %vm770, %v7277, %v6853
      %v7310 = vsel %vm770, %v7278, %v6855
      %v7311 = vsel %vm770, %v7279, %v6857
      %v7312 = vsel %vm770, %v7280, %v6859
      %v7313 = vsel %vm770, %v7281, %v6861
      %v7314 = vsel %vm770, %v7282, %v6863
      %v7315 = vsel %vm770, %v7283, %v6865
      %v7316 = vsel %vm770, %v7284, %v6867
      %v7317 = vsel %vm770, %v7285, %v6869
      %v7318 = vsel %vm770, %v7286, %v6871
      %v7319 = vsel %vm770, %v7287, %v6873
      %v7320 = vsel %vm770, %v7288, %v6875
      %v7321 = vsel %vm770, %v7289, %v6877
      %v7322 = vsel %vm770, %v7290, %v6879
      %v7323 = vsel %vm770, %v7291, %v6881
      %v7324 = vsel %vm770, %v7292, %v6883
      %v7325 = vsel %vm770, %v7293, %v6885
      %v7326 = vsel %vm770, %v7294, %v6887
      %v7327 = vsel %vm770, %v7295, %v6889
      %v7328 = vsel %vm770, %v7296, %v6891
      %v7329 = vsel %vm3691, %v7297, %v6930
      %v7330 = vsel %vm3691, %v7298, %v6932
      %v7331 = vsel %vm3691, %v7299, %v6934
      %v7332 = vsel %vm3691, %v7300, %v6936
      %v7333 = vsel %vm3691, %v7301, %v6938
      %v7334 = vsel %vm3691, %v7302, %v6940
      %v7335 = vsel %vm3691, %v7303, %v6942
      %v7336 = vsel %vm3691, %v7304, %v6944
      %v7337 = vsel %vm3691, %v7305, %v6946
      %v7338 = vsel %vm3691, %v7306, %v6948
      %v7339 = vsel %vm3691, %v7307, %v6950
      %v7340 = vsel %vm3691, %v7308, %v6952
      %v7341 = vsel %vm3691, %v7309, %v6954
      %v7342 = vsel %vm3691, %v7310, %v6956
      %v7343 = vsel %vm3691, %v7311, %v6958
      %v7344 = vsel %vm3691, %v7312, %v6960
      %v7345 = vsel %vm3691, %v7313, %v6962
      %v7346 = vsel %vm3691, %v7314, %v6964
      %v7347 = vsel %vm3691, %v7315, %v6966
      %v7348 = vsel %vm3691, %v7316, %v6968
      %v7349 = vsel %vm3691, %v7317, %v6970
      %v7350 = vsel %vm3691, %v7318, %v6972
      %v7351 = vsel %vm3691, %v7319, %v6974
      %v7352 = vsel %vm3691, %v7320, %v6976
      %v7353 = vsel %vm3691, %v7321, %v6978
      %v7354 = vsel %vm3691, %v7322, %v6980
      %v7355 = vsel %vm3691, %v7323, %v6982
      %v7356 = vsel %vm3691, %v7324, %v6984
      %v7357 = vsel %vm3691, %v7325, %v6986
      %v7358 = vsel %vm3691, %v7326, %v6988
      %v7359 = vsel %vm3691, %v7327, %v6990
      %v7360 = vsel %vm3691, %v7328, %v6992
      %v7361 = vsel %vm1091, %v7329, %v7026
      %v7362 = vsel %vm1091, %v7330, %v7028
      %v7363 = vsel %vm1091, %v7331, %v7030
      %v7364 = vsel %vm1091, %v7332, %v7032
      %v7365 = vsel %vm1091, %v7333, %v7034
      %v7366 = vsel %vm1091, %v7334, %v7036
      %v7367 = vsel %vm1091, %v7335, %v7038
      %v7368 = vsel %vm1091, %v7336, %v7040
      %v7369 = vsel %vm1091, %v7337, %v7042
      %v7370 = vsel %vm1091, %v7338, %v7044
      %v7371 = vsel %vm1091, %v7339, %v7046
      %v7372 = vsel %vm1091, %v7340, %v7048
      %v7373 = vsel %vm1091, %v7341, %v7050
      %v7374 = vsel %vm1091, %v7342, %v7052
      %v7375 = vsel %vm1091, %v7343, %v7054
      %v7376 = vsel %vm1091, %v7344, %v7056
      %v7377 = vsel %vm1091, %v7345, %v7058
      %v7378 = vsel %vm1091, %v7346, %v7060
      %v7379 = vsel %vm1091, %v7347, %v7062
      %v7380 = vsel %vm1091, %v7348, %v7064
      %v7381 = vsel %vm1091, %v7349, %v7066
      %v7382 = vsel %vm1091, %v7350, %v7068
      %v7383 = vsel %vm1091, %v7351, %v7070
      %v7384 = vsel %vm1091, %v7352, %v7072
      %v7385 = vsel %vm1091, %v7353, %v7074
      %v7386 = vsel %vm1091, %v7354, %v7076
      %v7387 = vsel %vm1091, %v7355, %v7078
      %v7388 = vsel %vm1091, %v7356, %v7080
      %v7389 = vsel %vm1091, %v7357, %v7082
      %v7390 = vsel %vm1091, %v7358, %v7084
      %v7391 = vsel %vm1091, %v7359, %v3432
      %v7392 = vsel %vm1091, %v7360, %v3434
      %v7393 = vsel %vm3756, %v7361, %v7116
      %v7394 = vsel %vm3756, %v7362, %v7118
      %v7395 = vsel %vm3756, %v7363, %v7120
      %v7396 = vsel %vm3756, %v7364, %v7122
      %v7397 = vsel %vm3756, %v7365, %v7124
      %v7398 = vsel %vm3756, %v7366, %v7126
      %v7399 = vsel %vm3756, %v7367, %v7128
      %v7400 = vsel %vm3756, %v7368, %v7130
      %v7401 = vsel %vm3756, %v7369, %v7132
      %v7402 = vsel %vm3756, %v7370, %v7134
      %v7403 = vsel %vm3756, %v7371, %v7136
      %v7404 = vsel %vm3756, %v7372, %v7138
      %v7405 = vsel %vm3756, %v7373, %v7140
      %v7406 = vsel %vm3756, %v7374, %v7142
      %v7407 = vsel %vm3756, %v7375, %v7144
      %v7408 = vsel %vm3756, %v7376, %v7146
      %v7409 = vsel %vm3756, %v7377, %v7148
      %v7410 = vsel %vm3756, %v7378, %v7150
      %v7411 = vsel %vm3756, %v7379, %v7152
      %v7412 = vsel %vm3756, %v7380, %v7154
      %v7413 = vsel %vm3756, %v7381, %v7156
      %v7414 = vsel %vm3756, %v7382, %v7158
      %v7415 = vsel %vm3756, %v7383, %v7160
      %v7416 = vsel %vm3756, %v7384, %v7162
      %v7417 = vsel %vm3756, %v7385, %v7164
      %v7418 = vsel %vm3756, %v7386, %v7166
      %v7419 = vsel %vm3756, %v7387, %v7168
      %v7420 = vsel %vm3756, %v7388, %v7170
      %v7421 = vsel %vm3756, %v7389, %v7172
      %v7422 = vsel %vm3756, %v7390, %v7174
      %v7423 = vsel %vm3756, %v7391, %v3528
      %v7424 = vsel %vm3756, %v7392, %v3530
      %v7425 = vld [vmem:[%s9] sm:$0xff]
      %v7426 = vld [vmem:[%s9 + $0x8] sm:$0xff]
      %v7427 = vld [vmem:[%s9 + $0x10] sm:$0xff]
      %v7428 = vld [vmem:[%s9 + $0x18] sm:$0xff]
      %v7429 = vld [vmem:[%s9 + $0x20] sm:$0xff]
      %v7430 = vld [vmem:[%s9 + $0x28] sm:$0xff]
      %v7431 = vld [vmem:[%s9 + $0x30] sm:$0xff]
      %v7432 = vld [vmem:[%s9 + $0x38] sm:$0xff]
      %v7433 = vld [vmem:[%s9 + $0x40] sm:$0xff]
      %v7434 = vld [vmem:[%s9 + $0x48] sm:$0xff]
      %v7435 = vld [vmem:[%s9 + $0x50] sm:$0xff]
      %v7436 = vld [vmem:[%s9 + $0x58] sm:$0xff]
      %v7437 = vld [vmem:[%s9 + $0x60] sm:$0xff]
      %v7438 = vld [vmem:[%s9 + $0x68] sm:$0xff]
      %v7439 = vld [vmem:[%s9 + $0x70] sm:$0xff]
      %v7440 = vld [vmem:[%s9 + $0x78] sm:$0xff]
      %v7441 = vld [vmem:[%s9 + $0x80] sm:$0xff]
      %v7442 = vld [vmem:[%s9 + $0x88] sm:$0xff]
      %v7443 = vld [vmem:[%s10] sm:$0x1]
      %v7445 = vperm.slane %v7443, 0
      %v7447 = vsel %vm716, %v6567, 0
      %v7449 = vsel %vm716, %v6569, 0
      %v7451 = vsel %vm716, %v6572, 0
      %v7453 = vsel %vm716, %v6574, 0
      %v7455 = vsel %vm716, %v6577, 0
      %v7457 = vsel %vm716, %v6579, 0
      %v7459 = vsel %vm716, %v6582, 0
      %v7461 = vsel %vm716, %v6584, 0
      %v7463 = vsel %vm716, %v6587, 0
      %v7465 = vsel %vm716, %v6589, 0
      %v7467 = vsel %vm716, %v6592, 0
      %v7469 = vsel %vm716, %v6594, 0
      %v7471 = vsel %vm716, %v6597, 0
      %v7473 = vsel %vm716, %v6599, 0
      %v7475 = vsel %vm716, %v6602, 0
      %v7477 = vsel %vm716, %v6604, 0
      %v7479 = vsel %vm716, %v6607, 0
      %v7481 = vsel %vm716, %v6609, 0
      %v7483 = vsel %vm716, %v6612, 0
      %v7485 = vsel %vm716, %v6614, 0
      %v7487 = vsel %vm716, %v6617, 0
      %v7489 = vsel %vm716, %v6619, 0
      %v7491 = vsel %vm716, %v6622, 0
      %v7493 = vsel %vm716, %v6624, 0
      %v7495 = vsel %vm716, %v6627, 0
      %v7497 = vsel %vm716, %v6629, 0
      %v7499 = vsel %vm716, %v6632, 0
      %v7501 = vsel %vm716, %v6634, 0
      %v7503 = vsel %vm716, %v6926, 0
      %v7505 = vsel %vm716, %v6928, 0
      %7507 = vmatpush.msra.mxu0 %v7440
      %7508 = vmatpush.msra.mxu0 %v7439
      %7509 = vmatpush.msra.mxu0 %v7438
      %7510 = vmatpush.msra.mxu0 %v7437
      %7511 = vmatpush.msra.mxu0 %v7436
      %7512 = vmatpush.msra.mxu0 %v7435
      %7513 = vmatpush.msra.mxu0 %v7434
      %7514 = vmatpush.msra.mxu0 %v7433
      %7515 = vmatpush.msra.mxu0 %v7432
      %7516 = vmatpush.msra.mxu0 %v7431
      %7517 = vmatpush.msra.mxu0 %v7430
      %7518 = vmatpush.msra.mxu0 %v7429
      %7519 = vmatpush.msra.mxu0 %v7428
      %7520 = vmatpush.msra.mxu0 %v7427
      %7521 = vmatpush.msra.mxu0 %v7426
      %7522 = vmatpush.msra.mxu0 %v7425
      %7523 = vmatmul.f32.gmra.mxu0 %v7393
      %v7524 = vpop.f32.mrf.mxu0
      %v7525 = vadd.f32 %v7445, %v7524
      %7526 = vmatmul.f32.gmra.mxu0 %v7394
      %v7527 = vpop.f32.mrf.mxu0
      %v7528 = vadd.f32 %v7445, %v7527
      %7529 = vmatmul.f32.gmra.mxu0 %v7395
      %v7530 = vpop.f32.mrf.mxu0
      %v7531 = vadd.f32 %v7445, %v7530
      %7532 = vmatmul.f32.gmra.mxu0 %v7396
      %v7533 = vpop.f32.mrf.mxu0
      %v7534 = vadd.f32 %v7445, %v7533
      %7535 = vmatmul.f32.gmra.mxu0 %v7397
      %v7536 = vpop.f32.mrf.mxu0
      %v7537 = vadd.f32 %v7445, %v7536
      %7538 = vmatmul.f32.gmra.mxu0 %v7398
      %v7539 = vpop.f32.mrf.mxu0
      %v7540 = vadd.f32 %v7445, %v7539
      %7541 = vmatmul.f32.gmra.mxu0 %v7399
      %v7542 = vpop.f32.mrf.mxu0
      %v7543 = vadd.f32 %v7445, %v7542
      %7544 = vmatmul.f32.gmra.mxu0 %v7400
      %v7545 = vpop.f32.mrf.mxu0
      %v7546 = vadd.f32 %v7445, %v7545
      %7547 = vmatmul.f32.gmra.mxu0 %v7401
      %v7548 = vpop.f32.mrf.mxu0
      %v7549 = vadd.f32 %v7445, %v7548
      %7550 = vmatmul.f32.gmra.mxu0 %v7402
      %v7551 = vpop.f32.mrf.mxu0
      %v7552 = vadd.f32 %v7445, %v7551
      %7553 = vmatmul.f32.gmra.mxu0 %v7403
      %v7554 = vpop.f32.mrf.mxu0
      %v7555 = vadd.f32 %v7445, %v7554
      %7556 = vmatmul.f32.gmra.mxu0 %v7404
      %v7557 = vpop.f32.mrf.mxu0
      %v7558 = vadd.f32 %v7445, %v7557
      %7559 = vmatmul.f32.gmra.mxu0 %v7405
      %v7560 = vpop.f32.mrf.mxu0
      %v7561 = vadd.f32 %v7445, %v7560
      %7562 = vmatmul.f32.gmra.mxu0 %v7406
      %v7563 = vpop.f32.mrf.mxu0
      %v7564 = vadd.f32 %v7445, %v7563
      %7565 = vmatmul.f32.gmra.mxu0 %v7407
      %v7566 = vpop.f32.mrf.mxu0
      %v7567 = vadd.f32 %v7445, %v7566
      %7568 = vmatmul.f32.gmra.mxu0 %v7408
      %v7569 = vpop.f32.mrf.mxu0
      %v7570 = vadd.f32 %v7445, %v7569
      %7571 = vmatmul.f32.gmra.mxu0 %v7409
      %v7572 = vpop.f32.mrf.mxu0
      %v7573 = vadd.f32 %v7445, %v7572
      %7574 = vmatmul.f32.gmra.mxu0 %v7410
      %v7575 = vpop.f32.mrf.mxu0
      %v7576 = vadd.f32 %v7445, %v7575
      %7577 = vmatmul.f32.gmra.mxu0 %v7411
      %v7578 = vpop.f32.mrf.mxu0
      %v7579 = vadd.f32 %v7445, %v7578
      %7580 = vmatmul.f32.gmra.mxu0 %v7412
      %v7581 = vpop.f32.mrf.mxu0
      %v7582 = vadd.f32 %v7445, %v7581
      %7583 = vmatmul.f32.gmra.mxu0 %v7413
      %v7584 = vpop.f32.mrf.mxu0
      %v7585 = vadd.f32 %v7445, %v7584
      %7586 = vmatmul.f32.gmra.mxu0 %v7414
      %v7587 = vpop.f32.mrf.mxu0
      %v7588 = vadd.f32 %v7445, %v7587
      %7589 = vmatmul.f32.gmra.mxu0 %v7415
      %v7590 = vpop.f32.mrf.mxu0
      %v7591 = vadd.f32 %v7445, %v7590
      %7592 = vmatmul.f32.gmra.mxu0 %v7416
      %v7593 = vpop.f32.mrf.mxu0
      %v7594 = vadd.f32 %v7445, %v7593
      %7595 = vmatmul.f32.gmra.mxu0 %v7417
      %v7596 = vpop.f32.mrf.mxu0
      %v7597 = vadd.f32 %v7445, %v7596
      %7598 = vmatmul.f32.gmra.mxu0 %v7418
      %v7599 = vpop.f32.mrf.mxu0
      %v7600 = vadd.f32 %v7445, %v7599
      %7601 = vmatmul.f32.gmra.mxu0 %v7419
      %v7602 = vpop.f32.mrf.mxu0
      %v7603 = vadd.f32 %v7445, %v7602
      %7604 = vmatmul.f32.gmra.mxu0 %v7420
      %v7605 = vpop.f32.mrf.mxu0
      %v7606 = vadd.f32 %v7445, %v7605
      %7607 = vmatmul.f32.gmra.mxu0 %v7421
      %v7608 = vpop.f32.mrf.mxu0
      %v7609 = vadd.f32 %v7445, %v7608
      %7610 = vmatmul.f32.gmra.mxu0 %v7422
      %v7611 = vpop.f32.mrf.mxu0
      %v7612 = vadd.f32 %v7445, %v7611
      %7613 = vmatmul.f32.gmra.mxu0 %v7423
      %v7614 = vpop.f32.mrf.mxu0
      %v7615 = vadd.f32 %v7445, %v7614
      %7616 = vmatmul.f32.gmra.mxu0 %v7424
      %v7617 = vpop.f32.mrf.mxu0
      %v7618 = vadd.f32 %v7445, %v7617
      %7619 = vdwg.mxu0
      %7620 = vmatpush.msra.mxu0 0.0
      %7621 = vmatpush.msra.mxu0 0.0
      %7622 = vmatpush.msra.mxu0 0.0
      %7623 = vmatpush.msra.mxu0 0.0
      %7624 = vmatpush.msra.mxu0 0.0
      %7625 = vmatpush.msra.mxu0 0.0
      %7626 = vmatpush.msra.mxu0 0.0
      %7627 = vmatpush.msra.mxu0 0.0
      %7628 = vmatpush.msra.mxu0 0.0
      %7629 = vmatpush.msra.mxu0 0.0
      %7630 = vmatpush.msra.mxu0 0.0
      %7631 = vmatpush.msra.mxu0 0.0
      %7632 = vmatpush.msra.mxu0 0.0
      %7633 = vmatpush.msra.mxu0 0.0
      %7634 = vmatpush.msra.mxu0 %v7442
      %7635 = vmatpush.msra.mxu0 %v7441
      %7636 = vmatmul.f32.gmra.mxu0 %v7447
      %v7637 = vpop.f32.mrf.mxu0
      %v7638 = vadd.f32 %v7525, %v7637
      %7639 = vmatmul.f32.gmra.mxu0 %v7449
      %v7640 = vpop.f32.mrf.mxu0
      %v7641 = vadd.f32 %v7528, %v7640
      %7642 = vmatmul.f32.gmra.mxu0 %v7451
      %v7643 = vpop.f32.mrf.mxu0
      %v7644 = vadd.f32 %v7531, %v7643
      %7645 = vmatmul.f32.gmra.mxu0 %v7453
      %v7646 = vpop.f32.mrf.mxu0
      %v7647 = vadd.f32 %v7534, %v7646
      %7648 = vmatmul.f32.gmra.mxu0 %v7455
      %v7649 = vpop.f32.mrf.mxu0
      %v7650 = vadd.f32 %v7537, %v7649
      %7651 = vmatmul.f32.gmra.mxu0 %v7457
      %v7652 = vpop.f32.mrf.mxu0
      %v7653 = vadd.f32 %v7540, %v7652
      %7654 = vmatmul.f32.gmra.mxu0 %v7459
      %v7655 = vpop.f32.mrf.mxu0
      %v7656 = vadd.f32 %v7543, %v7655
      %7657 = vmatmul.f32.gmra.mxu0 %v7461
      %v7658 = vpop.f32.mrf.mxu0
      %v7659 = vadd.f32 %v7546, %v7658
      %7660 = vmatmul.f32.gmra.mxu0 %v7463
      %v7661 = vpop.f32.mrf.mxu0
      %v7662 = vadd.f32 %v7549, %v7661
      %7663 = vmatmul.f32.gmra.mxu0 %v7465
      %v7664 = vpop.f32.mrf.mxu0
      %v7665 = vadd.f32 %v7552, %v7664
      %7666 = vmatmul.f32.gmra.mxu0 %v7467
      %v7667 = vpop.f32.mrf.mxu0
      %v7668 = vadd.f32 %v7555, %v7667
      %7669 = vmatmul.f32.gmra.mxu0 %v7469
      %v7670 = vpop.f32.mrf.mxu0
      %v7671 = vadd.f32 %v7558, %v7670
      %7672 = vmatmul.f32.gmra.mxu0 %v7471
      %v7673 = vpop.f32.mrf.mxu0
      %v7674 = vadd.f32 %v7561, %v7673
      %7675 = vmatmul.f32.gmra.mxu0 %v7473
      %v7676 = vpop.f32.mrf.mxu0
      %v7677 = vadd.f32 %v7564, %v7676
      %7678 = vmatmul.f32.gmra.mxu0 %v7475
      %v7679 = vpop.f32.mrf.mxu0
      %v7680 = vadd.f32 %v7567, %v7679
      %7681 = vmatmul.f32.gmra.mxu0 %v7477
      %v7682 = vpop.f32.mrf.mxu0
      %v7683 = vadd.f32 %v7570, %v7682
      %7684 = vmatmul.f32.gmra.mxu0 %v7479
      %v7685 = vpop.f32.mrf.mxu0
      %v7686 = vadd.f32 %v7573, %v7685
      %7687 = vmatmul.f32.gmra.mxu0 %v7481
      %v7688 = vpop.f32.mrf.mxu0
      %v7689 = vadd.f32 %v7576, %v7688
      %7690 = vmatmul.f32.gmra.mxu0 %v7483
      %v7691 = vpop.f32.mrf.mxu0
      %v7692 = vadd.f32 %v7579, %v7691
      %7693 = vmatmul.f32.gmra.mxu0 %v7485
      %v7694 = vpop.f32.mrf.mxu0
      %v7695 = vadd.f32 %v7582, %v7694
      %7696 = vmatmul.f32.gmra.mxu0 %v7487
      %v7697 = vpop.f32.mrf.mxu0
      %v7698 = vadd.f32 %v7585, %v7697
      %7699 = vmatmul.f32.gmra.mxu0 %v7489
      %v7700 = vpop.f32.mrf.mxu0
      %v7701 = vadd.f32 %v7588, %v7700
      %7702 = vmatmul.f32.gmra.mxu0 %v7491
      %v7703 = vpop.f32.mrf.mxu0
      %v7704 = vadd.f32 %v7591, %v7703
      %7705 = vmatmul.f32.gmra.mxu0 %v7493
      %v7706 = vpop.f32.mrf.mxu0
      %v7707 = vadd.f32 %v7594, %v7706
      %7708 = vmatmul.f32.gmra.mxu0 %v7495
      %v7709 = vpop.f32.mrf.mxu0
      %v7710 = vadd.f32 %v7597, %v7709
      %7711 = vmatmul.f32.gmra.mxu0 %v7497
      %v7712 = vpop.f32.mrf.mxu0
      %v7713 = vadd.f32 %v7600, %v7712
      %7714 = vmatmul.f32.gmra.mxu0 %v7499
      %v7715 = vpop.f32.mrf.mxu0
      %v7716 = vadd.f32 %v7603, %v7715
      %7717 = vmatmul.f32.gmra.mxu0 %v7501
      %v7718 = vpop.f32.mrf.mxu0
      %v7719 = vadd.f32 %v7606, %v7718
      %7720 = vmatmul.f32.gmra.mxu0 %v7503
      %v7721 = vpop.f32.mrf.mxu0
      %v7722 = vadd.f32 %v7609, %v7721
      %7723 = vmatmul.f32.gmra.mxu0 %v7505
      %v7724 = vpop.f32.mrf.mxu0
      %v7725 = vadd.f32 %v7612, %v7724
      %7726 = vmatmul.f32.gmra.mxu0 %v3852
      %v7727 = vpop.f32.mrf.mxu0
      %v7728 = vadd.f32 %v7615, %v7727
      %7729 = vmatmul.f32.gmra.mxu0 %v3854
      %v7730 = vpop.f32.mrf.mxu0
      %v7731 = vadd.f32 %v7618, %v7730
      %7732 = vdwg.mxu0
      %v7733 = vxor.u32 %v7638, 2147483648
      %v7734 = vxor.u32 %v7641, 2147483648
      %v7735 = vxor.u32 %v7644, 2147483648
      %v7736 = vxor.u32 %v7647, 2147483648
      %v7737 = vxor.u32 %v7650, 2147483648
      %v7738 = vxor.u32 %v7653, 2147483648
      %v7739 = vxor.u32 %v7656, 2147483648
      %v7740 = vxor.u32 %v7659, 2147483648
      %v7741 = vxor.u32 %v7662, 2147483648
      %v7742 = vxor.u32 %v7665, 2147483648
      %v7743 = vxor.u32 %v7668, 2147483648
      %v7744 = vxor.u32 %v7671, 2147483648
      %v7745 = vxor.u32 %v7674, 2147483648
      %v7746 = vxor.u32 %v7677, 2147483648
      %v7747 = vxor.u32 %v7680, 2147483648
      %v7748 = vxor.u32 %v7683, 2147483648
      %v7749 = vxor.u32 %v7686, 2147483648
      %v7750 = vxor.u32 %v7689, 2147483648
      %v7751 = vxor.u32 %v7692, 2147483648
      %v7752 = vxor.u32 %v7695, 2147483648
      %v7753 = vxor.u32 %v7698, 2147483648
      %v7754 = vxor.u32 %v7701, 2147483648
      %v7755 = vxor.u32 %v7704, 2147483648
      %v7756 = vxor.u32 %v7707, 2147483648
      %v7757 = vxor.u32 %v7710, 2147483648
      %v7758 = vxor.u32 %v7713, 2147483648
      %v7759 = vxor.u32 %v7716, 2147483648
      %v7760 = vxor.u32 %v7719, 2147483648
      %v7761 = vxor.u32 %v7722, 2147483648
      %v7762 = vxor.u32 %v7725, 2147483648
      %v7763 = vxor.u32 %v7728, 2147483648
      %v7764 = vxor.u32 %v7731, 2147483648
      %v7765 = vmul.f32 %v7733, 1.442695
      %v7766 = vpow.pop %v7765
      %v7767 = vmul.f32 %v7734, 1.442695
      %v7768 = vpow.pop %v7767
      %v7769 = vmul.f32 %v7735, 1.442695
      %v7770 = vpow.pop %v7769
      %v7771 = vmul.f32 %v7736, 1.442695
      %v7772 = vpow.pop %v7771
      %v7773 = vmul.f32 %v7737, 1.442695
      %v7774 = vpow.pop %v7773
      %v7775 = vmul.f32 %v7738, 1.442695
      %v7776 = vpow.pop %v7775
      %v7777 = vmul.f32 %v7739, 1.442695
      %v7778 = vpow.pop %v7777
      %v7779 = vmul.f32 %v7740, 1.442695
      %v7780 = vpow.pop %v7779
      %v7781 = vmul.f32 %v7741, 1.442695
      %v7782 = vpow.pop %v7781
      %v7783 = vmul.f32 %v7742, 1.442695
      %v7784 = vpow.pop %v7783
      %v7785 = vmul.f32 %v7743, 1.442695
      %v7786 = vpow.pop %v7785
      %v7787 = vmul.f32 %v7744, 1.442695
      %v7788 = vpow.pop %v7787
      %v7789 = vmul.f32 %v7745, 1.442695
      %v7790 = vpow.pop %v7789
      %v7791 = vmul.f32 %v7746, 1.442695
      %v7792 = vpow.pop %v7791
      %v7793 = vmul.f32 %v7747, 1.442695
      %v7794 = vpow.pop %v7793
      %v7795 = vmul.f32 %v7748, 1.442695
      %v7796 = vpow.pop %v7795
      %v7797 = vmul.f32 %v7749, 1.442695
      %v7798 = vpow.pop %v7797
      %v7799 = vmul.f32 %v7750, 1.442695
      %v7800 = vpow.pop %v7799
      %v7801 = vmul.f32 %v7751, 1.442695
      %v7802 = vpow.pop %v7801
      %v7803 = vmul.f32 %v7752, 1.442695
      %v7804 = vpow.pop %v7803
      %v7805 = vmul.f32 %v7753, 1.442695
      %v7806 = vpow.pop %v7805
      %v7807 = vmul.f32 %v7754, 1.442695
      %v7808 = vpow.pop %v7807
      %v7809 = vmul.f32 %v7755, 1.442695
      %v7810 = vpow.pop %v7809
      %v7811 = vmul.f32 %v7756, 1.442695
      %v7812 = vpow.pop %v7811
      %v7813 = vmul.f32 %v7757, 1.442695
      %v7814 = vpow.pop %v7813
      %v7815 = vmul.f32 %v7758, 1.442695
      %v7816 = vpow.pop %v7815
      %v7817 = vmul.f32 %v7759, 1.442695
      %v7818 = vpow.pop %v7817
      %v7819 = vmul.f32 %v7760, 1.442695
      %v7820 = vpow.pop %v7819
      %v7821 = vmul.f32 %v7761, 1.442695
      %v7822 = vpow.pop %v7821
      %v7823 = vmul.f32 %v7762, 1.442695
      %v7824 = vpow.pop %v7823
      %v7825 = vmul.f32 %v7763, 1.442695
      %v7826 = vpow.pop %v7825
      %v7827 = vmul.f32 %v7764, 1.442695
      %v7828 = vpow.pop %v7827
      %v7829 = vadd.f32 %v7766, 1.0
      %v7830 = vadd.f32 %v7768, 1.0
      %v7831 = vadd.f32 %v7770, 1.0
      %v7832 = vadd.f32 %v7772, 1.0
      %v7833 = vadd.f32 %v7774, 1.0
      %v7834 = vadd.f32 %v7776, 1.0
      %v7835 = vadd.f32 %v7778, 1.0
      %v7836 = vadd.f32 %v7780, 1.0
      %v7837 = vadd.f32 %v7782, 1.0
      %v7838 = vadd.f32 %v7784, 1.0
      %v7839 = vadd.f32 %v7786, 1.0
      %v7840 = vadd.f32 %v7788, 1.0
      %v7841 = vadd.f32 %v7790, 1.0
      %v7842 = vadd.f32 %v7792, 1.0
      %v7843 = vadd.f32 %v7794, 1.0
      %v7844 = vadd.f32 %v7796, 1.0
      %v7845 = vadd.f32 %v7798, 1.0
      %v7846 = vadd.f32 %v7800, 1.0
      %v7847 = vadd.f32 %v7802, 1.0
      %v7848 = vadd.f32 %v7804, 1.0
      %v7849 = vadd.f32 %v7806, 1.0
      %v7850 = vadd.f32 %v7808, 1.0
      %v7851 = vadd.f32 %v7810, 1.0
      %v7852 = vadd.f32 %v7812, 1.0
      %v7853 = vadd.f32 %v7814, 1.0
      %v7854 = vadd.f32 %v7816, 1.0
      %v7855 = vadd.f32 %v7818, 1.0
      %v7856 = vadd.f32 %v7820, 1.0
      %v7857 = vadd.f32 %v7822, 1.0
      %v7858 = vadd.f32 %v7824, 1.0
      %v7859 = vadd.f32 %v7826, 1.0
      %v7860 = vadd.f32 %v7828, 1.0
      %v7861 = vrcp.pop %v7829
      %v7862 = vmul.f32 %v7829, %v7861
      %v7863 = vsub.f32 1.0, %v7862
      %v7864 = vmul.f32 %v7861, %v7863
      %v7865 = vadd.f32 %v7861, %v7864
      %vm7866 = vweird.f32 %v7829
      %vm7867 = vweird.f32 %v7861
      %vm7868 = vmor %vm7866, %vm7867
      %v7869 = vsel %vm7868, %v7861, %v7865
      %v7870 = vand.u32 2147483647, %v7829
      %vm7871 = vcmp.eq.f32.partialorder %v7870, 8.507059e+37
      %v7872 = vand.u32 %v7829, 2147483648
      %v7873 = vor.u32 1.1754944e-38, %v7872
      %v7874 = vsel %vm7871, %v7873, %v7869
      %v7875 = vmul.f32 1.0, %v7874
      %v7876 = vrcp.pop %v7830
      %v7877 = vmul.f32 %v7830, %v7876
      %v7878 = vsub.f32 1.0, %v7877
      %v7879 = vmul.f32 %v7876, %v7878
      %v7880 = vadd.f32 %v7876, %v7879
      %vm7881 = vweird.f32 %v7830
      %vm7882 = vweird.f32 %v7876
      %vm7883 = vmor %vm7881, %vm7882
      %v7884 = vsel %vm7883, %v7876, %v7880
      %v7885 = vand.u32 2147483647, %v7830
      %vm7886 = vcmp.eq.f32.partialorder %v7885, 8.507059e+37
      %v7887 = vand.u32 %v7830, 2147483648
      %v7888 = vor.u32 1.1754944e-38, %v7887
      %v7889 = vsel %vm7886, %v7888, %v7884
      %v7890 = vmul.f32 1.0, %v7889
      %v7891 = vrcp.pop %v7831
      %v7892 = vmul.f32 %v7831, %v7891
      %v7893 = vsub.f32 1.0, %v7892
      %v7894 = vmul.f32 %v7891, %v7893
      %v7895 = vadd.f32 %v7891, %v7894
      %vm7896 = vweird.f32 %v7831
      %vm7897 = vweird.f32 %v7891
      %vm7898 = vmor %vm7896, %vm7897
      %v7899 = vsel %vm7898, %v7891, %v7895
      %v7900 = vand.u32 2147483647, %v7831
      %vm7901 = vcmp.eq.f32.partialorder %v7900, 8.507059e+37
      %v7902 = vand.u32 %v7831, 2147483648
      %v7903 = vor.u32 1.1754944e-38, %v7902
      %v7904 = vsel %vm7901, %v7903, %v7899
      %v7905 = vmul.f32 1.0, %v7904
      %v7906 = vrcp.pop %v7832
      %v7907 = vmul.f32 %v7832, %v7906
      %v7908 = vsub.f32 1.0, %v7907
      %v7909 = vmul.f32 %v7906, %v7908
      %v7910 = vadd.f32 %v7906, %v7909
      %vm7911 = vweird.f32 %v7832
      %vm7912 = vweird.f32 %v7906
      %vm7913 = vmor %vm7911, %vm7912
      %v7914 = vsel %vm7913, %v7906, %v7910
      %v7915 = vand.u32 2147483647, %v7832
      %vm7916 = vcmp.eq.f32.partialorder %v7915, 8.507059e+37
      %v7917 = vand.u32 %v7832, 2147483648
      %v7918 = vor.u32 1.1754944e-38, %v7917
      %v7919 = vsel %vm7916, %v7918, %v7914
      %v7920 = vmul.f32 1.0, %v7919
      %v7921 = vrcp.pop %v7833
      %v7922 = vmul.f32 %v7833, %v7921
      %v7923 = vsub.f32 1.0, %v7922
      %v7924 = vmul.f32 %v7921, %v7923
      %v7925 = vadd.f32 %v7921, %v7924
      %vm7926 = vweird.f32 %v7833
      %vm7927 = vweird.f32 %v7921
      %vm7928 = vmor %vm7926, %vm7927
      %v7929 = vsel %vm7928, %v7921, %v7925
      %v7930 = vand.u32 2147483647, %v7833
      %vm7931 = vcmp.eq.f32.partialorder %v7930, 8.507059e+37
      %v7932 = vand.u32 %v7833, 2147483648
      %v7933 = vor.u32 1.1754944e-38, %v7932
      %v7934 = vsel %vm7931, %v7933, %v7929
      %v7935 = vmul.f32 1.0, %v7934
      %v7936 = vrcp.pop %v7834
      %v7937 = vmul.f32 %v7834, %v7936
      %v7938 = vsub.f32 1.0, %v7937
      %v7939 = vmul.f32 %v7936, %v7938
      %v7940 = vadd.f32 %v7936, %v7939
      %vm7941 = vweird.f32 %v7834
      %vm7942 = vweird.f32 %v7936
      %vm7943 = vmor %vm7941, %vm7942
      %v7944 = vsel %vm7943, %v7936, %v7940
      %v7945 = vand.u32 2147483647, %v7834
      %vm7946 = vcmp.eq.f32.partialorder %v7945, 8.507059e+37
      %v7947 = vand.u32 %v7834, 2147483648
      %v7948 = vor.u32 1.1754944e-38, %v7947
      %v7949 = vsel %vm7946, %v7948, %v7944
      %v7950 = vmul.f32 1.0, %v7949
      %v7951 = vrcp.pop %v7835
      %v7952 = vmul.f32 %v7835, %v7951
      %v7953 = vsub.f32 1.0, %v7952
      %v7954 = vmul.f32 %v7951, %v7953
      %v7955 = vadd.f32 %v7951, %v7954
      %vm7956 = vweird.f32 %v7835
      %vm7957 = vweird.f32 %v7951
      %vm7958 = vmor %vm7956, %vm7957
      %v7959 = vsel %vm7958, %v7951, %v7955
      %v7960 = vand.u32 2147483647, %v7835
      %vm7961 = vcmp.eq.f32.partialorder %v7960, 8.507059e+37
      %v7962 = vand.u32 %v7835, 2147483648
      %v7963 = vor.u32 1.1754944e-38, %v7962
      %v7964 = vsel %vm7961, %v7963, %v7959
      %v7965 = vmul.f32 1.0, %v7964
      %v7966 = vrcp.pop %v7836
      %v7967 = vmul.f32 %v7836, %v7966
      %v7968 = vsub.f32 1.0, %v7967
      %v7969 = vmul.f32 %v7966, %v7968
      %v7970 = vadd.f32 %v7966, %v7969
      %vm7971 = vweird.f32 %v7836
      %vm7972 = vweird.f32 %v7966
      %vm7973 = vmor %vm7971, %vm7972
      %v7974 = vsel %vm7973, %v7966, %v7970
      %v7975 = vand.u32 2147483647, %v7836
      %vm7976 = vcmp.eq.f32.partialorder %v7975, 8.507059e+37
      %v7977 = vand.u32 %v7836, 2147483648
      %v7978 = vor.u32 1.1754944e-38, %v7977
      %v7979 = vsel %vm7976, %v7978, %v7974
      %v7980 = vmul.f32 1.0, %v7979
      %v7981 = vrcp.pop %v7837
      %v7982 = vmul.f32 %v7837, %v7981
      %v7983 = vsub.f32 1.0, %v7982
      %v7984 = vmul.f32 %v7981, %v7983
      %v7985 = vadd.f32 %v7981, %v7984
      %vm7986 = vweird.f32 %v7837
      %vm7987 = vweird.f32 %v7981
      %vm7988 = vmor %vm7986, %vm7987
      %v7989 = vsel %vm7988, %v7981, %v7985
      %v7990 = vand.u32 2147483647, %v7837
      %vm7991 = vcmp.eq.f32.partialorder %v7990, 8.507059e+37
      %v7992 = vand.u32 %v7837, 2147483648
      %v7993 = vor.u32 1.1754944e-38, %v7992
      %v7994 = vsel %vm7991, %v7993, %v7989
      %v7995 = vmul.f32 1.0, %v7994
      %v7996 = vrcp.pop %v7838
      %v7997 = vmul.f32 %v7838, %v7996
      %v7998 = vsub.f32 1.0, %v7997
      %v7999 = vmul.f32 %v7996, %v7998
      %v8000 = vadd.f32 %v7996, %v7999
      %vm8001 = vweird.f32 %v7838
      %vm8002 = vweird.f32 %v7996
      %vm8003 = vmor %vm8001, %vm8002
      %v8004 = vsel %vm8003, %v7996, %v8000
      %v8005 = vand.u32 2147483647, %v7838
      %vm8006 = vcmp.eq.f32.partialorder %v8005, 8.507059e+37
      %v8007 = vand.u32 %v7838, 2147483648
      %v8008 = vor.u32 1.1754944e-38, %v8007
      %v8009 = vsel %vm8006, %v8008, %v8004
      %v8010 = vmul.f32 1.0, %v8009
      %v8011 = vrcp.pop %v7839
      %v8012 = vmul.f32 %v7839, %v8011
      %v8013 = vsub.f32 1.0, %v8012
      %v8014 = vmul.f32 %v8011, %v8013
      %v8015 = vadd.f32 %v8011, %v8014
      %vm8016 = vweird.f32 %v7839
      %vm8017 = vweird.f32 %v8011
      %vm8018 = vmor %vm8016, %vm8017
      %v8019 = vsel %vm8018, %v8011, %v8015
      %v8020 = vand.u32 2147483647, %v7839
      %vm8021 = vcmp.eq.f32.partialorder %v8020, 8.507059e+37
      %v8022 = vand.u32 %v7839, 2147483648
      %v8023 = vor.u32 1.1754944e-38, %v8022
      %v8024 = vsel %vm8021, %v8023, %v8019
      %v8025 = vmul.f32 1.0, %v8024
      %v8026 = vrcp.pop %v7840
      %v8027 = vmul.f32 %v7840, %v8026
      %v8028 = vsub.f32 1.0, %v8027
      %v8029 = vmul.f32 %v8026, %v8028
      %v8030 = vadd.f32 %v8026, %v8029
      %vm8031 = vweird.f32 %v7840
      %vm8032 = vweird.f32 %v8026
      %vm8033 = vmor %vm8031, %vm8032
      %v8034 = vsel %vm8033, %v8026, %v8030
      %v8035 = vand.u32 2147483647, %v7840
      %vm8036 = vcmp.eq.f32.partialorder %v8035, 8.507059e+37
      %v8037 = vand.u32 %v7840, 2147483648
      %v8038 = vor.u32 1.1754944e-38, %v8037
      %v8039 = vsel %vm8036, %v8038, %v8034
      %v8040 = vmul.f32 1.0, %v8039
      %v8041 = vrcp.pop %v7841
      %v8042 = vmul.f32 %v7841, %v8041
      %v8043 = vsub.f32 1.0, %v8042
      %v8044 = vmul.f32 %v8041, %v8043
      %v8045 = vadd.f32 %v8041, %v8044
      %vm8046 = vweird.f32 %v7841
      %vm8047 = vweird.f32 %v8041
      %vm8048 = vmor %vm8046, %vm8047
      %v8049 = vsel %vm8048, %v8041, %v8045
      %v8050 = vand.u32 2147483647, %v7841
      %vm8051 = vcmp.eq.f32.partialorder %v8050, 8.507059e+37
      %v8052 = vand.u32 %v7841, 2147483648
      %v8053 = vor.u32 1.1754944e-38, %v8052
      %v8054 = vsel %vm8051, %v8053, %v8049
      %v8055 = vmul.f32 1.0, %v8054
      %v8056 = vrcp.pop %v7842
      %v8057 = vmul.f32 %v7842, %v8056
      %v8058 = vsub.f32 1.0, %v8057
      %v8059 = vmul.f32 %v8056, %v8058
      %v8060 = vadd.f32 %v8056, %v8059
      %vm8061 = vweird.f32 %v7842
      %vm8062 = vweird.f32 %v8056
      %vm8063 = vmor %vm8061, %vm8062
      %v8064 = vsel %vm8063, %v8056, %v8060
      %v8065 = vand.u32 2147483647, %v7842
      %vm8066 = vcmp.eq.f32.partialorder %v8065, 8.507059e+37
      %v8067 = vand.u32 %v7842, 2147483648
      %v8068 = vor.u32 1.1754944e-38, %v8067
      %v8069 = vsel %vm8066, %v8068, %v8064
      %v8070 = vmul.f32 1.0, %v8069
      %v8071 = vrcp.pop %v7843
      %v8072 = vmul.f32 %v7843, %v8071
      %v8073 = vsub.f32 1.0, %v8072
      %v8074 = vmul.f32 %v8071, %v8073
      %v8075 = vadd.f32 %v8071, %v8074
      %vm8076 = vweird.f32 %v7843
      %vm8077 = vweird.f32 %v8071
      %vm8078 = vmor %vm8076, %vm8077
      %v8079 = vsel %vm8078, %v8071, %v8075
      %v8080 = vand.u32 2147483647, %v7843
      %vm8081 = vcmp.eq.f32.partialorder %v8080, 8.507059e+37
      %v8082 = vand.u32 %v7843, 2147483648
      %v8083 = vor.u32 1.1754944e-38, %v8082
      %v8084 = vsel %vm8081, %v8083, %v8079
      %v8085 = vmul.f32 1.0, %v8084
      %v8086 = vrcp.pop %v7844
      %v8087 = vmul.f32 %v7844, %v8086
      %v8088 = vsub.f32 1.0, %v8087
      %v8089 = vmul.f32 %v8086, %v8088
      %v8090 = vadd.f32 %v8086, %v8089
      %vm8091 = vweird.f32 %v7844
      %vm8092 = vweird.f32 %v8086
      %vm8093 = vmor %vm8091, %vm8092
      %v8094 = vsel %vm8093, %v8086, %v8090
      %v8095 = vand.u32 2147483647, %v7844
      %vm8096 = vcmp.eq.f32.partialorder %v8095, 8.507059e+37
      %v8097 = vand.u32 %v7844, 2147483648
      %v8098 = vor.u32 1.1754944e-38, %v8097
      %v8099 = vsel %vm8096, %v8098, %v8094
      %v8100 = vmul.f32 1.0, %v8099
      %v8101 = vrcp.pop %v7845
      %v8102 = vmul.f32 %v7845, %v8101
      %v8103 = vsub.f32 1.0, %v8102
      %v8104 = vmul.f32 %v8101, %v8103
      %v8105 = vadd.f32 %v8101, %v8104
      %vm8106 = vweird.f32 %v7845
      %vm8107 = vweird.f32 %v8101
      %vm8108 = vmor %vm8106, %vm8107
      %v8109 = vsel %vm8108, %v8101, %v8105
      %v8110 = vand.u32 2147483647, %v7845
      %vm8111 = vcmp.eq.f32.partialorder %v8110, 8.507059e+37
      %v8112 = vand.u32 %v7845, 2147483648
      %v8113 = vor.u32 1.1754944e-38, %v8112
      %v8114 = vsel %vm8111, %v8113, %v8109
      %v8115 = vmul.f32 1.0, %v8114
      %v8116 = vrcp.pop %v7846
      %v8117 = vmul.f32 %v7846, %v8116
      %v8118 = vsub.f32 1.0, %v8117
      %v8119 = vmul.f32 %v8116, %v8118
      %v8120 = vadd.f32 %v8116, %v8119
      %vm8121 = vweird.f32 %v7846
      %vm8122 = vweird.f32 %v8116
      %vm8123 = vmor %vm8121, %vm8122
      %v8124 = vsel %vm8123, %v8116, %v8120
      %v8125 = vand.u32 2147483647, %v7846
      %vm8126 = vcmp.eq.f32.partialorder %v8125, 8.507059e+37
      %v8127 = vand.u32 %v7846, 2147483648
      %v8128 = vor.u32 1.1754944e-38, %v8127
      %v8129 = vsel %vm8126, %v8128, %v8124
      %v8130 = vmul.f32 1.0, %v8129
      %v8131 = vrcp.pop %v7847
      %v8132 = vmul.f32 %v7847, %v8131
      %v8133 = vsub.f32 1.0, %v8132
      %v8134 = vmul.f32 %v8131, %v8133
      %v8135 = vadd.f32 %v8131, %v8134
      %vm8136 = vweird.f32 %v7847
      %vm8137 = vweird.f32 %v8131
      %vm8138 = vmor %vm8136, %vm8137
      %v8139 = vsel %vm8138, %v8131, %v8135
      %v8140 = vand.u32 2147483647, %v7847
      %vm8141 = vcmp.eq.f32.partialorder %v8140, 8.507059e+37
      %v8142 = vand.u32 %v7847, 2147483648
      %v8143 = vor.u32 1.1754944e-38, %v8142
      %v8144 = vsel %vm8141, %v8143, %v8139
      %v8145 = vmul.f32 1.0, %v8144
      %v8146 = vrcp.pop %v7848
      %v8147 = vmul.f32 %v7848, %v8146
      %v8148 = vsub.f32 1.0, %v8147
      %v8149 = vmul.f32 %v8146, %v8148
      %v8150 = vadd.f32 %v8146, %v8149
      %vm8151 = vweird.f32 %v7848
      %vm8152 = vweird.f32 %v8146
      %vm8153 = vmor %vm8151, %vm8152
      %v8154 = vsel %vm8153, %v8146, %v8150
      %v8155 = vand.u32 2147483647, %v7848
      %vm8156 = vcmp.eq.f32.partialorder %v8155, 8.507059e+37
      %v8157 = vand.u32 %v7848, 2147483648
      %v8158 = vor.u32 1.1754944e-38, %v8157
      %v8159 = vsel %vm8156, %v8158, %v8154
      %v8160 = vmul.f32 1.0, %v8159
      %v8161 = vrcp.pop %v7849
      %v8162 = vmul.f32 %v7849, %v8161
      %v8163 = vsub.f32 1.0, %v8162
      %v8164 = vmul.f32 %v8161, %v8163
      %v8165 = vadd.f32 %v8161, %v8164
      %vm8166 = vweird.f32 %v7849
      %vm8167 = vweird.f32 %v8161
      %vm8168 = vmor %vm8166, %vm8167
      %v8169 = vsel %vm8168, %v8161, %v8165
      %v8170 = vand.u32 2147483647, %v7849
      %vm8171 = vcmp.eq.f32.partialorder %v8170, 8.507059e+37
      %v8172 = vand.u32 %v7849, 2147483648
      %v8173 = vor.u32 1.1754944e-38, %v8172
      %v8174 = vsel %vm8171, %v8173, %v8169
      %v8175 = vmul.f32 1.0, %v8174
      %v8176 = vrcp.pop %v7850
      %v8177 = vmul.f32 %v7850, %v8176
      %v8178 = vsub.f32 1.0, %v8177
      %v8179 = vmul.f32 %v8176, %v8178
      %v8180 = vadd.f32 %v8176, %v8179
      %vm8181 = vweird.f32 %v7850
      %vm8182 = vweird.f32 %v8176
      %vm8183 = vmor %vm8181, %vm8182
      %v8184 = vsel %vm8183, %v8176, %v8180
      %v8185 = vand.u32 2147483647, %v7850
      %vm8186 = vcmp.eq.f32.partialorder %v8185, 8.507059e+37
      %v8187 = vand.u32 %v7850, 2147483648
      %v8188 = vor.u32 1.1754944e-38, %v8187
      %v8189 = vsel %vm8186, %v8188, %v8184
      %v8190 = vmul.f32 1.0, %v8189
      %v8191 = vrcp.pop %v7851
      %v8192 = vmul.f32 %v7851, %v8191
      %v8193 = vsub.f32 1.0, %v8192
      %v8194 = vmul.f32 %v8191, %v8193
      %v8195 = vadd.f32 %v8191, %v8194
      %vm8196 = vweird.f32 %v7851
      %vm8197 = vweird.f32 %v8191
      %vm8198 = vmor %vm8196, %vm8197
      %v8199 = vsel %vm8198, %v8191, %v8195
      %v8200 = vand.u32 2147483647, %v7851
      %vm8201 = vcmp.eq.f32.partialorder %v8200, 8.507059e+37
      %v8202 = vand.u32 %v7851, 2147483648
      %v8203 = vor.u32 1.1754944e-38, %v8202
      %v8204 = vsel %vm8201, %v8203, %v8199
      %v8205 = vmul.f32 1.0, %v8204
      %v8206 = vrcp.pop %v7852
      %v8207 = vmul.f32 %v7852, %v8206
      %v8208 = vsub.f32 1.0, %v8207
      %v8209 = vmul.f32 %v8206, %v8208
      %v8210 = vadd.f32 %v8206, %v8209
      %vm8211 = vweird.f32 %v7852
      %vm8212 = vweird.f32 %v8206
      %vm8213 = vmor %vm8211, %vm8212
      %v8214 = vsel %vm8213, %v8206, %v8210
      %v8215 = vand.u32 2147483647, %v7852
      %vm8216 = vcmp.eq.f32.partialorder %v8215, 8.507059e+37
      %v8217 = vand.u32 %v7852, 2147483648
      %v8218 = vor.u32 1.1754944e-38, %v8217
      %v8219 = vsel %vm8216, %v8218, %v8214
      %v8220 = vmul.f32 1.0, %v8219
      %v8221 = vrcp.pop %v7853
      %v8222 = vmul.f32 %v7853, %v8221
      %v8223 = vsub.f32 1.0, %v8222
      %v8224 = vmul.f32 %v8221, %v8223
      %v8225 = vadd.f32 %v8221, %v8224
      %vm8226 = vweird.f32 %v7853
      %vm8227 = vweird.f32 %v8221
      %vm8228 = vmor %vm8226, %vm8227
      %v8229 = vsel %vm8228, %v8221, %v8225
      %v8230 = vand.u32 2147483647, %v7853
      %vm8231 = vcmp.eq.f32.partialorder %v8230, 8.507059e+37
      %v8232 = vand.u32 %v7853, 2147483648
      %v8233 = vor.u32 1.1754944e-38, %v8232
      %v8234 = vsel %vm8231, %v8233, %v8229
      %v8235 = vmul.f32 1.0, %v8234
      %v8236 = vrcp.pop %v7854
      %v8237 = vmul.f32 %v7854, %v8236
      %v8238 = vsub.f32 1.0, %v8237
      %v8239 = vmul.f32 %v8236, %v8238
      %v8240 = vadd.f32 %v8236, %v8239
      %vm8241 = vweird.f32 %v7854
      %vm8242 = vweird.f32 %v8236
      %vm8243 = vmor %vm8241, %vm8242
      %v8244 = vsel %vm8243, %v8236, %v8240
      %v8245 = vand.u32 2147483647, %v7854
      %vm8246 = vcmp.eq.f32.partialorder %v8245, 8.507059e+37
      %v8247 = vand.u32 %v7854, 2147483648
      %v8248 = vor.u32 1.1754944e-38, %v8247
      %v8249 = vsel %vm8246, %v8248, %v8244
      %v8250 = vmul.f32 1.0, %v8249
      %v8251 = vrcp.pop %v7855
      %v8252 = vmul.f32 %v7855, %v8251
      %v8253 = vsub.f32 1.0, %v8252
      %v8254 = vmul.f32 %v8251, %v8253
      %v8255 = vadd.f32 %v8251, %v8254
      %vm8256 = vweird.f32 %v7855
      %vm8257 = vweird.f32 %v8251
      %vm8258 = vmor %vm8256, %vm8257
      %v8259 = vsel %vm8258, %v8251, %v8255
      %v8260 = vand.u32 2147483647, %v7855
      %vm8261 = vcmp.eq.f32.partialorder %v8260, 8.507059e+37
      %v8262 = vand.u32 %v7855, 2147483648
      %v8263 = vor.u32 1.1754944e-38, %v8262
      %v8264 = vsel %vm8261, %v8263, %v8259
      %v8265 = vmul.f32 1.0, %v8264
      %v8266 = vrcp.pop %v7856
      %v8267 = vmul.f32 %v7856, %v8266
      %v8268 = vsub.f32 1.0, %v8267
      %v8269 = vmul.f32 %v8266, %v8268
      %v8270 = vadd.f32 %v8266, %v8269
      %vm8271 = vweird.f32 %v7856
      %vm8272 = vweird.f32 %v8266
      %vm8273 = vmor %vm8271, %vm8272
      %v8274 = vsel %vm8273, %v8266, %v8270
      %v8275 = vand.u32 2147483647, %v7856
      %vm8276 = vcmp.eq.f32.partialorder %v8275, 8.507059e+37
      %v8277 = vand.u32 %v7856, 2147483648
      %v8278 = vor.u32 1.1754944e-38, %v8277
      %v8279 = vsel %vm8276, %v8278, %v8274
      %v8280 = vmul.f32 1.0, %v8279
      %v8281 = vrcp.pop %v7857
      %v8282 = vmul.f32 %v7857, %v8281
      %v8283 = vsub.f32 1.0, %v8282
      %v8284 = vmul.f32 %v8281, %v8283
      %v8285 = vadd.f32 %v8281, %v8284
      %vm8286 = vweird.f32 %v7857
      %vm8287 = vweird.f32 %v8281
      %vm8288 = vmor %vm8286, %vm8287
      %v8289 = vsel %vm8288, %v8281, %v8285
      %v8290 = vand.u32 2147483647, %v7857
      %vm8291 = vcmp.eq.f32.partialorder %v8290, 8.507059e+37
      %v8292 = vand.u32 %v7857, 2147483648
      %v8293 = vor.u32 1.1754944e-38, %v8292
      %v8294 = vsel %vm8291, %v8293, %v8289
      %v8295 = vmul.f32 1.0, %v8294
      %v8296 = vrcp.pop %v7858
      %v8297 = vmul.f32 %v7858, %v8296
      %v8298 = vsub.f32 1.0, %v8297
      %v8299 = vmul.f32 %v8296, %v8298
      %v8300 = vadd.f32 %v8296, %v8299
      %vm8301 = vweird.f32 %v7858
      %vm8302 = vweird.f32 %v8296
      %vm8303 = vmor %vm8301, %vm8302
      %v8304 = vsel %vm8303, %v8296, %v8300
      %v8305 = vand.u32 2147483647, %v7858
      %vm8306 = vcmp.eq.f32.partialorder %v8305, 8.507059e+37
      %v8307 = vand.u32 %v7858, 2147483648
      %v8308 = vor.u32 1.1754944e-38, %v8307
      %v8309 = vsel %vm8306, %v8308, %v8304
      %v8310 = vmul.f32 1.0, %v8309
      %v8311 = vrcp.pop %v7859
      %v8312 = vmul.f32 %v7859, %v8311
      %v8313 = vsub.f32 1.0, %v8312
      %v8314 = vmul.f32 %v8311, %v8313
      %v8315 = vadd.f32 %v8311, %v8314
      %vm8316 = vweird.f32 %v7859
      %vm8317 = vweird.f32 %v8311
      %vm8318 = vmor %vm8316, %vm8317
      %v8319 = vsel %vm8318, %v8311, %v8315
      %v8320 = vand.u32 2147483647, %v7859
      %vm8321 = vcmp.eq.f32.partialorder %v8320, 8.507059e+37
      %v8322 = vand.u32 %v7859, 2147483648
      %v8323 = vor.u32 1.1754944e-38, %v8322
      %v8324 = vsel %vm8321, %v8323, %v8319
      %v8325 = vmul.f32 1.0, %v8324
      %v8326 = vrcp.pop %v7860
      %v8327 = vmul.f32 %v7860, %v8326
      %v8328 = vsub.f32 1.0, %v8327
      %v8329 = vmul.f32 %v8326, %v8328
      %v8330 = vadd.f32 %v8326, %v8329
      %vm8331 = vweird.f32 %v7860
      %vm8332 = vweird.f32 %v8326
      %vm8333 = vmor %vm8331, %vm8332
      %v8334 = vsel %vm8333, %v8326, %v8330
      %v8335 = vand.u32 2147483647, %v7860
      %vm8336 = vcmp.eq.f32.partialorder %v8335, 8.507059e+37
      %v8337 = vand.u32 %v7860, 2147483648
      %v8338 = vor.u32 1.1754944e-38, %v8337
      %v8339 = vsel %vm8336, %v8338, %v8334
      %v8340 = vmul.f32 1.0, %v8339
      %v8341 = vsub.f32 %v7875, 0.5
      %v8342 = vsub.f32 %v7890, 0.5
      %v8343 = vsub.f32 %v7905, 0.5
      %v8344 = vsub.f32 %v7920, 0.5
      %v8345 = vsub.f32 %v7935, 0.5
      %v8346 = vsub.f32 %v7950, 0.5
      %v8347 = vsub.f32 %v7965, 0.5
      %v8348 = vsub.f32 %v7980, 0.5
      %v8349 = vsub.f32 %v7995, 0.5
      %v8350 = vsub.f32 %v8010, 0.5
      %v8351 = vsub.f32 %v8025, 0.5
      %v8352 = vsub.f32 %v8040, 0.5
      %v8353 = vsub.f32 %v8055, 0.5
      %v8354 = vsub.f32 %v8070, 0.5
      %v8355 = vsub.f32 %v8085, 0.5
      %v8356 = vsub.f32 %v8100, 0.5
      %v8357 = vsub.f32 %v8115, 0.5
      %v8358 = vsub.f32 %v8130, 0.5
      %v8359 = vsub.f32 %v8145, 0.5
      %v8360 = vsub.f32 %v8160, 0.5
      %v8361 = vsub.f32 %v8175, 0.5
      %v8362 = vsub.f32 %v8190, 0.5
      %v8363 = vsub.f32 %v8205, 0.5
      %v8364 = vsub.f32 %v8220, 0.5
      %v8365 = vsub.f32 %v8235, 0.5
      %v8366 = vsub.f32 %v8250, 0.5
      %v8367 = vsub.f32 %v8265, 0.5
      %v8368 = vsub.f32 %v8280, 0.5
      %v8369 = vsub.f32 %v8295, 0.5
      %v8370 = vsub.f32 %v8310, 0.5
      %v8371 = vsub.f32 %v8325, 0.5
      %v8372 = vsub.f32 %v8340, 0.5
      %vm8373 = vcmask 23552
      %8374 = vst.msk [vmem:[%s386] sm:$0xff] %vm8373, %v8341
      %8375 = vst.msk [vmem:[%s386 + $0x8] sm:$0xff] %vm8373, %v8342
      %8376 = vst.msk [vmem:[%s386 + $0x10] sm:$0xff] %vm8373, %v8343
      %8377 = vst.msk [vmem:[%s386 + $0x18] sm:$0xff] %vm8373, %v8344
      %8378 = vst.msk [vmem:[%s386 + $0x20] sm:$0xff] %vm8373, %v8345
      %8379 = vst.msk [vmem:[%s386 + $0x28] sm:$0xff] %vm8373, %v8346
      %8380 = vst.msk [vmem:[%s386 + $0x30] sm:$0xff] %vm8373, %v8347
      %8381 = vst.msk [vmem:[%s386 + $0x38] sm:$0xff] %vm8373, %v8348
      %8382 = vst.msk [vmem:[%s386 + $0x40] sm:$0xff] %vm8373, %v8349
      %8383 = vst.msk [vmem:[%s386 + $0x48] sm:$0xff] %vm8373, %v8350
      %8384 = vst.msk [vmem:[%s386 + $0x50] sm:$0xff] %vm8373, %v8351
      %8385 = vst.msk [vmem:[%s386 + $0x58] sm:$0xff] %vm8373, %v8352
      %8386 = vst.msk [vmem:[%s386 + $0x60] sm:$0xff] %vm8373, %v8353
      %8387 = vst.msk [vmem:[%s386 + $0x68] sm:$0xff] %vm8373, %v8354
      %8388 = vst.msk [vmem:[%s386 + $0x70] sm:$0xff] %vm8373, %v8355
      %8389 = vst.msk [vmem:[%s386 + $0x78] sm:$0xff] %vm8373, %v8356
      %8390 = vst.msk [vmem:[%s386 + $0x80] sm:$0xff] %vm8373, %v8357
      %8391 = vst.msk [vmem:[%s386 + $0x88] sm:$0xff] %vm8373, %v8358
      %8392 = vst.msk [vmem:[%s386 + $0x90] sm:$0xff] %vm8373, %v8359
      %8393 = vst.msk [vmem:[%s386 + $0x98] sm:$0xff] %vm8373, %v8360
      %8394 = vst.msk [vmem:[%s386 + $0xa0] sm:$0xff] %vm8373, %v8361
      %8395 = vst.msk [vmem:[%s386 + $0xa8] sm:$0xff] %vm8373, %v8362
      %8396 = vst.msk [vmem:[%s386 + $0xb0] sm:$0xff] %vm8373, %v8363
      %8397 = vst.msk [vmem:[%s386 + $0xb8] sm:$0xff] %vm8373, %v8364
      %8398 = vst.msk [vmem:[%s386 + $0xc0] sm:$0xff] %vm8373, %v8365
      %8399 = vst.msk [vmem:[%s386 + $0xc8] sm:$0xff] %vm8373, %v8366
      %8400 = vst.msk [vmem:[%s386 + $0xd0] sm:$0xff] %vm8373, %v8367
      %8401 = vst.msk [vmem:[%s386 + $0xd8] sm:$0xff] %vm8373, %v8368
      %8402 = vst.msk [vmem:[%s386 + $0xe0] sm:$0xff] %vm8373, %v8369
      %8403 = vst.msk [vmem:[%s386 + $0xe8] sm:$0xff] %vm8373, %v8370
      %8404 = vst.msk [vmem:[%s386 + $0xf0] sm:$0xff] %vm8373, %v8371
      %8405 = vst.msk [vmem:[%s386 + $0xf8] sm:$0xff] %vm8373, %v8372
      %p8406 = scmp.lt.s32.totalorder %s22, 1
      %s8407 = scalar_select %p8406, %s22, 1
      %s8408 = smul.addr %s8407, 32
      %s8409 = smul.addr %s8408, 8
      %s8410 = scalar_lea.vmem %s11, %s8409
      // Predicated region
      $region65: #{decoder_forward.1} parent=63 // pred_check
        %p8411 = pneg %p276
      $region66: #{decoder_forward.1} parent=63 // pred_check_branch
        %8413 = sbr.rel (%p8411) target = $region68
      $region67: #{decoder_forward.1} parent=63 // pred_region
        _
      $region68: #{decoder_forward.1} parent=63 // pred_fallthru
        _
    $region64: #{decoder_forward.1} parent=5 // pred_fallthru
      _
    %p8414 = scmp.le.s32.totalorder 2, %s17
    // Predicated region
    $region69: #{decoder_forward.1} parent=5 // pred_check
      %p8415 = pneg %p8414
    $region70: #{decoder_forward.1} parent=5 // pred_check_branch
      %8417 = sbr.rel (%p8415) target = $region72
    $region71: #{decoder_forward.1} parent=5 // pred_region
      %s8418 = ssub.s32 %s17, 2
      // Predicated region
      $region73: #{decoder_forward.1} parent=71 // pred_check
        %p8419 = pneg %p282
      $region74: #{decoder_forward.1} parent=71 // pred_check_branch
        %8421 = sbr.rel (%p8419) target = $region76
      $region75: #{decoder_forward.1} parent=71 // pred_region
        %p8422 = scmp.lt.s32.totalorder %s23, 1
        %s8423 = scalar_select %p8422, %s23, 1
        %s8424 = smul.addr %s8423, 32
        %s8425 = smul.addr %s8424, 8
        %s8426 = scalar_lea.vmem %s11, %s8425
      $region76: #{decoder_forward.1} parent=71 // pred_fallthru
        _
    $region72: #{decoder_forward.1} parent=5 // pred_fallthru
      _
  $region6: #{decoder_forward.1} parent=0 // loop_footer
    %s21 = sadd.s32 1, %s17
  $region7: #{decoder_forward.1} parent=0 // loop_footer_branch
    %16 = sbr.rel target = $region3
  $region8: #{decoder_forward.1} parent=0 // loop_exit
    _

</llo_original>
